<compile_context>
chip_gen: v6e
topology: v6e:2x2x1
jax: 0.10.0
libtpu: 0.0.40
codegen_flags: <defaults>
</compile_context>

<pallas_src>
import jax
import jax.numpy as jnp
from jax import lax
from jax.experimental import pallas as pl
from jax.experimental.pallas import tpu as pltpu

BN_EPS = 1e-5
LEAKY_SLOPE = 0.3

L_IN = 250          # input sequence length (fc1 expects 3968 = 128 * 31)
L4, C4 = 31, 128    # conv4 output geometry (length, channels)
FEAT = L4 * C4      # 3968
HID = 100
HID_PAD = 128       # fc hidden dim padded to a full lane tile
NCLS = 4


# ---------------------------------------------------------------------------
# In-kernel building blocks (values only: no scratch, no HBM round trips).
# ---------------------------------------------------------------------------
def _im2col(x, K, Lout):
    # x: (Lout + K - 1, Cin) already zero-padded.  -> (Lout, K * Cin)
    return jnp.concatenate([x[k:k + Lout, :] for k in range(K)], axis=-1)


def _conv_bn_lrelu(x, w_ref, b_ref, *, K, Lout):
    # One im2col matmul per layer; BN is pre-folded into w/b.
    cols = _im2col(x, K, Lout)                                   # (Lout, K*Cin)
    y = jnp.dot(cols, w_ref[...], preferred_element_type=jnp.float32)
    y = y + b_ref[...]                                           # (Lout, Cout)
    return jnp.where(y >= 0, y, LEAKY_SLOPE * y)                 # LeakyReLU(0.3)


def _maxpool2_and_pad(y, *, P, pad):
    # y: (L, C).  Returns (pad + P + pad, C) where rows [pad, pad+P) hold
    # max(y[2p], y[2p+1]) (MaxPool1d(2), floor) and the pad rows are exact
    # zeros (= the next conv's 'same' zero padding).  The even/odd row gather
    # is done with two 0/1 selection matmuls so everything stays in
    # vregs/VMEM values (no scratch store + strided reloads).
    L = y.shape[0]
    R = P + 2 * pad
    row = lax.broadcasted_iota(jnp.int32, (R, L), 0)
    col = lax.broadcasted_iota(jnp.int32, (R, L), 1)
    valid = jnp.logical_and(row >= pad, row < pad + P)
    tgt = 2 * (row - pad)
    one, zero = jnp.float32(1.0), jnp.float32(0.0)
    sel_e = jnp.where(jnp.logical_and(valid, col == tgt), one, zero)
    sel_o = jnp.where(jnp.logical_and(valid, col == tgt + 1), one, zero)
    y_even = jnp.dot(sel_e, y, preferred_element_type=jnp.float32)
    y_odd = jnp.dot(sel_o, y, preferred_element_type=jnp.float32)
    return jnp.maximum(y_even, y_odd)


# ---------------------------------------------------------------------------
# The fused kernel: one grid step = one batch element, all layers in VMEM.
# ---------------------------------------------------------------------------
def _cnn2_kernel(x_ref,
                 w1_ref, b1_ref, w2_ref, b2_ref, w3_ref, b3_ref, w4_ref, b4_ref,
                 wf1_ref, bf1_ref, wf2_ref, bf2_ref,
                 o_ref):
    x = x_ref[0]                                                   # (266, 8)

    # down1: Conv(1->16, K=17) + BN + LReLU, MaxPool(2), pad 5 for down2.
    y = _conv_bn_lrelu(x, w1_ref, b1_ref, K=17, Lout=250)          # (250, 16)
    x = _maxpool2_and_pad(y, P=125, pad=5)                         # (135, 16)
    # down2: Conv(16->32, K=11), MaxPool(2), pad 2 for down3.
    y = _conv_bn_lrelu(x, w2_ref, b2_ref, K=11, Lout=125)          # (125, 32)
    x = _maxpool2_and_pad(y, P=62, pad=2)                          # (66, 32)
    # down3: Conv(32->64, K=5), MaxPool(2), pad 1 for down4.
    y = _conv_bn_lrelu(x, w3_ref, b3_ref, K=5, Lout=62)            # (62, 64)
    x = _maxpool2_and_pad(y, P=31, pad=1)                          # (33, 64)
    # down4: Conv(64->128, K=3), no pool.
    y = _conv_bn_lrelu(x, w4_ref, b4_ref, K=3, Lout=L4)            # (31, 128)

    # Flatten (l, c) along the lane axis (order l*128 + c); wf1's rows were
    # permuted at prep time to match PyTorch's channel-major x.view(B, -1).
    feat = jnp.concatenate([y[l:l + 1, :] for l in range(L4)], axis=-1)  # (1, 3968)

    h = jnp.dot(feat, wf1_ref[...], preferred_element_type=jnp.float32) + bf1_ref[...]
    h = jnp.maximum(h, 0.0)                                        # ReLU, (1, 128)
    z = jnp.dot(h, wf2_ref[...], preferred_element_type=jnp.float32) + bf2_ref[...]
    z = z - jnp.max(z, axis=-1, keepdims=True)                     # Softmax(dim=1)
    e = jnp.exp(z)
    o_ref[0] = e / jnp.sum(e, axis=-1, keepdims=True)              # (1, 4)


# ---------------------------------------------------------------------------
# One-time parameter glue (outside the per-forward jit).
# ---------------------------------------------------------------------------
def prepare_params(params):
    """BN(eval) folding, (K*Cin, Cout) reshape, Cin pad for layer 1, fc1
    column permutation to match the in-kernel channels-last flatten, and
    zero-padding of the fc hidden dim 100 -> 128."""
    conv = []
    for name in ("down1", "down2", "down3", "down4"):
        w, b, gamma, beta, mean, var = params[name]      # w: (Cout, Cin, K)
        cout, cin, k = w.shape
        scale = gamma / jnp.sqrt(var + BN_EPS)                       # (Cout,)
        w_eff = jnp.transpose(w, (2, 1, 0)) * scale                  # (K, Cin, Cout)
        b_eff = (b - mean) * scale + beta                            # (Cout,)
        if cin < 8:                                                  # layer 1: Cin=1 -> 8
            w_eff = jnp.pad(w_eff, ((0, 0), (0, 8 - cin), (0, 0)))
            cin = 8
        conv.append((w_eff.reshape(k * cin, cout).astype(jnp.float32),
                     b_eff.reshape(1, cout).astype(jnp.float32)))

    w1, b1, w2, b2 = params["fc"]        # (100, 3968), (100,), (4, 100), (4,)
    # PyTorch flatten index is c*L4 + l; the kernel flattens as l*C4 + c.
    w1p = w1.reshape(HID, C4, L4).transpose(2, 1, 0).reshape(FEAT, HID)
    w1p = jnp.pad(w1p, ((0, 0), (0, HID_PAD - HID))).astype(jnp.float32)   # (3968, 128)
    b1p = jnp.pad(b1, (0, HID_PAD - HID)).reshape(1, HID_PAD).astype(jnp.float32)
    w2p = jnp.pad(w2.T, ((0, HID_PAD - HID), (0, 0))).astype(jnp.float32)  # (128, 4)
    b2p = b2.reshape(1, NCLS).astype(jnp.float32)
    return (*conv, (w1p, b1p, w2p, b2p))


# ---------------------------------------------------------------------------
# Full CNN2 forward: one pallas_call for the entire network.
# ---------------------------------------------------------------------------
@jax.jit
def cnn2_forward(x_ncl, prepped):
    # x_ncl: (B, 1, 250) in PyTorch NCL layout.
    B = x_ncl.shape[0]
    x = jnp.transpose(x_ncl, (0, 2, 1)).astype(jnp.float32)         # (B, 250, 1)
    xp = jnp.pad(x, ((0, 0), (8, 8), (0, 7)))                       # (B, 266, 8)
    (w1, b1), (w2, b2), (w3, b3), (w4, b4), (wf1, bf1, wf2, bf2) = prepped

    const = lambda b: (0, 0)
    out = pl.pallas_call(
        _cnn2_kernel,
        out_shape=jax.ShapeDtypeStruct((B, 1, NCLS), jnp.float32),
        grid=(B,),
        in_specs=[
            pl.BlockSpec((1, L_IN + 16, 8), lambda b: (b, 0, 0)),   # padded input
            pl.BlockSpec((17 * 8, 16), const), pl.BlockSpec((1, 16), const),
            pl.BlockSpec((11 * 16, 32), const), pl.BlockSpec((1, 32), const),
            pl.BlockSpec((5 * 32, 64), const), pl.BlockSpec((1, 64), const),
            pl.BlockSpec((3 * 64, 128), const), pl.BlockSpec((1, 128), const),
            pl.BlockSpec((FEAT, HID_PAD), const), pl.BlockSpec((1, HID_PAD), const),
            pl.BlockSpec((HID_PAD, NCLS), const), pl.BlockSpec((1, NCLS), const),
        ],
        out_specs=pl.BlockSpec((1, 1, NCLS), lambda b: (b, 0, 0)),
        compiler_params=pltpu.CompilerParams(
            dimension_semantics=("parallel",)),   # v7x: 2 TCs split the batch
    )(xp, w1, b1, w2, b2, w3, b3, w4, b4, wf1, bf1, wf2, bf2)
    return out.reshape(B, NCLS)


# ---------------------------------------------------------------------------
# Deterministic synthetic parameters (PyTorch layouts).
# ---------------------------------------------------------------------------
def init_params(key):
    def conv_block(k, cin, cout, ksz):
        k1, k2, k3, k4, k5, k6 = jax.random.split(k, 6)
        w = jax.random.normal(k1, (cout, cin, ksz), jnp.float32) * 0.05
        b = jax.random.normal(k2, (cout,), jnp.float32) * 0.05
        gamma = 1.0 + 0.1 * jax.random.normal(k3, (cout,), jnp.float32)
        beta = 0.1 * jax.random.normal(k4, (cout,), jnp.float32)
        mean = 0.1 * jax.random.normal(k5, (cout,), jnp.float32)
        var = jnp.abs(jax.random.normal(k6, (cout,), jnp.float32)) * 0.1 + 1.0
        return (w, b, gamma, beta, mean, var)

    keys = jax.random.split(key, 5)
    params = {
        "down1": conv_block(keys[0], 1, 16, 17),
        "down2": conv_block(keys[1], 16, 32, 11),
        "down3": conv_block(keys[2], 32, 64, 5),
        "down4": conv_block(keys[3], 64, 128, 3),
    }
    kf1, kf2, kf3, kf4 = jax.random.split(keys[4], 4)
    w1 = jax.random.normal(kf1, (HID, FEAT), jnp.float32) * 0.02
    b1 = jax.random.normal(kf2, (HID,), jnp.float32) * 0.02
    w2 = jax.random.normal(kf3, (NCLS, HID), jnp.float32) * 0.1
    b2 = jax.random.normal(kf4, (NCLS,), jnp.float32) * 0.1
    params["fc"] = (w1, b1, w2, b2)
    return params


if __name__ == "__main__":
    key = jax.random.PRNGKey(0)
    pkey, xkey = jax.random.split(key)
    params = init_params(pkey)
    prepped = prepare_params(params)                 # one-time glue, outside jit
    x = jax.random.normal(xkey, (2, 1, L_IN), jnp.float32)   # (B, C=1, L=250)
    out = cnn2_forward(x, prepped)
    out = jax.block_until_ready(out)
    assert out.shape == (2, NCLS)
    assert bool(jnp.all(jnp.isfinite(out)))
    assert bool(jnp.allclose(jnp.sum(out, axis=-1), 1.0, atol=1e-4))
    print("KERNEL_OK")
</pallas_src>

<mosaic_0001>
module attributes {stable_mosaic.version = 11 : i64} {
  func.func @_cnn2_kernel(%arg0: i32, %arg1: memref<1x266x8xf32, #tpu.memory_space<vmem>>, %arg2: memref<136x16xf32, #tpu.memory_space<vmem>>, %arg3: memref<1x16xf32, #tpu.memory_space<vmem>>, %arg4: memref<176x32xf32, #tpu.memory_space<vmem>>, %arg5: memref<1x32xf32, #tpu.memory_space<vmem>>, %arg6: memref<160x64xf32, #tpu.memory_space<vmem>>, %arg7: memref<1x64xf32, #tpu.memory_space<vmem>>, %arg8: memref<192x128xf32, #tpu.memory_space<vmem>>, %arg9: memref<1x128xf32, #tpu.memory_space<vmem>>, %arg10: memref<3968x128xf32, #tpu.memory_space<vmem>>, %arg11: memref<1x128xf32, #tpu.memory_space<vmem>>, %arg12: memref<128x4xf32, #tpu.memory_space<vmem>>, %arg13: memref<1x4xf32, #tpu.memory_space<vmem>>, %arg14: memref<1x1x4xf32, #tpu.memory_space<vmem>>) attributes {dimension_semantics = [#tpu.dimension_semantics<parallel>], iteration_bounds = array<i64: 2>, scalar_prefetch = 0 : i64, scratch_operands = 0 : i64, tpu.core_type = #tpu.core_type<tc>, window_params = [{transform_indices = @transform_0, window_bounds = array<i64: 1, 266, 8>}, {pipeline_mode = #tpu.pipeline_mode<synchronous>, transform_indices = @transform_1, window_bounds = array<i64: 136, 16>}, {pipeline_mode = #tpu.pipeline_mode<synchronous>, transform_indices = @transform_2, window_bounds = array<i64: 1, 16>}, {pipeline_mode = #tpu.pipeline_mode<synchronous>, transform_indices = @transform_3, window_bounds = array<i64: 176, 32>}, {pipeline_mode = #tpu.pipeline_mode<synchronous>, transform_indices = @transform_4, window_bounds = array<i64: 1, 32>}, {pipeline_mode = #tpu.pipeline_mode<synchronous>, transform_indices = @transform_5, window_bounds = array<i64: 160, 64>}, {pipeline_mode = #tpu.pipeline_mode<synchronous>, transform_indices = @transform_6, window_bounds = array<i64: 1, 64>}, {pipeline_mode = #tpu.pipeline_mode<synchronous>, transform_indices = @transform_7, window_bounds = array<i64: 192, 128>}, {pipeline_mode = #tpu.pipeline_mode<synchronous>, transform_indices = @transform_8, window_bounds = array<i64: 1, 128>}, {pipeline_mode = #tpu.pipeline_mode<synchronous>, transform_indices = @transform_9, window_bounds = array<i64: 3968, 128>}, {pipeline_mode = #tpu.pipeline_mode<synchronous>, transform_indices = @transform_10, window_bounds = array<i64: 1, 128>}, {pipeline_mode = #tpu.pipeline_mode<synchronous>, transform_indices = @transform_11, window_bounds = array<i64: 128, 4>}, {pipeline_mode = #tpu.pipeline_mode<synchronous>, transform_indices = @transform_12, window_bounds = array<i64: 1, 4>}, {transform_indices = @transform_13, window_bounds = array<i64: 1, 1, 4>}]} {
    %c0 = arith.constant 0 : index
    %c0_0 = arith.constant 0 : index
    %c0_1 = arith.constant 0 : index
    %0 = vector.load %arg1[%c0, %c0_0, %c0_1] : memref<1x266x8xf32, #tpu.memory_space<vmem>>, vector<1x266x8xf32>
    %1 = vector.shape_cast %0 : vector<1x266x8xf32> to vector<266x8xf32>
    %2 = vector.extract_strided_slice %1 {offsets = [0, 0], sizes = [250, 8], strides = [1, 1]} : vector<266x8xf32> to vector<250x8xf32>
    %3 = vector.extract_strided_slice %1 {offsets = [1, 0], sizes = [250, 8], strides = [1, 1]} : vector<266x8xf32> to vector<250x8xf32>
    %4 = vector.extract_strided_slice %1 {offsets = [2, 0], sizes = [250, 8], strides = [1, 1]} : vector<266x8xf32> to vector<250x8xf32>
    %5 = vector.extract_strided_slice %1 {offsets = [3, 0], sizes = [250, 8], strides = [1, 1]} : vector<266x8xf32> to vector<250x8xf32>
    %6 = vector.extract_strided_slice %1 {offsets = [4, 0], sizes = [250, 8], strides = [1, 1]} : vector<266x8xf32> to vector<250x8xf32>
    %7 = vector.extract_strided_slice %1 {offsets = [5, 0], sizes = [250, 8], strides = [1, 1]} : vector<266x8xf32> to vector<250x8xf32>
    %8 = vector.extract_strided_slice %1 {offsets = [6, 0], sizes = [250, 8], strides = [1, 1]} : vector<266x8xf32> to vector<250x8xf32>
    %9 = vector.extract_strided_slice %1 {offsets = [7, 0], sizes = [250, 8], strides = [1, 1]} : vector<266x8xf32> to vector<250x8xf32>
    %10 = vector.extract_strided_slice %1 {offsets = [8, 0], sizes = [250, 8], strides = [1, 1]} : vector<266x8xf32> to vector<250x8xf32>
    %11 = vector.extract_strided_slice %1 {offsets = [9, 0], sizes = [250, 8], strides = [1, 1]} : vector<266x8xf32> to vector<250x8xf32>
    %12 = vector.extract_strided_slice %1 {offsets = [10, 0], sizes = [250, 8], strides = [1, 1]} : vector<266x8xf32> to vector<250x8xf32>
    %13 = vector.extract_strided_slice %1 {offsets = [11, 0], sizes = [250, 8], strides = [1, 1]} : vector<266x8xf32> to vector<250x8xf32>
    %14 = vector.extract_strided_slice %1 {offsets = [12, 0], sizes = [250, 8], strides = [1, 1]} : vector<266x8xf32> to vector<250x8xf32>
    %15 = vector.extract_strided_slice %1 {offsets = [13, 0], sizes = [250, 8], strides = [1, 1]} : vector<266x8xf32> to vector<250x8xf32>
    %16 = vector.extract_strided_slice %1 {offsets = [14, 0], sizes = [250, 8], strides = [1, 1]} : vector<266x8xf32> to vector<250x8xf32>
    %17 = vector.extract_strided_slice %1 {offsets = [15, 0], sizes = [250, 8], strides = [1, 1]} : vector<266x8xf32> to vector<250x8xf32>
    %18 = vector.extract_strided_slice %1 {offsets = [16, 0], sizes = [250, 8], strides = [1, 1]} : vector<266x8xf32> to vector<250x8xf32>
    %19 = tpu.concatenate %2, %3, %4, %5, %6, %7, %8, %9, %10, %11, %12, %13, %14, %15, %16, %17 in 1 : vector<250x8xf32>, vector<250x8xf32>, vector<250x8xf32>, vector<250x8xf32>, vector<250x8xf32>, vector<250x8xf32>, vector<250x8xf32>, vector<250x8xf32>, vector<250x8xf32>, vector<250x8xf32>, vector<250x8xf32>, vector<250x8xf32>, vector<250x8xf32>, vector<250x8xf32>, vector<250x8xf32>, vector<250x8xf32> -> vector<250x128xf32>
    %20 = tpu.concatenate %19, %18 in 1 : vector<250x128xf32>, vector<250x8xf32> -> vector<250x136xf32>
    %c0_2 = arith.constant 0 : index
    %c0_3 = arith.constant 0 : index
    %21 = vector.load %arg2[%c0_2, %c0_3] : memref<136x16xf32, #tpu.memory_space<vmem>>, vector<136x16xf32>
    %cst = arith.constant dense<0.000000e+00> : vector<250x16xf32>
    %22 = tpu.matmul %20, %21, %cst {dimension_numbers = #tpu.dot_dimension_numbers<[1], [0], [0], [1], [0, 0, 1, 1], [], []>} : vector<250x136xf32>, vector<136x16xf32>, vector<250x16xf32> -> vector<250x16xf32>
    %c0_4 = arith.constant 0 : index
    %c0_5 = arith.constant 0 : index
    %23 = vector.load %arg3[%c0_4, %c0_5] : memref<1x16xf32, #tpu.memory_space<vmem>>, vector<1x16xf32>
    %24 = vector.broadcast %23 : vector<1x16xf32> to vector<250x16xf32>
    %25 = arith.addf %22, %24 : vector<250x16xf32>
    %cst_6 = arith.constant 0.000000e+00 : f32
    %26 = vector.broadcast %cst_6 : f32 to vector<250x16xf32>
    %27 = arith.cmpf oge, %25, %26 : vector<250x16xf32>
    %cst_7 = arith.constant 3.000000e-01 : f32
    %28 = vector.broadcast %cst_7 : f32 to vector<250x16xf32>
    %29 = arith.mulf %28, %25 : vector<250x16xf32>
    %30 = arith.select %27, %25, %29 : vector<250x16xi1>, vector<250x16xf32>
    %31 = tpu.iota {dimensions = array<i32: 0>} : vector<135x250xi32>
    %32 = tpu.iota {dimensions = array<i32: 1>} : vector<135x250xi32>
    %c5_i32 = arith.constant 5 : i32
    %33 = vector.broadcast %c5_i32 : i32 to vector<135x250xi32>
    %34 = arith.cmpi sge, %31, %33 : vector<135x250xi32>
    %c130_i32 = arith.constant 130 : i32
    %35 = vector.broadcast %c130_i32 : i32 to vector<135x250xi32>
    %36 = arith.cmpi slt, %31, %35 : vector<135x250xi32>
    %37 = arith.andi %34, %36 : vector<135x250xi1>
    %c5_i32_8 = arith.constant 5 : i32
    %38 = vector.broadcast %c5_i32_8 : i32 to vector<135x250xi32>
    %39 = arith.subi %31, %38 : vector<135x250xi32>
    %c2_i32 = arith.constant 2 : i32
    %40 = vector.broadcast %c2_i32 : i32 to vector<135x250xi32>
    %41 = arith.muli %40, %39 : vector<135x250xi32>
    %42 = arith.cmpi eq, %32, %41 : vector<135x250xi32>
    %43 = arith.andi %37, %42 : vector<135x250xi1>
    %cst_9 = arith.constant 1.000000e+00 : f32
    %cst_10 = arith.constant 0.000000e+00 : f32
    %44 = vector.broadcast %cst_9 : f32 to vector<135x250xf32>
    %45 = vector.broadcast %cst_10 : f32 to vector<135x250xf32>
    %46 = arith.select %43, %44, %45 : vector<135x250xi1>, vector<135x250xf32>
    %c1_i32 = arith.constant 1 : i32
    %47 = vector.broadcast %c1_i32 : i32 to vector<135x250xi32>
    %48 = arith.addi %41, %47 : vector<135x250xi32>
    %49 = arith.cmpi eq, %32, %48 : vector<135x250xi32>
    %50 = arith.andi %37, %49 : vector<135x250xi1>
    %cst_11 = arith.constant 1.000000e+00 : f32
    %cst_12 = arith.constant 0.000000e+00 : f32
    %51 = vector.broadcast %cst_11 : f32 to vector<135x250xf32>
    %52 = vector.broadcast %cst_12 : f32 to vector<135x250xf32>
    %53 = arith.select %50, %51, %52 : vector<135x250xi1>, vector<135x250xf32>
    %cst_13 = arith.constant dense<0.000000e+00> : vector<135x16xf32>
    %54 = tpu.matmul %46, %30, %cst_13 {dimension_numbers = #tpu.dot_dimension_numbers<[1], [0], [0], [1], [0, 0, 1, 1], [], []>} : vector<135x250xf32>, vector<250x16xf32>, vector<135x16xf32> -> vector<135x16xf32>
    %cst_14 = arith.constant dense<0.000000e+00> : vector<135x16xf32>
    %55 = tpu.matmul %53, %30, %cst_14 {dimension_numbers = #tpu.dot_dimension_numbers<[1], [0], [0], [1], [0, 0, 1, 1], [], []>} : vector<135x250xf32>, vector<250x16xf32>, vector<135x16xf32> -> vector<135x16xf32>
    %56 = arith.maximumf %54, %55 : vector<135x16xf32>
    %57 = vector.extract_strided_slice %56 {offsets = [0, 0], sizes = [125, 16], strides = [1, 1]} : vector<135x16xf32> to vector<125x16xf32>
    %58 = vector.extract_strided_slice %56 {offsets = [1, 0], sizes = [125, 16], strides = [1, 1]} : vector<135x16xf32> to vector<125x16xf32>
    %59 = vector.extract_strided_slice %56 {offsets = [2, 0], sizes = [125, 16], strides = [1, 1]} : vector<135x16xf32> to vector<125x16xf32>
    %60 = vector.extract_strided_slice %56 {offsets = [3, 0], sizes = [125, 16], strides = [1, 1]} : vector<135x16xf32> to vector<125x16xf32>
    %61 = vector.extract_strided_slice %56 {offsets = [4, 0], sizes = [125, 16], strides = [1, 1]} : vector<135x16xf32> to vector<125x16xf32>
    %62 = vector.extract_strided_slice %56 {offsets = [5, 0], sizes = [125, 16], strides = [1, 1]} : vector<135x16xf32> to vector<125x16xf32>
    %63 = vector.extract_strided_slice %56 {offsets = [6, 0], sizes = [125, 16], strides = [1, 1]} : vector<135x16xf32> to vector<125x16xf32>
    %64 = vector.extract_strided_slice %56 {offsets = [7, 0], sizes = [125, 16], strides = [1, 1]} : vector<135x16xf32> to vector<125x16xf32>
    %65 = vector.extract_strided_slice %56 {offsets = [8, 0], sizes = [125, 16], strides = [1, 1]} : vector<135x16xf32> to vector<125x16xf32>
    %66 = vector.extract_strided_slice %56 {offsets = [9, 0], sizes = [125, 16], strides = [1, 1]} : vector<135x16xf32> to vector<125x16xf32>
    %67 = vector.extract_strided_slice %56 {offsets = [10, 0], sizes = [125, 16], strides = [1, 1]} : vector<135x16xf32> to vector<125x16xf32>
    %68 = tpu.concatenate %57, %58, %59, %60, %61, %62, %63, %64, %65, %66, %67 in 1 : vector<125x16xf32>, vector<125x16xf32>, vector<125x16xf32>, vector<125x16xf32>, vector<125x16xf32>, vector<125x16xf32>, vector<125x16xf32>, vector<125x16xf32>, vector<125x16xf32>, vector<125x16xf32>, vector<125x16xf32> -> vector<125x176xf32>
    %c0_15 = arith.constant 0 : index
    %c0_16 = arith.constant 0 : index
    %69 = vector.load %arg4[%c0_15, %c0_16] : memref<176x32xf32, #tpu.memory_space<vmem>>, vector<176x32xf32>
    %cst_17 = arith.constant dense<0.000000e+00> : vector<125x32xf32>
    %70 = tpu.matmul %68, %69, %cst_17 {dimension_numbers = #tpu.dot_dimension_numbers<[1], [0], [0], [1], [0, 0, 1, 1], [], []>} : vector<125x176xf32>, vector<176x32xf32>, vector<125x32xf32> -> vector<125x32xf32>
    %c0_18 = arith.constant 0 : index
    %c0_19 = arith.constant 0 : index
    %71 = vector.load %arg5[%c0_18, %c0_19] : memref<1x32xf32, #tpu.memory_space<vmem>>, vector<1x32xf32>
    %72 = vector.broadcast %71 : vector<1x32xf32> to vector<125x32xf32>
    %73 = arith.addf %70, %72 : vector<125x32xf32>
    %cst_20 = arith.constant 0.000000e+00 : f32
    %74 = vector.broadcast %cst_20 : f32 to vector<125x32xf32>
    %75 = arith.cmpf oge, %73, %74 : vector<125x32xf32>
    %cst_21 = arith.constant 3.000000e-01 : f32
    %76 = vector.broadcast %cst_21 : f32 to vector<125x32xf32>
    %77 = arith.mulf %76, %73 : vector<125x32xf32>
    %78 = arith.select %75, %73, %77 : vector<125x32xi1>, vector<125x32xf32>
    %79 = tpu.iota {dimensions = array<i32: 0>} : vector<66x125xi32>
    %80 = tpu.iota {dimensions = array<i32: 1>} : vector<66x125xi32>
    %c2_i32_22 = arith.constant 2 : i32
    %81 = vector.broadcast %c2_i32_22 : i32 to vector<66x125xi32>
    %82 = arith.cmpi sge, %79, %81 : vector<66x125xi32>
    %c64_i32 = arith.constant 64 : i32
    %83 = vector.broadcast %c64_i32 : i32 to vector<66x125xi32>
    %84 = arith.cmpi slt, %79, %83 : vector<66x125xi32>
    %85 = arith.andi %82, %84 : vector<66x125xi1>
    %c2_i32_23 = arith.constant 2 : i32
    %86 = vector.broadcast %c2_i32_23 : i32 to vector<66x125xi32>
    %87 = arith.subi %79, %86 : vector<66x125xi32>
    %c2_i32_24 = arith.constant 2 : i32
    %88 = vector.broadcast %c2_i32_24 : i32 to vector<66x125xi32>
    %89 = arith.muli %88, %87 : vector<66x125xi32>
    %90 = arith.cmpi eq, %80, %89 : vector<66x125xi32>
    %91 = arith.andi %85, %90 : vector<66x125xi1>
    %cst_25 = arith.constant 1.000000e+00 : f32
    %cst_26 = arith.constant 0.000000e+00 : f32
    %92 = vector.broadcast %cst_25 : f32 to vector<66x125xf32>
    %93 = vector.broadcast %cst_26 : f32 to vector<66x125xf32>
    %94 = arith.select %91, %92, %93 : vector<66x125xi1>, vector<66x125xf32>
    %c1_i32_27 = arith.constant 1 : i32
    %95 = vector.broadcast %c1_i32_27 : i32 to vector<66x125xi32>
    %96 = arith.addi %89, %95 : vector<66x125xi32>
    %97 = arith.cmpi eq, %80, %96 : vector<66x125xi32>
    %98 = arith.andi %85, %97 : vector<66x125xi1>
    %cst_28 = arith.constant 1.000000e+00 : f32
    %cst_29 = arith.constant 0.000000e+00 : f32
    %99 = vector.broadcast %cst_28 : f32 to vector<66x125xf32>
    %100 = vector.broadcast %cst_29 : f32 to vector<66x125xf32>
    %101 = arith.select %98, %99, %100 : vector<66x125xi1>, vector<66x125xf32>
    %cst_30 = arith.constant dense<0.000000e+00> : vector<66x32xf32>
    %102 = tpu.matmul %94, %78, %cst_30 {dimension_numbers = #tpu.dot_dimension_numbers<[1], [0], [0], [1], [0, 0, 1, 1], [], []>} : vector<66x125xf32>, vector<125x32xf32>, vector<66x32xf32> -> vector<66x32xf32>
    %cst_31 = arith.constant dense<0.000000e+00> : vector<66x32xf32>
    %103 = tpu.matmul %101, %78, %cst_31 {dimension_numbers = #tpu.dot_dimension_numbers<[1], [0], [0], [1], [0, 0, 1, 1], [], []>} : vector<66x125xf32>, vector<125x32xf32>, vector<66x32xf32> -> vector<66x32xf32>
    %104 = arith.maximumf %102, %103 : vector<66x32xf32>
    %105 = vector.extract_strided_slice %104 {offsets = [0, 0], sizes = [62, 32], strides = [1, 1]} : vector<66x32xf32> to vector<62x32xf32>
    %106 = vector.extract_strided_slice %104 {offsets = [1, 0], sizes = [62, 32], strides = [1, 1]} : vector<66x32xf32> to vector<62x32xf32>
    %107 = vector.extract_strided_slice %104 {offsets = [2, 0], sizes = [62, 32], strides = [1, 1]} : vector<66x32xf32> to vector<62x32xf32>
    %108 = vector.extract_strided_slice %104 {offsets = [3, 0], sizes = [62, 32], strides = [1, 1]} : vector<66x32xf32> to vector<62x32xf32>
    %109 = vector.extract_strided_slice %104 {offsets = [4, 0], sizes = [62, 32], strides = [1, 1]} : vector<66x32xf32> to vector<62x32xf32>
    %110 = tpu.concatenate %105, %106, %107, %108, %109 in 1 : vector<62x32xf32>, vector<62x32xf32>, vector<62x32xf32>, vector<62x32xf32>, vector<62x32xf32> -> vector<62x160xf32>
    %c0_32 = arith.constant 0 : index
    %c0_33 = arith.constant 0 : index
    %111 = vector.load %arg6[%c0_32, %c0_33] : memref<160x64xf32, #tpu.memory_space<vmem>>, vector<160x64xf32>
    %cst_34 = arith.constant dense<0.000000e+00> : vector<62x64xf32>
    %112 = tpu.matmul %110, %111, %cst_34 {dimension_numbers = #tpu.dot_dimension_numbers<[1], [0], [0], [1], [0, 0, 1, 1], [], []>} : vector<62x160xf32>, vector<160x64xf32>, vector<62x64xf32> -> vector<62x64xf32>
    %c0_35 = arith.constant 0 : index
    %c0_36 = arith.constant 0 : index
    %113 = vector.load %arg7[%c0_35, %c0_36] : memref<1x64xf32, #tpu.memory_space<vmem>>, vector<1x64xf32>
    %114 = vector.broadcast %113 : vector<1x64xf32> to vector<62x64xf32>
    %115 = arith.addf %112, %114 : vector<62x64xf32>
    %cst_37 = arith.constant 0.000000e+00 : f32
    %116 = vector.broadcast %cst_37 : f32 to vector<62x64xf32>
    %117 = arith.cmpf oge, %115, %116 : vector<62x64xf32>
    %cst_38 = arith.constant 3.000000e-01 : f32
    %118 = vector.broadcast %cst_38 : f32 to vector<62x64xf32>
    %119 = arith.mulf %118, %115 : vector<62x64xf32>
    %120 = arith.select %117, %115, %119 : vector<62x64xi1>, vector<62x64xf32>
    %121 = tpu.iota {dimensions = array<i32: 0>} : vector<33x62xi32>
    %122 = tpu.iota {dimensions = array<i32: 1>} : vector<33x62xi32>
    %c1_i32_39 = arith.constant 1 : i32
    %123 = vector.broadcast %c1_i32_39 : i32 to vector<33x62xi32>
    %124 = arith.cmpi sge, %121, %123 : vector<33x62xi32>
    %c32_i32 = arith.constant 32 : i32
    %125 = vector.broadcast %c32_i32 : i32 to vector<33x62xi32>
    %126 = arith.cmpi slt, %121, %125 : vector<33x62xi32>
    %127 = arith.andi %124, %126 : vector<33x62xi1>
    %c1_i32_40 = arith.constant 1 : i32
    %128 = vector.broadcast %c1_i32_40 : i32 to vector<33x62xi32>
    %129 = arith.subi %121, %128 : vector<33x62xi32>
    %c2_i32_41 = arith.constant 2 : i32
    %130 = vector.broadcast %c2_i32_41 : i32 to vector<33x62xi32>
    %131 = arith.muli %130, %129 : vector<33x62xi32>
    %132 = arith.cmpi eq, %122, %131 : vector<33x62xi32>
    %133 = arith.andi %127, %132 : vector<33x62xi1>
    %cst_42 = arith.constant 1.000000e+00 : f32
    %cst_43 = arith.constant 0.000000e+00 : f32
    %134 = vector.broadcast %cst_42 : f32 to vector<33x62xf32>
    %135 = vector.broadcast %cst_43 : f32 to vector<33x62xf32>
    %136 = arith.select %133, %134, %135 : vector<33x62xi1>, vector<33x62xf32>
    %c1_i32_44 = arith.constant 1 : i32
    %137 = vector.broadcast %c1_i32_44 : i32 to vector<33x62xi32>
    %138 = arith.addi %131, %137 : vector<33x62xi32>
    %139 = arith.cmpi eq, %122, %138 : vector<33x62xi32>
    %140 = arith.andi %127, %139 : vector<33x62xi1>
    %cst_45 = arith.constant 1.000000e+00 : f32
    %cst_46 = arith.constant 0.000000e+00 : f32
    %141 = vector.broadcast %cst_45 : f32 to vector<33x62xf32>
    %142 = vector.broadcast %cst_46 : f32 to vector<33x62xf32>
    %143 = arith.select %140, %141, %142 : vector<33x62xi1>, vector<33x62xf32>
    %cst_47 = arith.constant dense<0.000000e+00> : vector<33x64xf32>
    %144 = tpu.matmul %136, %120, %cst_47 {dimension_numbers = #tpu.dot_dimension_numbers<[1], [0], [0], [1], [0, 0, 1, 1], [], []>} : vector<33x62xf32>, vector<62x64xf32>, vector<33x64xf32> -> vector<33x64xf32>
    %cst_48 = arith.constant dense<0.000000e+00> : vector<33x64xf32>
    %145 = tpu.matmul %143, %120, %cst_48 {dimension_numbers = #tpu.dot_dimension_numbers<[1], [0], [0], [1], [0, 0, 1, 1], [], []>} : vector<33x62xf32>, vector<62x64xf32>, vector<33x64xf32> -> vector<33x64xf32>
    %146 = arith.maximumf %144, %145 : vector<33x64xf32>
    %147 = vector.extract_strided_slice %146 {offsets = [0, 0], sizes = [31, 64], strides = [1, 1]} : vector<33x64xf32> to vector<31x64xf32>
    %148 = vector.extract_strided_slice %146 {offsets = [1, 0], sizes = [31, 64], strides = [1, 1]} : vector<33x64xf32> to vector<31x64xf32>
    %149 = vector.extract_strided_slice %146 {offsets = [2, 0], sizes = [31, 64], strides = [1, 1]} : vector<33x64xf32> to vector<31x64xf32>
    %150 = tpu.concatenate %147, %148, %149 in 1 : vector<31x64xf32>, vector<31x64xf32>, vector<31x64xf32> -> vector<31x192xf32>
    %c0_49 = arith.constant 0 : index
    %c0_50 = arith.constant 0 : index
    %151 = vector.load %arg8[%c0_49, %c0_50] : memref<192x128xf32, #tpu.memory_space<vmem>>, vector<192x128xf32>
    %cst_51 = arith.constant dense<0.000000e+00> : vector<31x128xf32>
    %152 = tpu.matmul %150, %151, %cst_51 {dimension_numbers = #tpu.dot_dimension_numbers<[1], [0], [0], [1], [0, 0, 1, 1], [], []>} : vector<31x192xf32>, vector<192x128xf32>, vector<31x128xf32> -> vector<31x128xf32>
    %c0_52 = arith.constant 0 : index
    %c0_53 = arith.constant 0 : index
    %153 = vector.load %arg9[%c0_52, %c0_53] : memref<1x128xf32, #tpu.memory_space<vmem>>, vector<1x128xf32>
    %154 = vector.broadcast %153 : vector<1x128xf32> to vector<31x128xf32>
    %155 = arith.addf %152, %154 : vector<31x128xf32>
    %cst_54 = arith.constant 0.000000e+00 : f32
    %156 = vector.broadcast %cst_54 : f32 to vector<31x128xf32>
    %157 = arith.cmpf oge, %155, %156 : vector<31x128xf32>
    %cst_55 = arith.constant 3.000000e-01 : f32
    %158 = vector.broadcast %cst_55 : f32 to vector<31x128xf32>
    %159 = arith.mulf %158, %155 : vector<31x128xf32>
    %160 = arith.select %157, %155, %159 : vector<31x128xi1>, vector<31x128xf32>
    %161 = vector.extract_strided_slice %160 {offsets = [0, 0], sizes = [1, 128], strides = [1, 1]} : vector<31x128xf32> to vector<1x128xf32>
    %162 = vector.extract_strided_slice %160 {offsets = [1, 0], sizes = [1, 128], strides = [1, 1]} : vector<31x128xf32> to vector<1x128xf32>
    %163 = vector.extract_strided_slice %160 {offsets = [2, 0], sizes = [1, 128], strides = [1, 1]} : vector<31x128xf32> to vector<1x128xf32>
    %164 = vector.extract_strided_slice %160 {offsets = [3, 0], sizes = [1, 128], strides = [1, 1]} : vector<31x128xf32> to vector<1x128xf32>
    %165 = vector.extract_strided_slice %160 {offsets = [4, 0], sizes = [1, 128], strides = [1, 1]} : vector<31x128xf32> to vector<1x128xf32>
    %166 = vector.extract_strided_slice %160 {offsets = [5, 0], sizes = [1, 128], strides = [1, 1]} : vector<31x128xf32> to vector<1x128xf32>
    %167 = vector.extract_strided_slice %160 {offsets = [6, 0], sizes = [1, 128], strides = [1, 1]} : vector<31x128xf32> to vector<1x128xf32>
    %168 = vector.extract_strided_slice %160 {offsets = [7, 0], sizes = [1, 128], strides = [1, 1]} : vector<31x128xf32> to vector<1x128xf32>
    %169 = vector.extract_strided_slice %160 {offsets = [8, 0], sizes = [1, 128], strides = [1, 1]} : vector<31x128xf32> to vector<1x128xf32>
    %170 = vector.extract_strided_slice %160 {offsets = [9, 0], sizes = [1, 128], strides = [1, 1]} : vector<31x128xf32> to vector<1x128xf32>
    %171 = vector.extract_strided_slice %160 {offsets = [10, 0], sizes = [1, 128], strides = [1, 1]} : vector<31x128xf32> to vector<1x128xf32>
    %172 = vector.extract_strided_slice %160 {offsets = [11, 0], sizes = [1, 128], strides = [1, 1]} : vector<31x128xf32> to vector<1x128xf32>
    %173 = vector.extract_strided_slice %160 {offsets = [12, 0], sizes = [1, 128], strides = [1, 1]} : vector<31x128xf32> to vector<1x128xf32>
    %174 = vector.extract_strided_slice %160 {offsets = [13, 0], sizes = [1, 128], strides = [1, 1]} : vector<31x128xf32> to vector<1x128xf32>
    %175 = vector.extract_strided_slice %160 {offsets = [14, 0], sizes = [1, 128], strides = [1, 1]} : vector<31x128xf32> to vector<1x128xf32>
    %176 = vector.extract_strided_slice %160 {offsets = [15, 0], sizes = [1, 128], strides = [1, 1]} : vector<31x128xf32> to vector<1x128xf32>
    %177 = vector.extract_strided_slice %160 {offsets = [16, 0], sizes = [1, 128], strides = [1, 1]} : vector<31x128xf32> to vector<1x128xf32>
    %178 = vector.extract_strided_slice %160 {offsets = [17, 0], sizes = [1, 128], strides = [1, 1]} : vector<31x128xf32> to vector<1x128xf32>
    %179 = vector.extract_strided_slice %160 {offsets = [18, 0], sizes = [1, 128], strides = [1, 1]} : vector<31x128xf32> to vector<1x128xf32>
    %180 = vector.extract_strided_slice %160 {offsets = [19, 0], sizes = [1, 128], strides = [1, 1]} : vector<31x128xf32> to vector<1x128xf32>
    %181 = vector.extract_strided_slice %160 {offsets = [20, 0], sizes = [1, 128], strides = [1, 1]} : vector<31x128xf32> to vector<1x128xf32>
    %182 = vector.extract_strided_slice %160 {offsets = [21, 0], sizes = [1, 128], strides = [1, 1]} : vector<31x128xf32> to vector<1x128xf32>
    %183 = vector.extract_strided_slice %160 {offsets = [22, 0], sizes = [1, 128], strides = [1, 1]} : vector<31x128xf32> to vector<1x128xf32>
    %184 = vector.extract_strided_slice %160 {offsets = [23, 0], sizes = [1, 128], strides = [1, 1]} : vector<31x128xf32> to vector<1x128xf32>
    %185 = vector.extract_strided_slice %160 {offsets = [24, 0], sizes = [1, 128], strides = [1, 1]} : vector<31x128xf32> to vector<1x128xf32>
    %186 = vector.extract_strided_slice %160 {offsets = [25, 0], sizes = [1, 128], strides = [1, 1]} : vector<31x128xf32> to vector<1x128xf32>
    %187 = vector.extract_strided_slice %160 {offsets = [26, 0], sizes = [1, 128], strides = [1, 1]} : vector<31x128xf32> to vector<1x128xf32>
    %188 = vector.extract_strided_slice %160 {offsets = [27, 0], sizes = [1, 128], strides = [1, 1]} : vector<31x128xf32> to vector<1x128xf32>
    %189 = vector.extract_strided_slice %160 {offsets = [28, 0], sizes = [1, 128], strides = [1, 1]} : vector<31x128xf32> to vector<1x128xf32>
    %190 = vector.extract_strided_slice %160 {offsets = [29, 0], sizes = [1, 128], strides = [1, 1]} : vector<31x128xf32> to vector<1x128xf32>
    %191 = vector.extract_strided_slice %160 {offsets = [30, 0], sizes = [1, 128], strides = [1, 1]} : vector<31x128xf32> to vector<1x128xf32>
    %192 = tpu.concatenate %161, %162, %163, %164, %165, %166, %167, %168, %169, %170, %171, %172, %173, %174, %175, %176 in 1 : vector<1x128xf32>, vector<1x128xf32>, vector<1x128xf32>, vector<1x128xf32>, vector<1x128xf32>, vector<1x128xf32>, vector<1x128xf32>, vector<1x128xf32>, vector<1x128xf32>, vector<1x128xf32>, vector<1x128xf32>, vector<1x128xf32>, vector<1x128xf32>, vector<1x128xf32>, vector<1x128xf32>, vector<1x128xf32> -> vector<1x2048xf32>
    %193 = tpu.concatenate %177, %178, %179, %180, %181, %182, %183, %184, %185, %186, %187, %188, %189, %190, %191 in 1 : vector<1x128xf32>, vector<1x128xf32>, vector<1x128xf32>, vector<1x128xf32>, vector<1x128xf32>, vector<1x128xf32>, vector<1x128xf32>, vector<1x128xf32>, vector<1x128xf32>, vector<1x128xf32>, vector<1x128xf32>, vector<1x128xf32>, vector<1x128xf32>, vector<1x128xf32>, vector<1x128xf32> -> vector<1x1920xf32>
    %194 = tpu.concatenate %192, %193 in 1 : vector<1x2048xf32>, vector<1x1920xf32> -> vector<1x3968xf32>
    %c0_56 = arith.constant 0 : index
    %c0_57 = arith.constant 0 : index
    %195 = vector.load %arg10[%c0_56, %c0_57] : memref<3968x128xf32, #tpu.memory_space<vmem>>, vector<3968x128xf32>
    %cst_58 = arith.constant dense<0.000000e+00> : vector<1x128xf32>
    %196 = tpu.matmul %194, %195, %cst_58 {dimension_numbers = #tpu.dot_dimension_numbers<[1], [0], [0], [1], [0, 0, 1, 1], [], []>} : vector<1x3968xf32>, vector<3968x128xf32>, vector<1x128xf32> -> vector<1x128xf32>
    %c0_59 = arith.constant 0 : index
    %c0_60 = arith.constant 0 : index
    %197 = vector.load %arg11[%c0_59, %c0_60] : memref<1x128xf32, #tpu.memory_space<vmem>>, vector<1x128xf32>
    %198 = arith.addf %196, %197 : vector<1x128xf32>
    %cst_61 = arith.constant 0.000000e+00 : f32
    %199 = vector.broadcast %cst_61 : f32 to vector<1x128xf32>
    %200 = arith.maximumf %198, %199 : vector<1x128xf32>
    %c0_62 = arith.constant 0 : index
    %c0_63 = arith.constant 0 : index
    %201 = vector.load %arg12[%c0_62, %c0_63] : memref<128x4xf32, #tpu.memory_space<vmem>>, vector<128x4xf32>
    %cst_64 = arith.constant dense<0.000000e+00> : vector<1x4xf32>
    %202 = tpu.matmul %200, %201, %cst_64 {dimension_numbers = #tpu.dot_dimension_numbers<[1], [0], [0], [1], [0, 0, 1, 1], [], []>} : vector<1x128xf32>, vector<128x4xf32>, vector<1x4xf32> -> vector<1x4xf32>
    %c0_65 = arith.constant 0 : index
    %c0_66 = arith.constant 0 : index
    %203 = vector.load %arg13[%c0_65, %c0_66] : memref<1x4xf32, #tpu.memory_space<vmem>>, vector<1x4xf32>
    %204 = arith.addf %202, %203 : vector<1x4xf32>
    %cst_67 = arith.constant dense<0xFF800000> : vector<1xf32>
    %205 = vector.multi_reduction <maximumf>, %204, %cst_67 [1] : vector<1x4xf32> to vector<1xf32>
    %206 = vector.shape_cast %205 : vector<1xf32> to vector<1x1xf32>
    %207 = vector.broadcast %206 : vector<1x1xf32> to vector<1x4xf32>
    %208 = arith.subf %204, %207 : vector<1x4xf32>
    %209 = math.exp %208 : vector<1x4xf32>
    %cst_68 = arith.constant dense<0.000000e+00> : vector<1xf32>
    %210 = vector.multi_reduction <add>, %209, %cst_68 [1] : vector<1x4xf32> to vector<1xf32>
    %211 = vector.shape_cast %210 : vector<1xf32> to vector<1x1xf32>
    %212 = vector.broadcast %211 : vector<1x1xf32> to vector<1x4xf32>
    %213 = arith.divf %209, %212 : vector<1x4xf32>
    %c0_69 = arith.constant 0 : index
    %c0_70 = arith.constant 0 : index
    %c0_71 = arith.constant 0 : index
    %214 = vector.load %arg14[%c0_69, %c0_70, %c0_71] : memref<1x1x4xf32, #tpu.memory_space<vmem>>, vector<1x1x4xf32>
    %215 = vector.shape_cast %214 : vector<1x1x4xf32> to vector<1x4xf32>
    %216 = vector.shape_cast %213 : vector<1x4xf32> to vector<1x1x4xf32>
    tpu.vector_store %arg14[%c0_69, %c0_70, %c0_71], %216 {strides = array<i32>} : memref<1x1x4xf32, #tpu.memory_space<vmem>>, vector<1x1x4xf32>,
    return
  }
  func.func @transform_0(%arg0: i32) -> (i32, i32, i32) {
    %c0_i32 = arith.constant 0 : i32
    %c0_i32_0 = arith.constant 0 : i32
    %c0_i32_1 = arith.constant 0 : i32
    return %arg0, %c0_i32, %c0_i32_0 : i32, i32, i32
  }
  func.func @transform_1(%arg0: i32) -> (i32, i32) {
    %c0_i32 = arith.constant 0 : i32
    %c0_i32_0 = arith.constant 0 : i32
    %c0_i32_1 = arith.constant 0 : i32
    return %c0_i32, %c0_i32_0 : i32, i32
  }
  func.func @transform_2(%arg0: i32) -> (i32, i32) {
    %c0_i32 = arith.constant 0 : i32
    %c0_i32_0 = arith.constant 0 : i32
    %c0_i32_1 = arith.constant 0 : i32
    return %c0_i32, %c0_i32_0 : i32, i32
  }
  func.func @transform_3(%arg0: i32) -> (i32, i32) {
    %c0_i32 = arith.constant 0 : i32
    %c0_i32_0 = arith.constant 0 : i32
    %c0_i32_1 = arith.constant 0 : i32
    return %c0_i32, %c0_i32_0 : i32, i32
  }
  func.func @transform_4(%arg0: i32) -> (i32, i32) {
    %c0_i32 = arith.constant 0 : i32
    %c0_i32_0 = arith.constant 0 : i32
    %c0_i32_1 = arith.constant 0 : i32
    return %c0_i32, %c0_i32_0 : i32, i32
  }
  func.func @transform_5(%arg0: i32) -> (i32, i32) {
    %c0_i32 = arith.constant 0 : i32
    %c0_i32_0 = arith.constant 0 : i32
    %c0_i32_1 = arith.constant 0 : i32
    return %c0_i32, %c0_i32_0 : i32, i32
  }
  func.func @transform_6(%arg0: i32) -> (i32, i32) {
    %c0_i32 = arith.constant 0 : i32
    %c0_i32_0 = arith.constant 0 : i32
    %c0_i32_1 = arith.constant 0 : i32
    return %c0_i32, %c0_i32_0 : i32, i32
  }
  func.func @transform_7(%arg0: i32) -> (i32, i32) {
    %c0_i32 = arith.constant 0 : i32
    %c0_i32_0 = arith.constant 0 : i32
    %c0_i32_1 = arith.constant 0 : i32
    return %c0_i32, %c0_i32_0 : i32, i32
  }
  func.func @transform_8(%arg0: i32) -> (i32, i32) {
    %c0_i32 = arith.constant 0 : i32
    %c0_i32_0 = arith.constant 0 : i32
    %c0_i32_1 = arith.constant 0 : i32
    return %c0_i32, %c0_i32_0 : i32, i32
  }
  func.func @transform_9(%arg0: i32) -> (i32, i32) {
    %c0_i32 = arith.constant 0 : i32
    %c0_i32_0 = arith.constant 0 : i32
    %c0_i32_1 = arith.constant 0 : i32
    return %c0_i32, %c0_i32_0 : i32, i32
  }
  func.func @transform_10(%arg0: i32) -> (i32, i32) {
    %c0_i32 = arith.constant 0 : i32
    %c0_i32_0 = arith.constant 0 : i32
    %c0_i32_1 = arith.constant 0 : i32
    return %c0_i32, %c0_i32_0 : i32, i32
  }
  func.func @transform_11(%arg0: i32) -> (i32, i32) {
    %c0_i32 = arith.constant 0 : i32
    %c0_i32_0 = arith.constant 0 : i32
    %c0_i32_1 = arith.constant 0 : i32
    return %c0_i32, %c0_i32_0 : i32, i32
  }
  func.func @transform_12(%arg0: i32) -> (i32, i32) {
    %c0_i32 = arith.constant 0 : i32
    %c0_i32_0 = arith.constant 0 : i32
    %c0_i32_1 = arith.constant 0 : i32
    return %c0_i32, %c0_i32_0 : i32, i32
  }
  func.func @transform_13(%arg0: i32) -> (i32, i32, i32) {
    %c0_i32 = arith.constant 0 : i32
    %c0_i32_0 = arith.constant 0 : i32
    %c0_i32_1 = arith.constant 0 : i32
    return %arg0, %c0_i32, %c0_i32_0 : i32, i32, i32
  }
}

</mosaic_0001>

<llo_original>
// kernel: cnn2_forward.1
$region0: #{cnn2_forward.1}
  #allocation0 [shape = 'u32[]', space=smem, size = 0x4, offset = 0x4, fixed_abs, tag = 'smem constant byte address 0x4 - core index']
  #allocation1 [shape = 'u32[144,128]{1,0:T(1,128)}', space=vmem, size = 0x12000, scoped, tag = 'internal scratch']
  %s0 = inlined_call_operand.vmem [shape: f32[2,266,8], index: 0, kind: input, shape index: {}]
  %s1 = inlined_call_operand.vmem [shape: f32[136,16], index: 1, kind: input, shape index: {}]
  %s2 = inlined_call_operand.hbm [shape: f32[1,16], index: 2, kind: input, shape index: {}]
  %s3 = inlined_call_operand.vmem [shape: f32[176,32], index: 3, kind: input, shape index: {}]
  %s4 = inlined_call_operand.hbm [shape: f32[1,32], index: 4, kind: input, shape index: {}]
  %s5 = inlined_call_operand.vmem [shape: f32[160,64], index: 5, kind: input, shape index: {}]
  %s6 = inlined_call_operand.hbm [shape: f32[1,64], index: 6, kind: input, shape index: {}]
  %s7 = inlined_call_operand.hbm [shape: f32[192,128], index: 7, kind: input, shape index: {}]
  %s8 = inlined_call_operand.hbm [shape: f32[1,128], index: 8, kind: input, shape index: {}]
  %s9 = inlined_call_operand.hbm [shape: f32[3968,128], index: 9, kind: input, shape index: {}]
  %s10 = inlined_call_operand.hbm [shape: f32[1,128], index: 10, kind: input, shape index: {}]
  %s11 = inlined_call_operand.vmem [shape: f32[128,4], index: 11, kind: input, shape index: {}]
  %s12 = inlined_call_operand.hbm [shape: f32[1,4], index: 12, kind: input, shape index: {}]
  %s13 = inlined_call_operand.hbm [shape: f32[2,1,4], index: 13, kind: output, shape index: {}]
  %s14 = sld [smem:[#allocation0]]
  $region117: #{cnn2_forward.1} parent=0
    _
  %s16 = ssub.s32 1, %s14
  %s17 = scalar_select 0, %s16, %s14
  $region1: #{cnn2_forward.1} parent=0
    #allocation2 [shape = 'u8[512]{0}', space=vmem, size = 0x400, scoped, tag = 'input window, operand 2, single buffered']
    #allocation3 [shape = 's32[2]{0}', space=sflag, size = 0x8, scoped, tag = 'scoped memory for cnn2_forward.1']
    #allocation4 [shape = 's32[2]{0}', space=sflag, size = 0x8, scoped, tag = 'scoped memory for cnn2_forward.1']
    #allocation5 [shape = 'u8[512]{0}', space=vmem, size = 0x400, scoped, tag = 'input window, operand 4, single buffered']
    #allocation6 [shape = 's32[1]{0}', space=sflag, size = 0x4, scoped, tag = 'scoped memory for cnn2_forward.1']
    #allocation7 [shape = 'u8[512]{0}', space=vmem, size = 0x400, scoped, tag = 'input window, operand 6, single buffered']
    #allocation8 [shape = 'u8[98304]{0}', space=vmem, size = 0x18000, scoped, tag = 'input window, operand 7, single buffered']
    #allocation9 [shape = 's32[1]{0}', space=sflag, size = 0x4, scoped, tag = 'scoped memory for cnn2_forward.1']
    #allocation10 [shape = 'u8[512]{0}', space=vmem, size = 0x400, scoped, tag = 'input window, operand 8, single buffered']
    #allocation11 [shape = 'u8[2031616]{0}', space=vmem, size = 0x1f0000, scoped, tag = 'input window, operand 9, single buffered']
    #allocation12 [shape = 's32[1]{0}', space=sflag, size = 0x4, scoped, tag = 'scoped memory for cnn2_forward.1']
    #allocation13 [shape = 'u8[512]{0}', space=vmem, size = 0x400, scoped, tag = 'input window, operand 10, single buffered']
    #allocation14 [shape = 'u8[512]{0}', space=vmem, size = 0x400, scoped, tag = 'input window, operand 12, single buffered']
    #allocation15 [shape = 's32[1]{0}', space=sflag, size = 0x4, scoped, tag = 'scoped memory for cnn2_forward.1']
    #allocation16 [shape = 'u8[1024]{0}', space=vmem, size = 0x400, scoped, tag = 'output window, operand 0']
    %18 = vsyncpa [#allocation3], 0
    %19 = vsyncpa [#allocation6], 0
    %20 = vsyncpa [#allocation9], 0
    %21 = vsyncpa [#allocation12], 0
    %22 = vsyncpa [#allocation15], 0
    %23 = vsyncpa [#allocation4], 0
    %s24 = scalar_lea.sflag [#allocation4], 1
    %25 = vsyncpa %s24, 0
    loop: start=0, step=1, limit=4
    $region2: #{cnn2_forward.1} parent=1 // loop_pre_header
      _
    $region3: #{cnn2_forward.1} parent=1 // loop_header
      %s27 = sphi 0, %s31
      %p28 = scmp.ge.s32.totalorder %s27, 4
      %s37 = sphi 0, %s39
      %s40 = sphi 0, %s37
      %s41 = sphi 0, %s40
      %s57 = sphi 0, %s41
      %s61 = sphi 0, %s61
      %s63 = sphi 0, %s61
      %s64 = sphi 0, %s63
      %s78 = sphi 0, %s64
      %s82 = sphi 0, %s82
      %s84 = sphi 0, %s82
      %s85 = sphi 0, %s84
      %s99 = sphi 0, %s85
      %s103 = sphi 0, %s103
      %s105 = sphi 0, %s103
      %s106 = sphi 0, %s105
      %s120 = sphi 0, %s106
      %s124 = sphi 0, %s124
      %s126 = sphi 0, %s124
      %s127 = sphi 0, %s126
      %s141 = sphi 0, %s127
      %s145 = sphi 0, %s145
      %s147 = sphi 0, %s145
      %s148 = sphi 0, %s147
      %s162 = sphi 0, %s148
      %s166 = sphi 0, %s166
      %s168 = sphi 0, %s166
      %s169 = sphi 0, %s168
      %s183 = sphi 0, %s169
      %s187 = sphi 0, %s187
      %s189 = sphi 0, %s187
      %s190 = sphi 0, %s189
      %s204 = sphi 0, %s190
      %s208 = sphi 0, %s208
      %s210 = sphi 0, %s208
      %s211 = sphi 0, %s210
      %s225 = sphi 0, %s211
      %s229 = sphi 0, %s229
      %s231 = sphi 0, %s229
      %s232 = sphi 0, %s231
      %s246 = sphi 0, %s232
      %s250 = sphi 0, %s250
      %s252 = sphi 0, %s250
      %s253 = sphi 0, %s252
      %s267 = sphi 0, %s253
      %s271 = sphi 0, %s271
      %s273 = sphi 0, %s271
      %s274 = sphi 0, %s273
      %s288 = sphi 0, %s274
      %s292 = sphi 0, %s292
      %s294 = sphi 0, %s292
      %s295 = sphi 0, %s294
      %s309 = sphi 0, %s295
      %s315 = sphi 0, %s317
      %s318 = sphi 0, %s315
      %s319 = sphi 0, %s318
      %s335 = sphi 0, %s319
    $region4: #{cnn2_forward.1} parent=1 // loop_header_branch
      %30 = sbr.rel (%p28) target = $region8
    $region5: #{cnn2_forward.1} parent=1 // loop_body
      %s32 = ssub.s32 %s27, 1
      %s33 = ssub.s32 %s27, 2
      %s34 = sadd.s32 %s27, 1
      %s35 = ssub.s32 %s27, %s34
      %p36 = scmp.eq.s32.totalorder %s35, 0
      %s38 = sadd.s32 %s37, 1
      %s39 = scalar_select %p36, %s37, %s38
      %p42 = pneg %p36
      %p43 = scmp.eq.s32.totalorder %s27, 1
      %p44 = por %p42, %p43
      %p45 = scmp.ne.s32.totalorder %s37, %s40
      %p46 = scmp.eq.s32.totalorder %s27, 0
      %p47 = por %p45, %p46
      %p48 = scmp.ne.s32.totalorder %s37, %s40
      %p49 = scmp.eq.s32.totalorder %s32, 1
      %p50 = por %p48, %p49
      %p51 = scmp.ne.s32.totalorder %s40, %s41
      %p52 = scmp.eq.s32.totalorder %s32, 0
      %p53 = por %p51, %p52
      %p54 = scmp.ne.s32.totalorder %s40, %s41
      %p55 = scmp.eq.s32.totalorder %s33, 1
      %p56 = por %p54, %p55
      %p58 = scmp.ne.s32.totalorder %s41, %s57
      %p59 = scmp.eq.s32.totalorder %s33, 0
      %p60 = por %p58, %p59
      %s62 = sadd.s32 %s61, 1
      %p65 = scmp.eq.s32.totalorder %s27, 1
      %p66 = scmp.ne.s32.totalorder %s61, %s63
      %p67 = scmp.eq.s32.totalorder %s27, 0
      %p68 = por %p66, %p67
      %p69 = scmp.ne.s32.totalorder %s61, %s63
      %p70 = scmp.eq.s32.totalorder %s32, 1
      %p71 = por %p69, %p70
      %p72 = scmp.ne.s32.totalorder %s63, %s64
      %p73 = scmp.eq.s32.totalorder %s32, 0
      %p74 = por %p72, %p73
      %p75 = scmp.ne.s32.totalorder %s63, %s64
      %p76 = scmp.eq.s32.totalorder %s33, 1
      %p77 = por %p75, %p76
      %p79 = scmp.ne.s32.totalorder %s64, %s78
      %p80 = scmp.eq.s32.totalorder %s33, 0
      %p81 = por %p79, %p80
      %s83 = sadd.s32 %s82, 1
      %p86 = scmp.eq.s32.totalorder %s27, 1
      %p87 = scmp.ne.s32.totalorder %s82, %s84
      %p88 = scmp.eq.s32.totalorder %s27, 0
      %p89 = por %p87, %p88
      %p90 = scmp.ne.s32.totalorder %s82, %s84
      %p91 = scmp.eq.s32.totalorder %s32, 1
      %p92 = por %p90, %p91
      %p93 = scmp.ne.s32.totalorder %s84, %s85
      %p94 = scmp.eq.s32.totalorder %s32, 0
      %p95 = por %p93, %p94
      %p96 = scmp.ne.s32.totalorder %s84, %s85
      %p97 = scmp.eq.s32.totalorder %s33, 1
      %p98 = por %p96, %p97
      %p100 = scmp.ne.s32.totalorder %s85, %s99
      %p101 = scmp.eq.s32.totalorder %s33, 0
      %p102 = por %p100, %p101
      %s104 = sadd.s32 %s103, 1
      %p107 = scmp.eq.s32.totalorder %s27, 1
      %p108 = scmp.ne.s32.totalorder %s103, %s105
      %p109 = scmp.eq.s32.totalorder %s27, 0
      %p110 = por %p108, %p109
      %p111 = scmp.ne.s32.totalorder %s103, %s105
      %p112 = scmp.eq.s32.totalorder %s32, 1
      %p113 = por %p111, %p112
      %p114 = scmp.ne.s32.totalorder %s105, %s106
      %p115 = scmp.eq.s32.totalorder %s32, 0
      %p116 = por %p114, %p115
      %p117 = scmp.ne.s32.totalorder %s105, %s106
      %p118 = scmp.eq.s32.totalorder %s33, 1
      %p119 = por %p117, %p118
      %p121 = scmp.ne.s32.totalorder %s106, %s120
      %p122 = scmp.eq.s32.totalorder %s33, 0
      %p123 = por %p121, %p122
      %s125 = sadd.s32 %s124, 1
      %p128 = scmp.eq.s32.totalorder %s27, 1
      %p129 = scmp.ne.s32.totalorder %s124, %s126
      %p130 = scmp.eq.s32.totalorder %s27, 0
      %p131 = por %p129, %p130
      %p132 = scmp.ne.s32.totalorder %s124, %s126
      %p133 = scmp.eq.s32.totalorder %s32, 1
      %p134 = por %p132, %p133
      %p135 = scmp.ne.s32.totalorder %s126, %s127
      %p136 = scmp.eq.s32.totalorder %s32, 0
      %p137 = por %p135, %p136
      %p138 = scmp.ne.s32.totalorder %s126, %s127
      %p139 = scmp.eq.s32.totalorder %s33, 1
      %p140 = por %p138, %p139
      %p142 = scmp.ne.s32.totalorder %s127, %s141
      %p143 = scmp.eq.s32.totalorder %s33, 0
      %p144 = por %p142, %p143
      %s146 = sadd.s32 %s145, 1
      %p149 = scmp.eq.s32.totalorder %s27, 1
      %p150 = scmp.ne.s32.totalorder %s145, %s147
      %p151 = scmp.eq.s32.totalorder %s27, 0
      %p152 = por %p150, %p151
      %p153 = scmp.ne.s32.totalorder %s145, %s147
      %p154 = scmp.eq.s32.totalorder %s32, 1
      %p155 = por %p153, %p154
      %p156 = scmp.ne.s32.totalorder %s147, %s148
      %p157 = scmp.eq.s32.totalorder %s32, 0
      %p158 = por %p156, %p157
      %p159 = scmp.ne.s32.totalorder %s147, %s148
      %p160 = scmp.eq.s32.totalorder %s33, 1
      %p161 = por %p159, %p160
      %p163 = scmp.ne.s32.totalorder %s148, %s162
      %p164 = scmp.eq.s32.totalorder %s33, 0
      %p165 = por %p163, %p164
      %s167 = sadd.s32 %s166, 1
      %p170 = scmp.eq.s32.totalorder %s27, 1
      %p171 = scmp.ne.s32.totalorder %s166, %s168
      %p172 = scmp.eq.s32.totalorder %s27, 0
      %p173 = por %p171, %p172
      %p174 = scmp.ne.s32.totalorder %s166, %s168
      %p175 = scmp.eq.s32.totalorder %s32, 1
      %p176 = por %p174, %p175
      %p177 = scmp.ne.s32.totalorder %s168, %s169
      %p178 = scmp.eq.s32.totalorder %s32, 0
      %p179 = por %p177, %p178
      %p180 = scmp.ne.s32.totalorder %s168, %s169
      %p181 = scmp.eq.s32.totalorder %s33, 1
      %p182 = por %p180, %p181
      %p184 = scmp.ne.s32.totalorder %s169, %s183
      %p185 = scmp.eq.s32.totalorder %s33, 0
      %p186 = por %p184, %p185
      %s188 = sadd.s32 %s187, 1
      %p191 = scmp.eq.s32.totalorder %s27, 1
      %p192 = scmp.ne.s32.totalorder %s187, %s189
      %p193 = scmp.eq.s32.totalorder %s27, 0
      %p194 = por %p192, %p193
      %p195 = scmp.ne.s32.totalorder %s187, %s189
      %p196 = scmp.eq.s32.totalorder %s32, 1
      %p197 = por %p195, %p196
      %p198 = scmp.ne.s32.totalorder %s189, %s190
      %p199 = scmp.eq.s32.totalorder %s32, 0
      %p200 = por %p198, %p199
      %p201 = scmp.ne.s32.totalorder %s189, %s190
      %p202 = scmp.eq.s32.totalorder %s33, 1
      %p203 = por %p201, %p202
      %p205 = scmp.ne.s32.totalorder %s190, %s204
      %p206 = scmp.eq.s32.totalorder %s33, 0
      %p207 = por %p205, %p206
      %s209 = sadd.s32 %s208, 1
      %p212 = scmp.eq.s32.totalorder %s27, 1
      %p213 = scmp.ne.s32.totalorder %s208, %s210
      %p214 = scmp.eq.s32.totalorder %s27, 0
      %p215 = por %p213, %p214
      %p216 = scmp.ne.s32.totalorder %s208, %s210
      %p217 = scmp.eq.s32.totalorder %s32, 1
      %p218 = por %p216, %p217
      %p219 = scmp.ne.s32.totalorder %s210, %s211
      %p220 = scmp.eq.s32.totalorder %s32, 0
      %p221 = por %p219, %p220
      %p222 = scmp.ne.s32.totalorder %s210, %s211
      %p223 = scmp.eq.s32.totalorder %s33, 1
      %p224 = por %p222, %p223
      %p226 = scmp.ne.s32.totalorder %s211, %s225
      %p227 = scmp.eq.s32.totalorder %s33, 0
      %p228 = por %p226, %p227
      %s230 = sadd.s32 %s229, 1
      %p233 = scmp.eq.s32.totalorder %s27, 1
      %p234 = scmp.ne.s32.totalorder %s229, %s231
      %p235 = scmp.eq.s32.totalorder %s27, 0
      %p236 = por %p234, %p235
      %p237 = scmp.ne.s32.totalorder %s229, %s231
      %p238 = scmp.eq.s32.totalorder %s32, 1
      %p239 = por %p237, %p238
      %p240 = scmp.ne.s32.totalorder %s231, %s232
      %p241 = scmp.eq.s32.totalorder %s32, 0
      %p242 = por %p240, %p241
      %p243 = scmp.ne.s32.totalorder %s231, %s232
      %p244 = scmp.eq.s32.totalorder %s33, 1
      %p245 = por %p243, %p244
      %p247 = scmp.ne.s32.totalorder %s232, %s246
      %p248 = scmp.eq.s32.totalorder %s33, 0
      %p249 = por %p247, %p248
      %s251 = sadd.s32 %s250, 1
      %p254 = scmp.eq.s32.totalorder %s27, 1
      %p255 = scmp.ne.s32.totalorder %s250, %s252
      %p256 = scmp.eq.s32.totalorder %s27, 0
      %p257 = por %p255, %p256
      %p258 = scmp.ne.s32.totalorder %s250, %s252
      %p259 = scmp.eq.s32.totalorder %s32, 1
      %p260 = por %p258, %p259
      %p261 = scmp.ne.s32.totalorder %s252, %s253
      %p262 = scmp.eq.s32.totalorder %s32, 0
      %p263 = por %p261, %p262
      %p264 = scmp.ne.s32.totalorder %s252, %s253
      %p265 = scmp.eq.s32.totalorder %s33, 1
      %p266 = por %p264, %p265
      %p268 = scmp.ne.s32.totalorder %s253, %s267
      %p269 = scmp.eq.s32.totalorder %s33, 0
      %p270 = por %p268, %p269
      %s272 = sadd.s32 %s271, 1
      %p275 = scmp.eq.s32.totalorder %s27, 1
      %p276 = scmp.ne.s32.totalorder %s271, %s273
      %p277 = scmp.eq.s32.totalorder %s27, 0
      %p278 = por %p276, %p277
      %p279 = scmp.ne.s32.totalorder %s271, %s273
      %p280 = scmp.eq.s32.totalorder %s32, 1
      %p281 = por %p279, %p280
      %p282 = scmp.ne.s32.totalorder %s273, %s274
      %p283 = scmp.eq.s32.totalorder %s32, 0
      %p284 = por %p282, %p283
      %p285 = scmp.ne.s32.totalorder %s273, %s274
      %p286 = scmp.eq.s32.totalorder %s33, 1
      %p287 = por %p285, %p286
      %p289 = scmp.ne.s32.totalorder %s274, %s288
      %p290 = scmp.eq.s32.totalorder %s33, 0
      %p291 = por %p289, %p290
      %s293 = sadd.s32 %s292, 1
      %p296 = scmp.eq.s32.totalorder %s27, 1
      %p297 = scmp.ne.s32.totalorder %s292, %s294
      %p298 = scmp.eq.s32.totalorder %s27, 0
      %p299 = por %p297, %p298
      %p300 = scmp.ne.s32.totalorder %s292, %s294
      %p301 = scmp.eq.s32.totalorder %s32, 1
      %p302 = por %p300, %p301
      %p303 = scmp.ne.s32.totalorder %s294, %s295
      %p304 = scmp.eq.s32.totalorder %s32, 0
      %p305 = por %p303, %p304
      %p306 = scmp.ne.s32.totalorder %s294, %s295
      %p307 = scmp.eq.s32.totalorder %s33, 1
      %p308 = por %p306, %p307
      %p310 = scmp.ne.s32.totalorder %s295, %s309
      %p311 = scmp.eq.s32.totalorder %s33, 0
      %p312 = por %p310, %p311
      %s313 = ssub.s32 %s27, %s34
      %p314 = scmp.eq.s32.totalorder %s313, 0
      %s316 = sadd.s32 %s315, 1
      %s317 = scalar_select %p314, %s315, %s316
      %p320 = pneg %p314
      %p321 = scmp.eq.s32.totalorder %s27, 1
      %p322 = por %p320, %p321
      %p323 = scmp.ne.s32.totalorder %s315, %s318
      %p324 = scmp.eq.s32.totalorder %s27, 0
      %p325 = por %p323, %p324
      %p326 = scmp.ne.s32.totalorder %s315, %s318
      %p327 = scmp.eq.s32.totalorder %s32, 1
      %p328 = por %p326, %p327
      %p329 = scmp.ne.s32.totalorder %s318, %s319
      %p330 = scmp.eq.s32.totalorder %s32, 0
      %p331 = por %p329, %p330
      %p332 = scmp.ne.s32.totalorder %s318, %s319
      %p333 = scmp.eq.s32.totalorder %s33, 1
      %p334 = por %p332, %p333
      %p336 = scmp.ne.s32.totalorder %s319, %s335
      %p337 = scmp.eq.s32.totalorder %s33, 0
      %p338 = por %p336, %p337
      %p339 = scmp.le.s32.totalorder 1, %s27
      %p340 = scmp.lt.s32.totalorder %s27, 3
      %p341 = pnand %p339, %p340
      %p342 = pneg %p341
      // Predicated region
      $region9: #{cnn2_forward.1} parent=5 // pred_check
        _
      $region10: #{cnn2_forward.1} parent=5 // pred_check_branch
        %344 = sbr.rel (%p341) target = $region12
      $region11: #{cnn2_forward.1} parent=5 // pred_region
        %s345 = ssub.s32 %s27, 1
        // Predicated region
        $region13: #{cnn2_forward.1} parent=11 // pred_check
          %p346 = pneg %p74
        $region14: #{cnn2_forward.1} parent=11 // pred_check_branch
          %348 = sbr.rel (%p346) target = $region16
        $region15: #{cnn2_forward.1} parent=11 // pred_region
          _
        $region16: #{cnn2_forward.1} parent=11 // pred_fallthru
          _
        // Predicated region
        $region17: #{cnn2_forward.1} parent=11 // pred_check
          %p349 = pneg %p95
        $region18: #{cnn2_forward.1} parent=11 // pred_check_branch
          %351 = sbr.rel (%p349) target = $region20
        $region19: #{cnn2_forward.1} parent=11 // pred_region
          %s353 = ssub.s32 16, 16
          %354 = vsyncadd [#allocation3], %s353
          %s356 = sshll.u32 [#allocation2], 4
          %s357 = int_to_ptr.vmem [resolvable:$true] %s356
          %359 = dma.hbm_to_vmem [thread:$0]  %s2, 16, %s357, [#allocation3]
        $region20: #{cnn2_forward.1} parent=11 // pred_fallthru
          _
        // Predicated region
        $region21: #{cnn2_forward.1} parent=11 // pred_check
          %p360 = pneg %p116
        $region22: #{cnn2_forward.1} parent=11 // pred_check_branch
          %362 = sbr.rel (%p360) target = $region24
        $region23: #{cnn2_forward.1} parent=11 // pred_region
          _
        $region24: #{cnn2_forward.1} parent=11 // pred_fallthru
          _
        // Predicated region
        $region25: #{cnn2_forward.1} parent=11 // pred_check
          %p363 = pneg %p137
        $region26: #{cnn2_forward.1} parent=11 // pred_check_branch
          %365 = sbr.rel (%p363) target = $region28
        $region27: #{cnn2_forward.1} parent=11 // pred_region
          %s367 = ssub.s32 16, 16
          %368 = vsyncadd [#allocation6], %s367
          %s370 = sshll.u32 [#allocation5], 4
          %s371 = int_to_ptr.vmem [resolvable:$true] %s370
          %373 = dma.hbm_to_vmem [thread:$0]  %s4, 16, %s371, [#allocation6]
        $region28: #{cnn2_forward.1} parent=11 // pred_fallthru
          _
        // Predicated region
        $region29: #{cnn2_forward.1} parent=11 // pred_check
          %p374 = pneg %p158
        $region30: #{cnn2_forward.1} parent=11 // pred_check_branch
          %376 = sbr.rel (%p374) target = $region32
        $region31: #{cnn2_forward.1} parent=11 // pred_region
          _
        $region32: #{cnn2_forward.1} parent=11 // pred_fallthru
          _
        // Predicated region
        $region33: #{cnn2_forward.1} parent=11 // pred_check
          %p377 = pneg %p179
        $region34: #{cnn2_forward.1} parent=11 // pred_check_branch
          %379 = sbr.rel (%p377) target = $region36
        $region35: #{cnn2_forward.1} parent=11 // pred_region
          %s381 = ssub.s32 16, 16
          %382 = vsyncadd [#allocation6], %s381
          %s384 = sshll.u32 [#allocation7], 4
          %s385 = int_to_ptr.vmem [resolvable:$true] %s384
          %387 = dma.hbm_to_vmem [thread:$0]  %s6, 16, %s385, [#allocation6]
        $region36: #{cnn2_forward.1} parent=11 // pred_fallthru
          _
        // Predicated region
        $region37: #{cnn2_forward.1} parent=11 // pred_check
          %p388 = pneg %p200
        $region38: #{cnn2_forward.1} parent=11 // pred_check_branch
          %390 = sbr.rel (%p388) target = $region40
        $region39: #{cnn2_forward.1} parent=11 // pred_region
          %s392 = ssub.s32 3072, 3072
          %393 = vsyncadd [#allocation9], %s392
          %s394 = sshll.u32 [#allocation8], 4
          %s395 = int_to_ptr.vmem [resolvable:$true] %s394
          %400 = dma.hbm_to_vmem [thread:$0]  %s7, 3072, %s395, [#allocation9], 128, 128, 8
        $region40: #{cnn2_forward.1} parent=11 // pred_fallthru
          _
        // Predicated region
        $region41: #{cnn2_forward.1} parent=11 // pred_check
          %p401 = pneg %p221
        $region42: #{cnn2_forward.1} parent=11 // pred_check_branch
          %403 = sbr.rel (%p401) target = $region44
        $region43: #{cnn2_forward.1} parent=11 // pred_region
          %s405 = ssub.s32 16, 16
          %406 = vsyncadd [#allocation9], %s405
          %s408 = sshll.u32 [#allocation10], 4
          %s409 = int_to_ptr.vmem [resolvable:$true] %s408
          %411 = dma.hbm_to_vmem [thread:$0]  %s8, 16, %s409, [#allocation9]
        $region44: #{cnn2_forward.1} parent=11 // pred_fallthru
          _
        // Predicated region
        $region45: #{cnn2_forward.1} parent=11 // pred_check
          %p412 = pneg %p242
        $region46: #{cnn2_forward.1} parent=11 // pred_check_branch
          %414 = sbr.rel (%p412) target = $region48
        $region47: #{cnn2_forward.1} parent=11 // pred_region
          %s416 = ssub.s32 63488, 63488
          %417 = vsyncadd [#allocation12], %s416
          %s418 = sshll.u32 [#allocation11], 4
          %s419 = int_to_ptr.vmem [resolvable:$true] %s418
          %424 = dma.hbm_to_vmem [thread:$0]  %s9, 63488, %s419, [#allocation12], 128, 128, 8
        $region48: #{cnn2_forward.1} parent=11 // pred_fallthru
          _
        // Predicated region
        $region49: #{cnn2_forward.1} parent=11 // pred_check
          %p425 = pneg %p263
        $region50: #{cnn2_forward.1} parent=11 // pred_check_branch
          %427 = sbr.rel (%p425) target = $region52
        $region51: #{cnn2_forward.1} parent=11 // pred_region
          %s429 = ssub.s32 16, 16
          %430 = vsyncadd [#allocation12], %s429
          %s432 = sshll.u32 [#allocation13], 4
          %s433 = int_to_ptr.vmem [resolvable:$true] %s432
          %435 = dma.hbm_to_vmem [thread:$0]  %s10, 16, %s433, [#allocation12]
        $region52: #{cnn2_forward.1} parent=11 // pred_fallthru
          _
        // Predicated region
        $region53: #{cnn2_forward.1} parent=11 // pred_check
          %p436 = pneg %p284
        $region54: #{cnn2_forward.1} parent=11 // pred_check_branch
          %438 = sbr.rel (%p436) target = $region56
        $region55: #{cnn2_forward.1} parent=11 // pred_region
          _
        $region56: #{cnn2_forward.1} parent=11 // pred_fallthru
          _
        // Predicated region
        $region57: #{cnn2_forward.1} parent=11 // pred_check
          %p439 = pneg %p305
        $region58: #{cnn2_forward.1} parent=11 // pred_check_branch
          %441 = sbr.rel (%p439) target = $region60
        $region59: #{cnn2_forward.1} parent=11 // pred_region
          %s443 = ssub.s32 16, 16
          %444 = vsyncadd [#allocation15], %s443
          %s446 = sshll.u32 [#allocation14], 4
          %s447 = int_to_ptr.vmem [resolvable:$true] %s446
          %449 = dma.hbm_to_vmem [thread:$0]  %s12, 16, %s447, [#allocation15]
        $region60: #{cnn2_forward.1} parent=11 // pred_fallthru
          _
      $region12: #{cnn2_forward.1} parent=5 // pred_fallthru
        _
      %p450 = scmp.lt.s32.totalorder %s27, 2
      // Predicated region
      $region61: #{cnn2_forward.1} parent=5 // pred_check
        %p451 = pneg %p450
      $region62: #{cnn2_forward.1} parent=5 // pred_check_branch
        %453 = sbr.rel (%p451) target = $region64
      $region63: #{cnn2_forward.1} parent=5 // pred_region
        // Predicated region
        $region65: #{cnn2_forward.1} parent=63 // pred_check
          %p454 = pneg %p47
        $region66: #{cnn2_forward.1} parent=63 // pred_check_branch
          %456 = sbr.rel (%p454) target = $region68
        $region67: #{cnn2_forward.1} parent=63 // pred_region
          %p457 = scmp.lt.s32.totalorder %s27, 1
          %s458 = scalar_select %p457, %s27, 1
          %s459 = smul.addr %s458, 34
          %s460 = smul.addr %s459, 8
          %s461 = scalar_lea.vmem %s0, %s460
        $region68: #{cnn2_forward.1} parent=63 // pred_fallthru
          _
      $region64: #{cnn2_forward.1} parent=5 // pred_fallthru
        _
      %p462 = scmp.le.s32.totalorder 1, %s27
      %p463 = scmp.lt.s32.totalorder %s27, 3
      %p464 = pnand %p462, %p463
      %p465 = pneg %p464
      // Predicated region
      $region69: #{cnn2_forward.1} parent=5 // pred_check
        _
      $region70: #{cnn2_forward.1} parent=5 // pred_check_branch
        %467 = sbr.rel (%p464) target = $region72
      $region71: #{cnn2_forward.1} parent=5 // pred_region
        %s468 = ssub.s32 %s27, 1
        // Predicated region
        $region73: #{cnn2_forward.1} parent=71 // pred_check
          %p469 = pneg %p95
        $region74: #{cnn2_forward.1} parent=71 // pred_check_branch
          %471 = sbr.rel (%p469) target = $region76
        $region75: #{cnn2_forward.1} parent=71 // pred_region
          %472 = dma.done [#allocation3], 16
        $region76: #{cnn2_forward.1} parent=71 // pred_fallthru
          _
        // Predicated region
        $region77: #{cnn2_forward.1} parent=71 // pred_check
          %p473 = pneg %p137
        $region78: #{cnn2_forward.1} parent=71 // pred_check_branch
          %475 = sbr.rel (%p473) target = $region80
        $region79: #{cnn2_forward.1} parent=71 // pred_region
          %476 = dma.done [#allocation6], 16
        $region80: #{cnn2_forward.1} parent=71 // pred_fallthru
          _
        // Predicated region
        $region81: #{cnn2_forward.1} parent=71 // pred_check
          %p477 = pneg %p179
        $region82: #{cnn2_forward.1} parent=71 // pred_check_branch
          %479 = sbr.rel (%p477) target = $region84
        $region83: #{cnn2_forward.1} parent=71 // pred_region
          %480 = dma.done [#allocation6], 16
        $region84: #{cnn2_forward.1} parent=71 // pred_fallthru
          _
        // Predicated region
        $region85: #{cnn2_forward.1} parent=71 // pred_check
          %p481 = pneg %p200
        $region86: #{cnn2_forward.1} parent=71 // pred_check_branch
          %483 = sbr.rel (%p481) target = $region88
        $region87: #{cnn2_forward.1} parent=71 // pred_region
          %484 = dma.done [#allocation9], 3072
        $region88: #{cnn2_forward.1} parent=71 // pred_fallthru
          _
        // Predicated region
        $region89: #{cnn2_forward.1} parent=71 // pred_check
          %p485 = pneg %p221
        $region90: #{cnn2_forward.1} parent=71 // pred_check_branch
          %487 = sbr.rel (%p485) target = $region92
        $region91: #{cnn2_forward.1} parent=71 // pred_region
          %488 = dma.done [#allocation9], 16
        $region92: #{cnn2_forward.1} parent=71 // pred_fallthru
          _
        // Predicated region
        $region93: #{cnn2_forward.1} parent=71 // pred_check
          %p489 = pneg %p242
        $region94: #{cnn2_forward.1} parent=71 // pred_check_branch
          %491 = sbr.rel (%p489) target = $region96
        $region95: #{cnn2_forward.1} parent=71 // pred_region
          %492 = dma.done [#allocation12], 63488
        $region96: #{cnn2_forward.1} parent=71 // pred_fallthru
          _
        // Predicated region
        $region97: #{cnn2_forward.1} parent=71 // pred_check
          %p493 = pneg %p263
        $region98: #{cnn2_forward.1} parent=71 // pred_check_branch
          %495 = sbr.rel (%p493) target = $region100
        $region99: #{cnn2_forward.1} parent=71 // pred_region
          %496 = dma.done [#allocation12], 16
        $region100: #{cnn2_forward.1} parent=71 // pred_fallthru
          _
        // Predicated region
        $region101: #{cnn2_forward.1} parent=71 // pred_check
          %p497 = pneg %p305
        $region102: #{cnn2_forward.1} parent=71 // pred_check_branch
          %499 = sbr.rel (%p497) target = $region104
        $region103: #{cnn2_forward.1} parent=71 // pred_region
          %500 = dma.done [#allocation15], 16
        $region104: #{cnn2_forward.1} parent=71 // pred_fallthru
          _
        %p501 = scmp.lt.s32.totalorder %s32, 1
        %s502 = scalar_select %p501, %s32, 1
        %s503 = smul.addr %s502, 34
        %s504 = smul.addr %s503, 8
        %s505 = scalar_lea.vmem %s0, %s504
        %p506 = pneg %p53
        %p507 = pneg %p50
        %p508 = pneg %p74
        %p509 = pneg %p71
        %p510 = pneg %p95
        %p511 = pneg %p92
        %p512 = pneg %p116
        %p513 = pneg %p113
        %p514 = pneg %p137
        %p515 = pneg %p134
        %p516 = pneg %p158
        %p517 = pneg %p155
        %p518 = pneg %p179
        %p519 = pneg %p176
        %p520 = pneg %p200
        %p521 = pneg %p197
        %p522 = pneg %p221
        %p523 = pneg %p218
        %p524 = pneg %p242
        %p525 = pneg %p239
        %p526 = pneg %p263
        %p527 = pneg %p260
        %p528 = pneg %p284
        %p529 = pneg %p281
        %p530 = pneg %p305
        %p531 = pneg %p302
        %p532 = pneg %p331
        %p533 = pneg %p328
        %s534 = sand.u32 %s318, 1
        %s535 = scalar_lea.sflag [#allocation4], %s534
        %s536 = sand.u32 %s318, 1
        %s537 = scalar_lea.vmem [#allocation16], %s536
        %p538 = scmp.lt.s32.totalorder %s32, 1
        %s539 = scalar_select %p538, %s32, 1
        %s540 = smul.addr %s539, 34
        %s541 = smul.addr %s540, 8
        %s542 = scalar_lea.vmem %s0, %s541
        %v543 = vld [vmem:[%s542] sm:$0xff]
        %v544 = vld [vmem:[%s542 + $0x8] sm:$0xff]
        %v545 = vld [vmem:[%s542 + $0x10] sm:$0xff]
        %v546 = vld [vmem:[%s542 + $0x18] sm:$0xff]
        %v547 = vld [vmem:[%s542 + $0x20] sm:$0xff]
        %v548 = vld [vmem:[%s542 + $0x28] sm:$0xff]
        %v549 = vld [vmem:[%s542 + $0x30] sm:$0xff]
        %v550 = vld [vmem:[%s542 + $0x38] sm:$0xff]
        %v551 = vld [vmem:[%s542 + $0x40] sm:$0xff]
        %v552 = vld [vmem:[%s542 + $0x48] sm:$0xff]
        %v553 = vld [vmem:[%s542 + $0x50] sm:$0xff]
        %v554 = vld [vmem:[%s542 + $0x58] sm:$0xff]
        %v555 = vld [vmem:[%s542 + $0x60] sm:$0xff]
        %v556 = vld [vmem:[%s542 + $0x68] sm:$0xff]
        %v557 = vld [vmem:[%s542 + $0x70] sm:$0xff]
        %v558 = vld [vmem:[%s542 + $0x78] sm:$0xff]
        %v559 = vld [vmem:[%s542 + $0x80] sm:$0xff]
        %v560 = vld [vmem:[%s542 + $0x88] sm:$0xff]
        %v561 = vld [vmem:[%s542 + $0x90] sm:$0xff]
        %v562 = vld [vmem:[%s542 + $0x98] sm:$0xff]
        %v563 = vld [vmem:[%s542 + $0xa0] sm:$0xff]
        %v564 = vld [vmem:[%s542 + $0xa8] sm:$0xff]
        %v565 = vld [vmem:[%s542 + $0xb0] sm:$0xff]
        %v566 = vld [vmem:[%s542 + $0xb8] sm:$0xff]
        %v567 = vld [vmem:[%s542 + $0xc0] sm:$0xff]
        %v568 = vld [vmem:[%s542 + $0xc8] sm:$0xff]
        %v569 = vld [vmem:[%s542 + $0xd0] sm:$0xff]
        %v570 = vld [vmem:[%s542 + $0xd8] sm:$0xff]
        %v571 = vld [vmem:[%s542 + $0xe0] sm:$0xff]
        %v572 = vld [vmem:[%s542 + $0xe8] sm:$0xff]
        %v573 = vld [vmem:[%s542 + $0xf0] sm:$0xff]
        %v574 = vld [vmem:[%s542 + $0xf8] sm:$0xff]
        %v575 = vld [vmem:[%s542 + $0x100] sm:$0xff]
        %v576 = vld [vmem:[%s542 + $0x108] sm:$0x3]
        %vm609 = vcmask 1046528
        %v610 = vrot.slane %v543, 1
        %v611 = vrot.slane %v544, 1
        %v612 = vsel %vm609, %v610, %v611
        %v613 = vrot.slane %v545, 1
        %v614 = vsel %vm609, %v611, %v613
        %v615 = vrot.slane %v546, 1
        %v616 = vsel %vm609, %v613, %v615
        %v617 = vrot.slane %v547, 1
        %v618 = vsel %vm609, %v615, %v617
        %v619 = vrot.slane %v548, 1
        %v620 = vsel %vm609, %v617, %v619
        %v621 = vrot.slane %v549, 1
        %v622 = vsel %vm609, %v619, %v621
        %v623 = vrot.slane %v550, 1
        %v624 = vsel %vm609, %v621, %v623
        %v625 = vrot.slane %v551, 1
        %v626 = vsel %vm609, %v623, %v625
        %v627 = vrot.slane %v552, 1
        %v628 = vsel %vm609, %v625, %v627
        %v629 = vrot.slane %v553, 1
        %v630 = vsel %vm609, %v627, %v629
        %v631 = vrot.slane %v554, 1
        %v632 = vsel %vm609, %v629, %v631
        %v633 = vrot.slane %v555, 1
        %v634 = vsel %vm609, %v631, %v633
        %v635 = vrot.slane %v556, 1
        %v636 = vsel %vm609, %v633, %v635
        %v637 = vrot.slane %v557, 1
        %v638 = vsel %vm609, %v635, %v637
        %v639 = vrot.slane %v558, 1
        %v640 = vsel %vm609, %v637, %v639
        %v641 = vrot.slane %v559, 1
        %v642 = vsel %vm609, %v639, %v641
        %v643 = vrot.slane %v560, 1
        %v644 = vsel %vm609, %v641, %v643
        %v645 = vrot.slane %v561, 1
        %v646 = vsel %vm609, %v643, %v645
        %v647 = vrot.slane %v562, 1
        %v648 = vsel %vm609, %v645, %v647
        %v649 = vrot.slane %v563, 1
        %v650 = vsel %vm609, %v647, %v649
        %v651 = vrot.slane %v564, 1
        %v652 = vsel %vm609, %v649, %v651
        %v653 = vrot.slane %v565, 1
        %v654 = vsel %vm609, %v651, %v653
        %v655 = vrot.slane %v566, 1
        %v656 = vsel %vm609, %v653, %v655
        %v657 = vrot.slane %v567, 1
        %v658 = vsel %vm609, %v655, %v657
        %v659 = vrot.slane %v568, 1
        %v660 = vsel %vm609, %v657, %v659
        %v661 = vrot.slane %v569, 1
        %v662 = vsel %vm609, %v659, %v661
        %v663 = vrot.slane %v570, 1
        %v664 = vsel %vm609, %v661, %v663
        %v665 = vrot.slane %v571, 1
        %v666 = vsel %vm609, %v663, %v665
        %v667 = vrot.slane %v572, 1
        %v668 = vsel %vm609, %v665, %v667
        %v669 = vrot.slane %v573, 1
        %v670 = vsel %vm609, %v667, %v669
        %v671 = vrot.slane %v574, 1
        %v672 = vsel %vm609, %v669, %v671
        %673 = vrot.lane.b32.xlu0 %v612, 8
        %v674 = vpop.permute.xlu0 %673
        %675 = vrot.lane.b32.xlu0 %v614, 8
        %v676 = vpop.permute.xlu0 %675
        %677 = vrot.lane.b32.xlu0 %v616, 8
        %v678 = vpop.permute.xlu0 %677
        %679 = vrot.lane.b32.xlu0 %v618, 8
        %v680 = vpop.permute.xlu0 %679
        %681 = vrot.lane.b32.xlu0 %v620, 8
        %v682 = vpop.permute.xlu0 %681
        %683 = vrot.lane.b32.xlu0 %v622, 8
        %v684 = vpop.permute.xlu0 %683
        %685 = vrot.lane.b32.xlu0 %v624, 8
        %v686 = vpop.permute.xlu0 %685
        %687 = vrot.lane.b32.xlu0 %v626, 8
        %v688 = vpop.permute.xlu0 %687
        %689 = vrot.lane.b32.xlu0 %v628, 8
        %v690 = vpop.permute.xlu0 %689
        %691 = vrot.lane.b32.xlu0 %v630, 8
        %v692 = vpop.permute.xlu0 %691
        %693 = vrot.lane.b32.xlu0 %v632, 8
        %v694 = vpop.permute.xlu0 %693
        %695 = vrot.lane.b32.xlu0 %v634, 8
        %v696 = vpop.permute.xlu0 %695
        %697 = vrot.lane.b32.xlu0 %v636, 8
        %v698 = vpop.permute.xlu0 %697
        %699 = vrot.lane.b32.xlu0 %v638, 8
        %v700 = vpop.permute.xlu0 %699
        %701 = vrot.lane.b32.xlu0 %v640, 8
        %v702 = vpop.permute.xlu0 %701
        %703 = vrot.lane.b32.xlu0 %v642, 8
        %v704 = vpop.permute.xlu0 %703
        %705 = vrot.lane.b32.xlu0 %v644, 8
        %v706 = vpop.permute.xlu0 %705
        %707 = vrot.lane.b32.xlu0 %v646, 8
        %v708 = vpop.permute.xlu0 %707
        %709 = vrot.lane.b32.xlu0 %v648, 8
        %v710 = vpop.permute.xlu0 %709
        %711 = vrot.lane.b32.xlu0 %v650, 8
        %v712 = vpop.permute.xlu0 %711
        %713 = vrot.lane.b32.xlu0 %v652, 8
        %v714 = vpop.permute.xlu0 %713
        %715 = vrot.lane.b32.xlu0 %v654, 8
        %v716 = vpop.permute.xlu0 %715
        %717 = vrot.lane.b32.xlu0 %v656, 8
        %v718 = vpop.permute.xlu0 %717
        %719 = vrot.lane.b32.xlu0 %v658, 8
        %v720 = vpop.permute.xlu0 %719
        %721 = vrot.lane.b32.xlu0 %v660, 8
        %v722 = vpop.permute.xlu0 %721
        %723 = vrot.lane.b32.xlu0 %v662, 8
        %v724 = vpop.permute.xlu0 %723
        %725 = vrot.lane.b32.xlu0 %v664, 8
        %v726 = vpop.permute.xlu0 %725
        %727 = vrot.lane.b32.xlu0 %v666, 8
        %v728 = vpop.permute.xlu0 %727
        %729 = vrot.lane.b32.xlu0 %v668, 8
        %v730 = vpop.permute.xlu0 %729
        %731 = vrot.lane.b32.xlu0 %v670, 8
        %v732 = vpop.permute.xlu0 %731
        %733 = vrot.lane.b32.xlu0 %v672, 8
        %v734 = vpop.permute.xlu0 %733
        %735 = vrot.lane.b32.xlu0 %v671, 8
        %v736 = vpop.permute.xlu0 %735
        %vm769 = vcmask 1045504
        %v770 = vrot.slane %v543, 2
        %v771 = vrot.slane %v544, 2
        %v772 = vsel %vm769, %v770, %v771
        %v773 = vrot.slane %v545, 2
        %v774 = vsel %vm769, %v771, %v773
        %v775 = vrot.slane %v546, 2
        %v776 = vsel %vm769, %v773, %v775
        %v777 = vrot.slane %v547, 2
        %v778 = vsel %vm769, %v775, %v777
        %v779 = vrot.slane %v548, 2
        %v780 = vsel %vm769, %v777, %v779
        %v781 = vrot.slane %v549, 2
        %v782 = vsel %vm769, %v779, %v781
        %v783 = vrot.slane %v550, 2
        %v784 = vsel %vm769, %v781, %v783
        %v785 = vrot.slane %v551, 2
        %v786 = vsel %vm769, %v783, %v785
        %v787 = vrot.slane %v552, 2
        %v788 = vsel %vm769, %v785, %v787
        %v789 = vrot.slane %v553, 2
        %v790 = vsel %vm769, %v787, %v789
        %v791 = vrot.slane %v554, 2
        %v792 = vsel %vm769, %v789, %v791
        %v793 = vrot.slane %v555, 2
        %v794 = vsel %vm769, %v791, %v793
        %v795 = vrot.slane %v556, 2
        %v796 = vsel %vm769, %v793, %v795
        %v797 = vrot.slane %v557, 2
        %v798 = vsel %vm769, %v795, %v797
        %v799 = vrot.slane %v558, 2
        %v800 = vsel %vm769, %v797, %v799
        %v801 = vrot.slane %v559, 2
        %v802 = vsel %vm769, %v799, %v801
        %v803 = vrot.slane %v560, 2
        %v804 = vsel %vm769, %v801, %v803
        %v805 = vrot.slane %v561, 2
        %v806 = vsel %vm769, %v803, %v805
        %v807 = vrot.slane %v562, 2
        %v808 = vsel %vm769, %v805, %v807
        %v809 = vrot.slane %v563, 2
        %v810 = vsel %vm769, %v807, %v809
        %v811 = vrot.slane %v564, 2
        %v812 = vsel %vm769, %v809, %v811
        %v813 = vrot.slane %v565, 2
        %v814 = vsel %vm769, %v811, %v813
        %v815 = vrot.slane %v566, 2
        %v816 = vsel %vm769, %v813, %v815
        %v817 = vrot.slane %v567, 2
        %v818 = vsel %vm769, %v815, %v817
        %v819 = vrot.slane %v568, 2
        %v820 = vsel %vm769, %v817, %v819
        %v821 = vrot.slane %v569, 2
        %v822 = vsel %vm769, %v819, %v821
        %v823 = vrot.slane %v570, 2
        %v824 = vsel %vm769, %v821, %v823
        %v825 = vrot.slane %v571, 2
        %v826 = vsel %vm769, %v823, %v825
        %v827 = vrot.slane %v572, 2
        %v828 = vsel %vm769, %v825, %v827
        %v829 = vrot.slane %v573, 2
        %v830 = vsel %vm769, %v827, %v829
        %v831 = vrot.slane %v574, 2
        %v832 = vsel %vm769, %v829, %v831
        %833 = vrot.lane.b32.xlu0 %v772, 16
        %v834 = vpop.permute.xlu0 %833
        %835 = vrot.lane.b32.xlu0 %v774, 16
        %v836 = vpop.permute.xlu0 %835
        %837 = vrot.lane.b32.xlu0 %v776, 16
        %v838 = vpop.permute.xlu0 %837
        %839 = vrot.lane.b32.xlu0 %v778, 16
        %v840 = vpop.permute.xlu0 %839
        %841 = vrot.lane.b32.xlu0 %v780, 16
        %v842 = vpop.permute.xlu0 %841
        %843 = vrot.lane.b32.xlu0 %v782, 16
        %v844 = vpop.permute.xlu0 %843
        %845 = vrot.lane.b32.xlu0 %v784, 16
        %v846 = vpop.permute.xlu0 %845
        %847 = vrot.lane.b32.xlu0 %v786, 16
        %v848 = vpop.permute.xlu0 %847
        %849 = vrot.lane.b32.xlu0 %v788, 16
        %v850 = vpop.permute.xlu0 %849
        %851 = vrot.lane.b32.xlu0 %v790, 16
        %v852 = vpop.permute.xlu0 %851
        %853 = vrot.lane.b32.xlu0 %v792, 16
        %v854 = vpop.permute.xlu0 %853
        %855 = vrot.lane.b32.xlu0 %v794, 16
        %v856 = vpop.permute.xlu0 %855
        %857 = vrot.lane.b32.xlu0 %v796, 16
        %v858 = vpop.permute.xlu0 %857
        %859 = vrot.lane.b32.xlu0 %v798, 16
        %v860 = vpop.permute.xlu0 %859
        %861 = vrot.lane.b32.xlu0 %v800, 16
        %v862 = vpop.permute.xlu0 %861
        %863 = vrot.lane.b32.xlu0 %v802, 16
        %v864 = vpop.permute.xlu0 %863
        %865 = vrot.lane.b32.xlu0 %v804, 16
        %v866 = vpop.permute.xlu0 %865
        %867 = vrot.lane.b32.xlu0 %v806, 16
        %v868 = vpop.permute.xlu0 %867
        %869 = vrot.lane.b32.xlu0 %v808, 16
        %v870 = vpop.permute.xlu0 %869
        %871 = vrot.lane.b32.xlu0 %v810, 16
        %v872 = vpop.permute.xlu0 %871
        %873 = vrot.lane.b32.xlu0 %v812, 16
        %v874 = vpop.permute.xlu0 %873
        %875 = vrot.lane.b32.xlu0 %v814, 16
        %v876 = vpop.permute.xlu0 %875
        %877 = vrot.lane.b32.xlu0 %v816, 16
        %v878 = vpop.permute.xlu0 %877
        %879 = vrot.lane.b32.xlu0 %v818, 16
        %v880 = vpop.permute.xlu0 %879
        %881 = vrot.lane.b32.xlu0 %v820, 16
        %v882 = vpop.permute.xlu0 %881
        %883 = vrot.lane.b32.xlu0 %v822, 16
        %v884 = vpop.permute.xlu0 %883
        %885 = vrot.lane.b32.xlu0 %v824, 16
        %v886 = vpop.permute.xlu0 %885
        %887 = vrot.lane.b32.xlu0 %v826, 16
        %v888 = vpop.permute.xlu0 %887
        %889 = vrot.lane.b32.xlu0 %v828, 16
        %v890 = vpop.permute.xlu0 %889
        %891 = vrot.lane.b32.xlu0 %v830, 16
        %v892 = vpop.permute.xlu0 %891
        %893 = vrot.lane.b32.xlu0 %v832, 16
        %v894 = vpop.permute.xlu0 %893
        %895 = vrot.lane.b32.xlu0 %v831, 16
        %v896 = vpop.permute.xlu0 %895
        %vm929 = vcmask 1044480
        %v930 = vrot.slane %v543, 3
        %v931 = vrot.slane %v544, 3
        %v932 = vsel %vm929, %v930, %v931
        %v933 = vrot.slane %v545, 3
        %v934 = vsel %vm929, %v931, %v933
        %v935 = vrot.slane %v546, 3
        %v936 = vsel %vm929, %v933, %v935
        %v937 = vrot.slane %v547, 3
        %v938 = vsel %vm929, %v935, %v937
        %v939 = vrot.slane %v548, 3
        %v940 = vsel %vm929, %v937, %v939
        %v941 = vrot.slane %v549, 3
        %v942 = vsel %vm929, %v939, %v941
        %v943 = vrot.slane %v550, 3
        %v944 = vsel %vm929, %v941, %v943
        %v945 = vrot.slane %v551, 3
        %v946 = vsel %vm929, %v943, %v945
        %v947 = vrot.slane %v552, 3
        %v948 = vsel %vm929, %v945, %v947
        %v949 = vrot.slane %v553, 3
        %v950 = vsel %vm929, %v947, %v949
        %v951 = vrot.slane %v554, 3
        %v952 = vsel %vm929, %v949, %v951
        %v953 = vrot.slane %v555, 3
        %v954 = vsel %vm929, %v951, %v953
        %v955 = vrot.slane %v556, 3
        %v956 = vsel %vm929, %v953, %v955
        %v957 = vrot.slane %v557, 3
        %v958 = vsel %vm929, %v955, %v957
        %v959 = vrot.slane %v558, 3
        %v960 = vsel %vm929, %v957, %v959
        %v961 = vrot.slane %v559, 3
        %v962 = vsel %vm929, %v959, %v961
        %v963 = vrot.slane %v560, 3
        %v964 = vsel %vm929, %v961, %v963
        %v965 = vrot.slane %v561, 3
        %v966 = vsel %vm929, %v963, %v965
        %v967 = vrot.slane %v562, 3
        %v968 = vsel %vm929, %v965, %v967
        %v969 = vrot.slane %v563, 3
        %v970 = vsel %vm929, %v967, %v969
        %v971 = vrot.slane %v564, 3
        %v972 = vsel %vm929, %v969, %v971
        %v973 = vrot.slane %v565, 3
        %v974 = vsel %vm929, %v971, %v973
        %v975 = vrot.slane %v566, 3
        %v976 = vsel %vm929, %v973, %v975
        %v977 = vrot.slane %v567, 3
        %v978 = vsel %vm929, %v975, %v977
        %v979 = vrot.slane %v568, 3
        %v980 = vsel %vm929, %v977, %v979
        %v981 = vrot.slane %v569, 3
        %v982 = vsel %vm929, %v979, %v981
        %v983 = vrot.slane %v570, 3
        %v984 = vsel %vm929, %v981, %v983
        %v985 = vrot.slane %v571, 3
        %v986 = vsel %vm929, %v983, %v985
        %v987 = vrot.slane %v572, 3
        %v988 = vsel %vm929, %v985, %v987
        %v989 = vrot.slane %v573, 3
        %v990 = vsel %vm929, %v987, %v989
        %v991 = vrot.slane %v574, 3
        %v992 = vsel %vm929, %v989, %v991
        %993 = vrot.lane.b32.xlu0 %v932, 24
        %v994 = vpop.permute.xlu0 %993
        %995 = vrot.lane.b32.xlu0 %v934, 24
        %v996 = vpop.permute.xlu0 %995
        %997 = vrot.lane.b32.xlu0 %v936, 24
        %v998 = vpop.permute.xlu0 %997
        %999 = vrot.lane.b32.xlu0 %v938, 24
        %v1000 = vpop.permute.xlu0 %999
        %1001 = vrot.lane.b32.xlu0 %v940, 24
        %v1002 = vpop.permute.xlu0 %1001
        %1003 = vrot.lane.b32.xlu0 %v942, 24
        %v1004 = vpop.permute.xlu0 %1003
        %1005 = vrot.lane.b32.xlu0 %v944, 24
        %v1006 = vpop.permute.xlu0 %1005
        %1007 = vrot.lane.b32.xlu0 %v946, 24
        %v1008 = vpop.permute.xlu0 %1007
        %1009 = vrot.lane.b32.xlu0 %v948, 24
        %v1010 = vpop.permute.xlu0 %1009
        %1011 = vrot.lane.b32.xlu0 %v950, 24
        %v1012 = vpop.permute.xlu0 %1011
        %1013 = vrot.lane.b32.xlu0 %v952, 24
        %v1014 = vpop.permute.xlu0 %1013
        %1015 = vrot.lane.b32.xlu0 %v954, 24
        %v1016 = vpop.permute.xlu0 %1015
        %1017 = vrot.lane.b32.xlu0 %v956, 24
        %v1018 = vpop.permute.xlu0 %1017
        %1019 = vrot.lane.b32.xlu0 %v958, 24
        %v1020 = vpop.permute.xlu0 %1019
        %1021 = vrot.lane.b32.xlu0 %v960, 24
        %v1022 = vpop.permute.xlu0 %1021
        %1023 = vrot.lane.b32.xlu0 %v962, 24
        %v1024 = vpop.permute.xlu0 %1023
        %1025 = vrot.lane.b32.xlu0 %v964, 24
        %v1026 = vpop.permute.xlu0 %1025
        %1027 = vrot.lane.b32.xlu0 %v966, 24
        %v1028 = vpop.permute.xlu0 %1027
        %1029 = vrot.lane.b32.xlu0 %v968, 24
        %v1030 = vpop.permute.xlu0 %1029
        %1031 = vrot.lane.b32.xlu0 %v970, 24
        %v1032 = vpop.permute.xlu0 %1031
        %1033 = vrot.lane.b32.xlu0 %v972, 24
        %v1034 = vpop.permute.xlu0 %1033
        %1035 = vrot.lane.b32.xlu0 %v974, 24
        %v1036 = vpop.permute.xlu0 %1035
        %1037 = vrot.lane.b32.xlu0 %v976, 24
        %v1038 = vpop.permute.xlu0 %1037
        %1039 = vrot.lane.b32.xlu0 %v978, 24
        %v1040 = vpop.permute.xlu0 %1039
        %1041 = vrot.lane.b32.xlu0 %v980, 24
        %v1042 = vpop.permute.xlu0 %1041
        %1043 = vrot.lane.b32.xlu0 %v982, 24
        %v1044 = vpop.permute.xlu0 %1043
        %1045 = vrot.lane.b32.xlu0 %v984, 24
        %v1046 = vpop.permute.xlu0 %1045
        %1047 = vrot.lane.b32.xlu0 %v986, 24
        %v1048 = vpop.permute.xlu0 %1047
        %1049 = vrot.lane.b32.xlu0 %v988, 24
        %v1050 = vpop.permute.xlu0 %1049
        %1051 = vrot.lane.b32.xlu0 %v990, 24
        %v1052 = vpop.permute.xlu0 %1051
        %1053 = vrot.lane.b32.xlu0 %v992, 24
        %v1054 = vpop.permute.xlu0 %1053
        %1055 = vrot.lane.b32.xlu0 %v991, 24
        %v1056 = vpop.permute.xlu0 %1055
        %vm1089 = vcmask 1043456
        %v1090 = vrot.slane %v543, 4
        %v1091 = vrot.slane %v544, 4
        %v1092 = vsel %vm1089, %v1090, %v1091
        %v1093 = vrot.slane %v545, 4
        %v1094 = vsel %vm1089, %v1091, %v1093
        %v1095 = vrot.slane %v546, 4
        %v1096 = vsel %vm1089, %v1093, %v1095
        %v1097 = vrot.slane %v547, 4
        %v1098 = vsel %vm1089, %v1095, %v1097
        %v1099 = vrot.slane %v548, 4
        %v1100 = vsel %vm1089, %v1097, %v1099
        %v1101 = vrot.slane %v549, 4
        %v1102 = vsel %vm1089, %v1099, %v1101
        %v1103 = vrot.slane %v550, 4
        %v1104 = vsel %vm1089, %v1101, %v1103
        %v1105 = vrot.slane %v551, 4
        %v1106 = vsel %vm1089, %v1103, %v1105
        %v1107 = vrot.slane %v552, 4
        %v1108 = vsel %vm1089, %v1105, %v1107
        %v1109 = vrot.slane %v553, 4
        %v1110 = vsel %vm1089, %v1107, %v1109
        %v1111 = vrot.slane %v554, 4
        %v1112 = vsel %vm1089, %v1109, %v1111
        %v1113 = vrot.slane %v555, 4
        %v1114 = vsel %vm1089, %v1111, %v1113
        %v1115 = vrot.slane %v556, 4
        %v1116 = vsel %vm1089, %v1113, %v1115
        %v1117 = vrot.slane %v557, 4
        %v1118 = vsel %vm1089, %v1115, %v1117
        %v1119 = vrot.slane %v558, 4
        %v1120 = vsel %vm1089, %v1117, %v1119
        %v1121 = vrot.slane %v559, 4
        %v1122 = vsel %vm1089, %v1119, %v1121
        %v1123 = vrot.slane %v560, 4
        %v1124 = vsel %vm1089, %v1121, %v1123
        %v1125 = vrot.slane %v561, 4
        %v1126 = vsel %vm1089, %v1123, %v1125
        %v1127 = vrot.slane %v562, 4
        %v1128 = vsel %vm1089, %v1125, %v1127
        %v1129 = vrot.slane %v563, 4
        %v1130 = vsel %vm1089, %v1127, %v1129
        %v1131 = vrot.slane %v564, 4
        %v1132 = vsel %vm1089, %v1129, %v1131
        %v1133 = vrot.slane %v565, 4
        %v1134 = vsel %vm1089, %v1131, %v1133
        %v1135 = vrot.slane %v566, 4
        %v1136 = vsel %vm1089, %v1133, %v1135
        %v1137 = vrot.slane %v567, 4
        %v1138 = vsel %vm1089, %v1135, %v1137
        %v1139 = vrot.slane %v568, 4
        %v1140 = vsel %vm1089, %v1137, %v1139
        %v1141 = vrot.slane %v569, 4
        %v1142 = vsel %vm1089, %v1139, %v1141
        %v1143 = vrot.slane %v570, 4
        %v1144 = vsel %vm1089, %v1141, %v1143
        %v1145 = vrot.slane %v571, 4
        %v1146 = vsel %vm1089, %v1143, %v1145
        %v1147 = vrot.slane %v572, 4
        %v1148 = vsel %vm1089, %v1145, %v1147
        %v1149 = vrot.slane %v573, 4
        %v1150 = vsel %vm1089, %v1147, %v1149
        %v1151 = vrot.slane %v574, 4
        %v1152 = vsel %vm1089, %v1149, %v1151
        %1153 = vrot.lane.b32.xlu0 %v1092, 32
        %v1154 = vpop.permute.xlu0 %1153
        %1155 = vrot.lane.b32.xlu0 %v1094, 32
        %v1156 = vpop.permute.xlu0 %1155
        %1157 = vrot.lane.b32.xlu0 %v1096, 32
        %v1158 = vpop.permute.xlu0 %1157
        %1159 = vrot.lane.b32.xlu0 %v1098, 32
        %v1160 = vpop.permute.xlu0 %1159
        %1161 = vrot.lane.b32.xlu0 %v1100, 32
        %v1162 = vpop.permute.xlu0 %1161
        %1163 = vrot.lane.b32.xlu0 %v1102, 32
        %v1164 = vpop.permute.xlu0 %1163
        %1165 = vrot.lane.b32.xlu0 %v1104, 32
        %v1166 = vpop.permute.xlu0 %1165
        %1167 = vrot.lane.b32.xlu0 %v1106, 32
        %v1168 = vpop.permute.xlu0 %1167
        %1169 = vrot.lane.b32.xlu0 %v1108, 32
        %v1170 = vpop.permute.xlu0 %1169
        %1171 = vrot.lane.b32.xlu0 %v1110, 32
        %v1172 = vpop.permute.xlu0 %1171
        %1173 = vrot.lane.b32.xlu0 %v1112, 32
        %v1174 = vpop.permute.xlu0 %1173
        %1175 = vrot.lane.b32.xlu0 %v1114, 32
        %v1176 = vpop.permute.xlu0 %1175
        %1177 = vrot.lane.b32.xlu0 %v1116, 32
        %v1178 = vpop.permute.xlu0 %1177
        %1179 = vrot.lane.b32.xlu0 %v1118, 32
        %v1180 = vpop.permute.xlu0 %1179
        %1181 = vrot.lane.b32.xlu0 %v1120, 32
        %v1182 = vpop.permute.xlu0 %1181
        %1183 = vrot.lane.b32.xlu0 %v1122, 32
        %v1184 = vpop.permute.xlu0 %1183
        %1185 = vrot.lane.b32.xlu0 %v1124, 32
        %v1186 = vpop.permute.xlu0 %1185
        %1187 = vrot.lane.b32.xlu0 %v1126, 32
        %v1188 = vpop.permute.xlu0 %1187
        %1189 = vrot.lane.b32.xlu0 %v1128, 32
        %v1190 = vpop.permute.xlu0 %1189
        %1191 = vrot.lane.b32.xlu0 %v1130, 32
        %v1192 = vpop.permute.xlu0 %1191
        %1193 = vrot.lane.b32.xlu0 %v1132, 32
        %v1194 = vpop.permute.xlu0 %1193
        %1195 = vrot.lane.b32.xlu0 %v1134, 32
        %v1196 = vpop.permute.xlu0 %1195
        %1197 = vrot.lane.b32.xlu0 %v1136, 32
        %v1198 = vpop.permute.xlu0 %1197
        %1199 = vrot.lane.b32.xlu0 %v1138, 32
        %v1200 = vpop.permute.xlu0 %1199
        %1201 = vrot.lane.b32.xlu0 %v1140, 32
        %v1202 = vpop.permute.xlu0 %1201
        %1203 = vrot.lane.b32.xlu0 %v1142, 32
        %v1204 = vpop.permute.xlu0 %1203
        %1205 = vrot.lane.b32.xlu0 %v1144, 32
        %v1206 = vpop.permute.xlu0 %1205
        %1207 = vrot.lane.b32.xlu0 %v1146, 32
        %v1208 = vpop.permute.xlu0 %1207
        %1209 = vrot.lane.b32.xlu0 %v1148, 32
        %v1210 = vpop.permute.xlu0 %1209
        %1211 = vrot.lane.b32.xlu0 %v1150, 32
        %v1212 = vpop.permute.xlu0 %1211
        %1213 = vrot.lane.b32.xlu0 %v1152, 32
        %v1214 = vpop.permute.xlu0 %1213
        %1215 = vrot.lane.b32.xlu0 %v1151, 32
        %v1216 = vpop.permute.xlu0 %1215
        %vm1249 = vcmask 1042432
        %v1250 = vrot.slane %v543, 5
        %v1251 = vrot.slane %v544, 5
        %v1252 = vsel %vm1249, %v1250, %v1251
        %v1253 = vrot.slane %v545, 5
        %v1254 = vsel %vm1249, %v1251, %v1253
        %v1255 = vrot.slane %v546, 5
        %v1256 = vsel %vm1249, %v1253, %v1255
        %v1257 = vrot.slane %v547, 5
        %v1258 = vsel %vm1249, %v1255, %v1257
        %v1259 = vrot.slane %v548, 5
        %v1260 = vsel %vm1249, %v1257, %v1259
        %v1261 = vrot.slane %v549, 5
        %v1262 = vsel %vm1249, %v1259, %v1261
        %v1263 = vrot.slane %v550, 5
        %v1264 = vsel %vm1249, %v1261, %v1263
        %v1265 = vrot.slane %v551, 5
        %v1266 = vsel %vm1249, %v1263, %v1265
        %v1267 = vrot.slane %v552, 5
        %v1268 = vsel %vm1249, %v1265, %v1267
        %v1269 = vrot.slane %v553, 5
        %v1270 = vsel %vm1249, %v1267, %v1269
        %v1271 = vrot.slane %v554, 5
        %v1272 = vsel %vm1249, %v1269, %v1271
        %v1273 = vrot.slane %v555, 5
        %v1274 = vsel %vm1249, %v1271, %v1273
        %v1275 = vrot.slane %v556, 5
        %v1276 = vsel %vm1249, %v1273, %v1275
        %v1277 = vrot.slane %v557, 5
        %v1278 = vsel %vm1249, %v1275, %v1277
        %v1279 = vrot.slane %v558, 5
        %v1280 = vsel %vm1249, %v1277, %v1279
        %v1281 = vrot.slane %v559, 5
        %v1282 = vsel %vm1249, %v1279, %v1281
        %v1283 = vrot.slane %v560, 5
        %v1284 = vsel %vm1249, %v1281, %v1283
        %v1285 = vrot.slane %v561, 5
        %v1286 = vsel %vm1249, %v1283, %v1285
        %v1287 = vrot.slane %v562, 5
        %v1288 = vsel %vm1249, %v1285, %v1287
        %v1289 = vrot.slane %v563, 5
        %v1290 = vsel %vm1249, %v1287, %v1289
        %v1291 = vrot.slane %v564, 5
        %v1292 = vsel %vm1249, %v1289, %v1291
        %v1293 = vrot.slane %v565, 5
        %v1294 = vsel %vm1249, %v1291, %v1293
        %v1295 = vrot.slane %v566, 5
        %v1296 = vsel %vm1249, %v1293, %v1295
        %v1297 = vrot.slane %v567, 5
        %v1298 = vsel %vm1249, %v1295, %v1297
        %v1299 = vrot.slane %v568, 5
        %v1300 = vsel %vm1249, %v1297, %v1299
        %v1301 = vrot.slane %v569, 5
        %v1302 = vsel %vm1249, %v1299, %v1301
        %v1303 = vrot.slane %v570, 5
        %v1304 = vsel %vm1249, %v1301, %v1303
        %v1305 = vrot.slane %v571, 5
        %v1306 = vsel %vm1249, %v1303, %v1305
        %v1307 = vrot.slane %v572, 5
        %v1308 = vsel %vm1249, %v1305, %v1307
        %v1309 = vrot.slane %v573, 5
        %v1310 = vsel %vm1249, %v1307, %v1309
        %v1311 = vrot.slane %v574, 5
        %v1312 = vsel %vm1249, %v1309, %v1311
        %1313 = vrot.lane.b32.xlu0 %v1252, 40
        %v1314 = vpop.permute.xlu0 %1313
        %1315 = vrot.lane.b32.xlu0 %v1254, 40
        %v1316 = vpop.permute.xlu0 %1315
        %1317 = vrot.lane.b32.xlu0 %v1256, 40
        %v1318 = vpop.permute.xlu0 %1317
        %1319 = vrot.lane.b32.xlu0 %v1258, 40
        %v1320 = vpop.permute.xlu0 %1319
        %1321 = vrot.lane.b32.xlu0 %v1260, 40
        %v1322 = vpop.permute.xlu0 %1321
        %1323 = vrot.lane.b32.xlu0 %v1262, 40
        %v1324 = vpop.permute.xlu0 %1323
        %1325 = vrot.lane.b32.xlu0 %v1264, 40
        %v1326 = vpop.permute.xlu0 %1325
        %1327 = vrot.lane.b32.xlu0 %v1266, 40
        %v1328 = vpop.permute.xlu0 %1327
        %1329 = vrot.lane.b32.xlu0 %v1268, 40
        %v1330 = vpop.permute.xlu0 %1329
        %1331 = vrot.lane.b32.xlu0 %v1270, 40
        %v1332 = vpop.permute.xlu0 %1331
        %1333 = vrot.lane.b32.xlu0 %v1272, 40
        %v1334 = vpop.permute.xlu0 %1333
        %1335 = vrot.lane.b32.xlu0 %v1274, 40
        %v1336 = vpop.permute.xlu0 %1335
        %1337 = vrot.lane.b32.xlu0 %v1276, 40
        %v1338 = vpop.permute.xlu0 %1337
        %1339 = vrot.lane.b32.xlu0 %v1278, 40
        %v1340 = vpop.permute.xlu0 %1339
        %1341 = vrot.lane.b32.xlu0 %v1280, 40
        %v1342 = vpop.permute.xlu0 %1341
        %1343 = vrot.lane.b32.xlu0 %v1282, 40
        %v1344 = vpop.permute.xlu0 %1343
        %1345 = vrot.lane.b32.xlu0 %v1284, 40
        %v1346 = vpop.permute.xlu0 %1345
        %1347 = vrot.lane.b32.xlu0 %v1286, 40
        %v1348 = vpop.permute.xlu0 %1347
        %1349 = vrot.lane.b32.xlu0 %v1288, 40
        %v1350 = vpop.permute.xlu0 %1349
        %1351 = vrot.lane.b32.xlu0 %v1290, 40
        %v1352 = vpop.permute.xlu0 %1351
        %1353 = vrot.lane.b32.xlu0 %v1292, 40
        %v1354 = vpop.permute.xlu0 %1353
        %1355 = vrot.lane.b32.xlu0 %v1294, 40
        %v1356 = vpop.permute.xlu0 %1355
        %1357 = vrot.lane.b32.xlu0 %v1296, 40
        %v1358 = vpop.permute.xlu0 %1357
        %1359 = vrot.lane.b32.xlu0 %v1298, 40
        %v1360 = vpop.permute.xlu0 %1359
        %1361 = vrot.lane.b32.xlu0 %v1300, 40
        %v1362 = vpop.permute.xlu0 %1361
        %1363 = vrot.lane.b32.xlu0 %v1302, 40
        %v1364 = vpop.permute.xlu0 %1363
        %1365 = vrot.lane.b32.xlu0 %v1304, 40
        %v1366 = vpop.permute.xlu0 %1365
        %1367 = vrot.lane.b32.xlu0 %v1306, 40
        %v1368 = vpop.permute.xlu0 %1367
        %1369 = vrot.lane.b32.xlu0 %v1308, 40
        %v1370 = vpop.permute.xlu0 %1369
        %1371 = vrot.lane.b32.xlu0 %v1310, 40
        %v1372 = vpop.permute.xlu0 %1371
        %1373 = vrot.lane.b32.xlu0 %v1312, 40
        %v1374 = vpop.permute.xlu0 %1373
        %1375 = vrot.lane.b32.xlu0 %v1311, 40
        %v1376 = vpop.permute.xlu0 %1375
        %vm1409 = vcmask 1041408
        %v1410 = vrot.slane %v543, 6
        %v1411 = vrot.slane %v544, 6
        %v1412 = vsel %vm1409, %v1410, %v1411
        %v1413 = vrot.slane %v545, 6
        %v1414 = vsel %vm1409, %v1411, %v1413
        %v1415 = vrot.slane %v546, 6
        %v1416 = vsel %vm1409, %v1413, %v1415
        %v1417 = vrot.slane %v547, 6
        %v1418 = vsel %vm1409, %v1415, %v1417
        %v1419 = vrot.slane %v548, 6
        %v1420 = vsel %vm1409, %v1417, %v1419
        %v1421 = vrot.slane %v549, 6
        %v1422 = vsel %vm1409, %v1419, %v1421
        %v1423 = vrot.slane %v550, 6
        %v1424 = vsel %vm1409, %v1421, %v1423
        %v1425 = vrot.slane %v551, 6
        %v1426 = vsel %vm1409, %v1423, %v1425
        %v1427 = vrot.slane %v552, 6
        %v1428 = vsel %vm1409, %v1425, %v1427
        %v1429 = vrot.slane %v553, 6
        %v1430 = vsel %vm1409, %v1427, %v1429
        %v1431 = vrot.slane %v554, 6
        %v1432 = vsel %vm1409, %v1429, %v1431
        %v1433 = vrot.slane %v555, 6
        %v1434 = vsel %vm1409, %v1431, %v1433
        %v1435 = vrot.slane %v556, 6
        %v1436 = vsel %vm1409, %v1433, %v1435
        %v1437 = vrot.slane %v557, 6
        %v1438 = vsel %vm1409, %v1435, %v1437
        %v1439 = vrot.slane %v558, 6
        %v1440 = vsel %vm1409, %v1437, %v1439
        %v1441 = vrot.slane %v559, 6
        %v1442 = vsel %vm1409, %v1439, %v1441
        %v1443 = vrot.slane %v560, 6
        %v1444 = vsel %vm1409, %v1441, %v1443
        %v1445 = vrot.slane %v561, 6
        %v1446 = vsel %vm1409, %v1443, %v1445
        %v1447 = vrot.slane %v562, 6
        %v1448 = vsel %vm1409, %v1445, %v1447
        %v1449 = vrot.slane %v563, 6
        %v1450 = vsel %vm1409, %v1447, %v1449
        %v1451 = vrot.slane %v564, 6
        %v1452 = vsel %vm1409, %v1449, %v1451
        %v1453 = vrot.slane %v565, 6
        %v1454 = vsel %vm1409, %v1451, %v1453
        %v1455 = vrot.slane %v566, 6
        %v1456 = vsel %vm1409, %v1453, %v1455
        %v1457 = vrot.slane %v567, 6
        %v1458 = vsel %vm1409, %v1455, %v1457
        %v1459 = vrot.slane %v568, 6
        %v1460 = vsel %vm1409, %v1457, %v1459
        %v1461 = vrot.slane %v569, 6
        %v1462 = vsel %vm1409, %v1459, %v1461
        %v1463 = vrot.slane %v570, 6
        %v1464 = vsel %vm1409, %v1461, %v1463
        %v1465 = vrot.slane %v571, 6
        %v1466 = vsel %vm1409, %v1463, %v1465
        %v1467 = vrot.slane %v572, 6
        %v1468 = vsel %vm1409, %v1465, %v1467
        %v1469 = vrot.slane %v573, 6
        %v1470 = vsel %vm1409, %v1467, %v1469
        %v1471 = vrot.slane %v574, 6
        %v1472 = vsel %vm1409, %v1469, %v1471
        %1473 = vrot.lane.b32.xlu0 %v1412, 48
        %v1474 = vpop.permute.xlu0 %1473
        %1475 = vrot.lane.b32.xlu0 %v1414, 48
        %v1476 = vpop.permute.xlu0 %1475
        %1477 = vrot.lane.b32.xlu0 %v1416, 48
        %v1478 = vpop.permute.xlu0 %1477
        %1479 = vrot.lane.b32.xlu0 %v1418, 48
        %v1480 = vpop.permute.xlu0 %1479
        %1481 = vrot.lane.b32.xlu0 %v1420, 48
        %v1482 = vpop.permute.xlu0 %1481
        %1483 = vrot.lane.b32.xlu0 %v1422, 48
        %v1484 = vpop.permute.xlu0 %1483
        %1485 = vrot.lane.b32.xlu0 %v1424, 48
        %v1486 = vpop.permute.xlu0 %1485
        %1487 = vrot.lane.b32.xlu0 %v1426, 48
        %v1488 = vpop.permute.xlu0 %1487
        %1489 = vrot.lane.b32.xlu0 %v1428, 48
        %v1490 = vpop.permute.xlu0 %1489
        %1491 = vrot.lane.b32.xlu0 %v1430, 48
        %v1492 = vpop.permute.xlu0 %1491
        %1493 = vrot.lane.b32.xlu0 %v1432, 48
        %v1494 = vpop.permute.xlu0 %1493
        %1495 = vrot.lane.b32.xlu0 %v1434, 48
        %v1496 = vpop.permute.xlu0 %1495
        %1497 = vrot.lane.b32.xlu0 %v1436, 48
        %v1498 = vpop.permute.xlu0 %1497
        %1499 = vrot.lane.b32.xlu0 %v1438, 48
        %v1500 = vpop.permute.xlu0 %1499
        %1501 = vrot.lane.b32.xlu0 %v1440, 48
        %v1502 = vpop.permute.xlu0 %1501
        %1503 = vrot.lane.b32.xlu0 %v1442, 48
        %v1504 = vpop.permute.xlu0 %1503
        %1505 = vrot.lane.b32.xlu0 %v1444, 48
        %v1506 = vpop.permute.xlu0 %1505
        %1507 = vrot.lane.b32.xlu0 %v1446, 48
        %v1508 = vpop.permute.xlu0 %1507
        %1509 = vrot.lane.b32.xlu0 %v1448, 48
        %v1510 = vpop.permute.xlu0 %1509
        %1511 = vrot.lane.b32.xlu0 %v1450, 48
        %v1512 = vpop.permute.xlu0 %1511
        %1513 = vrot.lane.b32.xlu0 %v1452, 48
        %v1514 = vpop.permute.xlu0 %1513
        %1515 = vrot.lane.b32.xlu0 %v1454, 48
        %v1516 = vpop.permute.xlu0 %1515
        %1517 = vrot.lane.b32.xlu0 %v1456, 48
        %v1518 = vpop.permute.xlu0 %1517
        %1519 = vrot.lane.b32.xlu0 %v1458, 48
        %v1520 = vpop.permute.xlu0 %1519
        %1521 = vrot.lane.b32.xlu0 %v1460, 48
        %v1522 = vpop.permute.xlu0 %1521
        %1523 = vrot.lane.b32.xlu0 %v1462, 48
        %v1524 = vpop.permute.xlu0 %1523
        %1525 = vrot.lane.b32.xlu0 %v1464, 48
        %v1526 = vpop.permute.xlu0 %1525
        %1527 = vrot.lane.b32.xlu0 %v1466, 48
        %v1528 = vpop.permute.xlu0 %1527
        %1529 = vrot.lane.b32.xlu0 %v1468, 48
        %v1530 = vpop.permute.xlu0 %1529
        %1531 = vrot.lane.b32.xlu0 %v1470, 48
        %v1532 = vpop.permute.xlu0 %1531
        %1533 = vrot.lane.b32.xlu0 %v1472, 48
        %v1534 = vpop.permute.xlu0 %1533
        %1535 = vrot.lane.b32.xlu0 %v1471, 48
        %v1536 = vpop.permute.xlu0 %1535
        %vm1570 = vcmask 1040384
        %v1571 = vrot.slane %v543, 7
        %v1572 = vrot.slane %v544, 7
        %v1573 = vsel %vm1570, %v1571, %v1572
        %v1574 = vrot.slane %v545, 7
        %v1575 = vsel %vm1570, %v1572, %v1574
        %v1576 = vrot.slane %v546, 7
        %v1577 = vsel %vm1570, %v1574, %v1576
        %v1578 = vrot.slane %v547, 7
        %v1579 = vsel %vm1570, %v1576, %v1578
        %v1580 = vrot.slane %v548, 7
        %v1581 = vsel %vm1570, %v1578, %v1580
        %v1582 = vrot.slane %v549, 7
        %v1583 = vsel %vm1570, %v1580, %v1582
        %v1584 = vrot.slane %v550, 7
        %v1585 = vsel %vm1570, %v1582, %v1584
        %v1586 = vrot.slane %v551, 7
        %v1587 = vsel %vm1570, %v1584, %v1586
        %v1588 = vrot.slane %v552, 7
        %v1589 = vsel %vm1570, %v1586, %v1588
        %v1590 = vrot.slane %v553, 7
        %v1591 = vsel %vm1570, %v1588, %v1590
        %v1592 = vrot.slane %v554, 7
        %v1593 = vsel %vm1570, %v1590, %v1592
        %v1594 = vrot.slane %v555, 7
        %v1595 = vsel %vm1570, %v1592, %v1594
        %v1596 = vrot.slane %v556, 7
        %v1597 = vsel %vm1570, %v1594, %v1596
        %v1598 = vrot.slane %v557, 7
        %v1599 = vsel %vm1570, %v1596, %v1598
        %v1600 = vrot.slane %v558, 7
        %v1601 = vsel %vm1570, %v1598, %v1600
        %v1602 = vrot.slane %v559, 7
        %v1603 = vsel %vm1570, %v1600, %v1602
        %v1604 = vrot.slane %v560, 7
        %v1605 = vsel %vm1570, %v1602, %v1604
        %v1606 = vrot.slane %v561, 7
        %v1607 = vsel %vm1570, %v1604, %v1606
        %v1608 = vrot.slane %v562, 7
        %v1609 = vsel %vm1570, %v1606, %v1608
        %v1610 = vrot.slane %v563, 7
        %v1611 = vsel %vm1570, %v1608, %v1610
        %v1612 = vrot.slane %v564, 7
        %v1613 = vsel %vm1570, %v1610, %v1612
        %v1614 = vrot.slane %v565, 7
        %v1615 = vsel %vm1570, %v1612, %v1614
        %v1616 = vrot.slane %v566, 7
        %v1617 = vsel %vm1570, %v1614, %v1616
        %v1618 = vrot.slane %v567, 7
        %v1619 = vsel %vm1570, %v1616, %v1618
        %v1620 = vrot.slane %v568, 7
        %v1621 = vsel %vm1570, %v1618, %v1620
        %v1622 = vrot.slane %v569, 7
        %v1623 = vsel %vm1570, %v1620, %v1622
        %v1624 = vrot.slane %v570, 7
        %v1625 = vsel %vm1570, %v1622, %v1624
        %v1626 = vrot.slane %v571, 7
        %v1627 = vsel %vm1570, %v1624, %v1626
        %v1628 = vrot.slane %v572, 7
        %v1629 = vsel %vm1570, %v1626, %v1628
        %v1630 = vrot.slane %v573, 7
        %v1631 = vsel %vm1570, %v1628, %v1630
        %v1632 = vrot.slane %v574, 7
        %v1633 = vsel %vm1570, %v1630, %v1632
        %v1634 = vrot.slane %v575, 7
        %v1635 = vsel %vm1570, %v1632, %v1634
        %1636 = vrot.lane.b32.xlu0 %v1573, 56
        %v1637 = vpop.permute.xlu0 %1636
        %1638 = vrot.lane.b32.xlu0 %v1575, 56
        %v1639 = vpop.permute.xlu0 %1638
        %1640 = vrot.lane.b32.xlu0 %v1577, 56
        %v1641 = vpop.permute.xlu0 %1640
        %1642 = vrot.lane.b32.xlu0 %v1579, 56
        %v1643 = vpop.permute.xlu0 %1642
        %1644 = vrot.lane.b32.xlu0 %v1581, 56
        %v1645 = vpop.permute.xlu0 %1644
        %1646 = vrot.lane.b32.xlu0 %v1583, 56
        %v1647 = vpop.permute.xlu0 %1646
        %1648 = vrot.lane.b32.xlu0 %v1585, 56
        %v1649 = vpop.permute.xlu0 %1648
        %1650 = vrot.lane.b32.xlu0 %v1587, 56
        %v1651 = vpop.permute.xlu0 %1650
        %1652 = vrot.lane.b32.xlu0 %v1589, 56
        %v1653 = vpop.permute.xlu0 %1652
        %1654 = vrot.lane.b32.xlu0 %v1591, 56
        %v1655 = vpop.permute.xlu0 %1654
        %1656 = vrot.lane.b32.xlu0 %v1593, 56
        %v1657 = vpop.permute.xlu0 %1656
        %1658 = vrot.lane.b32.xlu0 %v1595, 56
        %v1659 = vpop.permute.xlu0 %1658
        %1660 = vrot.lane.b32.xlu0 %v1597, 56
        %v1661 = vpop.permute.xlu0 %1660
        %1662 = vrot.lane.b32.xlu0 %v1599, 56
        %v1663 = vpop.permute.xlu0 %1662
        %1664 = vrot.lane.b32.xlu0 %v1601, 56
        %v1665 = vpop.permute.xlu0 %1664
        %1666 = vrot.lane.b32.xlu0 %v1603, 56
        %v1667 = vpop.permute.xlu0 %1666
        %1668 = vrot.lane.b32.xlu0 %v1605, 56
        %v1669 = vpop.permute.xlu0 %1668
        %1670 = vrot.lane.b32.xlu0 %v1607, 56
        %v1671 = vpop.permute.xlu0 %1670
        %1672 = vrot.lane.b32.xlu0 %v1609, 56
        %v1673 = vpop.permute.xlu0 %1672
        %1674 = vrot.lane.b32.xlu0 %v1611, 56
        %v1675 = vpop.permute.xlu0 %1674
        %1676 = vrot.lane.b32.xlu0 %v1613, 56
        %v1677 = vpop.permute.xlu0 %1676
        %1678 = vrot.lane.b32.xlu0 %v1615, 56
        %v1679 = vpop.permute.xlu0 %1678
        %1680 = vrot.lane.b32.xlu0 %v1617, 56
        %v1681 = vpop.permute.xlu0 %1680
        %1682 = vrot.lane.b32.xlu0 %v1619, 56
        %v1683 = vpop.permute.xlu0 %1682
        %1684 = vrot.lane.b32.xlu0 %v1621, 56
        %v1685 = vpop.permute.xlu0 %1684
        %1686 = vrot.lane.b32.xlu0 %v1623, 56
        %v1687 = vpop.permute.xlu0 %1686
        %1688 = vrot.lane.b32.xlu0 %v1625, 56
        %v1689 = vpop.permute.xlu0 %1688
        %1690 = vrot.lane.b32.xlu0 %v1627, 56
        %v1691 = vpop.permute.xlu0 %1690
        %1692 = vrot.lane.b32.xlu0 %v1629, 56
        %v1693 = vpop.permute.xlu0 %1692
        %1694 = vrot.lane.b32.xlu0 %v1631, 56
        %v1695 = vpop.permute.xlu0 %1694
        %1696 = vrot.lane.b32.xlu0 %v1633, 56
        %v1697 = vpop.permute.xlu0 %1696
        %1698 = vrot.lane.b32.xlu0 %v1635, 56
        %v1699 = vpop.permute.xlu0 %1698
        %1732 = vrot.lane.b32.xlu0 %v544, 64
        %v1733 = vpop.permute.xlu0 %1732
        %1734 = vrot.lane.b32.xlu0 %v545, 64
        %v1735 = vpop.permute.xlu0 %1734
        %1736 = vrot.lane.b32.xlu0 %v546, 64
        %v1737 = vpop.permute.xlu0 %1736
        %1738 = vrot.lane.b32.xlu0 %v547, 64
        %v1739 = vpop.permute.xlu0 %1738
        %1740 = vrot.lane.b32.xlu0 %v548, 64
        %v1741 = vpop.permute.xlu0 %1740
        %1742 = vrot.lane.b32.xlu0 %v549, 64
        %v1743 = vpop.permute.xlu0 %1742
        %1744 = vrot.lane.b32.xlu0 %v550, 64
        %v1745 = vpop.permute.xlu0 %1744
        %1746 = vrot.lane.b32.xlu0 %v551, 64
        %v1747 = vpop.permute.xlu0 %1746
        %1748 = vrot.lane.b32.xlu0 %v552, 64
        %v1749 = vpop.permute.xlu0 %1748
        %1750 = vrot.lane.b32.xlu0 %v553, 64
        %v1751 = vpop.permute.xlu0 %1750
        %1752 = vrot.lane.b32.xlu0 %v554, 64
        %v1753 = vpop.permute.xlu0 %1752
        %1754 = vrot.lane.b32.xlu0 %v555, 64
        %v1755 = vpop.permute.xlu0 %1754
        %1756 = vrot.lane.b32.xlu0 %v556, 64
        %v1757 = vpop.permute.xlu0 %1756
        %1758 = vrot.lane.b32.xlu0 %v557, 64
        %v1759 = vpop.permute.xlu0 %1758
        %1760 = vrot.lane.b32.xlu0 %v558, 64
        %v1761 = vpop.permute.xlu0 %1760
        %1762 = vrot.lane.b32.xlu0 %v559, 64
        %v1763 = vpop.permute.xlu0 %1762
        %1764 = vrot.lane.b32.xlu0 %v560, 64
        %v1765 = vpop.permute.xlu0 %1764
        %1766 = vrot.lane.b32.xlu0 %v561, 64
        %v1767 = vpop.permute.xlu0 %1766
        %1768 = vrot.lane.b32.xlu0 %v562, 64
        %v1769 = vpop.permute.xlu0 %1768
        %1770 = vrot.lane.b32.xlu0 %v563, 64
        %v1771 = vpop.permute.xlu0 %1770
        %1772 = vrot.lane.b32.xlu0 %v564, 64
        %v1773 = vpop.permute.xlu0 %1772
        %1774 = vrot.lane.b32.xlu0 %v565, 64
        %v1775 = vpop.permute.xlu0 %1774
        %1776 = vrot.lane.b32.xlu0 %v566, 64
        %v1777 = vpop.permute.xlu0 %1776
        %1778 = vrot.lane.b32.xlu0 %v567, 64
        %v1779 = vpop.permute.xlu0 %1778
        %1780 = vrot.lane.b32.xlu0 %v568, 64
        %v1781 = vpop.permute.xlu0 %1780
        %1782 = vrot.lane.b32.xlu0 %v569, 64
        %v1783 = vpop.permute.xlu0 %1782
        %1784 = vrot.lane.b32.xlu0 %v570, 64
        %v1785 = vpop.permute.xlu0 %1784
        %1786 = vrot.lane.b32.xlu0 %v571, 64
        %v1787 = vpop.permute.xlu0 %1786
        %1788 = vrot.lane.b32.xlu0 %v572, 64
        %v1789 = vpop.permute.xlu0 %1788
        %1790 = vrot.lane.b32.xlu0 %v573, 64
        %v1791 = vpop.permute.xlu0 %1790
        %1792 = vrot.lane.b32.xlu0 %v574, 64
        %v1793 = vpop.permute.xlu0 %1792
        %1794 = vrot.lane.b32.xlu0 %v575, 64
        %v1795 = vpop.permute.xlu0 %1794
        %v1828 = vrot.slane %v575, 1
        %v1829 = vsel %vm609, %v671, %v1828
        %1830 = vrot.lane.b32.xlu0 %v614, 72
        %v1831 = vpop.permute.xlu0 %1830
        %1832 = vrot.lane.b32.xlu0 %v616, 72
        %v1833 = vpop.permute.xlu0 %1832
        %1834 = vrot.lane.b32.xlu0 %v618, 72
        %v1835 = vpop.permute.xlu0 %1834
        %1836 = vrot.lane.b32.xlu0 %v620, 72
        %v1837 = vpop.permute.xlu0 %1836
        %1838 = vrot.lane.b32.xlu0 %v622, 72
        %v1839 = vpop.permute.xlu0 %1838
        %1840 = vrot.lane.b32.xlu0 %v624, 72
        %v1841 = vpop.permute.xlu0 %1840
        %1842 = vrot.lane.b32.xlu0 %v626, 72
        %v1843 = vpop.permute.xlu0 %1842
        %1844 = vrot.lane.b32.xlu0 %v628, 72
        %v1845 = vpop.permute.xlu0 %1844
        %1846 = vrot.lane.b32.xlu0 %v630, 72
        %v1847 = vpop.permute.xlu0 %1846
        %1848 = vrot.lane.b32.xlu0 %v632, 72
        %v1849 = vpop.permute.xlu0 %1848
        %1850 = vrot.lane.b32.xlu0 %v634, 72
        %v1851 = vpop.permute.xlu0 %1850
        %1852 = vrot.lane.b32.xlu0 %v636, 72
        %v1853 = vpop.permute.xlu0 %1852
        %1854 = vrot.lane.b32.xlu0 %v638, 72
        %v1855 = vpop.permute.xlu0 %1854
        %1856 = vrot.lane.b32.xlu0 %v640, 72
        %v1857 = vpop.permute.xlu0 %1856
        %1858 = vrot.lane.b32.xlu0 %v642, 72
        %v1859 = vpop.permute.xlu0 %1858
        %1860 = vrot.lane.b32.xlu0 %v644, 72
        %v1861 = vpop.permute.xlu0 %1860
        %1862 = vrot.lane.b32.xlu0 %v646, 72
        %v1863 = vpop.permute.xlu0 %1862
        %1864 = vrot.lane.b32.xlu0 %v648, 72
        %v1865 = vpop.permute.xlu0 %1864
        %1866 = vrot.lane.b32.xlu0 %v650, 72
        %v1867 = vpop.permute.xlu0 %1866
        %1868 = vrot.lane.b32.xlu0 %v652, 72
        %v1869 = vpop.permute.xlu0 %1868
        %1870 = vrot.lane.b32.xlu0 %v654, 72
        %v1871 = vpop.permute.xlu0 %1870
        %1872 = vrot.lane.b32.xlu0 %v656, 72
        %v1873 = vpop.permute.xlu0 %1872
        %1874 = vrot.lane.b32.xlu0 %v658, 72
        %v1875 = vpop.permute.xlu0 %1874
        %1876 = vrot.lane.b32.xlu0 %v660, 72
        %v1877 = vpop.permute.xlu0 %1876
        %1878 = vrot.lane.b32.xlu0 %v662, 72
        %v1879 = vpop.permute.xlu0 %1878
        %1880 = vrot.lane.b32.xlu0 %v664, 72
        %v1881 = vpop.permute.xlu0 %1880
        %1882 = vrot.lane.b32.xlu0 %v666, 72
        %v1883 = vpop.permute.xlu0 %1882
        %1884 = vrot.lane.b32.xlu0 %v668, 72
        %v1885 = vpop.permute.xlu0 %1884
        %1886 = vrot.lane.b32.xlu0 %v670, 72
        %v1887 = vpop.permute.xlu0 %1886
        %1888 = vrot.lane.b32.xlu0 %v672, 72
        %v1889 = vpop.permute.xlu0 %1888
        %1890 = vrot.lane.b32.xlu0 %v1829, 72
        %v1891 = vpop.permute.xlu0 %1890
        %1892 = vrot.lane.b32.xlu0 %v1828, 72
        %v1893 = vpop.permute.xlu0 %1892
        %v1926 = vrot.slane %v575, 2
        %v1927 = vsel %vm769, %v831, %v1926
        %1928 = vrot.lane.b32.xlu0 %v774, 80
        %v1929 = vpop.permute.xlu0 %1928
        %1930 = vrot.lane.b32.xlu0 %v776, 80
        %v1931 = vpop.permute.xlu0 %1930
        %1932 = vrot.lane.b32.xlu0 %v778, 80
        %v1933 = vpop.permute.xlu0 %1932
        %1934 = vrot.lane.b32.xlu0 %v780, 80
        %v1935 = vpop.permute.xlu0 %1934
        %1936 = vrot.lane.b32.xlu0 %v782, 80
        %v1937 = vpop.permute.xlu0 %1936
        %1938 = vrot.lane.b32.xlu0 %v784, 80
        %v1939 = vpop.permute.xlu0 %1938
        %1940 = vrot.lane.b32.xlu0 %v786, 80
        %v1941 = vpop.permute.xlu0 %1940
        %1942 = vrot.lane.b32.xlu0 %v788, 80
        %v1943 = vpop.permute.xlu0 %1942
        %1944 = vrot.lane.b32.xlu0 %v790, 80
        %v1945 = vpop.permute.xlu0 %1944
        %1946 = vrot.lane.b32.xlu0 %v792, 80
        %v1947 = vpop.permute.xlu0 %1946
        %1948 = vrot.lane.b32.xlu0 %v794, 80
        %v1949 = vpop.permute.xlu0 %1948
        %1950 = vrot.lane.b32.xlu0 %v796, 80
        %v1951 = vpop.permute.xlu0 %1950
        %1952 = vrot.lane.b32.xlu0 %v798, 80
        %v1953 = vpop.permute.xlu0 %1952
        %1954 = vrot.lane.b32.xlu0 %v800, 80
        %v1955 = vpop.permute.xlu0 %1954
        %1956 = vrot.lane.b32.xlu0 %v802, 80
        %v1957 = vpop.permute.xlu0 %1956
        %1958 = vrot.lane.b32.xlu0 %v804, 80
        %v1959 = vpop.permute.xlu0 %1958
        %1960 = vrot.lane.b32.xlu0 %v806, 80
        %v1961 = vpop.permute.xlu0 %1960
        %1962 = vrot.lane.b32.xlu0 %v808, 80
        %v1963 = vpop.permute.xlu0 %1962
        %1964 = vrot.lane.b32.xlu0 %v810, 80
        %v1965 = vpop.permute.xlu0 %1964
        %1966 = vrot.lane.b32.xlu0 %v812, 80
        %v1967 = vpop.permute.xlu0 %1966
        %1968 = vrot.lane.b32.xlu0 %v814, 80
        %v1969 = vpop.permute.xlu0 %1968
        %1970 = vrot.lane.b32.xlu0 %v816, 80
        %v1971 = vpop.permute.xlu0 %1970
        %1972 = vrot.lane.b32.xlu0 %v818, 80
        %v1973 = vpop.permute.xlu0 %1972
        %1974 = vrot.lane.b32.xlu0 %v820, 80
        %v1975 = vpop.permute.xlu0 %1974
        %1976 = vrot.lane.b32.xlu0 %v822, 80
        %v1977 = vpop.permute.xlu0 %1976
        %1978 = vrot.lane.b32.xlu0 %v824, 80
        %v1979 = vpop.permute.xlu0 %1978
        %1980 = vrot.lane.b32.xlu0 %v826, 80
        %v1981 = vpop.permute.xlu0 %1980
        %1982 = vrot.lane.b32.xlu0 %v828, 80
        %v1983 = vpop.permute.xlu0 %1982
        %1984 = vrot.lane.b32.xlu0 %v830, 80
        %v1985 = vpop.permute.xlu0 %1984
        %1986 = vrot.lane.b32.xlu0 %v832, 80
        %v1987 = vpop.permute.xlu0 %1986
        %1988 = vrot.lane.b32.xlu0 %v1927, 80
        %v1989 = vpop.permute.xlu0 %1988
        %1990 = vrot.lane.b32.xlu0 %v1926, 80
        %v1991 = vpop.permute.xlu0 %1990
        %v2024 = vrot.slane %v575, 3
        %v2025 = vsel %vm929, %v991, %v2024
        %2026 = vrot.lane.b32.xlu0 %v934, 88
        %v2027 = vpop.permute.xlu0 %2026
        %2028 = vrot.lane.b32.xlu0 %v936, 88
        %v2029 = vpop.permute.xlu0 %2028
        %2030 = vrot.lane.b32.xlu0 %v938, 88
        %v2031 = vpop.permute.xlu0 %2030
        %2032 = vrot.lane.b32.xlu0 %v940, 88
        %v2033 = vpop.permute.xlu0 %2032
        %2034 = vrot.lane.b32.xlu0 %v942, 88
        %v2035 = vpop.permute.xlu0 %2034
        %2036 = vrot.lane.b32.xlu0 %v944, 88
        %v2037 = vpop.permute.xlu0 %2036
        %2038 = vrot.lane.b32.xlu0 %v946, 88
        %v2039 = vpop.permute.xlu0 %2038
        %2040 = vrot.lane.b32.xlu0 %v948, 88
        %v2041 = vpop.permute.xlu0 %2040
        %2042 = vrot.lane.b32.xlu0 %v950, 88
        %v2043 = vpop.permute.xlu0 %2042
        %2044 = vrot.lane.b32.xlu0 %v952, 88
        %v2045 = vpop.permute.xlu0 %2044
        %2046 = vrot.lane.b32.xlu0 %v954, 88
        %v2047 = vpop.permute.xlu0 %2046
        %2048 = vrot.lane.b32.xlu0 %v956, 88
        %v2049 = vpop.permute.xlu0 %2048
        %2050 = vrot.lane.b32.xlu0 %v958, 88
        %v2051 = vpop.permute.xlu0 %2050
        %2052 = vrot.lane.b32.xlu0 %v960, 88
        %v2053 = vpop.permute.xlu0 %2052
        %2054 = vrot.lane.b32.xlu0 %v962, 88
        %v2055 = vpop.permute.xlu0 %2054
        %2056 = vrot.lane.b32.xlu0 %v964, 88
        %v2057 = vpop.permute.xlu0 %2056
        %2058 = vrot.lane.b32.xlu0 %v966, 88
        %v2059 = vpop.permute.xlu0 %2058
        %2060 = vrot.lane.b32.xlu0 %v968, 88
        %v2061 = vpop.permute.xlu0 %2060
        %2062 = vrot.lane.b32.xlu0 %v970, 88
        %v2063 = vpop.permute.xlu0 %2062
        %2064 = vrot.lane.b32.xlu0 %v972, 88
        %v2065 = vpop.permute.xlu0 %2064
        %2066 = vrot.lane.b32.xlu0 %v974, 88
        %v2067 = vpop.permute.xlu0 %2066
        %2068 = vrot.lane.b32.xlu0 %v976, 88
        %v2069 = vpop.permute.xlu0 %2068
        %2070 = vrot.lane.b32.xlu0 %v978, 88
        %v2071 = vpop.permute.xlu0 %2070
        %2072 = vrot.lane.b32.xlu0 %v980, 88
        %v2073 = vpop.permute.xlu0 %2072
        %2074 = vrot.lane.b32.xlu0 %v982, 88
        %v2075 = vpop.permute.xlu0 %2074
        %2076 = vrot.lane.b32.xlu0 %v984, 88
        %v2077 = vpop.permute.xlu0 %2076
        %2078 = vrot.lane.b32.xlu0 %v986, 88
        %v2079 = vpop.permute.xlu0 %2078
        %2080 = vrot.lane.b32.xlu0 %v988, 88
        %v2081 = vpop.permute.xlu0 %2080
        %2082 = vrot.lane.b32.xlu0 %v990, 88
        %v2083 = vpop.permute.xlu0 %2082
        %2084 = vrot.lane.b32.xlu0 %v992, 88
        %v2085 = vpop.permute.xlu0 %2084
        %2086 = vrot.lane.b32.xlu0 %v2025, 88
        %v2087 = vpop.permute.xlu0 %2086
        %2088 = vrot.lane.b32.xlu0 %v2024, 88
        %v2089 = vpop.permute.xlu0 %2088
        %v2122 = vrot.slane %v575, 4
        %v2123 = vsel %vm1089, %v1151, %v2122
        %2124 = vrot.lane.b32.xlu0 %v1094, 96
        %v2125 = vpop.permute.xlu0 %2124
        %2126 = vrot.lane.b32.xlu0 %v1096, 96
        %v2127 = vpop.permute.xlu0 %2126
        %2128 = vrot.lane.b32.xlu0 %v1098, 96
        %v2129 = vpop.permute.xlu0 %2128
        %2130 = vrot.lane.b32.xlu0 %v1100, 96
        %v2131 = vpop.permute.xlu0 %2130
        %2132 = vrot.lane.b32.xlu0 %v1102, 96
        %v2133 = vpop.permute.xlu0 %2132
        %2134 = vrot.lane.b32.xlu0 %v1104, 96
        %v2135 = vpop.permute.xlu0 %2134
        %2136 = vrot.lane.b32.xlu0 %v1106, 96
        %v2137 = vpop.permute.xlu0 %2136
        %2138 = vrot.lane.b32.xlu0 %v1108, 96
        %v2139 = vpop.permute.xlu0 %2138
        %2140 = vrot.lane.b32.xlu0 %v1110, 96
        %v2141 = vpop.permute.xlu0 %2140
        %2142 = vrot.lane.b32.xlu0 %v1112, 96
        %v2143 = vpop.permute.xlu0 %2142
        %2144 = vrot.lane.b32.xlu0 %v1114, 96
        %v2145 = vpop.permute.xlu0 %2144
        %2146 = vrot.lane.b32.xlu0 %v1116, 96
        %v2147 = vpop.permute.xlu0 %2146
        %2148 = vrot.lane.b32.xlu0 %v1118, 96
        %v2149 = vpop.permute.xlu0 %2148
        %2150 = vrot.lane.b32.xlu0 %v1120, 96
        %v2151 = vpop.permute.xlu0 %2150
        %2152 = vrot.lane.b32.xlu0 %v1122, 96
        %v2153 = vpop.permute.xlu0 %2152
        %2154 = vrot.lane.b32.xlu0 %v1124, 96
        %v2155 = vpop.permute.xlu0 %2154
        %2156 = vrot.lane.b32.xlu0 %v1126, 96
        %v2157 = vpop.permute.xlu0 %2156
        %2158 = vrot.lane.b32.xlu0 %v1128, 96
        %v2159 = vpop.permute.xlu0 %2158
        %2160 = vrot.lane.b32.xlu0 %v1130, 96
        %v2161 = vpop.permute.xlu0 %2160
        %2162 = vrot.lane.b32.xlu0 %v1132, 96
        %v2163 = vpop.permute.xlu0 %2162
        %2164 = vrot.lane.b32.xlu0 %v1134, 96
        %v2165 = vpop.permute.xlu0 %2164
        %2166 = vrot.lane.b32.xlu0 %v1136, 96
        %v2167 = vpop.permute.xlu0 %2166
        %2168 = vrot.lane.b32.xlu0 %v1138, 96
        %v2169 = vpop.permute.xlu0 %2168
        %2170 = vrot.lane.b32.xlu0 %v1140, 96
        %v2171 = vpop.permute.xlu0 %2170
        %2172 = vrot.lane.b32.xlu0 %v1142, 96
        %v2173 = vpop.permute.xlu0 %2172
        %2174 = vrot.lane.b32.xlu0 %v1144, 96
        %v2175 = vpop.permute.xlu0 %2174
        %2176 = vrot.lane.b32.xlu0 %v1146, 96
        %v2177 = vpop.permute.xlu0 %2176
        %2178 = vrot.lane.b32.xlu0 %v1148, 96
        %v2179 = vpop.permute.xlu0 %2178
        %2180 = vrot.lane.b32.xlu0 %v1150, 96
        %v2181 = vpop.permute.xlu0 %2180
        %2182 = vrot.lane.b32.xlu0 %v1152, 96
        %v2183 = vpop.permute.xlu0 %2182
        %2184 = vrot.lane.b32.xlu0 %v2123, 96
        %v2185 = vpop.permute.xlu0 %2184
        %2186 = vrot.lane.b32.xlu0 %v2122, 96
        %v2187 = vpop.permute.xlu0 %2186
        %v2220 = vrot.slane %v575, 5
        %v2221 = vsel %vm1249, %v1311, %v2220
        %2222 = vrot.lane.b32.xlu0 %v1254, 104
        %v2223 = vpop.permute.xlu0 %2222
        %2224 = vrot.lane.b32.xlu0 %v1256, 104
        %v2225 = vpop.permute.xlu0 %2224
        %2226 = vrot.lane.b32.xlu0 %v1258, 104
        %v2227 = vpop.permute.xlu0 %2226
        %2228 = vrot.lane.b32.xlu0 %v1260, 104
        %v2229 = vpop.permute.xlu0 %2228
        %2230 = vrot.lane.b32.xlu0 %v1262, 104
        %v2231 = vpop.permute.xlu0 %2230
        %2232 = vrot.lane.b32.xlu0 %v1264, 104
        %v2233 = vpop.permute.xlu0 %2232
        %2234 = vrot.lane.b32.xlu0 %v1266, 104
        %v2235 = vpop.permute.xlu0 %2234
        %2236 = vrot.lane.b32.xlu0 %v1268, 104
        %v2237 = vpop.permute.xlu0 %2236
        %2238 = vrot.lane.b32.xlu0 %v1270, 104
        %v2239 = vpop.permute.xlu0 %2238
        %2240 = vrot.lane.b32.xlu0 %v1272, 104
        %v2241 = vpop.permute.xlu0 %2240
        %2242 = vrot.lane.b32.xlu0 %v1274, 104
        %v2243 = vpop.permute.xlu0 %2242
        %2244 = vrot.lane.b32.xlu0 %v1276, 104
        %v2245 = vpop.permute.xlu0 %2244
        %2246 = vrot.lane.b32.xlu0 %v1278, 104
        %v2247 = vpop.permute.xlu0 %2246
        %2248 = vrot.lane.b32.xlu0 %v1280, 104
        %v2249 = vpop.permute.xlu0 %2248
        %2250 = vrot.lane.b32.xlu0 %v1282, 104
        %v2251 = vpop.permute.xlu0 %2250
        %2252 = vrot.lane.b32.xlu0 %v1284, 104
        %v2253 = vpop.permute.xlu0 %2252
        %2254 = vrot.lane.b32.xlu0 %v1286, 104
        %v2255 = vpop.permute.xlu0 %2254
        %2256 = vrot.lane.b32.xlu0 %v1288, 104
        %v2257 = vpop.permute.xlu0 %2256
        %2258 = vrot.lane.b32.xlu0 %v1290, 104
        %v2259 = vpop.permute.xlu0 %2258
        %2260 = vrot.lane.b32.xlu0 %v1292, 104
        %v2261 = vpop.permute.xlu0 %2260
        %2262 = vrot.lane.b32.xlu0 %v1294, 104
        %v2263 = vpop.permute.xlu0 %2262
        %2264 = vrot.lane.b32.xlu0 %v1296, 104
        %v2265 = vpop.permute.xlu0 %2264
        %2266 = vrot.lane.b32.xlu0 %v1298, 104
        %v2267 = vpop.permute.xlu0 %2266
        %2268 = vrot.lane.b32.xlu0 %v1300, 104
        %v2269 = vpop.permute.xlu0 %2268
        %2270 = vrot.lane.b32.xlu0 %v1302, 104
        %v2271 = vpop.permute.xlu0 %2270
        %2272 = vrot.lane.b32.xlu0 %v1304, 104
        %v2273 = vpop.permute.xlu0 %2272
        %2274 = vrot.lane.b32.xlu0 %v1306, 104
        %v2275 = vpop.permute.xlu0 %2274
        %2276 = vrot.lane.b32.xlu0 %v1308, 104
        %v2277 = vpop.permute.xlu0 %2276
        %2278 = vrot.lane.b32.xlu0 %v1310, 104
        %v2279 = vpop.permute.xlu0 %2278
        %2280 = vrot.lane.b32.xlu0 %v1312, 104
        %v2281 = vpop.permute.xlu0 %2280
        %2282 = vrot.lane.b32.xlu0 %v2221, 104
        %v2283 = vpop.permute.xlu0 %2282
        %2284 = vrot.lane.b32.xlu0 %v2220, 104
        %v2285 = vpop.permute.xlu0 %2284
        %v2318 = vrot.slane %v575, 6
        %v2319 = vsel %vm1409, %v1471, %v2318
        %2320 = vrot.lane.b32.xlu0 %v1414, 112
        %v2321 = vpop.permute.xlu0 %2320
        %2322 = vrot.lane.b32.xlu0 %v1416, 112
        %v2323 = vpop.permute.xlu0 %2322
        %2324 = vrot.lane.b32.xlu0 %v1418, 112
        %v2325 = vpop.permute.xlu0 %2324
        %2326 = vrot.lane.b32.xlu0 %v1420, 112
        %v2327 = vpop.permute.xlu0 %2326
        %2328 = vrot.lane.b32.xlu0 %v1422, 112
        %v2329 = vpop.permute.xlu0 %2328
        %2330 = vrot.lane.b32.xlu0 %v1424, 112
        %v2331 = vpop.permute.xlu0 %2330
        %2332 = vrot.lane.b32.xlu0 %v1426, 112
        %v2333 = vpop.permute.xlu0 %2332
        %2334 = vrot.lane.b32.xlu0 %v1428, 112
        %v2335 = vpop.permute.xlu0 %2334
        %2336 = vrot.lane.b32.xlu0 %v1430, 112
        %v2337 = vpop.permute.xlu0 %2336
        %2338 = vrot.lane.b32.xlu0 %v1432, 112
        %v2339 = vpop.permute.xlu0 %2338
        %2340 = vrot.lane.b32.xlu0 %v1434, 112
        %v2341 = vpop.permute.xlu0 %2340
        %2342 = vrot.lane.b32.xlu0 %v1436, 112
        %v2343 = vpop.permute.xlu0 %2342
        %2344 = vrot.lane.b32.xlu0 %v1438, 112
        %v2345 = vpop.permute.xlu0 %2344
        %2346 = vrot.lane.b32.xlu0 %v1440, 112
        %v2347 = vpop.permute.xlu0 %2346
        %2348 = vrot.lane.b32.xlu0 %v1442, 112
        %v2349 = vpop.permute.xlu0 %2348
        %2350 = vrot.lane.b32.xlu0 %v1444, 112
        %v2351 = vpop.permute.xlu0 %2350
        %2352 = vrot.lane.b32.xlu0 %v1446, 112
        %v2353 = vpop.permute.xlu0 %2352
        %2354 = vrot.lane.b32.xlu0 %v1448, 112
        %v2355 = vpop.permute.xlu0 %2354
        %2356 = vrot.lane.b32.xlu0 %v1450, 112
        %v2357 = vpop.permute.xlu0 %2356
        %2358 = vrot.lane.b32.xlu0 %v1452, 112
        %v2359 = vpop.permute.xlu0 %2358
        %2360 = vrot.lane.b32.xlu0 %v1454, 112
        %v2361 = vpop.permute.xlu0 %2360
        %2362 = vrot.lane.b32.xlu0 %v1456, 112
        %v2363 = vpop.permute.xlu0 %2362
        %2364 = vrot.lane.b32.xlu0 %v1458, 112
        %v2365 = vpop.permute.xlu0 %2364
        %2366 = vrot.lane.b32.xlu0 %v1460, 112
        %v2367 = vpop.permute.xlu0 %2366
        %2368 = vrot.lane.b32.xlu0 %v1462, 112
        %v2369 = vpop.permute.xlu0 %2368
        %2370 = vrot.lane.b32.xlu0 %v1464, 112
        %v2371 = vpop.permute.xlu0 %2370
        %2372 = vrot.lane.b32.xlu0 %v1466, 112
        %v2373 = vpop.permute.xlu0 %2372
        %2374 = vrot.lane.b32.xlu0 %v1468, 112
        %v2375 = vpop.permute.xlu0 %2374
        %2376 = vrot.lane.b32.xlu0 %v1470, 112
        %v2377 = vpop.permute.xlu0 %2376
        %2378 = vrot.lane.b32.xlu0 %v1472, 112
        %v2379 = vpop.permute.xlu0 %2378
        %2380 = vrot.lane.b32.xlu0 %v2319, 112
        %v2381 = vpop.permute.xlu0 %2380
        %2382 = vrot.lane.b32.xlu0 %v2318, 112
        %v2383 = vpop.permute.xlu0 %2382
        %v2417 = vrot.slane %v576, 7
        %v2418 = vsel %vm1570, %v1634, %v2417
        %2419 = vrot.lane.b32.xlu0 %v1575, 120
        %v2420 = vpop.permute.xlu0 %2419
        %2421 = vrot.lane.b32.xlu0 %v1577, 120
        %v2422 = vpop.permute.xlu0 %2421
        %2423 = vrot.lane.b32.xlu0 %v1579, 120
        %v2424 = vpop.permute.xlu0 %2423
        %2425 = vrot.lane.b32.xlu0 %v1581, 120
        %v2426 = vpop.permute.xlu0 %2425
        %2427 = vrot.lane.b32.xlu0 %v1583, 120
        %v2428 = vpop.permute.xlu0 %2427
        %2429 = vrot.lane.b32.xlu0 %v1585, 120
        %v2430 = vpop.permute.xlu0 %2429
        %2431 = vrot.lane.b32.xlu0 %v1587, 120
        %v2432 = vpop.permute.xlu0 %2431
        %2433 = vrot.lane.b32.xlu0 %v1589, 120
        %v2434 = vpop.permute.xlu0 %2433
        %2435 = vrot.lane.b32.xlu0 %v1591, 120
        %v2436 = vpop.permute.xlu0 %2435
        %2437 = vrot.lane.b32.xlu0 %v1593, 120
        %v2438 = vpop.permute.xlu0 %2437
        %2439 = vrot.lane.b32.xlu0 %v1595, 120
        %v2440 = vpop.permute.xlu0 %2439
        %2441 = vrot.lane.b32.xlu0 %v1597, 120
        %v2442 = vpop.permute.xlu0 %2441
        %2443 = vrot.lane.b32.xlu0 %v1599, 120
        %v2444 = vpop.permute.xlu0 %2443
        %2445 = vrot.lane.b32.xlu0 %v1601, 120
        %v2446 = vpop.permute.xlu0 %2445
        %2447 = vrot.lane.b32.xlu0 %v1603, 120
        %v2448 = vpop.permute.xlu0 %2447
        %2449 = vrot.lane.b32.xlu0 %v1605, 120
        %v2450 = vpop.permute.xlu0 %2449
        %2451 = vrot.lane.b32.xlu0 %v1607, 120
        %v2452 = vpop.permute.xlu0 %2451
        %2453 = vrot.lane.b32.xlu0 %v1609, 120
        %v2454 = vpop.permute.xlu0 %2453
        %2455 = vrot.lane.b32.xlu0 %v1611, 120
        %v2456 = vpop.permute.xlu0 %2455
        %2457 = vrot.lane.b32.xlu0 %v1613, 120
        %v2458 = vpop.permute.xlu0 %2457
        %2459 = vrot.lane.b32.xlu0 %v1615, 120
        %v2460 = vpop.permute.xlu0 %2459
        %2461 = vrot.lane.b32.xlu0 %v1617, 120
        %v2462 = vpop.permute.xlu0 %2461
        %2463 = vrot.lane.b32.xlu0 %v1619, 120
        %v2464 = vpop.permute.xlu0 %2463
        %2465 = vrot.lane.b32.xlu0 %v1621, 120
        %v2466 = vpop.permute.xlu0 %2465
        %2467 = vrot.lane.b32.xlu0 %v1623, 120
        %v2468 = vpop.permute.xlu0 %2467
        %2469 = vrot.lane.b32.xlu0 %v1625, 120
        %v2470 = vpop.permute.xlu0 %2469
        %2471 = vrot.lane.b32.xlu0 %v1627, 120
        %v2472 = vpop.permute.xlu0 %2471
        %2473 = vrot.lane.b32.xlu0 %v1629, 120
        %v2474 = vpop.permute.xlu0 %2473
        %2475 = vrot.lane.b32.xlu0 %v1631, 120
        %v2476 = vpop.permute.xlu0 %2475
        %2477 = vrot.lane.b32.xlu0 %v1633, 120
        %v2478 = vpop.permute.xlu0 %2477
        %2479 = vrot.lane.b32.xlu0 %v1635, 120
        %v2480 = vpop.permute.xlu0 %2479
        %2481 = vrot.lane.b32.xlu0 %v2418, 120
        %v2482 = vpop.permute.xlu0 %2481
        %vm2515 = vcmask 64512
        %v2516 = vsel %vm2515, %v543, %v674
        %v2517 = vsel %vm2515, %v544, %v676
        %v2518 = vsel %vm2515, %v545, %v678
        %v2519 = vsel %vm2515, %v546, %v680
        %v2520 = vsel %vm2515, %v547, %v682
        %v2521 = vsel %vm2515, %v548, %v684
        %v2522 = vsel %vm2515, %v549, %v686
        %v2523 = vsel %vm2515, %v550, %v688
        %v2524 = vsel %vm2515, %v551, %v690
        %v2525 = vsel %vm2515, %v552, %v692
        %v2526 = vsel %vm2515, %v553, %v694
        %v2527 = vsel %vm2515, %v554, %v696
        %v2528 = vsel %vm2515, %v555, %v698
        %v2529 = vsel %vm2515, %v556, %v700
        %v2530 = vsel %vm2515, %v557, %v702
        %v2531 = vsel %vm2515, %v558, %v704
        %v2532 = vsel %vm2515, %v559, %v706
        %v2533 = vsel %vm2515, %v560, %v708
        %v2534 = vsel %vm2515, %v561, %v710
        %v2535 = vsel %vm2515, %v562, %v712
        %v2536 = vsel %vm2515, %v563, %v714
        %v2537 = vsel %vm2515, %v564, %v716
        %v2538 = vsel %vm2515, %v565, %v718
        %v2539 = vsel %vm2515, %v566, %v720
        %v2540 = vsel %vm2515, %v567, %v722
        %v2541 = vsel %vm2515, %v568, %v724
        %v2542 = vsel %vm2515, %v569, %v726
        %v2543 = vsel %vm2515, %v570, %v728
        %v2544 = vsel %vm2515, %v571, %v730
        %v2545 = vsel %vm2515, %v572, %v732
        %v2546 = vsel %vm2515, %v573, %v734
        %v2547 = vsel %vm2515, %v574, %v736
        %vm2548 = vcmask 130048
        %v2549 = vsel %vm2548, %v2516, %v834
        %v2550 = vsel %vm2548, %v2517, %v836
        %v2551 = vsel %vm2548, %v2518, %v838
        %v2552 = vsel %vm2548, %v2519, %v840
        %v2553 = vsel %vm2548, %v2520, %v842
        %v2554 = vsel %vm2548, %v2521, %v844
        %v2555 = vsel %vm2548, %v2522, %v846
        %v2556 = vsel %vm2548, %v2523, %v848
        %v2557 = vsel %vm2548, %v2524, %v850
        %v2558 = vsel %vm2548, %v2525, %v852
        %v2559 = vsel %vm2548, %v2526, %v854
        %v2560 = vsel %vm2548, %v2527, %v856
        %v2561 = vsel %vm2548, %v2528, %v858
        %v2562 = vsel %vm2548, %v2529, %v860
        %v2563 = vsel %vm2548, %v2530, %v862
        %v2564 = vsel %vm2548, %v2531, %v864
        %v2565 = vsel %vm2548, %v2532, %v866
        %v2566 = vsel %vm2548, %v2533, %v868
        %v2567 = vsel %vm2548, %v2534, %v870
        %v2568 = vsel %vm2548, %v2535, %v872
        %v2569 = vsel %vm2548, %v2536, %v874
        %v2570 = vsel %vm2548, %v2537, %v876
        %v2571 = vsel %vm2548, %v2538, %v878
        %v2572 = vsel %vm2548, %v2539, %v880
        %v2573 = vsel %vm2548, %v2540, %v882
        %v2574 = vsel %vm2548, %v2541, %v884
        %v2575 = vsel %vm2548, %v2542, %v886
        %v2576 = vsel %vm2548, %v2543, %v888
        %v2577 = vsel %vm2548, %v2544, %v890
        %v2578 = vsel %vm2548, %v2545, %v892
        %v2579 = vsel %vm2548, %v2546, %v894
        %v2580 = vsel %vm2548, %v2547, %v896
        %vm2581 = vcmask 195584
        %v2582 = vsel %vm2581, %v2549, %v994
        %v2583 = vsel %vm2581, %v2550, %v996
        %v2584 = vsel %vm2581, %v2551, %v998
        %v2585 = vsel %vm2581, %v2552, %v1000
        %v2586 = vsel %vm2581, %v2553, %v1002
        %v2587 = vsel %vm2581, %v2554, %v1004
        %v2588 = vsel %vm2581, %v2555, %v1006
        %v2589 = vsel %vm2581, %v2556, %v1008
        %v2590 = vsel %vm2581, %v2557, %v1010
        %v2591 = vsel %vm2581, %v2558, %v1012
        %v2592 = vsel %vm2581, %v2559, %v1014
        %v2593 = vsel %vm2581, %v2560, %v1016
        %v2594 = vsel %vm2581, %v2561, %v1018
        %v2595 = vsel %vm2581, %v2562, %v1020
        %v2596 = vsel %vm2581, %v2563, %v1022
        %v2597 = vsel %vm2581, %v2564, %v1024
        %v2598 = vsel %vm2581, %v2565, %v1026
        %v2599 = vsel %vm2581, %v2566, %v1028
        %v2600 = vsel %vm2581, %v2567, %v1030
        %v2601 = vsel %vm2581, %v2568, %v1032
        %v2602 = vsel %vm2581, %v2569, %v1034
        %v2603 = vsel %vm2581, %v2570, %v1036
        %v2604 = vsel %vm2581, %v2571, %v1038
        %v2605 = vsel %vm2581, %v2572, %v1040
        %v2606 = vsel %vm2581, %v2573, %v1042
        %v2607 = vsel %vm2581, %v2574, %v1044
        %v2608 = vsel %vm2581, %v2575, %v1046
        %v2609 = vsel %vm2581, %v2576, %v1048
        %v2610 = vsel %vm2581, %v2577, %v1050
        %v2611 = vsel %vm2581, %v2578, %v1052
        %v2612 = vsel %vm2581, %v2579, %v1054
        %v2613 = vsel %vm2581, %v2580, %v1056
        %vm2614 = vcmask 261120
        %v2615 = vsel %vm2614, %v2582, %v1154
        %v2616 = vsel %vm2614, %v2583, %v1156
        %v2617 = vsel %vm2614, %v2584, %v1158
        %v2618 = vsel %vm2614, %v2585, %v1160
        %v2619 = vsel %vm2614, %v2586, %v1162
        %v2620 = vsel %vm2614, %v2587, %v1164
        %v2621 = vsel %vm2614, %v2588, %v1166
        %v2622 = vsel %vm2614, %v2589, %v1168
        %v2623 = vsel %vm2614, %v2590, %v1170
        %v2624 = vsel %vm2614, %v2591, %v1172
        %v2625 = vsel %vm2614, %v2592, %v1174
        %v2626 = vsel %vm2614, %v2593, %v1176
        %v2627 = vsel %vm2614, %v2594, %v1178
        %v2628 = vsel %vm2614, %v2595, %v1180
        %v2629 = vsel %vm2614, %v2596, %v1182
        %v2630 = vsel %vm2614, %v2597, %v1184
        %v2631 = vsel %vm2614, %v2598, %v1186
        %v2632 = vsel %vm2614, %v2599, %v1188
        %v2633 = vsel %vm2614, %v2600, %v1190
        %v2634 = vsel %vm2614, %v2601, %v1192
        %v2635 = vsel %vm2614, %v2602, %v1194
        %v2636 = vsel %vm2614, %v2603, %v1196
        %v2637 = vsel %vm2614, %v2604, %v1198
        %v2638 = vsel %vm2614, %v2605, %v1200
        %v2639 = vsel %vm2614, %v2606, %v1202
        %v2640 = vsel %vm2614, %v2607, %v1204
        %v2641 = vsel %vm2614, %v2608, %v1206
        %v2642 = vsel %vm2614, %v2609, %v1208
        %v2643 = vsel %vm2614, %v2610, %v1210
        %v2644 = vsel %vm2614, %v2611, %v1212
        %v2645 = vsel %vm2614, %v2612, %v1214
        %v2646 = vsel %vm2614, %v2613, %v1216
        %vm2647 = vcmask 326656
        %v2648 = vsel %vm2647, %v2615, %v1314
        %v2649 = vsel %vm2647, %v2616, %v1316
        %v2650 = vsel %vm2647, %v2617, %v1318
        %v2651 = vsel %vm2647, %v2618, %v1320
        %v2652 = vsel %vm2647, %v2619, %v1322
        %v2653 = vsel %vm2647, %v2620, %v1324
        %v2654 = vsel %vm2647, %v2621, %v1326
        %v2655 = vsel %vm2647, %v2622, %v1328
        %v2656 = vsel %vm2647, %v2623, %v1330
        %v2657 = vsel %vm2647, %v2624, %v1332
        %v2658 = vsel %vm2647, %v2625, %v1334
        %v2659 = vsel %vm2647, %v2626, %v1336
        %v2660 = vsel %vm2647, %v2627, %v1338
        %v2661 = vsel %vm2647, %v2628, %v1340
        %v2662 = vsel %vm2647, %v2629, %v1342
        %v2663 = vsel %vm2647, %v2630, %v1344
        %v2664 = vsel %vm2647, %v2631, %v1346
        %v2665 = vsel %vm2647, %v2632, %v1348
        %v2666 = vsel %vm2647, %v2633, %v1350
        %v2667 = vsel %vm2647, %v2634, %v1352
        %v2668 = vsel %vm2647, %v2635, %v1354
        %v2669 = vsel %vm2647, %v2636, %v1356
        %v2670 = vsel %vm2647, %v2637, %v1358
        %v2671 = vsel %vm2647, %v2638, %v1360
        %v2672 = vsel %vm2647, %v2639, %v1362
        %v2673 = vsel %vm2647, %v2640, %v1364
        %v2674 = vsel %vm2647, %v2641, %v1366
        %v2675 = vsel %vm2647, %v2642, %v1368
        %v2676 = vsel %vm2647, %v2643, %v1370
        %v2677 = vsel %vm2647, %v2644, %v1372
        %v2678 = vsel %vm2647, %v2645, %v1374
        %v2679 = vsel %vm2647, %v2646, %v1376
        %vm2680 = vcmask 392192
        %v2681 = vsel %vm2680, %v2648, %v1474
        %v2682 = vsel %vm2680, %v2649, %v1476
        %v2683 = vsel %vm2680, %v2650, %v1478
        %v2684 = vsel %vm2680, %v2651, %v1480
        %v2685 = vsel %vm2680, %v2652, %v1482
        %v2686 = vsel %vm2680, %v2653, %v1484
        %v2687 = vsel %vm2680, %v2654, %v1486
        %v2688 = vsel %vm2680, %v2655, %v1488
        %v2689 = vsel %vm2680, %v2656, %v1490
        %v2690 = vsel %vm2680, %v2657, %v1492
        %v2691 = vsel %vm2680, %v2658, %v1494
        %v2692 = vsel %vm2680, %v2659, %v1496
        %v2693 = vsel %vm2680, %v2660, %v1498
        %v2694 = vsel %vm2680, %v2661, %v1500
        %v2695 = vsel %vm2680, %v2662, %v1502
        %v2696 = vsel %vm2680, %v2663, %v1504
        %v2697 = vsel %vm2680, %v2664, %v1506
        %v2698 = vsel %vm2680, %v2665, %v1508
        %v2699 = vsel %vm2680, %v2666, %v1510
        %v2700 = vsel %vm2680, %v2667, %v1512
        %v2701 = vsel %vm2680, %v2668, %v1514
        %v2702 = vsel %vm2680, %v2669, %v1516
        %v2703 = vsel %vm2680, %v2670, %v1518
        %v2704 = vsel %vm2680, %v2671, %v1520
        %v2705 = vsel %vm2680, %v2672, %v1522
        %v2706 = vsel %vm2680, %v2673, %v1524
        %v2707 = vsel %vm2680, %v2674, %v1526
        %v2708 = vsel %vm2680, %v2675, %v1528
        %v2709 = vsel %vm2680, %v2676, %v1530
        %v2710 = vsel %vm2680, %v2677, %v1532
        %v2711 = vsel %vm2680, %v2678, %v1534
        %v2712 = vsel %vm2680, %v2679, %v1536
        %vm2713 = vcmask 457728
        %v2714 = vsel %vm2713, %v2681, %v1637
        %v2715 = vsel %vm2713, %v2682, %v1639
        %v2716 = vsel %vm2713, %v2683, %v1641
        %v2717 = vsel %vm2713, %v2684, %v1643
        %v2718 = vsel %vm2713, %v2685, %v1645
        %v2719 = vsel %vm2713, %v2686, %v1647
        %v2720 = vsel %vm2713, %v2687, %v1649
        %v2721 = vsel %vm2713, %v2688, %v1651
        %v2722 = vsel %vm2713, %v2689, %v1653
        %v2723 = vsel %vm2713, %v2690, %v1655
        %v2724 = vsel %vm2713, %v2691, %v1657
        %v2725 = vsel %vm2713, %v2692, %v1659
        %v2726 = vsel %vm2713, %v2693, %v1661
        %v2727 = vsel %vm2713, %v2694, %v1663
        %v2728 = vsel %vm2713, %v2695, %v1665
        %v2729 = vsel %vm2713, %v2696, %v1667
        %v2730 = vsel %vm2713, %v2697, %v1669
        %v2731 = vsel %vm2713, %v2698, %v1671
        %v2732 = vsel %vm2713, %v2699, %v1673
        %v2733 = vsel %vm2713, %v2700, %v1675
        %v2734 = vsel %vm2713, %v2701, %v1677
        %v2735 = vsel %vm2713, %v2702, %v1679
        %v2736 = vsel %vm2713, %v2703, %v1681
        %v2737 = vsel %vm2713, %v2704, %v1683
        %v2738 = vsel %vm2713, %v2705, %v1685
        %v2739 = vsel %vm2713, %v2706, %v1687
        %v2740 = vsel %vm2713, %v2707, %v1689
        %v2741 = vsel %vm2713, %v2708, %v1691
        %v2742 = vsel %vm2713, %v2709, %v1693
        %v2743 = vsel %vm2713, %v2710, %v1695
        %v2744 = vsel %vm2713, %v2711, %v1697
        %v2745 = vsel %vm2713, %v2712, %v1699
        %vm2746 = vcmask 523264
        %v2747 = vsel %vm2746, %v2714, %v1733
        %v2748 = vsel %vm2746, %v2715, %v1735
        %v2749 = vsel %vm2746, %v2716, %v1737
        %v2750 = vsel %vm2746, %v2717, %v1739
        %v2751 = vsel %vm2746, %v2718, %v1741
        %v2752 = vsel %vm2746, %v2719, %v1743
        %v2753 = vsel %vm2746, %v2720, %v1745
        %v2754 = vsel %vm2746, %v2721, %v1747
        %v2755 = vsel %vm2746, %v2722, %v1749
        %v2756 = vsel %vm2746, %v2723, %v1751
        %v2757 = vsel %vm2746, %v2724, %v1753
        %v2758 = vsel %vm2746, %v2725, %v1755
        %v2759 = vsel %vm2746, %v2726, %v1757
        %v2760 = vsel %vm2746, %v2727, %v1759
        %v2761 = vsel %vm2746, %v2728, %v1761
        %v2762 = vsel %vm2746, %v2729, %v1763
        %v2763 = vsel %vm2746, %v2730, %v1765
        %v2764 = vsel %vm2746, %v2731, %v1767
        %v2765 = vsel %vm2746, %v2732, %v1769
        %v2766 = vsel %vm2746, %v2733, %v1771
        %v2767 = vsel %vm2746, %v2734, %v1773
        %v2768 = vsel %vm2746, %v2735, %v1775
        %v2769 = vsel %vm2746, %v2736, %v1777
        %v2770 = vsel %vm2746, %v2737, %v1779
        %v2771 = vsel %vm2746, %v2738, %v1781
        %v2772 = vsel %vm2746, %v2739, %v1783
        %v2773 = vsel %vm2746, %v2740, %v1785
        %v2774 = vsel %vm2746, %v2741, %v1787
        %v2775 = vsel %vm2746, %v2742, %v1789
        %v2776 = vsel %vm2746, %v2743, %v1791
        %v2777 = vsel %vm2746, %v2744, %v1793
        %v2778 = vsel %vm2746, %v2745, %v1795
        %vm2779 = vcmask 588800
        %v2780 = vsel %vm2779, %v2747, %v1831
        %v2781 = vsel %vm2779, %v2748, %v1833
        %v2782 = vsel %vm2779, %v2749, %v1835
        %v2783 = vsel %vm2779, %v2750, %v1837
        %v2784 = vsel %vm2779, %v2751, %v1839
        %v2785 = vsel %vm2779, %v2752, %v1841
        %v2786 = vsel %vm2779, %v2753, %v1843
        %v2787 = vsel %vm2779, %v2754, %v1845
        %v2788 = vsel %vm2779, %v2755, %v1847
        %v2789 = vsel %vm2779, %v2756, %v1849
        %v2790 = vsel %vm2779, %v2757, %v1851
        %v2791 = vsel %vm2779, %v2758, %v1853
        %v2792 = vsel %vm2779, %v2759, %v1855
        %v2793 = vsel %vm2779, %v2760, %v1857
        %v2794 = vsel %vm2779, %v2761, %v1859
        %v2795 = vsel %vm2779, %v2762, %v1861
        %v2796 = vsel %vm2779, %v2763, %v1863
        %v2797 = vsel %vm2779, %v2764, %v1865
        %v2798 = vsel %vm2779, %v2765, %v1867
        %v2799 = vsel %vm2779, %v2766, %v1869
        %v2800 = vsel %vm2779, %v2767, %v1871
        %v2801 = vsel %vm2779, %v2768, %v1873
        %v2802 = vsel %vm2779, %v2769, %v1875
        %v2803 = vsel %vm2779, %v2770, %v1877
        %v2804 = vsel %vm2779, %v2771, %v1879
        %v2805 = vsel %vm2779, %v2772, %v1881
        %v2806 = vsel %vm2779, %v2773, %v1883
        %v2807 = vsel %vm2779, %v2774, %v1885
        %v2808 = vsel %vm2779, %v2775, %v1887
        %v2809 = vsel %vm2779, %v2776, %v1889
        %v2810 = vsel %vm2779, %v2777, %v1891
        %v2811 = vsel %vm2779, %v2778, %v1893
        %vm2812 = vcmask 654336
        %v2813 = vsel %vm2812, %v2780, %v1929
        %v2814 = vsel %vm2812, %v2781, %v1931
        %v2815 = vsel %vm2812, %v2782, %v1933
        %v2816 = vsel %vm2812, %v2783, %v1935
        %v2817 = vsel %vm2812, %v2784, %v1937
        %v2818 = vsel %vm2812, %v2785, %v1939
        %v2819 = vsel %vm2812, %v2786, %v1941
        %v2820 = vsel %vm2812, %v2787, %v1943
        %v2821 = vsel %vm2812, %v2788, %v1945
        %v2822 = vsel %vm2812, %v2789, %v1947
        %v2823 = vsel %vm2812, %v2790, %v1949
        %v2824 = vsel %vm2812, %v2791, %v1951
        %v2825 = vsel %vm2812, %v2792, %v1953
        %v2826 = vsel %vm2812, %v2793, %v1955
        %v2827 = vsel %vm2812, %v2794, %v1957
        %v2828 = vsel %vm2812, %v2795, %v1959
        %v2829 = vsel %vm2812, %v2796, %v1961
        %v2830 = vsel %vm2812, %v2797, %v1963
        %v2831 = vsel %vm2812, %v2798, %v1965
        %v2832 = vsel %vm2812, %v2799, %v1967
        %v2833 = vsel %vm2812, %v2800, %v1969
        %v2834 = vsel %vm2812, %v2801, %v1971
        %v2835 = vsel %vm2812, %v2802, %v1973
        %v2836 = vsel %vm2812, %v2803, %v1975
        %v2837 = vsel %vm2812, %v2804, %v1977
        %v2838 = vsel %vm2812, %v2805, %v1979
        %v2839 = vsel %vm2812, %v2806, %v1981
        %v2840 = vsel %vm2812, %v2807, %v1983
        %v2841 = vsel %vm2812, %v2808, %v1985
        %v2842 = vsel %vm2812, %v2809, %v1987
        %v2843 = vsel %vm2812, %v2810, %v1989
        %v2844 = vsel %vm2812, %v2811, %v1991
        %vm2845 = vcmask 719872
        %v2846 = vsel %vm2845, %v2813, %v2027
        %v2847 = vsel %vm2845, %v2814, %v2029
        %v2848 = vsel %vm2845, %v2815, %v2031
        %v2849 = vsel %vm2845, %v2816, %v2033
        %v2850 = vsel %vm2845, %v2817, %v2035
        %v2851 = vsel %vm2845, %v2818, %v2037
        %v2852 = vsel %vm2845, %v2819, %v2039
        %v2853 = vsel %vm2845, %v2820, %v2041
        %v2854 = vsel %vm2845, %v2821, %v2043
        %v2855 = vsel %vm2845, %v2822, %v2045
        %v2856 = vsel %vm2845, %v2823, %v2047
        %v2857 = vsel %vm2845, %v2824, %v2049
        %v2858 = vsel %vm2845, %v2825, %v2051
        %v2859 = vsel %vm2845, %v2826, %v2053
        %v2860 = vsel %vm2845, %v2827, %v2055
        %v2861 = vsel %vm2845, %v2828, %v2057
        %v2862 = vsel %vm2845, %v2829, %v2059
        %v2863 = vsel %vm2845, %v2830, %v2061
        %v2864 = vsel %vm2845, %v2831, %v2063
        %v2865 = vsel %vm2845, %v2832, %v2065
        %v2866 = vsel %vm2845, %v2833, %v2067
        %v2867 = vsel %vm2845, %v2834, %v2069
        %v2868 = vsel %vm2845, %v2835, %v2071
        %v2869 = vsel %vm2845, %v2836, %v2073
        %v2870 = vsel %vm2845, %v2837, %v2075
        %v2871 = vsel %vm2845, %v2838, %v2077
        %v2872 = vsel %vm2845, %v2839, %v2079
        %v2873 = vsel %vm2845, %v2840, %v2081
        %v2874 = vsel %vm2845, %v2841, %v2083
        %v2875 = vsel %vm2845, %v2842, %v2085
        %v2876 = vsel %vm2845, %v2843, %v2087
        %v2877 = vsel %vm2845, %v2844, %v2089
        %vm2878 = vcmask 785408
        %v2879 = vsel %vm2878, %v2846, %v2125
        %v2880 = vsel %vm2878, %v2847, %v2127
        %v2881 = vsel %vm2878, %v2848, %v2129
        %v2882 = vsel %vm2878, %v2849, %v2131
        %v2883 = vsel %vm2878, %v2850, %v2133
        %v2884 = vsel %vm2878, %v2851, %v2135
        %v2885 = vsel %vm2878, %v2852, %v2137
        %v2886 = vsel %vm2878, %v2853, %v2139
        %v2887 = vsel %vm2878, %v2854, %v2141
        %v2888 = vsel %vm2878, %v2855, %v2143
        %v2889 = vsel %vm2878, %v2856, %v2145
        %v2890 = vsel %vm2878, %v2857, %v2147
        %v2891 = vsel %vm2878, %v2858, %v2149
        %v2892 = vsel %vm2878, %v2859, %v2151
        %v2893 = vsel %vm2878, %v2860, %v2153
        %v2894 = vsel %vm2878, %v2861, %v2155
        %v2895 = vsel %vm2878, %v2862, %v2157
        %v2896 = vsel %vm2878, %v2863, %v2159
        %v2897 = vsel %vm2878, %v2864, %v2161
        %v2898 = vsel %vm2878, %v2865, %v2163
        %v2899 = vsel %vm2878, %v2866, %v2165
        %v2900 = vsel %vm2878, %v2867, %v2167
        %v2901 = vsel %vm2878, %v2868, %v2169
        %v2902 = vsel %vm2878, %v2869, %v2171
        %v2903 = vsel %vm2878, %v2870, %v2173
        %v2904 = vsel %vm2878, %v2871, %v2175
        %v2905 = vsel %vm2878, %v2872, %v2177
        %v2906 = vsel %vm2878, %v2873, %v2179
        %v2907 = vsel %vm2878, %v2874, %v2181
        %v2908 = vsel %vm2878, %v2875, %v2183
        %v2909 = vsel %vm2878, %v2876, %v2185
        %v2910 = vsel %vm2878, %v2877, %v2187
        %vm2911 = vcmask 850944
        %v2912 = vsel %vm2911, %v2879, %v2223
        %v2913 = vsel %vm2911, %v2880, %v2225
        %v2914 = vsel %vm2911, %v2881, %v2227
        %v2915 = vsel %vm2911, %v2882, %v2229
        %v2916 = vsel %vm2911, %v2883, %v2231
        %v2917 = vsel %vm2911, %v2884, %v2233
        %v2918 = vsel %vm2911, %v2885, %v2235
        %v2919 = vsel %vm2911, %v2886, %v2237
        %v2920 = vsel %vm2911, %v2887, %v2239
        %v2921 = vsel %vm2911, %v2888, %v2241
        %v2922 = vsel %vm2911, %v2889, %v2243
        %v2923 = vsel %vm2911, %v2890, %v2245
        %v2924 = vsel %vm2911, %v2891, %v2247
        %v2925 = vsel %vm2911, %v2892, %v2249
        %v2926 = vsel %vm2911, %v2893, %v2251
        %v2927 = vsel %vm2911, %v2894, %v2253
        %v2928 = vsel %vm2911, %v2895, %v2255
        %v2929 = vsel %vm2911, %v2896, %v2257
        %v2930 = vsel %vm2911, %v2897, %v2259
        %v2931 = vsel %vm2911, %v2898, %v2261
        %v2932 = vsel %vm2911, %v2899, %v2263
        %v2933 = vsel %vm2911, %v2900, %v2265
        %v2934 = vsel %vm2911, %v2901, %v2267
        %v2935 = vsel %vm2911, %v2902, %v2269
        %v2936 = vsel %vm2911, %v2903, %v2271
        %v2937 = vsel %vm2911, %v2904, %v2273
        %v2938 = vsel %vm2911, %v2905, %v2275
        %v2939 = vsel %vm2911, %v2906, %v2277
        %v2940 = vsel %vm2911, %v2907, %v2279
        %v2941 = vsel %vm2911, %v2908, %v2281
        %v2942 = vsel %vm2911, %v2909, %v2283
        %v2943 = vsel %vm2911, %v2910, %v2285
        %vm2944 = vcmask 916480
        %v2945 = vsel %vm2944, %v2912, %v2321
        %v2946 = vsel %vm2944, %v2913, %v2323
        %v2947 = vsel %vm2944, %v2914, %v2325
        %v2948 = vsel %vm2944, %v2915, %v2327
        %v2949 = vsel %vm2944, %v2916, %v2329
        %v2950 = vsel %vm2944, %v2917, %v2331
        %v2951 = vsel %vm2944, %v2918, %v2333
        %v2952 = vsel %vm2944, %v2919, %v2335
        %v2953 = vsel %vm2944, %v2920, %v2337
        %v2954 = vsel %vm2944, %v2921, %v2339
        %v2955 = vsel %vm2944, %v2922, %v2341
        %v2956 = vsel %vm2944, %v2923, %v2343
        %v2957 = vsel %vm2944, %v2924, %v2345
        %v2958 = vsel %vm2944, %v2925, %v2347
        %v2959 = vsel %vm2944, %v2926, %v2349
        %v2960 = vsel %vm2944, %v2927, %v2351
        %v2961 = vsel %vm2944, %v2928, %v2353
        %v2962 = vsel %vm2944, %v2929, %v2355
        %v2963 = vsel %vm2944, %v2930, %v2357
        %v2964 = vsel %vm2944, %v2931, %v2359
        %v2965 = vsel %vm2944, %v2932, %v2361
        %v2966 = vsel %vm2944, %v2933, %v2363
        %v2967 = vsel %vm2944, %v2934, %v2365
        %v2968 = vsel %vm2944, %v2935, %v2367
        %v2969 = vsel %vm2944, %v2936, %v2369
        %v2970 = vsel %vm2944, %v2937, %v2371
        %v2971 = vsel %vm2944, %v2938, %v2373
        %v2972 = vsel %vm2944, %v2939, %v2375
        %v2973 = vsel %vm2944, %v2940, %v2377
        %v2974 = vsel %vm2944, %v2941, %v2379
        %v2975 = vsel %vm2944, %v2942, %v2381
        %v2976 = vsel %vm2944, %v2943, %v2383
        %vm2977 = vcmask 982016
        %v2978 = vsel %vm2977, %v2945, %v2420
        %v2979 = vsel %vm2977, %v2946, %v2422
        %v2980 = vsel %vm2977, %v2947, %v2424
        %v2981 = vsel %vm2977, %v2948, %v2426
        %v2982 = vsel %vm2977, %v2949, %v2428
        %v2983 = vsel %vm2977, %v2950, %v2430
        %v2984 = vsel %vm2977, %v2951, %v2432
        %v2985 = vsel %vm2977, %v2952, %v2434
        %v2986 = vsel %vm2977, %v2953, %v2436
        %v2987 = vsel %vm2977, %v2954, %v2438
        %v2988 = vsel %vm2977, %v2955, %v2440
        %v2989 = vsel %vm2977, %v2956, %v2442
        %v2990 = vsel %vm2977, %v2957, %v2444
        %v2991 = vsel %vm2977, %v2958, %v2446
        %v2992 = vsel %vm2977, %v2959, %v2448
        %v2993 = vsel %vm2977, %v2960, %v2450
        %v2994 = vsel %vm2977, %v2961, %v2452
        %v2995 = vsel %vm2977, %v2962, %v2454
        %v2996 = vsel %vm2977, %v2963, %v2456
        %v2997 = vsel %vm2977, %v2964, %v2458
        %v2998 = vsel %vm2977, %v2965, %v2460
        %v2999 = vsel %vm2977, %v2966, %v2462
        %v3000 = vsel %vm2977, %v2967, %v2464
        %v3001 = vsel %vm2977, %v2968, %v2466
        %v3002 = vsel %vm2977, %v2969, %v2468
        %v3003 = vsel %vm2977, %v2970, %v2470
        %v3004 = vsel %vm2977, %v2971, %v2472
        %v3005 = vsel %vm2977, %v2972, %v2474
        %v3006 = vsel %vm2977, %v2973, %v2476
        %v3007 = vsel %vm2977, %v2974, %v2478
        %v3008 = vsel %vm2977, %v2975, %v2480
        %v3009 = vsel %vm2977, %v2976, %v2482
        %v3010 = vld [vmem:[%s1] sm:$0xff]
        %v3011 = vld [vmem:[%s1 + $0x8] sm:$0xff]
        %v3012 = vld [vmem:[%s1 + $0x10] sm:$0xff]
        %v3013 = vld [vmem:[%s1 + $0x18] sm:$0xff]
        %v3014 = vld [vmem:[%s1 + $0x20] sm:$0xff]
        %v3015 = vld [vmem:[%s1 + $0x28] sm:$0xff]
        %v3016 = vld [vmem:[%s1 + $0x30] sm:$0xff]
        %v3017 = vld [vmem:[%s1 + $0x38] sm:$0xff]
        %v3018 = vld [vmem:[%s1 + $0x40] sm:$0xff]
        %v3019 = vld [vmem:[%s1 + $0x48] sm:$0xff]
        %v3020 = vld [vmem:[%s1 + $0x50] sm:$0xff]
        %v3021 = vld [vmem:[%s1 + $0x58] sm:$0xff]
        %v3022 = vld [vmem:[%s1 + $0x60] sm:$0xff]
        %v3023 = vld [vmem:[%s1 + $0x68] sm:$0xff]
        %v3024 = vld [vmem:[%s1 + $0x70] sm:$0xff]
        %v3025 = vld [vmem:[%s1 + $0x78] sm:$0xff]
        %v3026 = vld [vmem:[%s1 + $0x80] sm:$0xff]
        %v3027 = vld [vmem:[#allocation2] sm:$0x1]
        %v3029 = vlaneseq
        %v3030 = vshrl.u32 %v3029, 7
        %v3031 = vsub.s32 0, %v3030
        %v3032 = vrot.slane %v3027, %v3031
        %v3034 = vsel %vm2515, %v545, 0
        %v3036 = vsel %vm2515, %v546, 0
        %v3038 = vsel %vm2515, %v547, 0
        %v3040 = vsel %vm2515, %v548, 0
        %v3042 = vsel %vm2515, %v549, 0
        %v3044 = vsel %vm2515, %v550, 0
        %v3046 = vsel %vm2515, %v551, 0
        %v3048 = vsel %vm2515, %v552, 0
        %v3050 = vsel %vm2515, %v553, 0
        %v3052 = vsel %vm2515, %v554, 0
        %v3054 = vsel %vm2515, %v555, 0
        %v3056 = vsel %vm2515, %v556, 0
        %v3058 = vsel %vm2515, %v557, 0
        %v3060 = vsel %vm2515, %v558, 0
        %v3062 = vsel %vm2515, %v559, 0
        %v3064 = vsel %vm2515, %v560, 0
        %v3066 = vsel %vm2515, %v561, 0
        %v3068 = vsel %vm2515, %v562, 0
        %v3070 = vsel %vm2515, %v563, 0
        %v3072 = vsel %vm2515, %v564, 0
        %v3074 = vsel %vm2515, %v565, 0
        %v3076 = vsel %vm2515, %v566, 0
        %v3078 = vsel %vm2515, %v567, 0
        %v3080 = vsel %vm2515, %v568, 0
        %v3082 = vsel %vm2515, %v569, 0
        %v3084 = vsel %vm2515, %v570, 0
        %v3086 = vsel %vm2515, %v571, 0
        %v3088 = vsel %vm2515, %v572, 0
        %v3090 = vsel %vm2515, %v573, 0
        %v3092 = vsel %vm2515, %v574, 0
        %v3094 = vsel %vm2515, %v575, 0
        %v3096 = vsel %vm2515, %v576, 0
        %3098 = vmatprep.subr.mxu0 0.0
        %3099 = vmatpush1.msra.mxu0 %v3025
        %3100 = vmatprep.subr.mxu0 0.0
        %3101 = vmatpush1.msra.mxu0 %v3024
        %3102 = vmatprep.subr.mxu0 0.0
        %3103 = vmatpush1.msra.mxu0 %v3023
        %3104 = vmatprep.subr.mxu0 0.0
        %3105 = vmatpush1.msra.mxu0 %v3022
        %3106 = vmatprep.subr.mxu0 0.0
        %3107 = vmatpush1.msra.mxu0 %v3021
        %3108 = vmatprep.subr.mxu0 0.0
        %3109 = vmatpush1.msra.mxu0 %v3020
        %3110 = vmatprep.subr.mxu0 0.0
        %3111 = vmatpush1.msra.mxu0 %v3019
        %3112 = vmatprep.subr.mxu0 0.0
        %3113 = vmatpush1.msra.mxu0 %v3018
        %3114 = vmatprep.subr.mxu0 0.0
        %3115 = vmatpush1.msra.mxu0 %v3017
        %3116 = vmatprep.subr.mxu0 0.0
        %3117 = vmatpush1.msra.mxu0 %v3016
        %3118 = vmatprep.subr.mxu0 0.0
        %3119 = vmatpush1.msra.mxu0 %v3015
        %3120 = vmatprep.subr.mxu0 0.0
        %3121 = vmatpush1.msra.mxu0 %v3014
        %3122 = vmatprep.subr.mxu0 0.0
        %3123 = vmatpush1.msra.mxu0 %v3013
        %3124 = vmatprep.subr.mxu0 0.0
        %3125 = vmatpush1.msra.mxu0 %v3012
        %3126 = vmatprep.subr.mxu0 0.0
        %3127 = vmatpush1.msra.mxu0 %v3011
        %3128 = vmatprep.subr.mxu0 0.0
        %3129 = vmatpush1.msra.mxu0 %v3010
        %3130 = vmatprep.subr.mxu0 0.0
        %3131 = vmatpush2.msra.mxu0 0.0
        %3132 = vmatprep.subr.mxu0 0.0
        %3133 = vmatpush2.msra.mxu0 0.0
        %3134 = vmatprep.subr.mxu0 0.0
        %3135 = vmatpush2.msra.mxu0 0.0
        %3136 = vmatprep.subr.mxu0 0.0
        %3137 = vmatpush2.msra.mxu0 0.0
        %3138 = vmatprep.subr.mxu0 0.0
        %3139 = vmatpush2.msra.mxu0 0.0
        %3140 = vmatprep.subr.mxu0 0.0
        %3141 = vmatpush2.msra.mxu0 0.0
        %3142 = vmatprep.subr.mxu0 0.0
        %3143 = vmatpush2.msra.mxu0 0.0
        %3144 = vmatprep.subr.mxu0 0.0
        %3145 = vmatpush2.msra.mxu0 0.0
        %3146 = vmatprep.subr.mxu0 0.0
        %3147 = vmatpush2.msra.mxu0 0.0
        %3148 = vmatprep.subr.mxu0 0.0
        %3149 = vmatpush2.msra.mxu0 0.0
        %3150 = vmatprep.subr.mxu0 0.0
        %3151 = vmatpush2.msra.mxu0 0.0
        %3152 = vmatprep.subr.mxu0 0.0
        %3153 = vmatpush2.msra.mxu0 0.0
        %3154 = vmatprep.subr.mxu0 0.0
        %3155 = vmatpush2.msra.mxu0 0.0
        %3156 = vmatprep.subr.mxu0 0.0
        %3157 = vmatpush2.msra.mxu0 0.0
        %3158 = vmatprep.subr.mxu0 0.0
        %3159 = vmatpush2.msra.mxu0 0.0
        %3160 = vmatprep.subr.mxu0 0.0
        %3161 = vmatpush2.msra.mxu0 %v3026
        %3162 = vmatprep.mubr.f32.mxu0 %v3034
        %3163 = vmatmul.mubr.f32.gmra.mxu0 %v2978
        %v3164 = vpop.f32.mrf.mxu0
        %v3165 = vadd.f32 %v3032, %v3164
        %v3166 = vpop.f32.mrf.mxu0
        %3167 = vmatprep.mubr.f32.mxu0 %v3036
        %3168 = vmatmul.mubr.f32.gmra.mxu0 %v2979
        %v3169 = vpop.f32.mrf.mxu0
        %v3170 = vadd.f32 %v3032, %v3169
        %v3171 = vpop.f32.mrf.mxu0
        %3172 = vmatprep.mubr.f32.mxu0 %v3038
        %3173 = vmatmul.mubr.f32.gmra.mxu0 %v2980
        %v3174 = vpop.f32.mrf.mxu0
        %v3175 = vadd.f32 %v3032, %v3174
        %v3176 = vpop.f32.mrf.mxu0
        %3177 = vmatprep.mubr.f32.mxu0 %v3040
        %3178 = vmatmul.mubr.f32.gmra.mxu0 %v2981
        %v3179 = vpop.f32.mrf.mxu0
        %v3180 = vadd.f32 %v3032, %v3179
        %v3181 = vpop.f32.mrf.mxu0
        %3182 = vmatprep.mubr.f32.mxu0 %v3042
        %3183 = vmatmul.mubr.f32.gmra.mxu0 %v2982
        %v3184 = vpop.f32.mrf.mxu0
        %v3185 = vadd.f32 %v3032, %v3184
        %v3186 = vpop.f32.mrf.mxu0
        %3187 = vmatprep.mubr.f32.mxu0 %v3044
        %3188 = vmatmul.mubr.f32.gmra.mxu0 %v2983
        %v3189 = vpop.f32.mrf.mxu0
        %v3190 = vadd.f32 %v3032, %v3189
        %v3191 = vpop.f32.mrf.mxu0
        %3192 = vmatprep.mubr.f32.mxu0 %v3046
        %3193 = vmatmul.mubr.f32.gmra.mxu0 %v2984
        %v3194 = vpop.f32.mrf.mxu0
        %v3195 = vadd.f32 %v3032, %v3194
        %v3196 = vpop.f32.mrf.mxu0
        %3197 = vmatprep.mubr.f32.mxu0 %v3048
        %3198 = vmatmul.mubr.f32.gmra.mxu0 %v2985
        %v3199 = vpop.f32.mrf.mxu0
        %v3200 = vadd.f32 %v3032, %v3199
        %v3201 = vpop.f32.mrf.mxu0
        %3202 = vmatprep.mubr.f32.mxu0 %v3050
        %3203 = vmatmul.mubr.f32.gmra.mxu0 %v2986
        %v3204 = vpop.f32.mrf.mxu0
        %v3205 = vadd.f32 %v3032, %v3204
        %v3206 = vpop.f32.mrf.mxu0
        %3207 = vmatprep.mubr.f32.mxu0 %v3052
        %3208 = vmatmul.mubr.f32.gmra.mxu0 %v2987
        %v3209 = vpop.f32.mrf.mxu0
        %v3210 = vadd.f32 %v3032, %v3209
        %v3211 = vpop.f32.mrf.mxu0
        %3212 = vmatprep.mubr.f32.mxu0 %v3054
        %3213 = vmatmul.mubr.f32.gmra.mxu0 %v2988
        %v3214 = vpop.f32.mrf.mxu0
        %v3215 = vadd.f32 %v3032, %v3214
        %v3216 = vpop.f32.mrf.mxu0
        %3217 = vmatprep.mubr.f32.mxu0 %v3056
        %3218 = vmatmul.mubr.f32.gmra.mxu0 %v2989
        %v3219 = vpop.f32.mrf.mxu0
        %v3220 = vadd.f32 %v3032, %v3219
        %v3221 = vpop.f32.mrf.mxu0
        %3222 = vmatprep.mubr.f32.mxu0 %v3058
        %3223 = vmatmul.mubr.f32.gmra.mxu0 %v2990
        %v3224 = vpop.f32.mrf.mxu0
        %v3225 = vadd.f32 %v3032, %v3224
        %v3226 = vpop.f32.mrf.mxu0
        %3227 = vmatprep.mubr.f32.mxu0 %v3060
        %3228 = vmatmul.mubr.f32.gmra.mxu0 %v2991
        %v3229 = vpop.f32.mrf.mxu0
        %v3230 = vadd.f32 %v3032, %v3229
        %v3231 = vpop.f32.mrf.mxu0
        %3232 = vmatprep.mubr.f32.mxu0 %v3062
        %3233 = vmatmul.mubr.f32.gmra.mxu0 %v2992
        %v3234 = vpop.f32.mrf.mxu0
        %v3235 = vadd.f32 %v3032, %v3234
        %v3236 = vpop.f32.mrf.mxu0
        %3237 = vmatprep.mubr.f32.mxu0 %v3064
        %3238 = vmatmul.mubr.f32.gmra.mxu0 %v2993
        %v3239 = vpop.f32.mrf.mxu0
        %v3240 = vadd.f32 %v3032, %v3239
        %v3241 = vpop.f32.mrf.mxu0
        %3242 = vmatprep.mubr.f32.mxu0 %v3066
        %3243 = vmatmul.mubr.f32.gmra.mxu0 %v2994
        %v3244 = vpop.f32.mrf.mxu0
        %v3245 = vadd.f32 %v3032, %v3244
        %v3246 = vpop.f32.mrf.mxu0
        %3247 = vmatprep.mubr.f32.mxu0 %v3068
        %3248 = vmatmul.mubr.f32.gmra.mxu0 %v2995
        %v3249 = vpop.f32.mrf.mxu0
        %v3250 = vadd.f32 %v3032, %v3249
        %v3251 = vpop.f32.mrf.mxu0
        %3252 = vmatprep.mubr.f32.mxu0 %v3070
        %3253 = vmatmul.mubr.f32.gmra.mxu0 %v2996
        %v3254 = vpop.f32.mrf.mxu0
        %v3255 = vadd.f32 %v3032, %v3254
        %v3256 = vpop.f32.mrf.mxu0
        %3257 = vmatprep.mubr.f32.mxu0 %v3072
        %3258 = vmatmul.mubr.f32.gmra.mxu0 %v2997
        %v3259 = vpop.f32.mrf.mxu0
        %v3260 = vadd.f32 %v3032, %v3259
        %v3261 = vpop.f32.mrf.mxu0
        %3262 = vmatprep.mubr.f32.mxu0 %v3074
        %3263 = vmatmul.mubr.f32.gmra.mxu0 %v2998
        %v3264 = vpop.f32.mrf.mxu0
        %v3265 = vadd.f32 %v3032, %v3264
        %v3266 = vpop.f32.mrf.mxu0
        %3267 = vmatprep.mubr.f32.mxu0 %v3076
        %3268 = vmatmul.mubr.f32.gmra.mxu0 %v2999
        %v3269 = vpop.f32.mrf.mxu0
        %v3270 = vadd.f32 %v3032, %v3269
        %v3271 = vpop.f32.mrf.mxu0
        %3272 = vmatprep.mubr.f32.mxu0 %v3078
        %3273 = vmatmul.mubr.f32.gmra.mxu0 %v3000
        %v3274 = vpop.f32.mrf.mxu0
        %v3275 = vadd.f32 %v3032, %v3274
        %v3276 = vpop.f32.mrf.mxu0
        %3277 = vmatprep.mubr.f32.mxu0 %v3080
        %3278 = vmatmul.mubr.f32.gmra.mxu0 %v3001
        %v3279 = vpop.f32.mrf.mxu0
        %v3280 = vadd.f32 %v3032, %v3279
        %v3281 = vpop.f32.mrf.mxu0
        %3282 = vmatprep.mubr.f32.mxu0 %v3082
        %3283 = vmatmul.mubr.f32.gmra.mxu0 %v3002
        %v3284 = vpop.f32.mrf.mxu0
        %v3285 = vadd.f32 %v3032, %v3284
        %v3286 = vpop.f32.mrf.mxu0
        %3287 = vmatprep.mubr.f32.mxu0 %v3084
        %3288 = vmatmul.mubr.f32.gmra.mxu0 %v3003
        %v3289 = vpop.f32.mrf.mxu0
        %v3290 = vadd.f32 %v3032, %v3289
        %v3291 = vpop.f32.mrf.mxu0
        %3292 = vmatprep.mubr.f32.mxu0 %v3086
        %3293 = vmatmul.mubr.f32.gmra.mxu0 %v3004
        %v3294 = vpop.f32.mrf.mxu0
        %v3295 = vadd.f32 %v3032, %v3294
        %v3296 = vpop.f32.mrf.mxu0
        %3297 = vmatprep.mubr.f32.mxu0 %v3088
        %3298 = vmatmul.mubr.f32.gmra.mxu0 %v3005
        %v3299 = vpop.f32.mrf.mxu0
        %v3300 = vadd.f32 %v3032, %v3299
        %v3301 = vpop.f32.mrf.mxu0
        %3302 = vmatprep.mubr.f32.mxu0 %v3090
        %3303 = vmatmul.mubr.f32.gmra.mxu0 %v3006
        %v3304 = vpop.f32.mrf.mxu0
        %v3305 = vadd.f32 %v3032, %v3304
        %v3306 = vpop.f32.mrf.mxu0
        %3307 = vmatprep.mubr.f32.mxu0 %v3092
        %3308 = vmatmul.mubr.f32.gmra.mxu0 %v3007
        %v3309 = vpop.f32.mrf.mxu0
        %v3310 = vadd.f32 %v3032, %v3309
        %v3311 = vpop.f32.mrf.mxu0
        %3312 = vmatprep.mubr.f32.mxu0 %v3094
        %3313 = vmatmul.mubr.f32.gmra.mxu0 %v3008
        %v3314 = vpop.f32.mrf.mxu0
        %v3315 = vadd.f32 %v3032, %v3314
        %v3316 = vpop.f32.mrf.mxu0
        %3317 = vmatprep.mubr.f32.mxu0 %v3096
        %3318 = vmatmul.mubr.f32.gmra.mxu0 %v3009
        %v3319 = vpop.f32.mrf.mxu0
        %v3320 = vadd.f32 %v3032, %v3319
        %v3321 = vpop.f32.mrf.mxu0
        %3322 = vdwg.mxu0
        %vm3323 = vcmp.ge.f32.partialorder %v3165, 0.0
        %vm3324 = vcmp.ge.f32.partialorder %v3170, 0.0
        %vm3325 = vcmp.ge.f32.partialorder %v3175, 0.0
        %vm3326 = vcmp.ge.f32.partialorder %v3180, 0.0
        %vm3327 = vcmp.ge.f32.partialorder %v3185, 0.0
        %vm3328 = vcmp.ge.f32.partialorder %v3190, 0.0
        %vm3329 = vcmp.ge.f32.partialorder %v3195, 0.0
        %vm3330 = vcmp.ge.f32.partialorder %v3200, 0.0
        %vm3331 = vcmp.ge.f32.partialorder %v3205, 0.0
        %vm3332 = vcmp.ge.f32.partialorder %v3210, 0.0
        %vm3333 = vcmp.ge.f32.partialorder %v3215, 0.0
        %vm3334 = vcmp.ge.f32.partialorder %v3220, 0.0
        %vm3335 = vcmp.ge.f32.partialorder %v3225, 0.0
        %vm3336 = vcmp.ge.f32.partialorder %v3230, 0.0
        %vm3337 = vcmp.ge.f32.partialorder %v3235, 0.0
        %vm3338 = vcmp.ge.f32.partialorder %v3240, 0.0
        %vm3339 = vcmp.ge.f32.partialorder %v3245, 0.0
        %vm3340 = vcmp.ge.f32.partialorder %v3250, 0.0
        %vm3341 = vcmp.ge.f32.partialorder %v3255, 0.0
        %vm3342 = vcmp.ge.f32.partialorder %v3260, 0.0
        %vm3343 = vcmp.ge.f32.partialorder %v3265, 0.0
        %vm3344 = vcmp.ge.f32.partialorder %v3270, 0.0
        %vm3345 = vcmp.ge.f32.partialorder %v3275, 0.0
        %vm3346 = vcmp.ge.f32.partialorder %v3280, 0.0
        %vm3347 = vcmp.ge.f32.partialorder %v3285, 0.0
        %vm3348 = vcmp.ge.f32.partialorder %v3290, 0.0
        %vm3349 = vcmp.ge.f32.partialorder %v3295, 0.0
        %vm3350 = vcmp.ge.f32.partialorder %v3300, 0.0
        %vm3351 = vcmp.ge.f32.partialorder %v3305, 0.0
        %vm3352 = vcmp.ge.f32.partialorder %v3310, 0.0
        %vm3353 = vcmp.ge.f32.partialorder %v3315, 0.0
        %vm3354 = vcmp.ge.f32.partialorder %v3320, 0.0
        %v3355 = vmul.f32 %v3165, 0.3
        %v3356 = vmul.f32 %v3170, 0.3
        %v3357 = vmul.f32 %v3175, 0.3
        %v3358 = vmul.f32 %v3180, 0.3
        %v3359 = vmul.f32 %v3185, 0.3
        %v3360 = vmul.f32 %v3190, 0.3
        %v3361 = vmul.f32 %v3195, 0.3
        %v3362 = vmul.f32 %v3200, 0.3
        %v3363 = vmul.f32 %v3205, 0.3
        %v3364 = vmul.f32 %v3210, 0.3
        %v3365 = vmul.f32 %v3215, 0.3
        %v3366 = vmul.f32 %v3220, 0.3
        %v3367 = vmul.f32 %v3225, 0.3
        %v3368 = vmul.f32 %v3230, 0.3
        %v3369 = vmul.f32 %v3235, 0.3
        %v3370 = vmul.f32 %v3240, 0.3
        %v3371 = vmul.f32 %v3245, 0.3
        %v3372 = vmul.f32 %v3250, 0.3
        %v3373 = vmul.f32 %v3255, 0.3
        %v3374 = vmul.f32 %v3260, 0.3
        %v3375 = vmul.f32 %v3265, 0.3
        %v3376 = vmul.f32 %v3270, 0.3
        %v3377 = vmul.f32 %v3275, 0.3
        %v3378 = vmul.f32 %v3280, 0.3
        %v3379 = vmul.f32 %v3285, 0.3
        %v3380 = vmul.f32 %v3290, 0.3
        %v3381 = vmul.f32 %v3295, 0.3
        %v3382 = vmul.f32 %v3300, 0.3
        %v3383 = vmul.f32 %v3305, 0.3
        %v3384 = vmul.f32 %v3310, 0.3
        %v3385 = vmul.f32 %v3315, 0.3
        %v3386 = vmul.f32 %v3320, 0.3
        %v3387 = vsel %vm3323, %v3165, %v3355
        %v3388 = vsel %vm3324, %v3170, %v3356
        %v3389 = vsel %vm3325, %v3175, %v3357
        %v3390 = vsel %vm3326, %v3180, %v3358
        %v3391 = vsel %vm3327, %v3185, %v3359
        %v3392 = vsel %vm3328, %v3190, %v3360
        %v3393 = vsel %vm3329, %v3195, %v3361
        %v3394 = vsel %vm3330, %v3200, %v3362
        %v3395 = vsel %vm3331, %v3205, %v3363
        %v3396 = vsel %vm3332, %v3210, %v3364
        %v3397 = vsel %vm3333, %v3215, %v3365
        %v3398 = vsel %vm3334, %v3220, %v3366
        %v3399 = vsel %vm3335, %v3225, %v3367
        %v3400 = vsel %vm3336, %v3230, %v3368
        %v3401 = vsel %vm3337, %v3235, %v3369
        %v3402 = vsel %vm3338, %v3240, %v3370
        %v3403 = vsel %vm3339, %v3245, %v3371
        %v3404 = vsel %vm3340, %v3250, %v3372
        %v3405 = vsel %vm3341, %v3255, %v3373
        %v3406 = vsel %vm3342, %v3260, %v3374
        %v3407 = vsel %vm3343, %v3265, %v3375
        %v3408 = vsel %vm3344, %v3270, %v3376
        %v3409 = vsel %vm3345, %v3275, %v3377
        %v3410 = vsel %vm3346, %v3280, %v3378
        %v3411 = vsel %vm3347, %v3285, %v3379
        %v3412 = vsel %vm3348, %v3290, %v3380
        %v3413 = vsel %vm3349, %v3295, %v3381
        %v3414 = vsel %vm3350, %v3300, %v3382
        %v3415 = vsel %vm3351, %v3305, %v3383
        %v3416 = vsel %vm3352, %v3310, %v3384
        %v3417 = vsel %vm3353, %v3315, %v3385
        %v3418 = vsel %vm3354, %v3320, %v3386
        %v3419 = vlaneseq
        %v3420 = vshrl.u32 %v3419, 7
        %v3421 = vadd.s32 %v3420, 8
        %v3422 = vadd.s32 %v3420, 16
        %v3423 = vadd.s32 %v3420, 24
        %v3424 = vadd.s32 %v3420, 32
        %v3425 = vadd.s32 %v3420, 40
        %v3426 = vadd.s32 %v3420, 48
        %v3427 = vadd.s32 %v3420, 56
        %v3428 = vadd.s32 %v3420, 64
        %v3429 = vadd.s32 %v3420, 72
        %v3430 = vadd.s32 %v3420, 80
        %v3431 = vadd.s32 %v3420, 88
        %v3432 = vadd.s32 %v3420, 96
        %v3433 = vadd.s32 %v3420, 104
        %v3434 = vadd.s32 %v3420, 112
        %v3435 = vadd.s32 %v3420, 120
        %v3436 = vadd.s32 %v3420, 128
        %v3437 = vlaneseq
        %v3438 = vand.u32 %v3437, 127
        %v3439 = vadd.s32 %v3438, 128
        %vm3440 = vcmp.ge.s32.totalorder %v3420, 5
        %vm3441 = vcmp.ge.s32.totalorder %v3421, 5
        %vm3442 = vcmp.ge.s32.totalorder %v3422, 5
        %vm3443 = vcmp.ge.s32.totalorder %v3423, 5
        %vm3444 = vcmp.ge.s32.totalorder %v3424, 5
        %vm3445 = vcmp.ge.s32.totalorder %v3425, 5
        %vm3446 = vcmp.ge.s32.totalorder %v3426, 5
        %vm3447 = vcmp.ge.s32.totalorder %v3427, 5
        %vm3448 = vcmp.ge.s32.totalorder %v3428, 5
        %vm3449 = vcmp.ge.s32.totalorder %v3429, 5
        %vm3450 = vcmp.ge.s32.totalorder %v3430, 5
        %vm3451 = vcmp.ge.s32.totalorder %v3431, 5
        %vm3452 = vcmp.ge.s32.totalorder %v3432, 5
        %vm3453 = vcmp.ge.s32.totalorder %v3433, 5
        %vm3454 = vcmp.ge.s32.totalorder %v3434, 5
        %vm3455 = vcmp.ge.s32.totalorder %v3435, 5
        %vm3456 = vcmp.ge.s32.totalorder %v3436, 5
        %vm3457 = vcmp.lt.s32.totalorder %v3420, 130
        %vm3458 = vcmp.lt.s32.totalorder %v3421, 130
        %vm3459 = vcmp.lt.s32.totalorder %v3422, 130
        %vm3460 = vcmp.lt.s32.totalorder %v3423, 130
        %vm3461 = vcmp.lt.s32.totalorder %v3424, 130
        %vm3462 = vcmp.lt.s32.totalorder %v3425, 130
        %vm3463 = vcmp.lt.s32.totalorder %v3426, 130
        %vm3464 = vcmp.lt.s32.totalorder %v3427, 130
        %vm3465 = vcmp.lt.s32.totalorder %v3428, 130
        %vm3466 = vcmp.lt.s32.totalorder %v3429, 130
        %vm3467 = vcmp.lt.s32.totalorder %v3430, 130
        %vm3468 = vcmp.lt.s32.totalorder %v3431, 130
        %vm3469 = vcmp.lt.s32.totalorder %v3432, 130
        %vm3470 = vcmp.lt.s32.totalorder %v3433, 130
        %vm3471 = vcmp.lt.s32.totalorder %v3434, 130
        %vm3472 = vcmp.lt.s32.totalorder %v3435, 130
        %vm3473 = vcmp.lt.s32.totalorder %v3436, 130
        %vm3474 = vmand %vm3440, %vm3457
        %vm3475 = vmand %vm3441, %vm3458
        %vm3476 = vmand %vm3442, %vm3459
        %vm3477 = vmand %vm3443, %vm3460
        %vm3478 = vmand %vm3444, %vm3461
        %vm3479 = vmand %vm3445, %vm3462
        %vm3480 = vmand %vm3446, %vm3463
        %vm3481 = vmand %vm3447, %vm3464
        %vm3482 = vmand %vm3448, %vm3465
        %vm3483 = vmand %vm3449, %vm3466
        %vm3484 = vmand %vm3450, %vm3467
        %vm3485 = vmand %vm3451, %vm3468
        %vm3486 = vmand %vm3452, %vm3469
        %vm3487 = vmand %vm3453, %vm3470
        %vm3488 = vmand %vm3454, %vm3471
        %vm3489 = vmand %vm3455, %vm3472
        %vm3490 = vmand %vm3456, %vm3473
        %v3491 = vsub.s32 %v3420, 5
        %v3492 = vsub.s32 %v3421, 5
        %v3493 = vsub.s32 %v3422, 5
        %v3494 = vsub.s32 %v3423, 5
        %v3495 = vsub.s32 %v3424, 5
        %v3496 = vsub.s32 %v3425, 5
        %v3497 = vsub.s32 %v3426, 5
        %v3498 = vsub.s32 %v3427, 5
        %v3499 = vsub.s32 %v3428, 5
        %v3500 = vsub.s32 %v3429, 5
        %v3501 = vsub.s32 %v3430, 5
        %v3502 = vsub.s32 %v3431, 5
        %v3503 = vsub.s32 %v3432, 5
        %v3504 = vsub.s32 %v3433, 5
        %v3505 = vsub.s32 %v3434, 5
        %v3506 = vsub.s32 %v3435, 5
        %v3507 = vsub.s32 %v3436, 5
        %v3508 = vmul.u32 %v3491, 2
        %v3509 = vmul.u32 %v3492, 2
        %v3510 = vmul.u32 %v3493, 2
        %v3511 = vmul.u32 %v3494, 2
        %v3512 = vmul.u32 %v3495, 2
        %v3513 = vmul.u32 %v3496, 2
        %v3514 = vmul.u32 %v3497, 2
        %v3515 = vmul.u32 %v3498, 2
        %v3516 = vmul.u32 %v3499, 2
        %v3517 = vmul.u32 %v3500, 2
        %v3518 = vmul.u32 %v3501, 2
        %v3519 = vmul.u32 %v3502, 2
        %v3520 = vmul.u32 %v3503, 2
        %v3521 = vmul.u32 %v3504, 2
        %v3522 = vmul.u32 %v3505, 2
        %v3523 = vmul.u32 %v3506, 2
        %v3524 = vmul.u32 %v3507, 2
        %vm3525 = vcmp.eq.s32.totalorder %v3438, %v3508
        %vm3526 = vcmp.eq.s32.totalorder %v3439, %v3508
        %vm3527 = vcmp.eq.s32.totalorder %v3438, %v3509
        %vm3528 = vcmp.eq.s32.totalorder %v3439, %v3509
        %vm3529 = vcmp.eq.s32.totalorder %v3438, %v3510
        %vm3530 = vcmp.eq.s32.totalorder %v3439, %v3510
        %vm3531 = vcmp.eq.s32.totalorder %v3438, %v3511
        %vm3532 = vcmp.eq.s32.totalorder %v3439, %v3511
        %vm3533 = vcmp.eq.s32.totalorder %v3438, %v3512
        %vm3534 = vcmp.eq.s32.totalorder %v3439, %v3512
        %vm3535 = vcmp.eq.s32.totalorder %v3438, %v3513
        %vm3536 = vcmp.eq.s32.totalorder %v3439, %v3513
        %vm3537 = vcmp.eq.s32.totalorder %v3438, %v3514
        %vm3538 = vcmp.eq.s32.totalorder %v3439, %v3514
        %vm3539 = vcmp.eq.s32.totalorder %v3438, %v3515
        %vm3540 = vcmp.eq.s32.totalorder %v3439, %v3515
        %vm3541 = vcmp.eq.s32.totalorder %v3438, %v3516
        %vm3542 = vcmp.eq.s32.totalorder %v3439, %v3516
        %vm3543 = vcmp.eq.s32.totalorder %v3438, %v3517
        %vm3544 = vcmp.eq.s32.totalorder %v3439, %v3517
        %vm3545 = vcmp.eq.s32.totalorder %v3438, %v3518
        %vm3546 = vcmp.eq.s32.totalorder %v3439, %v3518
        %vm3547 = vcmp.eq.s32.totalorder %v3438, %v3519
        %vm3548 = vcmp.eq.s32.totalorder %v3439, %v3519
        %vm3549 = vcmp.eq.s32.totalorder %v3438, %v3520
        %vm3550 = vcmp.eq.s32.totalorder %v3439, %v3520
        %vm3551 = vcmp.eq.s32.totalorder %v3438, %v3521
        %vm3552 = vcmp.eq.s32.totalorder %v3439, %v3521
        %vm3553 = vcmp.eq.s32.totalorder %v3438, %v3522
        %vm3554 = vcmp.eq.s32.totalorder %v3439, %v3522
        %vm3555 = vcmp.eq.s32.totalorder %v3438, %v3523
        %vm3556 = vcmp.eq.s32.totalorder %v3439, %v3523
        %vm3557 = vcmp.eq.s32.totalorder %v3438, %v3524
        %vm3558 = vcmp.eq.s32.totalorder %v3439, %v3524
        %vm3559 = vmand %vm3474, %vm3525
        %vm3560 = vmand %vm3474, %vm3526
        %vm3561 = vmand %vm3475, %vm3527
        %vm3562 = vmand %vm3475, %vm3528
        %vm3563 = vmand %vm3476, %vm3529
        %vm3564 = vmand %vm3476, %vm3530
        %vm3565 = vmand %vm3477, %vm3531
        %vm3566 = vmand %vm3477, %vm3532
        %vm3567 = vmand %vm3478, %vm3533
        %vm3568 = vmand %vm3478, %vm3534
        %vm3569 = vmand %vm3479, %vm3535
        %vm3570 = vmand %vm3479, %vm3536
        %vm3571 = vmand %vm3480, %vm3537
        %vm3572 = vmand %vm3480, %vm3538
        %vm3573 = vmand %vm3481, %vm3539
        %vm3574 = vmand %vm3481, %vm3540
        %vm3575 = vmand %vm3482, %vm3541
        %vm3576 = vmand %vm3482, %vm3542
        %vm3577 = vmand %vm3483, %vm3543
        %vm3578 = vmand %vm3483, %vm3544
        %vm3579 = vmand %vm3484, %vm3545
        %vm3580 = vmand %vm3484, %vm3546
        %vm3581 = vmand %vm3485, %vm3547
        %vm3582 = vmand %vm3485, %vm3548
        %vm3583 = vmand %vm3486, %vm3549
        %vm3584 = vmand %vm3486, %vm3550
        %vm3585 = vmand %vm3487, %vm3551
        %vm3586 = vmand %vm3487, %vm3552
        %vm3587 = vmand %vm3488, %vm3553
        %vm3588 = vmand %vm3488, %vm3554
        %vm3589 = vmand %vm3489, %vm3555
        %vm3590 = vmand %vm3489, %vm3556
        %vm3591 = vmand %vm3490, %vm3557
        %vm3592 = vmand %vm3490, %vm3558
        %v3593 = vsel %vm3559, 1.0, 0.0
        %v3594 = vsel %vm3560, 1.0, 0.0
        %v3595 = vsel %vm3561, 1.0, 0.0
        %v3596 = vsel %vm3562, 1.0, 0.0
        %v3597 = vsel %vm3563, 1.0, 0.0
        %v3598 = vsel %vm3564, 1.0, 0.0
        %v3599 = vsel %vm3565, 1.0, 0.0
        %v3600 = vsel %vm3566, 1.0, 0.0
        %v3601 = vsel %vm3567, 1.0, 0.0
        %v3602 = vsel %vm3568, 1.0, 0.0
        %v3603 = vsel %vm3569, 1.0, 0.0
        %v3604 = vsel %vm3570, 1.0, 0.0
        %v3605 = vsel %vm3571, 1.0, 0.0
        %v3606 = vsel %vm3572, 1.0, 0.0
        %v3607 = vsel %vm3573, 1.0, 0.0
        %v3608 = vsel %vm3574, 1.0, 0.0
        %v3609 = vsel %vm3575, 1.0, 0.0
        %v3610 = vsel %vm3576, 1.0, 0.0
        %v3611 = vsel %vm3577, 1.0, 0.0
        %v3612 = vsel %vm3578, 1.0, 0.0
        %v3613 = vsel %vm3579, 1.0, 0.0
        %v3614 = vsel %vm3580, 1.0, 0.0
        %v3615 = vsel %vm3581, 1.0, 0.0
        %v3616 = vsel %vm3582, 1.0, 0.0
        %v3617 = vsel %vm3583, 1.0, 0.0
        %v3618 = vsel %vm3584, 1.0, 0.0
        %v3619 = vsel %vm3585, 1.0, 0.0
        %v3620 = vsel %vm3586, 1.0, 0.0
        %v3621 = vsel %vm3587, 1.0, 0.0
        %v3622 = vsel %vm3588, 1.0, 0.0
        %v3623 = vsel %vm3589, 1.0, 0.0
        %v3624 = vsel %vm3590, 1.0, 0.0
        %v3625 = vsel %vm3591, 1.0, 0.0
        %v3626 = vsel %vm3592, 1.0, 0.0
        %v3627 = vadd.s32 %v3508, 1
        %v3628 = vadd.s32 %v3509, 1
        %v3629 = vadd.s32 %v3510, 1
        %v3630 = vadd.s32 %v3511, 1
        %v3631 = vadd.s32 %v3512, 1
        %v3632 = vadd.s32 %v3513, 1
        %v3633 = vadd.s32 %v3514, 1
        %v3634 = vadd.s32 %v3515, 1
        %v3635 = vadd.s32 %v3516, 1
        %v3636 = vadd.s32 %v3517, 1
        %v3637 = vadd.s32 %v3518, 1
        %v3638 = vadd.s32 %v3519, 1
        %v3639 = vadd.s32 %v3520, 1
        %v3640 = vadd.s32 %v3521, 1
        %v3641 = vadd.s32 %v3522, 1
        %v3642 = vadd.s32 %v3523, 1
        %v3643 = vadd.s32 %v3524, 1
        %vm3644 = vcmp.eq.s32.totalorder %v3438, %v3627
        %vm3645 = vcmp.eq.s32.totalorder %v3439, %v3627
        %vm3646 = vcmp.eq.s32.totalorder %v3438, %v3628
        %vm3647 = vcmp.eq.s32.totalorder %v3439, %v3628
        %vm3648 = vcmp.eq.s32.totalorder %v3438, %v3629
        %vm3649 = vcmp.eq.s32.totalorder %v3439, %v3629
        %vm3650 = vcmp.eq.s32.totalorder %v3438, %v3630
        %vm3651 = vcmp.eq.s32.totalorder %v3439, %v3630
        %vm3652 = vcmp.eq.s32.totalorder %v3438, %v3631
        %vm3653 = vcmp.eq.s32.totalorder %v3439, %v3631
        %vm3654 = vcmp.eq.s32.totalorder %v3438, %v3632
        %vm3655 = vcmp.eq.s32.totalorder %v3439, %v3632
        %vm3656 = vcmp.eq.s32.totalorder %v3438, %v3633
        %vm3657 = vcmp.eq.s32.totalorder %v3439, %v3633
        %vm3658 = vcmp.eq.s32.totalorder %v3438, %v3634
        %vm3659 = vcmp.eq.s32.totalorder %v3439, %v3634
        %vm3660 = vcmp.eq.s32.totalorder %v3438, %v3635
        %vm3661 = vcmp.eq.s32.totalorder %v3439, %v3635
        %vm3662 = vcmp.eq.s32.totalorder %v3438, %v3636
        %vm3663 = vcmp.eq.s32.totalorder %v3439, %v3636
        %vm3664 = vcmp.eq.s32.totalorder %v3438, %v3637
        %vm3665 = vcmp.eq.s32.totalorder %v3439, %v3637
        %vm3666 = vcmp.eq.s32.totalorder %v3438, %v3638
        %vm3667 = vcmp.eq.s32.totalorder %v3439, %v3638
        %vm3668 = vcmp.eq.s32.totalorder %v3438, %v3639
        %vm3669 = vcmp.eq.s32.totalorder %v3439, %v3639
        %vm3670 = vcmp.eq.s32.totalorder %v3438, %v3640
        %vm3671 = vcmp.eq.s32.totalorder %v3439, %v3640
        %vm3672 = vcmp.eq.s32.totalorder %v3438, %v3641
        %vm3673 = vcmp.eq.s32.totalorder %v3439, %v3641
        %vm3674 = vcmp.eq.s32.totalorder %v3438, %v3642
        %vm3675 = vcmp.eq.s32.totalorder %v3439, %v3642
        %vm3676 = vcmp.eq.s32.totalorder %v3438, %v3643
        %vm3677 = vcmp.eq.s32.totalorder %v3439, %v3643
        %vm3678 = vmand %vm3474, %vm3644
        %vm3679 = vmand %vm3474, %vm3645
        %vm3680 = vmand %vm3475, %vm3646
        %vm3681 = vmand %vm3475, %vm3647
        %vm3682 = vmand %vm3476, %vm3648
        %vm3683 = vmand %vm3476, %vm3649
        %vm3684 = vmand %vm3477, %vm3650
        %vm3685 = vmand %vm3477, %vm3651
        %vm3686 = vmand %vm3478, %vm3652
        %vm3687 = vmand %vm3478, %vm3653
        %vm3688 = vmand %vm3479, %vm3654
        %vm3689 = vmand %vm3479, %vm3655
        %vm3690 = vmand %vm3480, %vm3656
        %vm3691 = vmand %vm3480, %vm3657
        %vm3692 = vmand %vm3481, %vm3658
        %vm3693 = vmand %vm3481, %vm3659
        %vm3694 = vmand %vm3482, %vm3660
        %vm3695 = vmand %vm3482, %vm3661
        %vm3696 = vmand %vm3483, %vm3662
        %vm3697 = vmand %vm3483, %vm3663
        %vm3698 = vmand %vm3484, %vm3664
        %vm3699 = vmand %vm3484, %vm3665
        %vm3700 = vmand %vm3485, %vm3666
        %vm3701 = vmand %vm3485, %vm3667
        %vm3702 = vmand %vm3486, %vm3668
        %vm3703 = vmand %vm3486, %vm3669
        %vm3704 = vmand %vm3487, %vm3670
        %vm3705 = vmand %vm3487, %vm3671
        %vm3706 = vmand %vm3488, %vm3672
        %vm3707 = vmand %vm3488, %vm3673
        %vm3708 = vmand %vm3489, %vm3674
        %vm3709 = vmand %vm3489, %vm3675
        %vm3710 = vmand %vm3490, %vm3676
        %vm3711 = vmand %vm3490, %vm3677
        %v3712 = vsel %vm3678, 1.0, 0.0
        %v3713 = vsel %vm3679, 1.0, 0.0
        %v3714 = vsel %vm3680, 1.0, 0.0
        %v3715 = vsel %vm3681, 1.0, 0.0
        %v3716 = vsel %vm3682, 1.0, 0.0
        %v3717 = vsel %vm3683, 1.0, 0.0
        %v3718 = vsel %vm3684, 1.0, 0.0
        %v3719 = vsel %vm3685, 1.0, 0.0
        %v3720 = vsel %vm3686, 1.0, 0.0
        %v3721 = vsel %vm3687, 1.0, 0.0
        %v3722 = vsel %vm3688, 1.0, 0.0
        %v3723 = vsel %vm3689, 1.0, 0.0
        %v3724 = vsel %vm3690, 1.0, 0.0
        %v3725 = vsel %vm3691, 1.0, 0.0
        %v3726 = vsel %vm3692, 1.0, 0.0
        %v3727 = vsel %vm3693, 1.0, 0.0
        %v3728 = vsel %vm3694, 1.0, 0.0
        %v3729 = vsel %vm3695, 1.0, 0.0
        %v3730 = vsel %vm3696, 1.0, 0.0
        %v3731 = vsel %vm3697, 1.0, 0.0
        %v3732 = vsel %vm3698, 1.0, 0.0
        %v3733 = vsel %vm3699, 1.0, 0.0
        %v3734 = vsel %vm3700, 1.0, 0.0
        %v3735 = vsel %vm3701, 1.0, 0.0
        %v3736 = vsel %vm3702, 1.0, 0.0
        %v3737 = vsel %vm3703, 1.0, 0.0
        %v3738 = vsel %vm3704, 1.0, 0.0
        %v3739 = vsel %vm3705, 1.0, 0.0
        %v3740 = vsel %vm3706, 1.0, 0.0
        %v3741 = vsel %vm3707, 1.0, 0.0
        %v3742 = vsel %vm3708, 1.0, 0.0
        %v3743 = vsel %vm3709, 1.0, 0.0
        %v3744 = vsel %vm3710, 1.0, 0.0
        %v3745 = vsel %vm3711, 1.0, 0.0
        %vm3746 = vcmask 998400
        %v3748 = vsel %vm3746, %v3594, 0
        %v3751 = vsel %vm3746, %v3596, 0
        %v3754 = vsel %vm3746, %v3598, 0
        %v3757 = vsel %vm3746, %v3600, 0
        %v3760 = vsel %vm3746, %v3602, 0
        %v3763 = vsel %vm3746, %v3604, 0
        %v3766 = vsel %vm3746, %v3606, 0
        %v3769 = vsel %vm3746, %v3608, 0
        %v3772 = vsel %vm3746, %v3610, 0
        %v3775 = vsel %vm3746, %v3612, 0
        %v3778 = vsel %vm3746, %v3614, 0
        %v3781 = vsel %vm3746, %v3616, 0
        %v3784 = vsel %vm3746, %v3618, 0
        %v3787 = vsel %vm3746, %v3620, 0
        %v3790 = vsel %vm3746, %v3622, 0
        %v3793 = vsel %vm3746, %v3624, 0
        %v3796 = vsel %vm3746, %v3626, 0
        %v3799 = vsel %vm1409, %v3418, 0
        %3801 = vmatprep.subr.mxu0 0.0
        %3802 = vmatpush1.msra.mxu0 %v3402
        %3803 = vmatprep.subr.mxu0 0.0
        %3804 = vmatpush1.msra.mxu0 %v3401
        %3805 = vmatprep.subr.mxu0 0.0
        %3806 = vmatpush1.msra.mxu0 %v3400
        %3807 = vmatprep.subr.mxu0 0.0
        %3808 = vmatpush1.msra.mxu0 %v3399
        %3809 = vmatprep.subr.mxu0 0.0
        %3810 = vmatpush1.msra.mxu0 %v3398
        %3811 = vmatprep.subr.mxu0 0.0
        %3812 = vmatpush1.msra.mxu0 %v3397
        %3813 = vmatprep.subr.mxu0 0.0
        %3814 = vmatpush1.msra.mxu0 %v3396
        %3815 = vmatprep.subr.mxu0 0.0
        %3816 = vmatpush1.msra.mxu0 %v3395
        %3817 = vmatprep.subr.mxu0 0.0
        %3818 = vmatpush1.msra.mxu0 %v3394
        %3819 = vmatprep.subr.mxu0 0.0
        %3820 = vmatpush1.msra.mxu0 %v3393
        %3821 = vmatprep.subr.mxu0 0.0
        %3822 = vmatpush1.msra.mxu0 %v3392
        %3823 = vmatprep.subr.mxu0 0.0
        %3824 = vmatpush1.msra.mxu0 %v3391
        %3825 = vmatprep.subr.mxu0 0.0
        %3826 = vmatpush1.msra.mxu0 %v3390
        %3827 = vmatprep.subr.mxu0 0.0
        %3828 = vmatpush1.msra.mxu0 %v3389
        %3829 = vmatprep.subr.mxu0 0.0
        %3830 = vmatpush1.msra.mxu0 %v3388
        %3831 = vmatprep.subr.mxu0 0.0
        %3832 = vmatpush1.msra.mxu0 %v3387
        %3833 = vmatprep.subr.mxu0 0.0
        %3834 = vmatpush2.msra.mxu0 %v3799
        %3835 = vmatprep.subr.mxu0 0.0
        %3836 = vmatpush2.msra.mxu0 %v3417
        %3837 = vmatprep.subr.mxu0 0.0
        %3838 = vmatpush2.msra.mxu0 %v3416
        %3839 = vmatprep.subr.mxu0 0.0
        %3840 = vmatpush2.msra.mxu0 %v3415
        %3841 = vmatprep.subr.mxu0 0.0
        %3842 = vmatpush2.msra.mxu0 %v3414
        %3843 = vmatprep.subr.mxu0 0.0
        %3844 = vmatpush2.msra.mxu0 %v3413
        %3845 = vmatprep.subr.mxu0 0.0
        %3846 = vmatpush2.msra.mxu0 %v3412
        %3847 = vmatprep.subr.mxu0 0.0
        %3848 = vmatpush2.msra.mxu0 %v3411
        %3849 = vmatprep.subr.mxu0 0.0
        %3850 = vmatpush2.msra.mxu0 %v3410
        %3851 = vmatprep.subr.mxu0 0.0
        %3852 = vmatpush2.msra.mxu0 %v3409
        %3853 = vmatprep.subr.mxu0 0.0
        %3854 = vmatpush2.msra.mxu0 %v3408
        %3855 = vmatprep.subr.mxu0 0.0
        %3856 = vmatpush2.msra.mxu0 %v3407
        %3857 = vmatprep.subr.mxu0 0.0
        %3858 = vmatpush2.msra.mxu0 %v3406
        %3859 = vmatprep.subr.mxu0 0.0
        %3860 = vmatpush2.msra.mxu0 %v3405
        %3861 = vmatprep.subr.mxu0 0.0
        %3862 = vmatpush2.msra.mxu0 %v3404
        %3863 = vmatprep.subr.mxu0 0.0
        %3864 = vmatpush2.msra.mxu0 %v3403
        %3865 = vmatprep.mubr.f32.mxu0 %v3748
        %3866 = vmatmul.mubr.f32.gmra.mxu0 %v3593
        %v3867 = vpop.f32.mrf.mxu0
        %v3868 = vadd.f32 0.0, %v3867
        %v3869 = vpop.f32.mrf.mxu0
        %3870 = vmatprep.mubr.f32.mxu0 %v3751
        %3871 = vmatmul.mubr.f32.gmra.mxu0 %v3595
        %v3872 = vpop.f32.mrf.mxu0
        %v3873 = vadd.f32 0.0, %v3872
        %v3874 = vpop.f32.mrf.mxu0
        %3875 = vmatprep.mubr.f32.mxu0 %v3754
        %3876 = vmatmul.mubr.f32.gmra.mxu0 %v3597
        %v3877 = vpop.f32.mrf.mxu0
        %v3878 = vadd.f32 0.0, %v3877
        %v3879 = vpop.f32.mrf.mxu0
        %3880 = vmatprep.mubr.f32.mxu0 %v3757
        %3881 = vmatmul.mubr.f32.gmra.mxu0 %v3599
        %v3882 = vpop.f32.mrf.mxu0
        %v3883 = vadd.f32 0.0, %v3882
        %v3884 = vpop.f32.mrf.mxu0
        %3885 = vmatprep.mubr.f32.mxu0 %v3760
        %3886 = vmatmul.mubr.f32.gmra.mxu0 %v3601
        %v3887 = vpop.f32.mrf.mxu0
        %v3888 = vadd.f32 0.0, %v3887
        %v3889 = vpop.f32.mrf.mxu0
        %3890 = vmatprep.mubr.f32.mxu0 %v3763
        %3891 = vmatmul.mubr.f32.gmra.mxu0 %v3603
        %v3892 = vpop.f32.mrf.mxu0
        %v3893 = vadd.f32 0.0, %v3892
        %v3894 = vpop.f32.mrf.mxu0
        %3895 = vmatprep.mubr.f32.mxu0 %v3766
        %3896 = vmatmul.mubr.f32.gmra.mxu0 %v3605
        %v3897 = vpop.f32.mrf.mxu0
        %v3898 = vadd.f32 0.0, %v3897
        %v3899 = vpop.f32.mrf.mxu0
        %3900 = vmatprep.mubr.f32.mxu0 %v3769
        %3901 = vmatmul.mubr.f32.gmra.mxu0 %v3607
        %v3902 = vpop.f32.mrf.mxu0
        %v3903 = vadd.f32 0.0, %v3902
        %v3904 = vpop.f32.mrf.mxu0
        %3905 = vmatprep.mubr.f32.mxu0 %v3772
        %3906 = vmatmul.mubr.f32.gmra.mxu0 %v3609
        %v3907 = vpop.f32.mrf.mxu0
        %v3908 = vadd.f32 0.0, %v3907
        %v3909 = vpop.f32.mrf.mxu0
        %3910 = vmatprep.mubr.f32.mxu0 %v3775
        %3911 = vmatmul.mubr.f32.gmra.mxu0 %v3611
        %v3912 = vpop.f32.mrf.mxu0
        %v3913 = vadd.f32 0.0, %v3912
        %v3914 = vpop.f32.mrf.mxu0
        %3915 = vmatprep.mubr.f32.mxu0 %v3778
        %3916 = vmatmul.mubr.f32.gmra.mxu0 %v3613
        %v3917 = vpop.f32.mrf.mxu0
        %v3918 = vadd.f32 0.0, %v3917
        %v3919 = vpop.f32.mrf.mxu0
        %3920 = vmatprep.mubr.f32.mxu0 %v3781
        %3921 = vmatmul.mubr.f32.gmra.mxu0 %v3615
        %v3922 = vpop.f32.mrf.mxu0
        %v3923 = vadd.f32 0.0, %v3922
        %v3924 = vpop.f32.mrf.mxu0
        %3925 = vmatprep.mubr.f32.mxu0 %v3784
        %3926 = vmatmul.mubr.f32.gmra.mxu0 %v3617
        %v3927 = vpop.f32.mrf.mxu0
        %v3928 = vadd.f32 0.0, %v3927
        %v3929 = vpop.f32.mrf.mxu0
        %3930 = vmatprep.mubr.f32.mxu0 %v3787
        %3931 = vmatmul.mubr.f32.gmra.mxu0 %v3619
        %v3932 = vpop.f32.mrf.mxu0
        %v3933 = vadd.f32 0.0, %v3932
        %v3934 = vpop.f32.mrf.mxu0
        %3935 = vmatprep.mubr.f32.mxu0 %v3790
        %3936 = vmatmul.mubr.f32.gmra.mxu0 %v3621
        %v3937 = vpop.f32.mrf.mxu0
        %v3938 = vadd.f32 0.0, %v3937
        %v3939 = vpop.f32.mrf.mxu0
        %3940 = vmatprep.mubr.f32.mxu0 %v3793
        %3941 = vmatmul.mubr.f32.gmra.mxu0 %v3623
        %v3942 = vpop.f32.mrf.mxu0
        %v3943 = vadd.f32 0.0, %v3942
        %v3944 = vpop.f32.mrf.mxu0
        %3945 = vmatprep.mubr.f32.mxu0 %v3796
        %3946 = vmatmul.mubr.f32.gmra.mxu0 %v3625
        %v3947 = vpop.f32.mrf.mxu0
        %v3948 = vadd.f32 0.0, %v3947
        %v3949 = vpop.f32.mrf.mxu0
        %3950 = vdwg.mxu0
        %v3952 = vsel %vm3746, %v3713, 0
        %v3955 = vsel %vm3746, %v3715, 0
        %v3958 = vsel %vm3746, %v3717, 0
        %v3961 = vsel %vm3746, %v3719, 0
        %v3964 = vsel %vm3746, %v3721, 0
        %v3967 = vsel %vm3746, %v3723, 0
        %v3970 = vsel %vm3746, %v3725, 0
        %v3973 = vsel %vm3746, %v3727, 0
        %v3976 = vsel %vm3746, %v3729, 0
        %v3979 = vsel %vm3746, %v3731, 0
        %v3982 = vsel %vm3746, %v3733, 0
        %v3985 = vsel %vm3746, %v3735, 0
        %v3988 = vsel %vm3746, %v3737, 0
        %v3991 = vsel %vm3746, %v3739, 0
        %v3994 = vsel %vm3746, %v3741, 0
        %v3997 = vsel %vm3746, %v3743, 0
        %v4000 = vsel %vm3746, %v3745, 0
        %4002 = vmatprep.subr.mxu0 0.0
        %4003 = vmatpush1.msra.mxu0 %v3402
        %4004 = vmatprep.subr.mxu0 0.0
        %4005 = vmatpush1.msra.mxu0 %v3401
        %4006 = vmatprep.subr.mxu0 0.0
        %4007 = vmatpush1.msra.mxu0 %v3400
        %4008 = vmatprep.subr.mxu0 0.0
        %4009 = vmatpush1.msra.mxu0 %v3399
        %4010 = vmatprep.subr.mxu0 0.0
        %4011 = vmatpush1.msra.mxu0 %v3398
        %4012 = vmatprep.subr.mxu0 0.0
        %4013 = vmatpush1.msra.mxu0 %v3397
        %4014 = vmatprep.subr.mxu0 0.0
        %4015 = vmatpush1.msra.mxu0 %v3396
        %4016 = vmatprep.subr.mxu0 0.0
        %4017 = vmatpush1.msra.mxu0 %v3395
        %4018 = vmatprep.subr.mxu0 0.0
        %4019 = vmatpush1.msra.mxu0 %v3394
        %4020 = vmatprep.subr.mxu0 0.0
        %4021 = vmatpush1.msra.mxu0 %v3393
        %4022 = vmatprep.subr.mxu0 0.0
        %4023 = vmatpush1.msra.mxu0 %v3392
        %4024 = vmatprep.subr.mxu0 0.0
        %4025 = vmatpush1.msra.mxu0 %v3391
        %4026 = vmatprep.subr.mxu0 0.0
        %4027 = vmatpush1.msra.mxu0 %v3390
        %4028 = vmatprep.subr.mxu0 0.0
        %4029 = vmatpush1.msra.mxu0 %v3389
        %4030 = vmatprep.subr.mxu0 0.0
        %4031 = vmatpush1.msra.mxu0 %v3388
        %4032 = vmatprep.subr.mxu0 0.0
        %4033 = vmatpush1.msra.mxu0 %v3387
        %4034 = vmatprep.subr.mxu0 0.0
        %4035 = vmatpush2.msra.mxu0 %v3799
        %4036 = vmatprep.subr.mxu0 0.0
        %4037 = vmatpush2.msra.mxu0 %v3417
        %4038 = vmatprep.subr.mxu0 0.0
        %4039 = vmatpush2.msra.mxu0 %v3416
        %4040 = vmatprep.subr.mxu0 0.0
        %4041 = vmatpush2.msra.mxu0 %v3415
        %4042 = vmatprep.subr.mxu0 0.0
        %4043 = vmatpush2.msra.mxu0 %v3414
        %4044 = vmatprep.subr.mxu0 0.0
        %4045 = vmatpush2.msra.mxu0 %v3413
        %4046 = vmatprep.subr.mxu0 0.0
        %4047 = vmatpush2.msra.mxu0 %v3412
        %4048 = vmatprep.subr.mxu0 0.0
        %4049 = vmatpush2.msra.mxu0 %v3411
        %4050 = vmatprep.subr.mxu0 0.0
        %4051 = vmatpush2.msra.mxu0 %v3410
        %4052 = vmatprep.subr.mxu0 0.0
        %4053 = vmatpush2.msra.mxu0 %v3409
        %4054 = vmatprep.subr.mxu0 0.0
        %4055 = vmatpush2.msra.mxu0 %v3408
        %4056 = vmatprep.subr.mxu0 0.0
        %4057 = vmatpush2.msra.mxu0 %v3407
        %4058 = vmatprep.subr.mxu0 0.0
        %4059 = vmatpush2.msra.mxu0 %v3406
        %4060 = vmatprep.subr.mxu0 0.0
        %4061 = vmatpush2.msra.mxu0 %v3405
        %4062 = vmatprep.subr.mxu0 0.0
        %4063 = vmatpush2.msra.mxu0 %v3404
        %4064 = vmatprep.subr.mxu0 0.0
        %4065 = vmatpush2.msra.mxu0 %v3403
        %4066 = vmatprep.mubr.f32.mxu0 %v3952
        %4067 = vmatmul.mubr.f32.gmra.mxu0 %v3712
        %v4068 = vpop.f32.mrf.mxu0
        %v4069 = vadd.f32 0.0, %v4068
        %v4070 = vpop.f32.mrf.mxu0
        %4071 = vmatprep.mubr.f32.mxu0 %v3955
        %4072 = vmatmul.mubr.f32.gmra.mxu0 %v3714
        %v4073 = vpop.f32.mrf.mxu0
        %v4074 = vadd.f32 0.0, %v4073
        %v4075 = vpop.f32.mrf.mxu0
        %4076 = vmatprep.mubr.f32.mxu0 %v3958
        %4077 = vmatmul.mubr.f32.gmra.mxu0 %v3716
        %v4078 = vpop.f32.mrf.mxu0
        %v4079 = vadd.f32 0.0, %v4078
        %v4080 = vpop.f32.mrf.mxu0
        %4081 = vmatprep.mubr.f32.mxu0 %v3961
        %4082 = vmatmul.mubr.f32.gmra.mxu0 %v3718
        %v4083 = vpop.f32.mrf.mxu0
        %v4084 = vadd.f32 0.0, %v4083
        %v4085 = vpop.f32.mrf.mxu0
        %4086 = vmatprep.mubr.f32.mxu0 %v3964
        %4087 = vmatmul.mubr.f32.gmra.mxu0 %v3720
        %v4088 = vpop.f32.mrf.mxu0
        %v4089 = vadd.f32 0.0, %v4088
        %v4090 = vpop.f32.mrf.mxu0
        %4091 = vmatprep.mubr.f32.mxu0 %v3967
        %4092 = vmatmul.mubr.f32.gmra.mxu0 %v3722
        %v4093 = vpop.f32.mrf.mxu0
        %v4094 = vadd.f32 0.0, %v4093
        %v4095 = vpop.f32.mrf.mxu0
        %4096 = vmatprep.mubr.f32.mxu0 %v3970
        %4097 = vmatmul.mubr.f32.gmra.mxu0 %v3724
        %v4098 = vpop.f32.mrf.mxu0
        %v4099 = vadd.f32 0.0, %v4098
        %v4100 = vpop.f32.mrf.mxu0
        %4101 = vmatprep.mubr.f32.mxu0 %v3973
        %4102 = vmatmul.mubr.f32.gmra.mxu0 %v3726
        %v4103 = vpop.f32.mrf.mxu0
        %v4104 = vadd.f32 0.0, %v4103
        %v4105 = vpop.f32.mrf.mxu0
        %4106 = vmatprep.mubr.f32.mxu0 %v3976
        %4107 = vmatmul.mubr.f32.gmra.mxu0 %v3728
        %v4108 = vpop.f32.mrf.mxu0
        %v4109 = vadd.f32 0.0, %v4108
        %v4110 = vpop.f32.mrf.mxu0
        %4111 = vmatprep.mubr.f32.mxu0 %v3979
        %4112 = vmatmul.mubr.f32.gmra.mxu0 %v3730
        %v4113 = vpop.f32.mrf.mxu0
        %v4114 = vadd.f32 0.0, %v4113
        %v4115 = vpop.f32.mrf.mxu0
        %4116 = vmatprep.mubr.f32.mxu0 %v3982
        %4117 = vmatmul.mubr.f32.gmra.mxu0 %v3732
        %v4118 = vpop.f32.mrf.mxu0
        %v4119 = vadd.f32 0.0, %v4118
        %v4120 = vpop.f32.mrf.mxu0
        %4121 = vmatprep.mubr.f32.mxu0 %v3985
        %4122 = vmatmul.mubr.f32.gmra.mxu0 %v3734
        %v4123 = vpop.f32.mrf.mxu0
        %v4124 = vadd.f32 0.0, %v4123
        %v4125 = vpop.f32.mrf.mxu0
        %4126 = vmatprep.mubr.f32.mxu0 %v3988
        %4127 = vmatmul.mubr.f32.gmra.mxu0 %v3736
        %v4128 = vpop.f32.mrf.mxu0
        %v4129 = vadd.f32 0.0, %v4128
        %v4130 = vpop.f32.mrf.mxu0
        %4131 = vmatprep.mubr.f32.mxu0 %v3991
        %4132 = vmatmul.mubr.f32.gmra.mxu0 %v3738
        %v4133 = vpop.f32.mrf.mxu0
        %v4134 = vadd.f32 0.0, %v4133
        %v4135 = vpop.f32.mrf.mxu0
        %4136 = vmatprep.mubr.f32.mxu0 %v3994
        %4137 = vmatmul.mubr.f32.gmra.mxu0 %v3740
        %v4138 = vpop.f32.mrf.mxu0
        %v4139 = vadd.f32 0.0, %v4138
        %v4140 = vpop.f32.mrf.mxu0
        %4141 = vmatprep.mubr.f32.mxu0 %v3997
        %4142 = vmatmul.mubr.f32.gmra.mxu0 %v3742
        %v4143 = vpop.f32.mrf.mxu0
        %v4144 = vadd.f32 0.0, %v4143
        %v4145 = vpop.f32.mrf.mxu0
        %4146 = vmatprep.mubr.f32.mxu0 %v4000
        %4147 = vmatmul.mubr.f32.gmra.mxu0 %v3744
        %v4148 = vpop.f32.mrf.mxu0
        %v4149 = vadd.f32 0.0, %v4148
        %v4150 = vpop.f32.mrf.mxu0
        %4151 = vdwg.mxu0
        %v4152 = vmax.f32 %v3868, %v4069
        %v4153 = vmax.f32 %v3873, %v4074
        %v4154 = vmax.f32 %v3878, %v4079
        %v4155 = vmax.f32 %v3883, %v4084
        %v4156 = vmax.f32 %v3888, %v4089
        %v4157 = vmax.f32 %v3893, %v4094
        %v4158 = vmax.f32 %v3898, %v4099
        %v4159 = vmax.f32 %v3903, %v4104
        %v4160 = vmax.f32 %v3908, %v4109
        %v4161 = vmax.f32 %v3913, %v4114
        %v4162 = vmax.f32 %v3918, %v4119
        %v4163 = vmax.f32 %v3923, %v4124
        %v4164 = vmax.f32 %v3928, %v4129
        %v4165 = vmax.f32 %v3933, %v4134
        %v4166 = vmax.f32 %v3938, %v4139
        %v4167 = vmax.f32 %v3943, %v4144
        %v4168 = vmax.f32 %v3948, %v4149
        %v4185 = vrot.slane %v4152, 1
        %v4186 = vrot.slane %v4153, 1
        %v4187 = vsel %vm609, %v4185, %v4186
        %v4188 = vrot.slane %v4154, 1
        %v4189 = vsel %vm609, %v4186, %v4188
        %v4190 = vrot.slane %v4155, 1
        %v4191 = vsel %vm609, %v4188, %v4190
        %v4192 = vrot.slane %v4156, 1
        %v4193 = vsel %vm609, %v4190, %v4192
        %v4194 = vrot.slane %v4157, 1
        %v4195 = vsel %vm609, %v4192, %v4194
        %v4196 = vrot.slane %v4158, 1
        %v4197 = vsel %vm609, %v4194, %v4196
        %v4198 = vrot.slane %v4159, 1
        %v4199 = vsel %vm609, %v4196, %v4198
        %v4200 = vrot.slane %v4160, 1
        %v4201 = vsel %vm609, %v4198, %v4200
        %v4202 = vrot.slane %v4161, 1
        %v4203 = vsel %vm609, %v4200, %v4202
        %v4204 = vrot.slane %v4162, 1
        %v4205 = vsel %vm609, %v4202, %v4204
        %v4206 = vrot.slane %v4163, 1
        %v4207 = vsel %vm609, %v4204, %v4206
        %v4208 = vrot.slane %v4164, 1
        %v4209 = vsel %vm609, %v4206, %v4208
        %v4210 = vrot.slane %v4165, 1
        %v4211 = vsel %vm609, %v4208, %v4210
        %v4212 = vrot.slane %v4166, 1
        %v4213 = vsel %vm609, %v4210, %v4212
        %v4214 = vrot.slane %v4167, 1
        %v4215 = vsel %vm609, %v4212, %v4214
        %4216 = vrot.lane.b32.xlu0 %v4187, 16
        %v4217 = vpop.permute.xlu0 %4216
        %4218 = vrot.lane.b32.xlu0 %v4189, 16
        %v4219 = vpop.permute.xlu0 %4218
        %4220 = vrot.lane.b32.xlu0 %v4191, 16
        %v4221 = vpop.permute.xlu0 %4220
        %4222 = vrot.lane.b32.xlu0 %v4193, 16
        %v4223 = vpop.permute.xlu0 %4222
        %4224 = vrot.lane.b32.xlu0 %v4195, 16
        %v4225 = vpop.permute.xlu0 %4224
        %4226 = vrot.lane.b32.xlu0 %v4197, 16
        %v4227 = vpop.permute.xlu0 %4226
        %4228 = vrot.lane.b32.xlu0 %v4199, 16
        %v4229 = vpop.permute.xlu0 %4228
        %4230 = vrot.lane.b32.xlu0 %v4201, 16
        %v4231 = vpop.permute.xlu0 %4230
        %4232 = vrot.lane.b32.xlu0 %v4203, 16
        %v4233 = vpop.permute.xlu0 %4232
        %4234 = vrot.lane.b32.xlu0 %v4205, 16
        %v4235 = vpop.permute.xlu0 %4234
        %4236 = vrot.lane.b32.xlu0 %v4207, 16
        %v4237 = vpop.permute.xlu0 %4236
        %4238 = vrot.lane.b32.xlu0 %v4209, 16
        %v4239 = vpop.permute.xlu0 %4238
        %4240 = vrot.lane.b32.xlu0 %v4211, 16
        %v4241 = vpop.permute.xlu0 %4240
        %4242 = vrot.lane.b32.xlu0 %v4213, 16
        %v4243 = vpop.permute.xlu0 %4242
        %4244 = vrot.lane.b32.xlu0 %v4215, 16
        %v4245 = vpop.permute.xlu0 %4244
        %4246 = vrot.lane.b32.xlu0 %v4214, 16
        %v4247 = vpop.permute.xlu0 %4246
        %v4264 = vrot.slane %v4152, 2
        %v4265 = vrot.slane %v4153, 2
        %v4266 = vsel %vm769, %v4264, %v4265
        %v4267 = vrot.slane %v4154, 2
        %v4268 = vsel %vm769, %v4265, %v4267
        %v4269 = vrot.slane %v4155, 2
        %v4270 = vsel %vm769, %v4267, %v4269
        %v4271 = vrot.slane %v4156, 2
        %v4272 = vsel %vm769, %v4269, %v4271
        %v4273 = vrot.slane %v4157, 2
        %v4274 = vsel %vm769, %v4271, %v4273
        %v4275 = vrot.slane %v4158, 2
        %v4276 = vsel %vm769, %v4273, %v4275
        %v4277 = vrot.slane %v4159, 2
        %v4278 = vsel %vm769, %v4275, %v4277
        %v4279 = vrot.slane %v4160, 2
        %v4280 = vsel %vm769, %v4277, %v4279
        %v4281 = vrot.slane %v4161, 2
        %v4282 = vsel %vm769, %v4279, %v4281
        %v4283 = vrot.slane %v4162, 2
        %v4284 = vsel %vm769, %v4281, %v4283
        %v4285 = vrot.slane %v4163, 2
        %v4286 = vsel %vm769, %v4283, %v4285
        %v4287 = vrot.slane %v4164, 2
        %v4288 = vsel %vm769, %v4285, %v4287
        %v4289 = vrot.slane %v4165, 2
        %v4290 = vsel %vm769, %v4287, %v4289
        %v4291 = vrot.slane %v4166, 2
        %v4292 = vsel %vm769, %v4289, %v4291
        %v4293 = vrot.slane %v4167, 2
        %v4294 = vsel %vm769, %v4291, %v4293
        %4295 = vrot.lane.b32.xlu0 %v4266, 32
        %v4296 = vpop.permute.xlu0 %4295
        %4297 = vrot.lane.b32.xlu0 %v4268, 32
        %v4298 = vpop.permute.xlu0 %4297
        %4299 = vrot.lane.b32.xlu0 %v4270, 32
        %v4300 = vpop.permute.xlu0 %4299
        %4301 = vrot.lane.b32.xlu0 %v4272, 32
        %v4302 = vpop.permute.xlu0 %4301
        %4303 = vrot.lane.b32.xlu0 %v4274, 32
        %v4304 = vpop.permute.xlu0 %4303
        %4305 = vrot.lane.b32.xlu0 %v4276, 32
        %v4306 = vpop.permute.xlu0 %4305
        %4307 = vrot.lane.b32.xlu0 %v4278, 32
        %v4308 = vpop.permute.xlu0 %4307
        %4309 = vrot.lane.b32.xlu0 %v4280, 32
        %v4310 = vpop.permute.xlu0 %4309
        %4311 = vrot.lane.b32.xlu0 %v4282, 32
        %v4312 = vpop.permute.xlu0 %4311
        %4313 = vrot.lane.b32.xlu0 %v4284, 32
        %v4314 = vpop.permute.xlu0 %4313
        %4315 = vrot.lane.b32.xlu0 %v4286, 32
        %v4316 = vpop.permute.xlu0 %4315
        %4317 = vrot.lane.b32.xlu0 %v4288, 32
        %v4318 = vpop.permute.xlu0 %4317
        %4319 = vrot.lane.b32.xlu0 %v4290, 32
        %v4320 = vpop.permute.xlu0 %4319
        %4321 = vrot.lane.b32.xlu0 %v4292, 32
        %v4322 = vpop.permute.xlu0 %4321
        %4323 = vrot.lane.b32.xlu0 %v4294, 32
        %v4324 = vpop.permute.xlu0 %4323
        %4325 = vrot.lane.b32.xlu0 %v4293, 32
        %v4326 = vpop.permute.xlu0 %4325
        %v4343 = vrot.slane %v4152, 3
        %v4344 = vrot.slane %v4153, 3
        %v4345 = vsel %vm929, %v4343, %v4344
        %v4346 = vrot.slane %v4154, 3
        %v4347 = vsel %vm929, %v4344, %v4346
        %v4348 = vrot.slane %v4155, 3
        %v4349 = vsel %vm929, %v4346, %v4348
        %v4350 = vrot.slane %v4156, 3
        %v4351 = vsel %vm929, %v4348, %v4350
        %v4352 = vrot.slane %v4157, 3
        %v4353 = vsel %vm929, %v4350, %v4352
        %v4354 = vrot.slane %v4158, 3
        %v4355 = vsel %vm929, %v4352, %v4354
        %v4356 = vrot.slane %v4159, 3
        %v4357 = vsel %vm929, %v4354, %v4356
        %v4358 = vrot.slane %v4160, 3
        %v4359 = vsel %vm929, %v4356, %v4358
        %v4360 = vrot.slane %v4161, 3
        %v4361 = vsel %vm929, %v4358, %v4360
        %v4362 = vrot.slane %v4162, 3
        %v4363 = vsel %vm929, %v4360, %v4362
        %v4364 = vrot.slane %v4163, 3
        %v4365 = vsel %vm929, %v4362, %v4364
        %v4366 = vrot.slane %v4164, 3
        %v4367 = vsel %vm929, %v4364, %v4366
        %v4368 = vrot.slane %v4165, 3
        %v4369 = vsel %vm929, %v4366, %v4368
        %v4370 = vrot.slane %v4166, 3
        %v4371 = vsel %vm929, %v4368, %v4370
        %v4372 = vrot.slane %v4167, 3
        %v4373 = vsel %vm929, %v4370, %v4372
        %4374 = vrot.lane.b32.xlu0 %v4345, 48
        %v4375 = vpop.permute.xlu0 %4374
        %4376 = vrot.lane.b32.xlu0 %v4347, 48
        %v4377 = vpop.permute.xlu0 %4376
        %4378 = vrot.lane.b32.xlu0 %v4349, 48
        %v4379 = vpop.permute.xlu0 %4378
        %4380 = vrot.lane.b32.xlu0 %v4351, 48
        %v4381 = vpop.permute.xlu0 %4380
        %4382 = vrot.lane.b32.xlu0 %v4353, 48
        %v4383 = vpop.permute.xlu0 %4382
        %4384 = vrot.lane.b32.xlu0 %v4355, 48
        %v4385 = vpop.permute.xlu0 %4384
        %4386 = vrot.lane.b32.xlu0 %v4357, 48
        %v4387 = vpop.permute.xlu0 %4386
        %4388 = vrot.lane.b32.xlu0 %v4359, 48
        %v4389 = vpop.permute.xlu0 %4388
        %4390 = vrot.lane.b32.xlu0 %v4361, 48
        %v4391 = vpop.permute.xlu0 %4390
        %4392 = vrot.lane.b32.xlu0 %v4363, 48
        %v4393 = vpop.permute.xlu0 %4392
        %4394 = vrot.lane.b32.xlu0 %v4365, 48
        %v4395 = vpop.permute.xlu0 %4394
        %4396 = vrot.lane.b32.xlu0 %v4367, 48
        %v4397 = vpop.permute.xlu0 %4396
        %4398 = vrot.lane.b32.xlu0 %v4369, 48
        %v4399 = vpop.permute.xlu0 %4398
        %4400 = vrot.lane.b32.xlu0 %v4371, 48
        %v4401 = vpop.permute.xlu0 %4400
        %4402 = vrot.lane.b32.xlu0 %v4373, 48
        %v4403 = vpop.permute.xlu0 %4402
        %4404 = vrot.lane.b32.xlu0 %v4372, 48
        %v4405 = vpop.permute.xlu0 %4404
        %v4423 = vrot.slane %v4152, 4
        %v4424 = vrot.slane %v4153, 4
        %v4425 = vsel %vm1089, %v4423, %v4424
        %v4426 = vrot.slane %v4154, 4
        %v4427 = vsel %vm1089, %v4424, %v4426
        %v4428 = vrot.slane %v4155, 4
        %v4429 = vsel %vm1089, %v4426, %v4428
        %v4430 = vrot.slane %v4156, 4
        %v4431 = vsel %vm1089, %v4428, %v4430
        %v4432 = vrot.slane %v4157, 4
        %v4433 = vsel %vm1089, %v4430, %v4432
        %v4434 = vrot.slane %v4158, 4
        %v4435 = vsel %vm1089, %v4432, %v4434
        %v4436 = vrot.slane %v4159, 4
        %v4437 = vsel %vm1089, %v4434, %v4436
        %v4438 = vrot.slane %v4160, 4
        %v4439 = vsel %vm1089, %v4436, %v4438
        %v4440 = vrot.slane %v4161, 4
        %v4441 = vsel %vm1089, %v4438, %v4440
        %v4442 = vrot.slane %v4162, 4
        %v4443 = vsel %vm1089, %v4440, %v4442
        %v4444 = vrot.slane %v4163, 4
        %v4445 = vsel %vm1089, %v4442, %v4444
        %v4446 = vrot.slane %v4164, 4
        %v4447 = vsel %vm1089, %v4444, %v4446
        %v4448 = vrot.slane %v4165, 4
        %v4449 = vsel %vm1089, %v4446, %v4448
        %v4450 = vrot.slane %v4166, 4
        %v4451 = vsel %vm1089, %v4448, %v4450
        %v4452 = vrot.slane %v4167, 4
        %v4453 = vsel %vm1089, %v4450, %v4452
        %v4454 = vrot.slane %v4168, 4
        %v4455 = vsel %vm1089, %v4452, %v4454
        %4456 = vrot.lane.b32.xlu0 %v4425, 64
        %v4457 = vpop.permute.xlu0 %4456
        %4458 = vrot.lane.b32.xlu0 %v4427, 64
        %v4459 = vpop.permute.xlu0 %4458
        %4460 = vrot.lane.b32.xlu0 %v4429, 64
        %v4461 = vpop.permute.xlu0 %4460
        %4462 = vrot.lane.b32.xlu0 %v4431, 64
        %v4463 = vpop.permute.xlu0 %4462
        %4464 = vrot.lane.b32.xlu0 %v4433, 64
        %v4465 = vpop.permute.xlu0 %4464
        %4466 = vrot.lane.b32.xlu0 %v4435, 64
        %v4467 = vpop.permute.xlu0 %4466
        %4468 = vrot.lane.b32.xlu0 %v4437, 64
        %v4469 = vpop.permute.xlu0 %4468
        %4470 = vrot.lane.b32.xlu0 %v4439, 64
        %v4471 = vpop.permute.xlu0 %4470
        %4472 = vrot.lane.b32.xlu0 %v4441, 64
        %v4473 = vpop.permute.xlu0 %4472
        %4474 = vrot.lane.b32.xlu0 %v4443, 64
        %v4475 = vpop.permute.xlu0 %4474
        %4476 = vrot.lane.b32.xlu0 %v4445, 64
        %v4477 = vpop.permute.xlu0 %4476
        %4478 = vrot.lane.b32.xlu0 %v4447, 64
        %v4479 = vpop.permute.xlu0 %4478
        %4480 = vrot.lane.b32.xlu0 %v4449, 64
        %v4481 = vpop.permute.xlu0 %4480
        %4482 = vrot.lane.b32.xlu0 %v4451, 64
        %v4483 = vpop.permute.xlu0 %4482
        %4484 = vrot.lane.b32.xlu0 %v4453, 64
        %v4485 = vpop.permute.xlu0 %4484
        %4486 = vrot.lane.b32.xlu0 %v4455, 64
        %v4487 = vpop.permute.xlu0 %4486
        %v4504 = vrot.slane %v4152, 5
        %v4505 = vrot.slane %v4153, 5
        %v4506 = vsel %vm1249, %v4504, %v4505
        %v4507 = vrot.slane %v4154, 5
        %v4508 = vsel %vm1249, %v4505, %v4507
        %v4509 = vrot.slane %v4155, 5
        %v4510 = vsel %vm1249, %v4507, %v4509
        %v4511 = vrot.slane %v4156, 5
        %v4512 = vsel %vm1249, %v4509, %v4511
        %v4513 = vrot.slane %v4157, 5
        %v4514 = vsel %vm1249, %v4511, %v4513
        %v4515 = vrot.slane %v4158, 5
        %v4516 = vsel %vm1249, %v4513, %v4515
        %v4517 = vrot.slane %v4159, 5
        %v4518 = vsel %vm1249, %v4515, %v4517
        %v4519 = vrot.slane %v4160, 5
        %v4520 = vsel %vm1249, %v4517, %v4519
        %v4521 = vrot.slane %v4161, 5
        %v4522 = vsel %vm1249, %v4519, %v4521
        %v4523 = vrot.slane %v4162, 5
        %v4524 = vsel %vm1249, %v4521, %v4523
        %v4525 = vrot.slane %v4163, 5
        %v4526 = vsel %vm1249, %v4523, %v4525
        %v4527 = vrot.slane %v4164, 5
        %v4528 = vsel %vm1249, %v4525, %v4527
        %v4529 = vrot.slane %v4165, 5
        %v4530 = vsel %vm1249, %v4527, %v4529
        %v4531 = vrot.slane %v4166, 5
        %v4532 = vsel %vm1249, %v4529, %v4531
        %v4533 = vrot.slane %v4167, 5
        %v4534 = vsel %vm1249, %v4531, %v4533
        %v4535 = vrot.slane %v4168, 5
        %v4536 = vsel %vm1249, %v4533, %v4535
        %4537 = vrot.lane.b32.xlu0 %v4506, 80
        %v4538 = vpop.permute.xlu0 %4537
        %4539 = vrot.lane.b32.xlu0 %v4508, 80
        %v4540 = vpop.permute.xlu0 %4539
        %4541 = vrot.lane.b32.xlu0 %v4510, 80
        %v4542 = vpop.permute.xlu0 %4541
        %4543 = vrot.lane.b32.xlu0 %v4512, 80
        %v4544 = vpop.permute.xlu0 %4543
        %4545 = vrot.lane.b32.xlu0 %v4514, 80
        %v4546 = vpop.permute.xlu0 %4545
        %4547 = vrot.lane.b32.xlu0 %v4516, 80
        %v4548 = vpop.permute.xlu0 %4547
        %4549 = vrot.lane.b32.xlu0 %v4518, 80
        %v4550 = vpop.permute.xlu0 %4549
        %4551 = vrot.lane.b32.xlu0 %v4520, 80
        %v4552 = vpop.permute.xlu0 %4551
        %4553 = vrot.lane.b32.xlu0 %v4522, 80
        %v4554 = vpop.permute.xlu0 %4553
        %4555 = vrot.lane.b32.xlu0 %v4524, 80
        %v4556 = vpop.permute.xlu0 %4555
        %4557 = vrot.lane.b32.xlu0 %v4526, 80
        %v4558 = vpop.permute.xlu0 %4557
        %4559 = vrot.lane.b32.xlu0 %v4528, 80
        %v4560 = vpop.permute.xlu0 %4559
        %4561 = vrot.lane.b32.xlu0 %v4530, 80
        %v4562 = vpop.permute.xlu0 %4561
        %4563 = vrot.lane.b32.xlu0 %v4532, 80
        %v4564 = vpop.permute.xlu0 %4563
        %4565 = vrot.lane.b32.xlu0 %v4534, 80
        %v4566 = vpop.permute.xlu0 %4565
        %4567 = vrot.lane.b32.xlu0 %v4536, 80
        %v4568 = vpop.permute.xlu0 %4567
        %v4585 = vrot.slane %v4152, 6
        %v4586 = vrot.slane %v4153, 6
        %v4587 = vsel %vm1409, %v4585, %v4586
        %v4588 = vrot.slane %v4154, 6
        %v4589 = vsel %vm1409, %v4586, %v4588
        %v4590 = vrot.slane %v4155, 6
        %v4591 = vsel %vm1409, %v4588, %v4590
        %v4592 = vrot.slane %v4156, 6
        %v4593 = vsel %vm1409, %v4590, %v4592
        %v4594 = vrot.slane %v4157, 6
        %v4595 = vsel %vm1409, %v4592, %v4594
        %v4596 = vrot.slane %v4158, 6
        %v4597 = vsel %vm1409, %v4594, %v4596
        %v4598 = vrot.slane %v4159, 6
        %v4599 = vsel %vm1409, %v4596, %v4598
        %v4600 = vrot.slane %v4160, 6
        %v4601 = vsel %vm1409, %v4598, %v4600
        %v4602 = vrot.slane %v4161, 6
        %v4603 = vsel %vm1409, %v4600, %v4602
        %v4604 = vrot.slane %v4162, 6
        %v4605 = vsel %vm1409, %v4602, %v4604
        %v4606 = vrot.slane %v4163, 6
        %v4607 = vsel %vm1409, %v4604, %v4606
        %v4608 = vrot.slane %v4164, 6
        %v4609 = vsel %vm1409, %v4606, %v4608
        %v4610 = vrot.slane %v4165, 6
        %v4611 = vsel %vm1409, %v4608, %v4610
        %v4612 = vrot.slane %v4166, 6
        %v4613 = vsel %vm1409, %v4610, %v4612
        %v4614 = vrot.slane %v4167, 6
        %v4615 = vsel %vm1409, %v4612, %v4614
        %v4616 = vrot.slane %v4168, 6
        %v4617 = vsel %vm1409, %v4614, %v4616
        %4618 = vrot.lane.b32.xlu0 %v4587, 96
        %v4619 = vpop.permute.xlu0 %4618
        %4620 = vrot.lane.b32.xlu0 %v4589, 96
        %v4621 = vpop.permute.xlu0 %4620
        %4622 = vrot.lane.b32.xlu0 %v4591, 96
        %v4623 = vpop.permute.xlu0 %4622
        %4624 = vrot.lane.b32.xlu0 %v4593, 96
        %v4625 = vpop.permute.xlu0 %4624
        %4626 = vrot.lane.b32.xlu0 %v4595, 96
        %v4627 = vpop.permute.xlu0 %4626
        %4628 = vrot.lane.b32.xlu0 %v4597, 96
        %v4629 = vpop.permute.xlu0 %4628
        %4630 = vrot.lane.b32.xlu0 %v4599, 96
        %v4631 = vpop.permute.xlu0 %4630
        %4632 = vrot.lane.b32.xlu0 %v4601, 96
        %v4633 = vpop.permute.xlu0 %4632
        %4634 = vrot.lane.b32.xlu0 %v4603, 96
        %v4635 = vpop.permute.xlu0 %4634
        %4636 = vrot.lane.b32.xlu0 %v4605, 96
        %v4637 = vpop.permute.xlu0 %4636
        %4638 = vrot.lane.b32.xlu0 %v4607, 96
        %v4639 = vpop.permute.xlu0 %4638
        %4640 = vrot.lane.b32.xlu0 %v4609, 96
        %v4641 = vpop.permute.xlu0 %4640
        %4642 = vrot.lane.b32.xlu0 %v4611, 96
        %v4643 = vpop.permute.xlu0 %4642
        %4644 = vrot.lane.b32.xlu0 %v4613, 96
        %v4645 = vpop.permute.xlu0 %4644
        %4646 = vrot.lane.b32.xlu0 %v4615, 96
        %v4647 = vpop.permute.xlu0 %4646
        %4648 = vrot.lane.b32.xlu0 %v4617, 96
        %v4649 = vpop.permute.xlu0 %4648
        %v4666 = vrot.slane %v4152, 7
        %v4667 = vrot.slane %v4153, 7
        %v4668 = vsel %vm1570, %v4666, %v4667
        %v4669 = vrot.slane %v4154, 7
        %v4670 = vsel %vm1570, %v4667, %v4669
        %v4671 = vrot.slane %v4155, 7
        %v4672 = vsel %vm1570, %v4669, %v4671
        %v4673 = vrot.slane %v4156, 7
        %v4674 = vsel %vm1570, %v4671, %v4673
        %v4675 = vrot.slane %v4157, 7
        %v4676 = vsel %vm1570, %v4673, %v4675
        %v4677 = vrot.slane %v4158, 7
        %v4678 = vsel %vm1570, %v4675, %v4677
        %v4679 = vrot.slane %v4159, 7
        %v4680 = vsel %vm1570, %v4677, %v4679
        %v4681 = vrot.slane %v4160, 7
        %v4682 = vsel %vm1570, %v4679, %v4681
        %v4683 = vrot.slane %v4161, 7
        %v4684 = vsel %vm1570, %v4681, %v4683
        %v4685 = vrot.slane %v4162, 7
        %v4686 = vsel %vm1570, %v4683, %v4685
        %v4687 = vrot.slane %v4163, 7
        %v4688 = vsel %vm1570, %v4685, %v4687
        %v4689 = vrot.slane %v4164, 7
        %v4690 = vsel %vm1570, %v4687, %v4689
        %v4691 = vrot.slane %v4165, 7
        %v4692 = vsel %vm1570, %v4689, %v4691
        %v4693 = vrot.slane %v4166, 7
        %v4694 = vsel %vm1570, %v4691, %v4693
        %v4695 = vrot.slane %v4167, 7
        %v4696 = vsel %vm1570, %v4693, %v4695
        %v4697 = vrot.slane %v4168, 7
        %v4698 = vsel %vm1570, %v4695, %v4697
        %4699 = vrot.lane.b32.xlu0 %v4668, 112
        %v4700 = vpop.permute.xlu0 %4699
        %4701 = vrot.lane.b32.xlu0 %v4670, 112
        %v4702 = vpop.permute.xlu0 %4701
        %4703 = vrot.lane.b32.xlu0 %v4672, 112
        %v4704 = vpop.permute.xlu0 %4703
        %4705 = vrot.lane.b32.xlu0 %v4674, 112
        %v4706 = vpop.permute.xlu0 %4705
        %4707 = vrot.lane.b32.xlu0 %v4676, 112
        %v4708 = vpop.permute.xlu0 %4707
        %4709 = vrot.lane.b32.xlu0 %v4678, 112
        %v4710 = vpop.permute.xlu0 %4709
        %4711 = vrot.lane.b32.xlu0 %v4680, 112
        %v4712 = vpop.permute.xlu0 %4711
        %4713 = vrot.lane.b32.xlu0 %v4682, 112
        %v4714 = vpop.permute.xlu0 %4713
        %4715 = vrot.lane.b32.xlu0 %v4684, 112
        %v4716 = vpop.permute.xlu0 %4715
        %4717 = vrot.lane.b32.xlu0 %v4686, 112
        %v4718 = vpop.permute.xlu0 %4717
        %4719 = vrot.lane.b32.xlu0 %v4688, 112
        %v4720 = vpop.permute.xlu0 %4719
        %4721 = vrot.lane.b32.xlu0 %v4690, 112
        %v4722 = vpop.permute.xlu0 %4721
        %4723 = vrot.lane.b32.xlu0 %v4692, 112
        %v4724 = vpop.permute.xlu0 %4723
        %4725 = vrot.lane.b32.xlu0 %v4694, 112
        %v4726 = vpop.permute.xlu0 %4725
        %4727 = vrot.lane.b32.xlu0 %v4696, 112
        %v4728 = vpop.permute.xlu0 %4727
        %4729 = vrot.lane.b32.xlu0 %v4698, 112
        %v4730 = vpop.permute.xlu0 %4729
        %v4747 = vrot.slane %v4168, 1
        %v4748 = vsel %vm609, %v4214, %v4747
        %4749 = vrot.lane.b32.xlu0 %v4748, 16
        %v4750 = vpop.permute.xlu0 %4749
        %4751 = vrot.lane.b32.xlu0 %v4747, 16
        %v4752 = vpop.permute.xlu0 %4751
        %v4755 = vrot.slane %v4168, 2
        %v4756 = vsel %vm769, %v4293, %v4755
        %4757 = vrot.lane.b32.xlu0 %v4756, 32
        %v4758 = vpop.permute.xlu0 %4757
        %4759 = vrot.lane.b32.xlu0 %v4755, 32
        %v4760 = vpop.permute.xlu0 %4759
        %v4763 = vsel %vm2548, %v4152, %v4217
        %v4764 = vsel %vm2548, %v4153, %v4219
        %v4765 = vsel %vm2548, %v4154, %v4221
        %v4766 = vsel %vm2548, %v4155, %v4223
        %v4767 = vsel %vm2548, %v4156, %v4225
        %v4768 = vsel %vm2548, %v4157, %v4227
        %v4769 = vsel %vm2548, %v4158, %v4229
        %v4770 = vsel %vm2548, %v4159, %v4231
        %v4771 = vsel %vm2548, %v4160, %v4233
        %v4772 = vsel %vm2548, %v4161, %v4235
        %v4773 = vsel %vm2548, %v4162, %v4237
        %v4774 = vsel %vm2548, %v4163, %v4239
        %v4775 = vsel %vm2548, %v4164, %v4241
        %v4776 = vsel %vm2548, %v4165, %v4243
        %v4777 = vsel %vm2548, %v4166, %v4245
        %v4778 = vsel %vm2548, %v4167, %v4247
        %v4779 = vsel %vm2614, %v4763, %v4296
        %v4780 = vsel %vm2614, %v4764, %v4298
        %v4781 = vsel %vm2614, %v4765, %v4300
        %v4782 = vsel %vm2614, %v4766, %v4302
        %v4783 = vsel %vm2614, %v4767, %v4304
        %v4784 = vsel %vm2614, %v4768, %v4306
        %v4785 = vsel %vm2614, %v4769, %v4308
        %v4786 = vsel %vm2614, %v4770, %v4310
        %v4787 = vsel %vm2614, %v4771, %v4312
        %v4788 = vsel %vm2614, %v4772, %v4314
        %v4789 = vsel %vm2614, %v4773, %v4316
        %v4790 = vsel %vm2614, %v4774, %v4318
        %v4791 = vsel %vm2614, %v4775, %v4320
        %v4792 = vsel %vm2614, %v4776, %v4322
        %v4793 = vsel %vm2614, %v4777, %v4324
        %v4794 = vsel %vm2614, %v4778, %v4326
        %v4795 = vsel %vm2680, %v4779, %v4375
        %v4796 = vsel %vm2680, %v4780, %v4377
        %v4797 = vsel %vm2680, %v4781, %v4379
        %v4798 = vsel %vm2680, %v4782, %v4381
        %v4799 = vsel %vm2680, %v4783, %v4383
        %v4800 = vsel %vm2680, %v4784, %v4385
        %v4801 = vsel %vm2680, %v4785, %v4387
        %v4802 = vsel %vm2680, %v4786, %v4389
        %v4803 = vsel %vm2680, %v4787, %v4391
        %v4804 = vsel %vm2680, %v4788, %v4393
        %v4805 = vsel %vm2680, %v4789, %v4395
        %v4806 = vsel %vm2680, %v4790, %v4397
        %v4807 = vsel %vm2680, %v4791, %v4399
        %v4808 = vsel %vm2680, %v4792, %v4401
        %v4809 = vsel %vm2680, %v4793, %v4403
        %v4810 = vsel %vm2680, %v4794, %v4405
        %v4811 = vsel %vm2746, %v4795, %v4457
        %v4812 = vsel %vm2746, %v4796, %v4459
        %v4813 = vsel %vm2746, %v4797, %v4461
        %v4814 = vsel %vm2746, %v4798, %v4463
        %v4815 = vsel %vm2746, %v4799, %v4465
        %v4816 = vsel %vm2746, %v4800, %v4467
        %v4817 = vsel %vm2746, %v4801, %v4469
        %v4818 = vsel %vm2746, %v4802, %v4471
        %v4819 = vsel %vm2746, %v4803, %v4473
        %v4820 = vsel %vm2746, %v4804, %v4475
        %v4821 = vsel %vm2746, %v4805, %v4477
        %v4822 = vsel %vm2746, %v4806, %v4479
        %v4823 = vsel %vm2746, %v4807, %v4481
        %v4824 = vsel %vm2746, %v4808, %v4483
        %v4825 = vsel %vm2746, %v4809, %v4485
        %v4826 = vsel %vm2746, %v4810, %v4487
        %v4827 = vsel %vm2812, %v4811, %v4538
        %v4828 = vsel %vm2812, %v4812, %v4540
        %v4829 = vsel %vm2812, %v4813, %v4542
        %v4830 = vsel %vm2812, %v4814, %v4544
        %v4831 = vsel %vm2812, %v4815, %v4546
        %v4832 = vsel %vm2812, %v4816, %v4548
        %v4833 = vsel %vm2812, %v4817, %v4550
        %v4834 = vsel %vm2812, %v4818, %v4552
        %v4835 = vsel %vm2812, %v4819, %v4554
        %v4836 = vsel %vm2812, %v4820, %v4556
        %v4837 = vsel %vm2812, %v4821, %v4558
        %v4838 = vsel %vm2812, %v4822, %v4560
        %v4839 = vsel %vm2812, %v4823, %v4562
        %v4840 = vsel %vm2812, %v4824, %v4564
        %v4841 = vsel %vm2812, %v4825, %v4566
        %v4842 = vsel %vm2812, %v4826, %v4568
        %v4843 = vsel %vm2878, %v4827, %v4619
        %v4844 = vsel %vm2878, %v4828, %v4621
        %v4845 = vsel %vm2878, %v4829, %v4623
        %v4846 = vsel %vm2878, %v4830, %v4625
        %v4847 = vsel %vm2878, %v4831, %v4627
        %v4848 = vsel %vm2878, %v4832, %v4629
        %v4849 = vsel %vm2878, %v4833, %v4631
        %v4850 = vsel %vm2878, %v4834, %v4633
        %v4851 = vsel %vm2878, %v4835, %v4635
        %v4852 = vsel %vm2878, %v4836, %v4637
        %v4853 = vsel %vm2878, %v4837, %v4639
        %v4854 = vsel %vm2878, %v4838, %v4641
        %v4855 = vsel %vm2878, %v4839, %v4643
        %v4856 = vsel %vm2878, %v4840, %v4645
        %v4857 = vsel %vm2878, %v4841, %v4647
        %v4858 = vsel %vm2878, %v4842, %v4649
        %v4859 = vsel %vm2944, %v4843, %v4700
        %v4860 = vsel %vm2944, %v4844, %v4702
        %v4861 = vsel %vm2944, %v4845, %v4704
        %v4862 = vsel %vm2944, %v4846, %v4706
        %v4863 = vsel %vm2944, %v4847, %v4708
        %v4864 = vsel %vm2944, %v4848, %v4710
        %v4865 = vsel %vm2944, %v4849, %v4712
        %v4866 = vsel %vm2944, %v4850, %v4714
        %v4867 = vsel %vm2944, %v4851, %v4716
        %v4868 = vsel %vm2944, %v4852, %v4718
        %v4869 = vsel %vm2944, %v4853, %v4720
        %v4870 = vsel %vm2944, %v4854, %v4722
        %v4871 = vsel %vm2944, %v4855, %v4724
        %v4872 = vsel %vm2944, %v4856, %v4726
        %v4873 = vsel %vm2944, %v4857, %v4728
        %v4874 = vsel %vm2944, %v4858, %v4730
        %v4875 = vsel %vm2548, %v4167, %v4750
        %v4876 = vsel %vm2548, %v4168, %v4752
        %v4877 = vsel %vm2614, %v4875, %v4758
        %v4878 = vsel %vm2614, %v4876, %v4760
        %v4879 = vld [vmem:[%s3] sm:$0xff]
        %v4880 = vld [vmem:[%s3 + $0x8] sm:$0xff]
        %v4881 = vld [vmem:[%s3 + $0x10] sm:$0xff]
        %v4882 = vld [vmem:[%s3 + $0x18] sm:$0xff]
        %v4883 = vld [vmem:[%s3 + $0x20] sm:$0xff]
        %v4884 = vld [vmem:[%s3 + $0x28] sm:$0xff]
        %v4885 = vld [vmem:[%s3 + $0x30] sm:$0xff]
        %v4886 = vld [vmem:[%s3 + $0x38] sm:$0xff]
        %v4887 = vld [vmem:[%s3 + $0x40] sm:$0xff]
        %v4888 = vld [vmem:[%s3 + $0x48] sm:$0xff]
        %v4889 = vld [vmem:[%s3 + $0x50] sm:$0xff]
        %v4890 = vld [vmem:[%s3 + $0x58] sm:$0xff]
        %v4891 = vld [vmem:[%s3 + $0x60] sm:$0xff]
        %v4892 = vld [vmem:[%s3 + $0x68] sm:$0xff]
        %v4893 = vld [vmem:[%s3 + $0x70] sm:$0xff]
        %v4894 = vld [vmem:[%s3 + $0x78] sm:$0xff]
        %v4895 = vld [vmem:[%s3 + $0x80] sm:$0xff]
        %v4896 = vld [vmem:[%s3 + $0x88] sm:$0xff]
        %v4897 = vld [vmem:[%s3 + $0x90] sm:$0xff]
        %v4898 = vld [vmem:[%s3 + $0x98] sm:$0xff]
        %v4899 = vld [vmem:[%s3 + $0xa0] sm:$0xff]
        %v4900 = vld [vmem:[%s3 + $0xa8] sm:$0xff]
        %v4901 = vld [vmem:[#allocation5] sm:$0x1]
        %v4903 = vlaneseq
        %v4904 = vshrl.u32 %v4903, 7
        %v4905 = vsub.s32 0, %v4904
        %v4906 = vrot.slane %v4901, %v4905
        %v4909 = vsel %vm2680, %v4780, 0
        %v4912 = vsel %vm2680, %v4781, 0
        %v4915 = vsel %vm2680, %v4782, 0
        %v4918 = vsel %vm2680, %v4783, 0
        %v4921 = vsel %vm2680, %v4784, 0
        %v4924 = vsel %vm2680, %v4785, 0
        %v4927 = vsel %vm2680, %v4786, 0
        %v4930 = vsel %vm2680, %v4787, 0
        %v4933 = vsel %vm2680, %v4788, 0
        %v4936 = vsel %vm2680, %v4789, 0
        %v4939 = vsel %vm2680, %v4790, 0
        %v4942 = vsel %vm2680, %v4791, 0
        %v4945 = vsel %vm2680, %v4792, 0
        %v4948 = vsel %vm2680, %v4793, 0
        %v4951 = vsel %vm2680, %v4877, 0
        %v4954 = vsel %vm2680, %v4878, 0
        %4956 = vmatprep.subr.mxu0 0.0
        %4957 = vmatpush1.msra.mxu0 %v4894
        %4958 = vmatprep.subr.mxu0 0.0
        %4959 = vmatpush1.msra.mxu0 %v4893
        %4960 = vmatprep.subr.mxu0 0.0
        %4961 = vmatpush1.msra.mxu0 %v4892
        %4962 = vmatprep.subr.mxu0 0.0
        %4963 = vmatpush1.msra.mxu0 %v4891
        %4964 = vmatprep.subr.mxu0 0.0
        %4965 = vmatpush1.msra.mxu0 %v4890
        %4966 = vmatprep.subr.mxu0 0.0
        %4967 = vmatpush1.msra.mxu0 %v4889
        %4968 = vmatprep.subr.mxu0 0.0
        %4969 = vmatpush1.msra.mxu0 %v4888
        %4970 = vmatprep.subr.mxu0 0.0
        %4971 = vmatpush1.msra.mxu0 %v4887
        %4972 = vmatprep.subr.mxu0 0.0
        %4973 = vmatpush1.msra.mxu0 %v4886
        %4974 = vmatprep.subr.mxu0 0.0
        %4975 = vmatpush1.msra.mxu0 %v4885
        %4976 = vmatprep.subr.mxu0 0.0
        %4977 = vmatpush1.msra.mxu0 %v4884
        %4978 = vmatprep.subr.mxu0 0.0
        %4979 = vmatpush1.msra.mxu0 %v4883
        %4980 = vmatprep.subr.mxu0 0.0
        %4981 = vmatpush1.msra.mxu0 %v4882
        %4982 = vmatprep.subr.mxu0 0.0
        %4983 = vmatpush1.msra.mxu0 %v4881
        %4984 = vmatprep.subr.mxu0 0.0
        %4985 = vmatpush1.msra.mxu0 %v4880
        %4986 = vmatprep.subr.mxu0 0.0
        %4987 = vmatpush1.msra.mxu0 %v4879
        %4988 = vmatprep.subr.mxu0 0.0
        %4989 = vmatpush2.msra.mxu0 0.0
        %4990 = vmatprep.subr.mxu0 0.0
        %4991 = vmatpush2.msra.mxu0 0.0
        %4992 = vmatprep.subr.mxu0 0.0
        %4993 = vmatpush2.msra.mxu0 0.0
        %4994 = vmatprep.subr.mxu0 0.0
        %4995 = vmatpush2.msra.mxu0 0.0
        %4996 = vmatprep.subr.mxu0 0.0
        %4997 = vmatpush2.msra.mxu0 0.0
        %4998 = vmatprep.subr.mxu0 0.0
        %4999 = vmatpush2.msra.mxu0 0.0
        %5000 = vmatprep.subr.mxu0 0.0
        %5001 = vmatpush2.msra.mxu0 0.0
        %5002 = vmatprep.subr.mxu0 0.0
        %5003 = vmatpush2.msra.mxu0 0.0
        %5004 = vmatprep.subr.mxu0 0.0
        %5005 = vmatpush2.msra.mxu0 0.0
        %5006 = vmatprep.subr.mxu0 0.0
        %5007 = vmatpush2.msra.mxu0 0.0
        %5008 = vmatprep.subr.mxu0 0.0
        %5009 = vmatpush2.msra.mxu0 %v4900
        %5010 = vmatprep.subr.mxu0 0.0
        %5011 = vmatpush2.msra.mxu0 %v4899
        %5012 = vmatprep.subr.mxu0 0.0
        %5013 = vmatpush2.msra.mxu0 %v4898
        %5014 = vmatprep.subr.mxu0 0.0
        %5015 = vmatpush2.msra.mxu0 %v4897
        %5016 = vmatprep.subr.mxu0 0.0
        %5017 = vmatpush2.msra.mxu0 %v4896
        %5018 = vmatprep.subr.mxu0 0.0
        %5019 = vmatpush2.msra.mxu0 %v4895
        %5020 = vmatprep.mubr.f32.mxu0 %v4909
        %5021 = vmatmul.mubr.f32.gmra.mxu0 %v4859
        %v5022 = vpop.f32.mrf.mxu0
        %v5023 = vadd.f32 %v4906, %v5022
        %v5024 = vpop.f32.mrf.mxu0
        %5025 = vmatprep.mubr.f32.mxu0 %v4912
        %5026 = vmatmul.mubr.f32.gmra.mxu0 %v4860
        %v5027 = vpop.f32.mrf.mxu0
        %v5028 = vadd.f32 %v4906, %v5027
        %v5029 = vpop.f32.mrf.mxu0
        %5030 = vmatprep.mubr.f32.mxu0 %v4915
        %5031 = vmatmul.mubr.f32.gmra.mxu0 %v4861
        %v5032 = vpop.f32.mrf.mxu0
        %v5033 = vadd.f32 %v4906, %v5032
        %v5034 = vpop.f32.mrf.mxu0
        %5035 = vmatprep.mubr.f32.mxu0 %v4918
        %5036 = vmatmul.mubr.f32.gmra.mxu0 %v4862
        %v5037 = vpop.f32.mrf.mxu0
        %v5038 = vadd.f32 %v4906, %v5037
        %v5039 = vpop.f32.mrf.mxu0
        %5040 = vmatprep.mubr.f32.mxu0 %v4921
        %5041 = vmatmul.mubr.f32.gmra.mxu0 %v4863
        %v5042 = vpop.f32.mrf.mxu0
        %v5043 = vadd.f32 %v4906, %v5042
        %v5044 = vpop.f32.mrf.mxu0
        %5045 = vmatprep.mubr.f32.mxu0 %v4924
        %5046 = vmatmul.mubr.f32.gmra.mxu0 %v4864
        %v5047 = vpop.f32.mrf.mxu0
        %v5048 = vadd.f32 %v4906, %v5047
        %v5049 = vpop.f32.mrf.mxu0
        %5050 = vmatprep.mubr.f32.mxu0 %v4927
        %5051 = vmatmul.mubr.f32.gmra.mxu0 %v4865
        %v5052 = vpop.f32.mrf.mxu0
        %v5053 = vadd.f32 %v4906, %v5052
        %v5054 = vpop.f32.mrf.mxu0
        %5055 = vmatprep.mubr.f32.mxu0 %v4930
        %5056 = vmatmul.mubr.f32.gmra.mxu0 %v4866
        %v5057 = vpop.f32.mrf.mxu0
        %v5058 = vadd.f32 %v4906, %v5057
        %v5059 = vpop.f32.mrf.mxu0
        %5060 = vmatprep.mubr.f32.mxu0 %v4933
        %5061 = vmatmul.mubr.f32.gmra.mxu0 %v4867
        %v5062 = vpop.f32.mrf.mxu0
        %v5063 = vadd.f32 %v4906, %v5062
        %v5064 = vpop.f32.mrf.mxu0
        %5065 = vmatprep.mubr.f32.mxu0 %v4936
        %5066 = vmatmul.mubr.f32.gmra.mxu0 %v4868
        %v5067 = vpop.f32.mrf.mxu0
        %v5068 = vadd.f32 %v4906, %v5067
        %v5069 = vpop.f32.mrf.mxu0
        %5070 = vmatprep.mubr.f32.mxu0 %v4939
        %5071 = vmatmul.mubr.f32.gmra.mxu0 %v4869
        %v5072 = vpop.f32.mrf.mxu0
        %v5073 = vadd.f32 %v4906, %v5072
        %v5074 = vpop.f32.mrf.mxu0
        %5075 = vmatprep.mubr.f32.mxu0 %v4942
        %5076 = vmatmul.mubr.f32.gmra.mxu0 %v4870
        %v5077 = vpop.f32.mrf.mxu0
        %v5078 = vadd.f32 %v4906, %v5077
        %v5079 = vpop.f32.mrf.mxu0
        %5080 = vmatprep.mubr.f32.mxu0 %v4945
        %5081 = vmatmul.mubr.f32.gmra.mxu0 %v4871
        %v5082 = vpop.f32.mrf.mxu0
        %v5083 = vadd.f32 %v4906, %v5082
        %v5084 = vpop.f32.mrf.mxu0
        %5085 = vmatprep.mubr.f32.mxu0 %v4948
        %5086 = vmatmul.mubr.f32.gmra.mxu0 %v4872
        %v5087 = vpop.f32.mrf.mxu0
        %v5088 = vadd.f32 %v4906, %v5087
        %v5089 = vpop.f32.mrf.mxu0
        %5090 = vmatprep.mubr.f32.mxu0 %v4951
        %5091 = vmatmul.mubr.f32.gmra.mxu0 %v4873
        %v5092 = vpop.f32.mrf.mxu0
        %v5093 = vadd.f32 %v4906, %v5092
        %v5094 = vpop.f32.mrf.mxu0
        %5095 = vmatprep.mubr.f32.mxu0 %v4954
        %5096 = vmatmul.mubr.f32.gmra.mxu0 %v4874
        %v5097 = vpop.f32.mrf.mxu0
        %v5098 = vadd.f32 %v4906, %v5097
        %v5099 = vpop.f32.mrf.mxu0
        %5100 = vdwg.mxu0
        %vm5101 = vcmp.ge.f32.partialorder %v5023, 0.0
        %vm5102 = vcmp.ge.f32.partialorder %v5028, 0.0
        %vm5103 = vcmp.ge.f32.partialorder %v5033, 0.0
        %vm5104 = vcmp.ge.f32.partialorder %v5038, 0.0
        %vm5105 = vcmp.ge.f32.partialorder %v5043, 0.0
        %vm5106 = vcmp.ge.f32.partialorder %v5048, 0.0
        %vm5107 = vcmp.ge.f32.partialorder %v5053, 0.0
        %vm5108 = vcmp.ge.f32.partialorder %v5058, 0.0
        %vm5109 = vcmp.ge.f32.partialorder %v5063, 0.0
        %vm5110 = vcmp.ge.f32.partialorder %v5068, 0.0
        %vm5111 = vcmp.ge.f32.partialorder %v5073, 0.0
        %vm5112 = vcmp.ge.f32.partialorder %v5078, 0.0
        %vm5113 = vcmp.ge.f32.partialorder %v5083, 0.0
        %vm5114 = vcmp.ge.f32.partialorder %v5088, 0.0
        %vm5115 = vcmp.ge.f32.partialorder %v5093, 0.0
        %vm5116 = vcmp.ge.f32.partialorder %v5098, 0.0
        %v5117 = vmul.f32 %v5023, 0.3
        %v5118 = vmul.f32 %v5028, 0.3
        %v5119 = vmul.f32 %v5033, 0.3
        %v5120 = vmul.f32 %v5038, 0.3
        %v5121 = vmul.f32 %v5043, 0.3
        %v5122 = vmul.f32 %v5048, 0.3
        %v5123 = vmul.f32 %v5053, 0.3
        %v5124 = vmul.f32 %v5058, 0.3
        %v5125 = vmul.f32 %v5063, 0.3
        %v5126 = vmul.f32 %v5068, 0.3
        %v5127 = vmul.f32 %v5073, 0.3
        %v5128 = vmul.f32 %v5078, 0.3
        %v5129 = vmul.f32 %v5083, 0.3
        %v5130 = vmul.f32 %v5088, 0.3
        %v5131 = vmul.f32 %v5093, 0.3
        %v5132 = vmul.f32 %v5098, 0.3
        %v5133 = vsel %vm5101, %v5023, %v5117
        %v5134 = vsel %vm5102, %v5028, %v5118
        %v5135 = vsel %vm5103, %v5033, %v5119
        %v5136 = vsel %vm5104, %v5038, %v5120
        %v5137 = vsel %vm5105, %v5043, %v5121
        %v5138 = vsel %vm5106, %v5048, %v5122
        %v5139 = vsel %vm5107, %v5053, %v5123
        %v5140 = vsel %vm5108, %v5058, %v5124
        %v5141 = vsel %vm5109, %v5063, %v5125
        %v5142 = vsel %vm5110, %v5068, %v5126
        %v5143 = vsel %vm5111, %v5073, %v5127
        %v5144 = vsel %vm5112, %v5078, %v5128
        %v5145 = vsel %vm5113, %v5083, %v5129
        %v5146 = vsel %vm5114, %v5088, %v5130
        %v5147 = vsel %vm5115, %v5093, %v5131
        %v5148 = vsel %vm5116, %v5098, %v5132
        %vm5149 = vcmp.ge.s32.totalorder %v3420, 2
        %vm5150 = vcmp.ge.s32.totalorder %v3421, 2
        %vm5151 = vcmp.ge.s32.totalorder %v3422, 2
        %vm5152 = vcmp.ge.s32.totalorder %v3423, 2
        %vm5153 = vcmp.ge.s32.totalorder %v3424, 2
        %vm5154 = vcmp.ge.s32.totalorder %v3425, 2
        %vm5155 = vcmp.ge.s32.totalorder %v3426, 2
        %vm5156 = vcmp.ge.s32.totalorder %v3427, 2
        %vm5157 = vcmp.ge.s32.totalorder %v3428, 2
        %vm5158 = vcmp.lt.s32.totalorder %v3420, 64
        %vm5159 = vcmp.lt.s32.totalorder %v3421, 64
        %vm5160 = vcmp.lt.s32.totalorder %v3422, 64
        %vm5161 = vcmp.lt.s32.totalorder %v3423, 64
        %vm5162 = vcmp.lt.s32.totalorder %v3424, 64
        %vm5163 = vcmp.lt.s32.totalorder %v3425, 64
        %vm5164 = vcmp.lt.s32.totalorder %v3426, 64
        %vm5165 = vcmp.lt.s32.totalorder %v3427, 64
        %vm5166 = vcmp.lt.s32.totalorder %v3428, 64
        %vm5167 = vmand %vm5149, %vm5158
        %vm5168 = vmand %vm5150, %vm5159
        %vm5169 = vmand %vm5151, %vm5160
        %vm5170 = vmand %vm5152, %vm5161
        %vm5171 = vmand %vm5153, %vm5162
        %vm5172 = vmand %vm5154, %vm5163
        %vm5173 = vmand %vm5155, %vm5164
        %vm5174 = vmand %vm5156, %vm5165
        %vm5175 = vmand %vm5157, %vm5166
        %v5176 = vsub.s32 %v3420, 2
        %v5177 = vsub.s32 %v3421, 2
        %v5178 = vsub.s32 %v3422, 2
        %v5179 = vsub.s32 %v3423, 2
        %v5180 = vsub.s32 %v3424, 2
        %v5181 = vsub.s32 %v3425, 2
        %v5182 = vsub.s32 %v3426, 2
        %v5183 = vsub.s32 %v3427, 2
        %v5184 = vsub.s32 %v3428, 2
        %v5185 = vmul.u32 %v5176, 2
        %v5186 = vmul.u32 %v5177, 2
        %v5187 = vmul.u32 %v5178, 2
        %v5188 = vmul.u32 %v5179, 2
        %v5189 = vmul.u32 %v5180, 2
        %v5190 = vmul.u32 %v5181, 2
        %v5191 = vmul.u32 %v5182, 2
        %v5192 = vmul.u32 %v5183, 2
        %v5193 = vmul.u32 %v5184, 2
        %vm5194 = vcmp.eq.s32.totalorder %v3438, %v5185
        %vm5195 = vcmp.eq.s32.totalorder %v3438, %v5186
        %vm5196 = vcmp.eq.s32.totalorder %v3438, %v5187
        %vm5197 = vcmp.eq.s32.totalorder %v3438, %v5188
        %vm5198 = vcmp.eq.s32.totalorder %v3438, %v5189
        %vm5199 = vcmp.eq.s32.totalorder %v3438, %v5190
        %vm5200 = vcmp.eq.s32.totalorder %v3438, %v5191
        %vm5201 = vcmp.eq.s32.totalorder %v3438, %v5192
        %vm5202 = vcmp.eq.s32.totalorder %v3438, %v5193
        %vm5203 = vmand %vm5167, %vm5194
        %vm5204 = vmand %vm5168, %vm5195
        %vm5205 = vmand %vm5169, %vm5196
        %vm5206 = vmand %vm5170, %vm5197
        %vm5207 = vmand %vm5171, %vm5198
        %vm5208 = vmand %vm5172, %vm5199
        %vm5209 = vmand %vm5173, %vm5200
        %vm5210 = vmand %vm5174, %vm5201
        %vm5211 = vmand %vm5175, %vm5202
        %v5212 = vsel %vm5203, 1.0, 0.0
        %v5213 = vsel %vm5204, 1.0, 0.0
        %v5214 = vsel %vm5205, 1.0, 0.0
        %v5215 = vsel %vm5206, 1.0, 0.0
        %v5216 = vsel %vm5207, 1.0, 0.0
        %v5217 = vsel %vm5208, 1.0, 0.0
        %v5218 = vsel %vm5209, 1.0, 0.0
        %v5219 = vsel %vm5210, 1.0, 0.0
        %v5220 = vsel %vm5211, 1.0, 0.0
        %v5221 = vadd.s32 %v5185, 1
        %v5222 = vadd.s32 %v5186, 1
        %v5223 = vadd.s32 %v5187, 1
        %v5224 = vadd.s32 %v5188, 1
        %v5225 = vadd.s32 %v5189, 1
        %v5226 = vadd.s32 %v5190, 1
        %v5227 = vadd.s32 %v5191, 1
        %v5228 = vadd.s32 %v5192, 1
        %v5229 = vadd.s32 %v5193, 1
        %vm5230 = vcmp.eq.s32.totalorder %v3438, %v5221
        %vm5231 = vcmp.eq.s32.totalorder %v3438, %v5222
        %vm5232 = vcmp.eq.s32.totalorder %v3438, %v5223
        %vm5233 = vcmp.eq.s32.totalorder %v3438, %v5224
        %vm5234 = vcmp.eq.s32.totalorder %v3438, %v5225
        %vm5235 = vcmp.eq.s32.totalorder %v3438, %v5226
        %vm5236 = vcmp.eq.s32.totalorder %v3438, %v5227
        %vm5237 = vcmp.eq.s32.totalorder %v3438, %v5228
        %vm5238 = vcmp.eq.s32.totalorder %v3438, %v5229
        %vm5239 = vmand %vm5167, %vm5230
        %vm5240 = vmand %vm5168, %vm5231
        %vm5241 = vmand %vm5169, %vm5232
        %vm5242 = vmand %vm5170, %vm5233
        %vm5243 = vmand %vm5171, %vm5234
        %vm5244 = vmand %vm5172, %vm5235
        %vm5245 = vmand %vm5173, %vm5236
        %vm5246 = vmand %vm5174, %vm5237
        %vm5247 = vmand %vm5175, %vm5238
        %v5248 = vsel %vm5239, 1.0, 0.0
        %v5249 = vsel %vm5240, 1.0, 0.0
        %v5250 = vsel %vm5241, 1.0, 0.0
        %v5251 = vsel %vm5242, 1.0, 0.0
        %v5252 = vsel %vm5243, 1.0, 0.0
        %v5253 = vsel %vm5244, 1.0, 0.0
        %v5254 = vsel %vm5245, 1.0, 0.0
        %v5255 = vsel %vm5246, 1.0, 0.0
        %v5256 = vsel %vm5247, 1.0, 0.0
        %vm5257 = vcmask 1022976
        %v5259 = vsel %vm5257, %v5212, 0
        %v5262 = vsel %vm5257, %v5213, 0
        %v5265 = vsel %vm5257, %v5214, 0
        %v5268 = vsel %vm5257, %v5215, 0
        %v5271 = vsel %vm5257, %v5216, 0
        %v5274 = vsel %vm5257, %v5217, 0
        %v5277 = vsel %vm5257, %v5218, 0
        %v5280 = vsel %vm5257, %v5219, 0
        %v5283 = vsel %vm5257, %v5220, 0
        %v5286 = vsel %vm929, %v5148, 0
        %5288 = vmatprep.subr.mxu0 0.0
        %5289 = vmatpush1.msra.mxu0 %v5286
        %5290 = vmatprep.subr.mxu0 0.0
        %5291 = vmatpush1.msra.mxu0 %v5147
        %5292 = vmatprep.subr.mxu0 0.0
        %5293 = vmatpush1.msra.mxu0 %v5146
        %5294 = vmatprep.subr.mxu0 0.0
        %5295 = vmatpush1.msra.mxu0 %v5145
        %5296 = vmatprep.subr.mxu0 0.0
        %5297 = vmatpush1.msra.mxu0 %v5144
        %5298 = vmatprep.subr.mxu0 0.0
        %5299 = vmatpush1.msra.mxu0 %v5143
        %5300 = vmatprep.subr.mxu0 0.0
        %5301 = vmatpush1.msra.mxu0 %v5142
        %5302 = vmatprep.subr.mxu0 0.0
        %5303 = vmatpush1.msra.mxu0 %v5141
        %5304 = vmatprep.subr.mxu0 0.0
        %5305 = vmatpush1.msra.mxu0 %v5140
        %5306 = vmatprep.subr.mxu0 0.0
        %5307 = vmatpush1.msra.mxu0 %v5139
        %5308 = vmatprep.subr.mxu0 0.0
        %5309 = vmatpush1.msra.mxu0 %v5138
        %5310 = vmatprep.subr.mxu0 0.0
        %5311 = vmatpush1.msra.mxu0 %v5137
        %5312 = vmatprep.subr.mxu0 0.0
        %5313 = vmatpush1.msra.mxu0 %v5136
        %5314 = vmatprep.subr.mxu0 0.0
        %5315 = vmatpush1.msra.mxu0 %v5135
        %5316 = vmatprep.subr.mxu0 0.0
        %5317 = vmatpush1.msra.mxu0 %v5134
        %5318 = vmatprep.subr.mxu0 0.0
        %5319 = vmatpush1.msra.mxu0 %v5133
        %5320 = vmatprep.subr.mxu0 0.0
        %5321 = vmatpush2.msra.mxu0 0.0
        %5322 = vmatprep.subr.mxu0 0.0
        %5323 = vmatpush2.msra.mxu0 0.0
        %5324 = vmatprep.subr.mxu0 0.0
        %5325 = vmatpush2.msra.mxu0 0.0
        %5326 = vmatprep.subr.mxu0 0.0
        %5327 = vmatpush2.msra.mxu0 0.0
        %5328 = vmatprep.subr.mxu0 0.0
        %5329 = vmatpush2.msra.mxu0 0.0
        %5330 = vmatprep.subr.mxu0 0.0
        %5331 = vmatpush2.msra.mxu0 0.0
        %5332 = vmatprep.subr.mxu0 0.0
        %5333 = vmatpush2.msra.mxu0 0.0
        %5334 = vmatprep.subr.mxu0 0.0
        %5335 = vmatpush2.msra.mxu0 0.0
        %5336 = vmatprep.subr.mxu0 0.0
        %5337 = vmatpush2.msra.mxu0 0.0
        %5338 = vmatprep.subr.mxu0 0.0
        %5339 = vmatpush2.msra.mxu0 0.0
        %5340 = vmatprep.subr.mxu0 0.0
        %5341 = vmatpush2.msra.mxu0 0.0
        %5342 = vmatprep.subr.mxu0 0.0
        %5343 = vmatpush2.msra.mxu0 0.0
        %5344 = vmatprep.subr.mxu0 0.0
        %5345 = vmatpush2.msra.mxu0 0.0
        %5346 = vmatprep.subr.mxu0 0.0
        %5347 = vmatpush2.msra.mxu0 0.0
        %5348 = vmatprep.subr.mxu0 0.0
        %5349 = vmatpush2.msra.mxu0 0.0
        %5350 = vmatprep.subr.mxu0 0.0
        %5351 = vmatpush2.msra.mxu0 0.0
        %5352 = vmatprep.mubr.f32.mxu0 0.0
        %5353 = vmatmul.mubr.f32.gmra.mxu0 %v5259
        %v5354 = vpop.f32.mrf.mxu0
        %v5355 = vadd.f32 0.0, %v5354
        %v5356 = vpop.f32.mrf.mxu0
        %5357 = vmatprep.mubr.f32.mxu0 0.0
        %5358 = vmatmul.mubr.f32.gmra.mxu0 %v5262
        %v5359 = vpop.f32.mrf.mxu0
        %v5360 = vadd.f32 0.0, %v5359
        %v5361 = vpop.f32.mrf.mxu0
        %5362 = vmatprep.mubr.f32.mxu0 0.0
        %5363 = vmatmul.mubr.f32.gmra.mxu0 %v5265
        %v5364 = vpop.f32.mrf.mxu0
        %v5365 = vadd.f32 0.0, %v5364
        %v5366 = vpop.f32.mrf.mxu0
        %5367 = vmatprep.mubr.f32.mxu0 0.0
        %5368 = vmatmul.mubr.f32.gmra.mxu0 %v5268
        %v5369 = vpop.f32.mrf.mxu0
        %v5370 = vadd.f32 0.0, %v5369
        %v5371 = vpop.f32.mrf.mxu0
        %5372 = vmatprep.mubr.f32.mxu0 0.0
        %5373 = vmatmul.mubr.f32.gmra.mxu0 %v5271
        %v5374 = vpop.f32.mrf.mxu0
        %v5375 = vadd.f32 0.0, %v5374
        %v5376 = vpop.f32.mrf.mxu0
        %5377 = vmatprep.mubr.f32.mxu0 0.0
        %5378 = vmatmul.mubr.f32.gmra.mxu0 %v5274
        %v5379 = vpop.f32.mrf.mxu0
        %v5380 = vadd.f32 0.0, %v5379
        %v5381 = vpop.f32.mrf.mxu0
        %5382 = vmatprep.mubr.f32.mxu0 0.0
        %5383 = vmatmul.mubr.f32.gmra.mxu0 %v5277
        %v5384 = vpop.f32.mrf.mxu0
        %v5385 = vadd.f32 0.0, %v5384
        %v5386 = vpop.f32.mrf.mxu0
        %5387 = vmatprep.mubr.f32.mxu0 0.0
        %5388 = vmatmul.mubr.f32.gmra.mxu0 %v5280
        %v5389 = vpop.f32.mrf.mxu0
        %v5390 = vadd.f32 0.0, %v5389
        %v5391 = vpop.f32.mrf.mxu0
        %5392 = vmatprep.mubr.f32.mxu0 0.0
        %5393 = vmatmul.mubr.f32.gmra.mxu0 %v5283
        %v5394 = vpop.f32.mrf.mxu0
        %v5395 = vadd.f32 0.0, %v5394
        %v5396 = vpop.f32.mrf.mxu0
        %5397 = vdwg.mxu0
        %v5399 = vsel %vm5257, %v5248, 0
        %v5402 = vsel %vm5257, %v5249, 0
        %v5405 = vsel %vm5257, %v5250, 0
        %v5408 = vsel %vm5257, %v5251, 0
        %v5411 = vsel %vm5257, %v5252, 0
        %v5414 = vsel %vm5257, %v5253, 0
        %v5417 = vsel %vm5257, %v5254, 0
        %v5420 = vsel %vm5257, %v5255, 0
        %v5423 = vsel %vm5257, %v5256, 0
        %5425 = vmatprep.subr.mxu0 0.0
        %5426 = vmatpush1.msra.mxu0 %v5286
        %5427 = vmatprep.subr.mxu0 0.0
        %5428 = vmatpush1.msra.mxu0 %v5147
        %5429 = vmatprep.subr.mxu0 0.0
        %5430 = vmatpush1.msra.mxu0 %v5146
        %5431 = vmatprep.subr.mxu0 0.0
        %5432 = vmatpush1.msra.mxu0 %v5145
        %5433 = vmatprep.subr.mxu0 0.0
        %5434 = vmatpush1.msra.mxu0 %v5144
        %5435 = vmatprep.subr.mxu0 0.0
        %5436 = vmatpush1.msra.mxu0 %v5143
        %5437 = vmatprep.subr.mxu0 0.0
        %5438 = vmatpush1.msra.mxu0 %v5142
        %5439 = vmatprep.subr.mxu0 0.0
        %5440 = vmatpush1.msra.mxu0 %v5141
        %5441 = vmatprep.subr.mxu0 0.0
        %5442 = vmatpush1.msra.mxu0 %v5140
        %5443 = vmatprep.subr.mxu0 0.0
        %5444 = vmatpush1.msra.mxu0 %v5139
        %5445 = vmatprep.subr.mxu0 0.0
        %5446 = vmatpush1.msra.mxu0 %v5138
        %5447 = vmatprep.subr.mxu0 0.0
        %5448 = vmatpush1.msra.mxu0 %v5137
        %5449 = vmatprep.subr.mxu0 0.0
        %5450 = vmatpush1.msra.mxu0 %v5136
        %5451 = vmatprep.subr.mxu0 0.0
        %5452 = vmatpush1.msra.mxu0 %v5135
        %5453 = vmatprep.subr.mxu0 0.0
        %5454 = vmatpush1.msra.mxu0 %v5134
        %5455 = vmatprep.subr.mxu0 0.0
        %5456 = vmatpush1.msra.mxu0 %v5133
        %5457 = vmatprep.subr.mxu0 0.0
        %5458 = vmatpush2.msra.mxu0 0.0
        %5459 = vmatprep.subr.mxu0 0.0
        %5460 = vmatpush2.msra.mxu0 0.0
        %5461 = vmatprep.subr.mxu0 0.0
        %5462 = vmatpush2.msra.mxu0 0.0
        %5463 = vmatprep.subr.mxu0 0.0
        %5464 = vmatpush2.msra.mxu0 0.0
        %5465 = vmatprep.subr.mxu0 0.0
        %5466 = vmatpush2.msra.mxu0 0.0
        %5467 = vmatprep.subr.mxu0 0.0
        %5468 = vmatpush2.msra.mxu0 0.0
        %5469 = vmatprep.subr.mxu0 0.0
        %5470 = vmatpush2.msra.mxu0 0.0
        %5471 = vmatprep.subr.mxu0 0.0
        %5472 = vmatpush2.msra.mxu0 0.0
        %5473 = vmatprep.subr.mxu0 0.0
        %5474 = vmatpush2.msra.mxu0 0.0
        %5475 = vmatprep.subr.mxu0 0.0
        %5476 = vmatpush2.msra.mxu0 0.0
        %5477 = vmatprep.subr.mxu0 0.0
        %5478 = vmatpush2.msra.mxu0 0.0
        %5479 = vmatprep.subr.mxu0 0.0
        %5480 = vmatpush2.msra.mxu0 0.0
        %5481 = vmatprep.subr.mxu0 0.0
        %5482 = vmatpush2.msra.mxu0 0.0
        %5483 = vmatprep.subr.mxu0 0.0
        %5484 = vmatpush2.msra.mxu0 0.0
        %5485 = vmatprep.subr.mxu0 0.0
        %5486 = vmatpush2.msra.mxu0 0.0
        %5487 = vmatprep.subr.mxu0 0.0
        %5488 = vmatpush2.msra.mxu0 0.0
        %5489 = vmatprep.mubr.f32.mxu0 0.0
        %5490 = vmatmul.mubr.f32.gmra.mxu0 %v5399
        %v5491 = vpop.f32.mrf.mxu0
        %v5492 = vadd.f32 0.0, %v5491
        %v5493 = vpop.f32.mrf.mxu0
        %5494 = vmatprep.mubr.f32.mxu0 0.0
        %5495 = vmatmul.mubr.f32.gmra.mxu0 %v5402
        %v5496 = vpop.f32.mrf.mxu0
        %v5497 = vadd.f32 0.0, %v5496
        %v5498 = vpop.f32.mrf.mxu0
        %5499 = vmatprep.mubr.f32.mxu0 0.0
        %5500 = vmatmul.mubr.f32.gmra.mxu0 %v5405
        %v5501 = vpop.f32.mrf.mxu0
        %v5502 = vadd.f32 0.0, %v5501
        %v5503 = vpop.f32.mrf.mxu0
        %5504 = vmatprep.mubr.f32.mxu0 0.0
        %5505 = vmatmul.mubr.f32.gmra.mxu0 %v5408
        %v5506 = vpop.f32.mrf.mxu0
        %v5507 = vadd.f32 0.0, %v5506
        %v5508 = vpop.f32.mrf.mxu0
        %5509 = vmatprep.mubr.f32.mxu0 0.0
        %5510 = vmatmul.mubr.f32.gmra.mxu0 %v5411
        %v5511 = vpop.f32.mrf.mxu0
        %v5512 = vadd.f32 0.0, %v5511
        %v5513 = vpop.f32.mrf.mxu0
        %5514 = vmatprep.mubr.f32.mxu0 0.0
        %5515 = vmatmul.mubr.f32.gmra.mxu0 %v5414
        %v5516 = vpop.f32.mrf.mxu0
        %v5517 = vadd.f32 0.0, %v5516
        %v5518 = vpop.f32.mrf.mxu0
        %5519 = vmatprep.mubr.f32.mxu0 0.0
        %5520 = vmatmul.mubr.f32.gmra.mxu0 %v5417
        %v5521 = vpop.f32.mrf.mxu0
        %v5522 = vadd.f32 0.0, %v5521
        %v5523 = vpop.f32.mrf.mxu0
        %5524 = vmatprep.mubr.f32.mxu0 0.0
        %5525 = vmatmul.mubr.f32.gmra.mxu0 %v5420
        %v5526 = vpop.f32.mrf.mxu0
        %v5527 = vadd.f32 0.0, %v5526
        %v5528 = vpop.f32.mrf.mxu0
        %5529 = vmatprep.mubr.f32.mxu0 0.0
        %5530 = vmatmul.mubr.f32.gmra.mxu0 %v5423
        %v5531 = vpop.f32.mrf.mxu0
        %v5532 = vadd.f32 0.0, %v5531
        %v5533 = vpop.f32.mrf.mxu0
        %5534 = vdwg.mxu0
        %v5535 = vmax.f32 %v5355, %v5492
        %v5536 = vmax.f32 %v5360, %v5497
        %v5537 = vmax.f32 %v5365, %v5502
        %v5538 = vmax.f32 %v5370, %v5507
        %v5539 = vmax.f32 %v5375, %v5512
        %v5540 = vmax.f32 %v5380, %v5517
        %v5541 = vmax.f32 %v5385, %v5522
        %v5542 = vmax.f32 %v5390, %v5527
        %v5543 = vmax.f32 %v5395, %v5532
        %v5552 = vrot.slane %v5535, 1
        %v5553 = vrot.slane %v5536, 1
        %v5554 = vsel %vm609, %v5552, %v5553
        %v5555 = vrot.slane %v5537, 1
        %v5556 = vsel %vm609, %v5553, %v5555
        %v5557 = vrot.slane %v5538, 1
        %v5558 = vsel %vm609, %v5555, %v5557
        %v5559 = vrot.slane %v5539, 1
        %v5560 = vsel %vm609, %v5557, %v5559
        %v5561 = vrot.slane %v5540, 1
        %v5562 = vsel %vm609, %v5559, %v5561
        %v5563 = vrot.slane %v5541, 1
        %v5564 = vsel %vm609, %v5561, %v5563
        %v5565 = vrot.slane %v5542, 1
        %v5566 = vsel %vm609, %v5563, %v5565
        %5567 = vrot.lane.b32.xlu0 %v5554, 32
        %v5568 = vpop.permute.xlu0 %5567
        %5569 = vrot.lane.b32.xlu0 %v5556, 32
        %v5570 = vpop.permute.xlu0 %5569
        %5571 = vrot.lane.b32.xlu0 %v5558, 32
        %v5572 = vpop.permute.xlu0 %5571
        %5573 = vrot.lane.b32.xlu0 %v5560, 32
        %v5574 = vpop.permute.xlu0 %5573
        %5575 = vrot.lane.b32.xlu0 %v5562, 32
        %v5576 = vpop.permute.xlu0 %5575
        %5577 = vrot.lane.b32.xlu0 %v5564, 32
        %v5578 = vpop.permute.xlu0 %5577
        %5579 = vrot.lane.b32.xlu0 %v5566, 32
        %v5580 = vpop.permute.xlu0 %5579
        %5581 = vrot.lane.b32.xlu0 %v5565, 32
        %v5582 = vpop.permute.xlu0 %5581
        %v5591 = vrot.slane %v5535, 2
        %v5592 = vrot.slane %v5536, 2
        %v5593 = vsel %vm769, %v5591, %v5592
        %v5594 = vrot.slane %v5537, 2
        %v5595 = vsel %vm769, %v5592, %v5594
        %v5596 = vrot.slane %v5538, 2
        %v5597 = vsel %vm769, %v5594, %v5596
        %v5598 = vrot.slane %v5539, 2
        %v5599 = vsel %vm769, %v5596, %v5598
        %v5600 = vrot.slane %v5540, 2
        %v5601 = vsel %vm769, %v5598, %v5600
        %v5602 = vrot.slane %v5541, 2
        %v5603 = vsel %vm769, %v5600, %v5602
        %v5604 = vrot.slane %v5542, 2
        %v5605 = vsel %vm769, %v5602, %v5604
        %5606 = vrot.lane.b32.xlu0 %v5593, 64
        %v5607 = vpop.permute.xlu0 %5606
        %5608 = vrot.lane.b32.xlu0 %v5595, 64
        %v5609 = vpop.permute.xlu0 %5608
        %5610 = vrot.lane.b32.xlu0 %v5597, 64
        %v5611 = vpop.permute.xlu0 %5610
        %5612 = vrot.lane.b32.xlu0 %v5599, 64
        %v5613 = vpop.permute.xlu0 %5612
        %5614 = vrot.lane.b32.xlu0 %v5601, 64
        %v5615 = vpop.permute.xlu0 %5614
        %5616 = vrot.lane.b32.xlu0 %v5603, 64
        %v5617 = vpop.permute.xlu0 %5616
        %5618 = vrot.lane.b32.xlu0 %v5605, 64
        %v5619 = vpop.permute.xlu0 %5618
        %5620 = vrot.lane.b32.xlu0 %v5604, 64
        %v5621 = vpop.permute.xlu0 %5620
        %v5631 = vrot.slane %v5535, 3
        %v5632 = vrot.slane %v5536, 3
        %v5633 = vsel %vm929, %v5631, %v5632
        %v5634 = vrot.slane %v5537, 3
        %v5635 = vsel %vm929, %v5632, %v5634
        %v5636 = vrot.slane %v5538, 3
        %v5637 = vsel %vm929, %v5634, %v5636
        %v5638 = vrot.slane %v5539, 3
        %v5639 = vsel %vm929, %v5636, %v5638
        %v5640 = vrot.slane %v5540, 3
        %v5641 = vsel %vm929, %v5638, %v5640
        %v5642 = vrot.slane %v5541, 3
        %v5643 = vsel %vm929, %v5640, %v5642
        %v5644 = vrot.slane %v5542, 3
        %v5645 = vsel %vm929, %v5642, %v5644
        %v5646 = vrot.slane %v5543, 3
        %v5647 = vsel %vm929, %v5644, %v5646
        %5648 = vrot.lane.b32.xlu0 %v5633, 96
        %v5649 = vpop.permute.xlu0 %5648
        %5650 = vrot.lane.b32.xlu0 %v5635, 96
        %v5651 = vpop.permute.xlu0 %5650
        %5652 = vrot.lane.b32.xlu0 %v5637, 96
        %v5653 = vpop.permute.xlu0 %5652
        %5654 = vrot.lane.b32.xlu0 %v5639, 96
        %v5655 = vpop.permute.xlu0 %5654
        %5656 = vrot.lane.b32.xlu0 %v5641, 96
        %v5657 = vpop.permute.xlu0 %5656
        %5658 = vrot.lane.b32.xlu0 %v5643, 96
        %v5659 = vpop.permute.xlu0 %5658
        %5660 = vrot.lane.b32.xlu0 %v5645, 96
        %v5661 = vpop.permute.xlu0 %5660
        %5662 = vrot.lane.b32.xlu0 %v5647, 96
        %v5663 = vpop.permute.xlu0 %5662
        %v5672 = vrot.slane %v5535, 4
        %v5673 = vrot.slane %v5536, 4
        %v5674 = vsel %vm1089, %v5672, %v5673
        %v5675 = vrot.slane %v5537, 4
        %v5676 = vsel %vm1089, %v5673, %v5675
        %v5677 = vrot.slane %v5538, 4
        %v5678 = vsel %vm1089, %v5675, %v5677
        %v5679 = vrot.slane %v5539, 4
        %v5680 = vsel %vm1089, %v5677, %v5679
        %v5681 = vrot.slane %v5540, 4
        %v5682 = vsel %vm1089, %v5679, %v5681
        %v5683 = vrot.slane %v5541, 4
        %v5684 = vsel %vm1089, %v5681, %v5683
        %v5685 = vrot.slane %v5542, 4
        %v5686 = vsel %vm1089, %v5683, %v5685
        %v5687 = vrot.slane %v5543, 4
        %v5688 = vsel %vm1089, %v5685, %v5687
        %v5689 = vsel %vm2614, %v5535, %v5568
        %v5690 = vsel %vm2614, %v5536, %v5570
        %v5691 = vsel %vm2614, %v5537, %v5572
        %v5692 = vsel %vm2614, %v5538, %v5574
        %v5693 = vsel %vm2614, %v5539, %v5576
        %v5694 = vsel %vm2614, %v5540, %v5578
        %v5695 = vsel %vm2614, %v5541, %v5580
        %v5696 = vsel %vm2614, %v5542, %v5582
        %v5697 = vsel %vm2746, %v5689, %v5607
        %v5698 = vsel %vm2746, %v5690, %v5609
        %v5699 = vsel %vm2746, %v5691, %v5611
        %v5700 = vsel %vm2746, %v5692, %v5613
        %v5701 = vsel %vm2746, %v5693, %v5615
        %v5702 = vsel %vm2746, %v5694, %v5617
        %v5703 = vsel %vm2746, %v5695, %v5619
        %v5704 = vsel %vm2746, %v5696, %v5621
        %v5705 = vsel %vm2878, %v5697, %v5649
        %v5706 = vsel %vm2878, %v5698, %v5651
        %v5707 = vsel %vm2878, %v5699, %v5653
        %v5708 = vsel %vm2878, %v5700, %v5655
        %v5709 = vsel %vm2878, %v5701, %v5657
        %v5710 = vsel %vm2878, %v5702, %v5659
        %v5711 = vsel %vm2878, %v5703, %v5661
        %v5712 = vsel %vm2878, %v5704, %v5663
        %v5713 = vld [vmem:[%s5] sm:$0xff]
        %v5714 = vld [vmem:[%s5 + $0x8] sm:$0xff]
        %v5715 = vld [vmem:[%s5 + $0x10] sm:$0xff]
        %v5716 = vld [vmem:[%s5 + $0x18] sm:$0xff]
        %v5717 = vld [vmem:[%s5 + $0x20] sm:$0xff]
        %v5718 = vld [vmem:[%s5 + $0x28] sm:$0xff]
        %v5719 = vld [vmem:[%s5 + $0x30] sm:$0xff]
        %v5720 = vld [vmem:[%s5 + $0x38] sm:$0xff]
        %v5721 = vld [vmem:[%s5 + $0x40] sm:$0xff]
        %v5722 = vld [vmem:[%s5 + $0x48] sm:$0xff]
        %v5723 = vld [vmem:[%s5 + $0x50] sm:$0xff]
        %v5724 = vld [vmem:[%s5 + $0x58] sm:$0xff]
        %v5725 = vld [vmem:[%s5 + $0x60] sm:$0xff]
        %v5726 = vld [vmem:[%s5 + $0x68] sm:$0xff]
        %v5727 = vld [vmem:[%s5 + $0x70] sm:$0xff]
        %v5728 = vld [vmem:[%s5 + $0x78] sm:$0xff]
        %v5729 = vld [vmem:[%s5 + $0x80] sm:$0xff]
        %v5730 = vld [vmem:[%s5 + $0x88] sm:$0xff]
        %v5731 = vld [vmem:[%s5 + $0x90] sm:$0xff]
        %v5732 = vld [vmem:[%s5 + $0x98] sm:$0xff]
        %v5733 = vld [vmem:[#allocation7] sm:$0x1]
        %v5735 = vlaneseq
        %v5736 = vshrl.u32 %v5735, 7
        %v5737 = vsub.s32 0, %v5736
        %v5738 = vrot.slane %v5733, %v5737
        %v5740 = vsel %vm2614, %v5674, 0
        %v5742 = vsel %vm2614, %v5676, 0
        %v5744 = vsel %vm2614, %v5678, 0
        %v5746 = vsel %vm2614, %v5680, 0
        %v5748 = vsel %vm2614, %v5682, 0
        %v5750 = vsel %vm2614, %v5684, 0
        %v5752 = vsel %vm2614, %v5686, 0
        %v5754 = vsel %vm2614, %v5688, 0
        %5756 = vmatprep.subr.mxu0 0.0
        %5757 = vmatpush1.msra.mxu0 %v5728
        %5758 = vmatprep.subr.mxu0 0.0
        %5759 = vmatpush1.msra.mxu0 %v5727
        %5760 = vmatprep.subr.mxu0 0.0
        %5761 = vmatpush1.msra.mxu0 %v5726
        %5762 = vmatprep.subr.mxu0 0.0
        %5763 = vmatpush1.msra.mxu0 %v5725
        %5764 = vmatprep.subr.mxu0 0.0
        %5765 = vmatpush1.msra.mxu0 %v5724
        %5766 = vmatprep.subr.mxu0 0.0
        %5767 = vmatpush1.msra.mxu0 %v5723
        %5768 = vmatprep.subr.mxu0 0.0
        %5769 = vmatpush1.msra.mxu0 %v5722
        %5770 = vmatprep.subr.mxu0 0.0
        %5771 = vmatpush1.msra.mxu0 %v5721
        %5772 = vmatprep.subr.mxu0 0.0
        %5773 = vmatpush1.msra.mxu0 %v5720
        %5774 = vmatprep.subr.mxu0 0.0
        %5775 = vmatpush1.msra.mxu0 %v5719
        %5776 = vmatprep.subr.mxu0 0.0
        %5777 = vmatpush1.msra.mxu0 %v5718
        %5778 = vmatprep.subr.mxu0 0.0
        %5779 = vmatpush1.msra.mxu0 %v5717
        %5780 = vmatprep.subr.mxu0 0.0
        %5781 = vmatpush1.msra.mxu0 %v5716
        %5782 = vmatprep.subr.mxu0 0.0
        %5783 = vmatpush1.msra.mxu0 %v5715
        %5784 = vmatprep.subr.mxu0 0.0
        %5785 = vmatpush1.msra.mxu0 %v5714
        %5786 = vmatprep.subr.mxu0 0.0
        %5787 = vmatpush1.msra.mxu0 %v5713
        %5788 = vmatprep.subr.mxu0 0.0
        %5789 = vmatpush2.msra.mxu0 0.0
        %5790 = vmatprep.subr.mxu0 0.0
        %5791 = vmatpush2.msra.mxu0 0.0
        %5792 = vmatprep.subr.mxu0 0.0
        %5793 = vmatpush2.msra.mxu0 0.0
        %5794 = vmatprep.subr.mxu0 0.0
        %5795 = vmatpush2.msra.mxu0 0.0
        %5796 = vmatprep.subr.mxu0 0.0
        %5797 = vmatpush2.msra.mxu0 0.0
        %5798 = vmatprep.subr.mxu0 0.0
        %5799 = vmatpush2.msra.mxu0 0.0
        %5800 = vmatprep.subr.mxu0 0.0
        %5801 = vmatpush2.msra.mxu0 0.0
        %5802 = vmatprep.subr.mxu0 0.0
        %5803 = vmatpush2.msra.mxu0 0.0
        %5804 = vmatprep.subr.mxu0 0.0
        %5805 = vmatpush2.msra.mxu0 0.0
        %5806 = vmatprep.subr.mxu0 0.0
        %5807 = vmatpush2.msra.mxu0 0.0
        %5808 = vmatprep.subr.mxu0 0.0
        %5809 = vmatpush2.msra.mxu0 0.0
        %5810 = vmatprep.subr.mxu0 0.0
        %5811 = vmatpush2.msra.mxu0 0.0
        %5812 = vmatprep.subr.mxu0 0.0
        %5813 = vmatpush2.msra.mxu0 %v5732
        %5814 = vmatprep.subr.mxu0 0.0
        %5815 = vmatpush2.msra.mxu0 %v5731
        %5816 = vmatprep.subr.mxu0 0.0
        %5817 = vmatpush2.msra.mxu0 %v5730
        %5818 = vmatprep.subr.mxu0 0.0
        %5819 = vmatpush2.msra.mxu0 %v5729
        %5820 = vmatprep.mubr.f32.mxu0 %v5740
        %5821 = vmatmul.mubr.f32.gmra.mxu0 %v5705
        %v5822 = vpop.f32.mrf.mxu0
        %v5823 = vadd.f32 %v5738, %v5822
        %v5824 = vpop.f32.mrf.mxu0
        %5825 = vmatprep.mubr.f32.mxu0 %v5742
        %5826 = vmatmul.mubr.f32.gmra.mxu0 %v5706
        %v5827 = vpop.f32.mrf.mxu0
        %v5828 = vadd.f32 %v5738, %v5827
        %v5829 = vpop.f32.mrf.mxu0
        %5830 = vmatprep.mubr.f32.mxu0 %v5744
        %5831 = vmatmul.mubr.f32.gmra.mxu0 %v5707
        %v5832 = vpop.f32.mrf.mxu0
        %v5833 = vadd.f32 %v5738, %v5832
        %v5834 = vpop.f32.mrf.mxu0
        %5835 = vmatprep.mubr.f32.mxu0 %v5746
        %5836 = vmatmul.mubr.f32.gmra.mxu0 %v5708
        %v5837 = vpop.f32.mrf.mxu0
        %v5838 = vadd.f32 %v5738, %v5837
        %v5839 = vpop.f32.mrf.mxu0
        %5840 = vmatprep.mubr.f32.mxu0 %v5748
        %5841 = vmatmul.mubr.f32.gmra.mxu0 %v5709
        %v5842 = vpop.f32.mrf.mxu0
        %v5843 = vadd.f32 %v5738, %v5842
        %v5844 = vpop.f32.mrf.mxu0
        %5845 = vmatprep.mubr.f32.mxu0 %v5750
        %5846 = vmatmul.mubr.f32.gmra.mxu0 %v5710
        %v5847 = vpop.f32.mrf.mxu0
        %v5848 = vadd.f32 %v5738, %v5847
        %v5849 = vpop.f32.mrf.mxu0
        %5850 = vmatprep.mubr.f32.mxu0 %v5752
        %5851 = vmatmul.mubr.f32.gmra.mxu0 %v5711
        %v5852 = vpop.f32.mrf.mxu0
        %v5853 = vadd.f32 %v5738, %v5852
        %v5854 = vpop.f32.mrf.mxu0
        %5855 = vmatprep.mubr.f32.mxu0 %v5754
        %5856 = vmatmul.mubr.f32.gmra.mxu0 %v5712
        %v5857 = vpop.f32.mrf.mxu0
        %v5858 = vadd.f32 %v5738, %v5857
        %v5859 = vpop.f32.mrf.mxu0
        %5860 = vdwg.mxu0
        %vm5861 = vcmp.ge.f32.partialorder %v5823, 0.0
        %vm5862 = vcmp.ge.f32.partialorder %v5828, 0.0
        %vm5863 = vcmp.ge.f32.partialorder %v5833, 0.0
        %vm5864 = vcmp.ge.f32.partialorder %v5838, 0.0
        %vm5865 = vcmp.ge.f32.partialorder %v5843, 0.0
        %vm5866 = vcmp.ge.f32.partialorder %v5848, 0.0
        %vm5867 = vcmp.ge.f32.partialorder %v5853, 0.0
        %vm5868 = vcmp.ge.f32.partialorder %v5858, 0.0
        %v5869 = vmul.f32 %v5823, 0.3
        %v5870 = vmul.f32 %v5828, 0.3
        %v5871 = vmul.f32 %v5833, 0.3
        %v5872 = vmul.f32 %v5838, 0.3
        %v5873 = vmul.f32 %v5843, 0.3
        %v5874 = vmul.f32 %v5848, 0.3
        %v5875 = vmul.f32 %v5853, 0.3
        %v5876 = vmul.f32 %v5858, 0.3
        %v5877 = vsel %vm5861, %v5823, %v5869
        %v5878 = vsel %vm5862, %v5828, %v5870
        %v5879 = vsel %vm5863, %v5833, %v5871
        %v5880 = vsel %vm5864, %v5838, %v5872
        %v5881 = vsel %vm5865, %v5843, %v5873
        %v5882 = vsel %vm5866, %v5848, %v5874
        %v5883 = vsel %vm5867, %v5853, %v5875
        %v5884 = vsel %vm5868, %v5858, %v5876
        %vm5885 = vcmp.ge.s32.totalorder %v3420, 1
        %vm5886 = vcmp.ge.s32.totalorder %v3421, 1
        %vm5887 = vcmp.ge.s32.totalorder %v3422, 1
        %vm5888 = vcmp.ge.s32.totalorder %v3423, 1
        %vm5889 = vcmp.ge.s32.totalorder %v3424, 1
        %vm5890 = vcmp.lt.s32.totalorder %v3420, 32
        %vm5891 = vcmp.lt.s32.totalorder %v3421, 32
        %vm5892 = vcmp.lt.s32.totalorder %v3422, 32
        %vm5893 = vcmp.lt.s32.totalorder %v3423, 32
        %vm5894 = vcmp.lt.s32.totalorder %v3424, 32
        %vm5895 = vmand %vm5885, %vm5890
        %vm5896 = vmand %vm5886, %vm5891
        %vm5897 = vmand %vm5887, %vm5892
        %vm5898 = vmand %vm5888, %vm5893
        %vm5899 = vmand %vm5889, %vm5894
        %v5900 = vsub.s32 %v3420, 1
        %v5901 = vsub.s32 %v3421, 1
        %v5902 = vsub.s32 %v3422, 1
        %v5903 = vsub.s32 %v3423, 1
        %v5904 = vsub.s32 %v3424, 1
        %v5905 = vmul.u32 %v5900, 2
        %v5906 = vmul.u32 %v5901, 2
        %v5907 = vmul.u32 %v5902, 2
        %v5908 = vmul.u32 %v5903, 2
        %v5909 = vmul.u32 %v5904, 2
        %vm5910 = vcmp.eq.s32.totalorder %v3438, %v5905
        %vm5911 = vcmp.eq.s32.totalorder %v3438, %v5906
        %vm5912 = vcmp.eq.s32.totalorder %v3438, %v5907
        %vm5913 = vcmp.eq.s32.totalorder %v3438, %v5908
        %vm5914 = vcmp.eq.s32.totalorder %v3438, %v5909
        %vm5915 = vmand %vm5895, %vm5910
        %vm5916 = vmand %vm5896, %vm5911
        %vm5917 = vmand %vm5897, %vm5912
        %vm5918 = vmand %vm5898, %vm5913
        %vm5919 = vmand %vm5899, %vm5914
        %v5920 = vsel %vm5915, 1.0, 0.0
        %v5921 = vsel %vm5916, 1.0, 0.0
        %v5922 = vsel %vm5917, 1.0, 0.0
        %v5923 = vsel %vm5918, 1.0, 0.0
        %v5924 = vsel %vm5919, 1.0, 0.0
        %v5925 = vadd.s32 %v5905, 1
        %v5926 = vadd.s32 %v5906, 1
        %v5927 = vadd.s32 %v5907, 1
        %v5928 = vadd.s32 %v5908, 1
        %v5929 = vadd.s32 %v5909, 1
        %vm5930 = vcmp.eq.s32.totalorder %v3438, %v5925
        %vm5931 = vcmp.eq.s32.totalorder %v3438, %v5926
        %vm5932 = vcmp.eq.s32.totalorder %v3438, %v5927
        %vm5933 = vcmp.eq.s32.totalorder %v3438, %v5928
        %vm5934 = vcmp.eq.s32.totalorder %v3438, %v5929
        %vm5935 = vmand %vm5895, %vm5930
        %vm5936 = vmand %vm5896, %vm5931
        %vm5937 = vmand %vm5897, %vm5932
        %vm5938 = vmand %vm5898, %vm5933
        %vm5939 = vmand %vm5899, %vm5934
        %v5940 = vsel %vm5935, 1.0, 0.0
        %v5941 = vsel %vm5936, 1.0, 0.0
        %v5942 = vsel %vm5937, 1.0, 0.0
        %v5943 = vsel %vm5938, 1.0, 0.0
        %v5944 = vsel %vm5939, 1.0, 0.0
        %vm5945 = vcmask 506880
        %v5947 = vsel %vm5945, %v5920, 0
        %v5950 = vsel %vm5945, %v5921, 0
        %v5953 = vsel %vm5945, %v5922, 0
        %v5956 = vsel %vm5945, %v5923, 0
        %v5959 = vsel %vm5945, %v5924, 0
        %v5962 = vsel %vm769, %v5884, 0
        %5964 = vmatprep.subr.mxu0 0.0
        %5965 = vmatpush1.msra.mxu0 0.0
        %5966 = vmatprep.subr.mxu0 0.0
        %5967 = vmatpush1.msra.mxu0 0.0
        %5968 = vmatprep.subr.mxu0 0.0
        %5969 = vmatpush1.msra.mxu0 0.0
        %5970 = vmatprep.subr.mxu0 0.0
        %5971 = vmatpush1.msra.mxu0 0.0
        %5972 = vmatprep.subr.mxu0 0.0
        %5973 = vmatpush1.msra.mxu0 0.0
        %5974 = vmatprep.subr.mxu0 0.0
        %5975 = vmatpush1.msra.mxu0 0.0
        %5976 = vmatprep.subr.mxu0 0.0
        %5977 = vmatpush1.msra.mxu0 0.0
        %5978 = vmatprep.subr.mxu0 0.0
        %5979 = vmatpush1.msra.mxu0 0.0
        %5980 = vmatprep.subr.mxu0 0.0
        %5981 = vmatpush1.msra.mxu0 %v5962
        %5982 = vmatprep.subr.mxu0 0.0
        %5983 = vmatpush1.msra.mxu0 %v5883
        %5984 = vmatprep.subr.mxu0 0.0
        %5985 = vmatpush1.msra.mxu0 %v5882
        %5986 = vmatprep.subr.mxu0 0.0
        %5987 = vmatpush1.msra.mxu0 %v5881
        %5988 = vmatprep.subr.mxu0 0.0
        %5989 = vmatpush1.msra.mxu0 %v5880
        %5990 = vmatprep.subr.mxu0 0.0
        %5991 = vmatpush1.msra.mxu0 %v5879
        %5992 = vmatprep.subr.mxu0 0.0
        %5993 = vmatpush1.msra.mxu0 %v5878
        %5994 = vmatprep.subr.mxu0 0.0
        %5995 = vmatpush1.msra.mxu0 %v5877
        %5996 = vmatprep.subr.mxu0 0.0
        %5997 = vmatpush2.msra.mxu0 0.0
        %5998 = vmatprep.subr.mxu0 0.0
        %5999 = vmatpush2.msra.mxu0 0.0
        %6000 = vmatprep.subr.mxu0 0.0
        %6001 = vmatpush2.msra.mxu0 0.0
        %6002 = vmatprep.subr.mxu0 0.0
        %6003 = vmatpush2.msra.mxu0 0.0
        %6004 = vmatprep.subr.mxu0 0.0
        %6005 = vmatpush2.msra.mxu0 0.0
        %6006 = vmatprep.subr.mxu0 0.0
        %6007 = vmatpush2.msra.mxu0 0.0
        %6008 = vmatprep.subr.mxu0 0.0
        %6009 = vmatpush2.msra.mxu0 0.0
        %6010 = vmatprep.subr.mxu0 0.0
        %6011 = vmatpush2.msra.mxu0 0.0
        %6012 = vmatprep.subr.mxu0 0.0
        %6013 = vmatpush2.msra.mxu0 0.0
        %6014 = vmatprep.subr.mxu0 0.0
        %6015 = vmatpush2.msra.mxu0 0.0
        %6016 = vmatprep.subr.mxu0 0.0
        %6017 = vmatpush2.msra.mxu0 0.0
        %6018 = vmatprep.subr.mxu0 0.0
        %6019 = vmatpush2.msra.mxu0 0.0
        %6020 = vmatprep.subr.mxu0 0.0
        %6021 = vmatpush2.msra.mxu0 0.0
        %6022 = vmatprep.subr.mxu0 0.0
        %6023 = vmatpush2.msra.mxu0 0.0
        %6024 = vmatprep.subr.mxu0 0.0
        %6025 = vmatpush2.msra.mxu0 0.0
        %6026 = vmatprep.subr.mxu0 0.0
        %6027 = vmatpush2.msra.mxu0 0.0
        %6028 = vmatprep.mubr.f32.mxu0 0.0
        %6029 = vmatmul.mubr.f32.gmra.mxu0 %v5947
        %v6030 = vpop.f32.mrf.mxu0
        %v6031 = vadd.f32 0.0, %v6030
        %v6032 = vpop.f32.mrf.mxu0
        %6033 = vmatprep.mubr.f32.mxu0 0.0
        %6034 = vmatmul.mubr.f32.gmra.mxu0 %v5950
        %v6035 = vpop.f32.mrf.mxu0
        %v6036 = vadd.f32 0.0, %v6035
        %v6037 = vpop.f32.mrf.mxu0
        %6038 = vmatprep.mubr.f32.mxu0 0.0
        %6039 = vmatmul.mubr.f32.gmra.mxu0 %v5953
        %v6040 = vpop.f32.mrf.mxu0
        %v6041 = vadd.f32 0.0, %v6040
        %v6042 = vpop.f32.mrf.mxu0
        %6043 = vmatprep.mubr.f32.mxu0 0.0
        %6044 = vmatmul.mubr.f32.gmra.mxu0 %v5956
        %v6045 = vpop.f32.mrf.mxu0
        %v6046 = vadd.f32 0.0, %v6045
        %v6047 = vpop.f32.mrf.mxu0
        %6048 = vmatprep.mubr.f32.mxu0 0.0
        %6049 = vmatmul.mubr.f32.gmra.mxu0 %v5959
        %v6050 = vpop.f32.mrf.mxu0
        %v6051 = vadd.f32 0.0, %v6050
        %v6052 = vpop.f32.mrf.mxu0
        %6053 = vdwg.mxu0
        %v6055 = vsel %vm5945, %v5940, 0
        %v6058 = vsel %vm5945, %v5941, 0
        %v6061 = vsel %vm5945, %v5942, 0
        %v6064 = vsel %vm5945, %v5943, 0
        %v6067 = vsel %vm5945, %v5944, 0
        %6069 = vmatprep.subr.mxu0 0.0
        %6070 = vmatpush1.msra.mxu0 0.0
        %6071 = vmatprep.subr.mxu0 0.0
        %6072 = vmatpush1.msra.mxu0 0.0
        %6073 = vmatprep.subr.mxu0 0.0
        %6074 = vmatpush1.msra.mxu0 0.0
        %6075 = vmatprep.subr.mxu0 0.0
        %6076 = vmatpush1.msra.mxu0 0.0
        %6077 = vmatprep.subr.mxu0 0.0
        %6078 = vmatpush1.msra.mxu0 0.0
        %6079 = vmatprep.subr.mxu0 0.0
        %6080 = vmatpush1.msra.mxu0 0.0
        %6081 = vmatprep.subr.mxu0 0.0
        %6082 = vmatpush1.msra.mxu0 0.0
        %6083 = vmatprep.subr.mxu0 0.0
        %6084 = vmatpush1.msra.mxu0 0.0
        %6085 = vmatprep.subr.mxu0 0.0
        %6086 = vmatpush1.msra.mxu0 %v5962
        %6087 = vmatprep.subr.mxu0 0.0
        %6088 = vmatpush1.msra.mxu0 %v5883
        %6089 = vmatprep.subr.mxu0 0.0
        %6090 = vmatpush1.msra.mxu0 %v5882
        %6091 = vmatprep.subr.mxu0 0.0
        %6092 = vmatpush1.msra.mxu0 %v5881
        %6093 = vmatprep.subr.mxu0 0.0
        %6094 = vmatpush1.msra.mxu0 %v5880
        %6095 = vmatprep.subr.mxu0 0.0
        %6096 = vmatpush1.msra.mxu0 %v5879
        %6097 = vmatprep.subr.mxu0 0.0
        %6098 = vmatpush1.msra.mxu0 %v5878
        %6099 = vmatprep.subr.mxu0 0.0
        %6100 = vmatpush1.msra.mxu0 %v5877
        %6101 = vmatprep.subr.mxu0 0.0
        %6102 = vmatpush2.msra.mxu0 0.0
        %6103 = vmatprep.subr.mxu0 0.0
        %6104 = vmatpush2.msra.mxu0 0.0
        %6105 = vmatprep.subr.mxu0 0.0
        %6106 = vmatpush2.msra.mxu0 0.0
        %6107 = vmatprep.subr.mxu0 0.0
        %6108 = vmatpush2.msra.mxu0 0.0
        %6109 = vmatprep.subr.mxu0 0.0
        %6110 = vmatpush2.msra.mxu0 0.0
        %6111 = vmatprep.subr.mxu0 0.0
        %6112 = vmatpush2.msra.mxu0 0.0
        %6113 = vmatprep.subr.mxu0 0.0
        %6114 = vmatpush2.msra.mxu0 0.0
        %6115 = vmatprep.subr.mxu0 0.0
        %6116 = vmatpush2.msra.mxu0 0.0
        %6117 = vmatprep.subr.mxu0 0.0
        %6118 = vmatpush2.msra.mxu0 0.0
        %6119 = vmatprep.subr.mxu0 0.0
        %6120 = vmatpush2.msra.mxu0 0.0
        %6121 = vmatprep.subr.mxu0 0.0
        %6122 = vmatpush2.msra.mxu0 0.0
        %6123 = vmatprep.subr.mxu0 0.0
        %6124 = vmatpush2.msra.mxu0 0.0
        %6125 = vmatprep.subr.mxu0 0.0
        %6126 = vmatpush2.msra.mxu0 0.0
        %6127 = vmatprep.subr.mxu0 0.0
        %6128 = vmatpush2.msra.mxu0 0.0
        %6129 = vmatprep.subr.mxu0 0.0
        %6130 = vmatpush2.msra.mxu0 0.0
        %6131 = vmatprep.subr.mxu0 0.0
        %6132 = vmatpush2.msra.mxu0 0.0
        %6133 = vmatprep.mubr.f32.mxu0 0.0
        %6134 = vmatmul.mubr.f32.gmra.mxu0 %v6055
        %v6135 = vpop.f32.mrf.mxu0
        %v6136 = vadd.f32 0.0, %v6135
        %v6137 = vpop.f32.mrf.mxu0
        %6138 = vmatprep.mubr.f32.mxu0 0.0
        %6139 = vmatmul.mubr.f32.gmra.mxu0 %v6058
        %v6140 = vpop.f32.mrf.mxu0
        %v6141 = vadd.f32 0.0, %v6140
        %v6142 = vpop.f32.mrf.mxu0
        %6143 = vmatprep.mubr.f32.mxu0 0.0
        %6144 = vmatmul.mubr.f32.gmra.mxu0 %v6061
        %v6145 = vpop.f32.mrf.mxu0
        %v6146 = vadd.f32 0.0, %v6145
        %v6147 = vpop.f32.mrf.mxu0
        %6148 = vmatprep.mubr.f32.mxu0 0.0
        %6149 = vmatmul.mubr.f32.gmra.mxu0 %v6064
        %v6150 = vpop.f32.mrf.mxu0
        %v6151 = vadd.f32 0.0, %v6150
        %v6152 = vpop.f32.mrf.mxu0
        %6153 = vmatprep.mubr.f32.mxu0 0.0
        %6154 = vmatmul.mubr.f32.gmra.mxu0 %v6067
        %v6155 = vpop.f32.mrf.mxu0
        %v6156 = vadd.f32 0.0, %v6155
        %v6157 = vpop.f32.mrf.mxu0
        %6158 = vdwg.mxu0
        %v6159 = vmax.f32 %v6031, %v6136
        %v6160 = vmax.f32 %v6036, %v6141
        %v6161 = vmax.f32 %v6041, %v6146
        %v6162 = vmax.f32 %v6046, %v6151
        %v6163 = vmax.f32 %v6051, %v6156
        %v6168 = vrot.slane %v6159, 1
        %v6169 = vrot.slane %v6160, 1
        %v6170 = vsel %vm609, %v6168, %v6169
        %v6171 = vrot.slane %v6161, 1
        %v6172 = vsel %vm609, %v6169, %v6171
        %v6173 = vrot.slane %v6162, 1
        %v6174 = vsel %vm609, %v6171, %v6173
        %6175 = vrot.lane.b32.xlu0 %v6170, 64
        %v6176 = vpop.permute.xlu0 %6175
        %6177 = vrot.lane.b32.xlu0 %v6172, 64
        %v6178 = vpop.permute.xlu0 %6177
        %6179 = vrot.lane.b32.xlu0 %v6174, 64
        %v6180 = vpop.permute.xlu0 %6179
        %6181 = vrot.lane.b32.xlu0 %v6173, 64
        %v6182 = vpop.permute.xlu0 %6181
        %v6188 = vrot.slane %v6159, 2
        %v6189 = vrot.slane %v6160, 2
        %v6190 = vsel %vm769, %v6188, %v6189
        %v6191 = vrot.slane %v6161, 2
        %v6192 = vsel %vm769, %v6189, %v6191
        %v6193 = vrot.slane %v6162, 2
        %v6194 = vsel %vm769, %v6191, %v6193
        %v6195 = vrot.slane %v6163, 2
        %v6196 = vsel %vm769, %v6193, %v6195
        %v6197 = vsel %vm2746, %v6159, %v6176
        %v6198 = vsel %vm2746, %v6160, %v6178
        %v6199 = vsel %vm2746, %v6161, %v6180
        %v6200 = vsel %vm2746, %v6162, %v6182
        %v6201 = vld [vmem:[#allocation8] sm:$0xff]
        %v6202 = vld [vmem:[#allocation8 + $0x8] sm:$0xff]
        %v6203 = vld [vmem:[#allocation8 + $0x10] sm:$0xff]
        %v6204 = vld [vmem:[#allocation8 + $0x18] sm:$0xff]
        %v6205 = vld [vmem:[#allocation8 + $0x20] sm:$0xff]
        %v6206 = vld [vmem:[#allocation8 + $0x28] sm:$0xff]
        %v6207 = vld [vmem:[#allocation8 + $0x30] sm:$0xff]
        %v6208 = vld [vmem:[#allocation8 + $0x38] sm:$0xff]
        %v6209 = vld [vmem:[#allocation8 + $0x40] sm:$0xff]
        %v6210 = vld [vmem:[#allocation8 + $0x48] sm:$0xff]
        %v6211 = vld [vmem:[#allocation8 + $0x50] sm:$0xff]
        %v6212 = vld [vmem:[#allocation8 + $0x58] sm:$0xff]
        %v6213 = vld [vmem:[#allocation8 + $0x60] sm:$0xff]
        %v6214 = vld [vmem:[#allocation8 + $0x68] sm:$0xff]
        %v6215 = vld [vmem:[#allocation8 + $0x70] sm:$0xff]
        %v6216 = vld [vmem:[#allocation8 + $0x78] sm:$0xff]
        %v6217 = vld [vmem:[#allocation8 + $0x80] sm:$0xff]
        %v6218 = vld [vmem:[#allocation8 + $0x88] sm:$0xff]
        %v6219 = vld [vmem:[#allocation8 + $0x90] sm:$0xff]
        %v6220 = vld [vmem:[#allocation8 + $0x98] sm:$0xff]
        %v6221 = vld [vmem:[#allocation8 + $0xa0] sm:$0xff]
        %v6222 = vld [vmem:[#allocation8 + $0xa8] sm:$0xff]
        %v6223 = vld [vmem:[#allocation8 + $0xb0] sm:$0xff]
        %v6224 = vld [vmem:[#allocation8 + $0xb8] sm:$0xff]
        %v6225 = vld [vmem:[#allocation10] sm:$0x1]
        %v6227 = vlaneseq
        %v6228 = vshrl.u32 %v6227, 7
        %v6229 = vsub.s32 0, %v6228
        %v6230 = vrot.slane %v6225, %v6229
        %v6232 = vsel %vm2746, %v6190, 0
        %v6234 = vsel %vm2746, %v6192, 0
        %v6236 = vsel %vm2746, %v6194, 0
        %v6238 = vsel %vm2746, %v6196, 0
        %6240 = vmatprep.subr.mxu0 0.0
        %6241 = vmatpush1.msra.mxu0 %v6216
        %6242 = vmatprep.subr.mxu0 0.0
        %6243 = vmatpush1.msra.mxu0 %v6215
        %6244 = vmatprep.subr.mxu0 0.0
        %6245 = vmatpush1.msra.mxu0 %v6214
        %6246 = vmatprep.subr.mxu0 0.0
        %6247 = vmatpush1.msra.mxu0 %v6213
        %6248 = vmatprep.subr.mxu0 0.0
        %6249 = vmatpush1.msra.mxu0 %v6212
        %6250 = vmatprep.subr.mxu0 0.0
        %6251 = vmatpush1.msra.mxu0 %v6211
        %6252 = vmatprep.subr.mxu0 0.0
        %6253 = vmatpush1.msra.mxu0 %v6210
        %6254 = vmatprep.subr.mxu0 0.0
        %6255 = vmatpush1.msra.mxu0 %v6209
        %6256 = vmatprep.subr.mxu0 0.0
        %6257 = vmatpush1.msra.mxu0 %v6208
        %6258 = vmatprep.subr.mxu0 0.0
        %6259 = vmatpush1.msra.mxu0 %v6207
        %6260 = vmatprep.subr.mxu0 0.0
        %6261 = vmatpush1.msra.mxu0 %v6206
        %6262 = vmatprep.subr.mxu0 0.0
        %6263 = vmatpush1.msra.mxu0 %v6205
        %6264 = vmatprep.subr.mxu0 0.0
        %6265 = vmatpush1.msra.mxu0 %v6204
        %6266 = vmatprep.subr.mxu0 0.0
        %6267 = vmatpush1.msra.mxu0 %v6203
        %6268 = vmatprep.subr.mxu0 0.0
        %6269 = vmatpush1.msra.mxu0 %v6202
        %6270 = vmatprep.subr.mxu0 0.0
        %6271 = vmatpush1.msra.mxu0 %v6201
        %6272 = vmatprep.subr.mxu0 0.0
        %6273 = vmatpush2.msra.mxu0 0.0
        %6274 = vmatprep.subr.mxu0 0.0
        %6275 = vmatpush2.msra.mxu0 0.0
        %6276 = vmatprep.subr.mxu0 0.0
        %6277 = vmatpush2.msra.mxu0 0.0
        %6278 = vmatprep.subr.mxu0 0.0
        %6279 = vmatpush2.msra.mxu0 0.0
        %6280 = vmatprep.subr.mxu0 0.0
        %6281 = vmatpush2.msra.mxu0 0.0
        %6282 = vmatprep.subr.mxu0 0.0
        %6283 = vmatpush2.msra.mxu0 0.0
        %6284 = vmatprep.subr.mxu0 0.0
        %6285 = vmatpush2.msra.mxu0 0.0
        %6286 = vmatprep.subr.mxu0 0.0
        %6287 = vmatpush2.msra.mxu0 0.0
        %6288 = vmatprep.subr.mxu0 0.0
        %6289 = vmatpush2.msra.mxu0 %v6224
        %6290 = vmatprep.subr.mxu0 0.0
        %6291 = vmatpush2.msra.mxu0 %v6223
        %6292 = vmatprep.subr.mxu0 0.0
        %6293 = vmatpush2.msra.mxu0 %v6222
        %6294 = vmatprep.subr.mxu0 0.0
        %6295 = vmatpush2.msra.mxu0 %v6221
        %6296 = vmatprep.subr.mxu0 0.0
        %6297 = vmatpush2.msra.mxu0 %v6220
        %6298 = vmatprep.subr.mxu0 0.0
        %6299 = vmatpush2.msra.mxu0 %v6219
        %6300 = vmatprep.subr.mxu0 0.0
        %6301 = vmatpush2.msra.mxu0 %v6218
        %6302 = vmatprep.subr.mxu0 0.0
        %6303 = vmatpush2.msra.mxu0 %v6217
        %6304 = vmatprep.mubr.f32.mxu0 %v6232
        %6305 = vmatmul.mubr.f32.gmra.mxu0 %v6197
        %v6306 = vpop.f32.mrf.mxu0
        %v6307 = vadd.f32 %v6230, %v6306
        %v6308 = vpop.f32.mrf.mxu0
        %6309 = vmatprep.mubr.f32.mxu0 %v6234
        %6310 = vmatmul.mubr.f32.gmra.mxu0 %v6198
        %v6311 = vpop.f32.mrf.mxu0
        %v6312 = vadd.f32 %v6230, %v6311
        %v6313 = vpop.f32.mrf.mxu0
        %6314 = vmatprep.mubr.f32.mxu0 %v6236
        %6315 = vmatmul.mubr.f32.gmra.mxu0 %v6199
        %v6316 = vpop.f32.mrf.mxu0
        %v6317 = vadd.f32 %v6230, %v6316
        %v6318 = vpop.f32.mrf.mxu0
        %6319 = vmatprep.mubr.f32.mxu0 %v6238
        %6320 = vmatmul.mubr.f32.gmra.mxu0 %v6200
        %v6321 = vpop.f32.mrf.mxu0
        %v6322 = vadd.f32 %v6230, %v6321
        %v6323 = vpop.f32.mrf.mxu0
        %6324 = vdwg.mxu0
        %vm6325 = vcmp.ge.f32.partialorder %v6307, 0.0
        %vm6326 = vcmp.ge.f32.partialorder %v6312, 0.0
        %vm6327 = vcmp.ge.f32.partialorder %v6317, 0.0
        %vm6328 = vcmp.ge.f32.partialorder %v6322, 0.0
        %v6329 = vmul.f32 %v6307, 0.3
        %v6330 = vmul.f32 %v6312, 0.3
        %v6331 = vmul.f32 %v6317, 0.3
        %v6332 = vmul.f32 %v6322, 0.3
        %v6333 = vsel %vm6325, %v6307, %v6329
        %v6334 = vsel %vm6326, %v6312, %v6330
        %v6335 = vsel %vm6327, %v6317, %v6331
        %v6336 = vsel %vm6328, %v6322, %v6332
        %v6338 = vrot.slane %v6333, 1
        %v6340 = vrot.slane %v6333, 2
        %v6342 = vrot.slane %v6333, 3
        %v6344 = vrot.slane %v6333, 4
        %v6346 = vrot.slane %v6333, 5
        %v6348 = vrot.slane %v6333, 6
        %v6350 = vrot.slane %v6333, 7
        %v6353 = vrot.slane %v6334, 1
        %v6355 = vrot.slane %v6334, 2
        %v6357 = vrot.slane %v6334, 3
        %v6359 = vrot.slane %v6334, 4
        %v6361 = vrot.slane %v6334, 5
        %v6363 = vrot.slane %v6334, 6
        %v6365 = vrot.slane %v6334, 7
        %v6368 = vrot.slane %v6335, 1
        %v6370 = vrot.slane %v6335, 2
        %v6372 = vrot.slane %v6335, 3
        %v6374 = vrot.slane %v6335, 4
        %v6376 = vrot.slane %v6335, 5
        %v6378 = vrot.slane %v6335, 6
        %v6380 = vrot.slane %v6335, 7
        %v6383 = vrot.slane %v6336, 1
        %v6385 = vrot.slane %v6336, 2
        %v6387 = vrot.slane %v6336, 3
        %v6389 = vrot.slane %v6336, 4
        %v6391 = vrot.slane %v6336, 5
        %v6393 = vrot.slane %v6336, 6
        %v6395 = vld [vmem:[#allocation11] sm:$0xff]
        %v6396 = vld [vmem:[#allocation11 + $0x8] sm:$0xff]
        %v6397 = vld [vmem:[#allocation11 + $0x10] sm:$0xff]
        %v6398 = vld [vmem:[#allocation11 + $0x18] sm:$0xff]
        %v6399 = vld [vmem:[#allocation11 + $0x20] sm:$0xff]
        %v6400 = vld [vmem:[#allocation11 + $0x28] sm:$0xff]
        %v6401 = vld [vmem:[#allocation11 + $0x30] sm:$0xff]
        %v6402 = vld [vmem:[#allocation11 + $0x38] sm:$0xff]
        %v6403 = vld [vmem:[#allocation11 + $0x40] sm:$0xff]
        %v6404 = vld [vmem:[#allocation11 + $0x48] sm:$0xff]
        %v6405 = vld [vmem:[#allocation11 + $0x50] sm:$0xff]
        %v6406 = vld [vmem:[#allocation11 + $0x58] sm:$0xff]
        %v6407 = vld [vmem:[#allocation11 + $0x60] sm:$0xff]
        %v6408 = vld [vmem:[#allocation11 + $0x68] sm:$0xff]
        %v6409 = vld [vmem:[#allocation11 + $0x70] sm:$0xff]
        %v6410 = vld [vmem:[#allocation11 + $0x78] sm:$0xff]
        %v6411 = vld [vmem:[#allocation11 + $0x80] sm:$0xff]
        %v6412 = vld [vmem:[#allocation11 + $0x88] sm:$0xff]
        %v6413 = vld [vmem:[#allocation11 + $0x90] sm:$0xff]
        %v6414 = vld [vmem:[#allocation11 + $0x98] sm:$0xff]
        %v6415 = vld [vmem:[#allocation11 + $0xa0] sm:$0xff]
        %v6416 = vld [vmem:[#allocation11 + $0xa8] sm:$0xff]
        %v6417 = vld [vmem:[#allocation11 + $0xb0] sm:$0xff]
        %v6418 = vld [vmem:[#allocation11 + $0xb8] sm:$0xff]
        %v6419 = vld [vmem:[#allocation11 + $0xc0] sm:$0xff]
        %v6420 = vld [vmem:[#allocation11 + $0xc8] sm:$0xff]
        %v6421 = vld [vmem:[#allocation11 + $0xd0] sm:$0xff]
        %v6422 = vld [vmem:[#allocation11 + $0xd8] sm:$0xff]
        %v6423 = vld [vmem:[#allocation11 + $0xe0] sm:$0xff]
        %v6424 = vld [vmem:[#allocation11 + $0xe8] sm:$0xff]
        %v6425 = vld [vmem:[#allocation11 + $0xf0] sm:$0xff]
        %v6426 = vld [vmem:[#allocation11 + $0xf8] sm:$0xff]
        %v6427 = vld [vmem:[#allocation11 + $0x100] sm:$0xff]
        %v6428 = vld [vmem:[#allocation11 + $0x108] sm:$0xff]
        %v6429 = vld [vmem:[#allocation11 + $0x110] sm:$0xff]
        %v6430 = vld [vmem:[#allocation11 + $0x118] sm:$0xff]
        %v6431 = vld [vmem:[#allocation11 + $0x120] sm:$0xff]
        %v6432 = vld [vmem:[#allocation11 + $0x128] sm:$0xff]
        %v6433 = vld [vmem:[#allocation11 + $0x130] sm:$0xff]
        %v6434 = vld [vmem:[#allocation11 + $0x138] sm:$0xff]
        %v6435 = vld [vmem:[#allocation11 + $0x140] sm:$0xff]
        %v6436 = vld [vmem:[#allocation11 + $0x148] sm:$0xff]
        %v6437 = vld [vmem:[#allocation11 + $0x150] sm:$0xff]
        %v6438 = vld [vmem:[#allocation11 + $0x158] sm:$0xff]
        %v6439 = vld [vmem:[#allocation11 + $0x160] sm:$0xff]
        %v6440 = vld [vmem:[#allocation11 + $0x168] sm:$0xff]
        %v6441 = vld [vmem:[#allocation11 + $0x170] sm:$0xff]
        %v6442 = vld [vmem:[#allocation11 + $0x178] sm:$0xff]
        %v6443 = vld [vmem:[#allocation11 + $0x180] sm:$0xff]
        %v6444 = vld [vmem:[#allocation11 + $0x188] sm:$0xff]
        %v6445 = vld [vmem:[#allocation11 + $0x190] sm:$0xff]
        %v6446 = vld [vmem:[#allocation11 + $0x198] sm:$0xff]
        %v6447 = vld [vmem:[#allocation11 + $0x1a0] sm:$0xff]
        %v6448 = vld [vmem:[#allocation11 + $0x1a8] sm:$0xff]
        %v6449 = vld [vmem:[#allocation11 + $0x1b0] sm:$0xff]
        %v6450 = vld [vmem:[#allocation11 + $0x1b8] sm:$0xff]
        %v6451 = vld [vmem:[#allocation11 + $0x1c0] sm:$0xff]
        %v6452 = vld [vmem:[#allocation11 + $0x1c8] sm:$0xff]
        %v6453 = vld [vmem:[#allocation11 + $0x1d0] sm:$0xff]
        %v6454 = vld [vmem:[#allocation11 + $0x1d8] sm:$0xff]
        %v6455 = vld [vmem:[#allocation11 + $0x1e0] sm:$0xff]
        %v6456 = vld [vmem:[#allocation11 + $0x1e8] sm:$0xff]
        %v6457 = vld [vmem:[#allocation11 + $0x1f0] sm:$0xff]
        %v6458 = vld [vmem:[#allocation11 + $0x1f8] sm:$0xff]
        %v6459 = vld [vmem:[#allocation11 + $0x200] sm:$0xff]
        %v6460 = vld [vmem:[#allocation11 + $0x208] sm:$0xff]
        %v6461 = vld [vmem:[#allocation11 + $0x210] sm:$0xff]
        %v6462 = vld [vmem:[#allocation11 + $0x218] sm:$0xff]
        %v6463 = vld [vmem:[#allocation11 + $0x220] sm:$0xff]
        %v6464 = vld [vmem:[#allocation11 + $0x228] sm:$0xff]
        %v6465 = vld [vmem:[#allocation11 + $0x230] sm:$0xff]
        %v6466 = vld [vmem:[#allocation11 + $0x238] sm:$0xff]
        %v6467 = vld [vmem:[#allocation11 + $0x240] sm:$0xff]
        %v6468 = vld [vmem:[#allocation11 + $0x248] sm:$0xff]
        %v6469 = vld [vmem:[#allocation11 + $0x250] sm:$0xff]
        %v6470 = vld [vmem:[#allocation11 + $0x258] sm:$0xff]
        %v6471 = vld [vmem:[#allocation11 + $0x260] sm:$0xff]
        %v6472 = vld [vmem:[#allocation11 + $0x268] sm:$0xff]
        %v6473 = vld [vmem:[#allocation11 + $0x270] sm:$0xff]
        %v6474 = vld [vmem:[#allocation11 + $0x278] sm:$0xff]
        %v6475 = vld [vmem:[#allocation11 + $0x280] sm:$0xff]
        %v6476 = vld [vmem:[#allocation11 + $0x288] sm:$0xff]
        %v6477 = vld [vmem:[#allocation11 + $0x290] sm:$0xff]
        %v6478 = vld [vmem:[#allocation11 + $0x298] sm:$0xff]
        %v6479 = vld [vmem:[#allocation11 + $0x2a0] sm:$0xff]
        %v6480 = vld [vmem:[#allocation11 + $0x2a8] sm:$0xff]
        %v6481 = vld [vmem:[#allocation11 + $0x2b0] sm:$0xff]
        %v6482 = vld [vmem:[#allocation11 + $0x2b8] sm:$0xff]
        %v6483 = vld [vmem:[#allocation11 + $0x2c0] sm:$0xff]
        %v6484 = vld [vmem:[#allocation11 + $0x2c8] sm:$0xff]
        %v6485 = vld [vmem:[#allocation11 + $0x2d0] sm:$0xff]
        %v6486 = vld [vmem:[#allocation11 + $0x2d8] sm:$0xff]
        %v6487 = vld [vmem:[#allocation11 + $0x2e0] sm:$0xff]
        %v6488 = vld [vmem:[#allocation11 + $0x2e8] sm:$0xff]
        %v6489 = vld [vmem:[#allocation11 + $0x2f0] sm:$0xff]
        %v6490 = vld [vmem:[#allocation11 + $0x2f8] sm:$0xff]
        %v6491 = vld [vmem:[#allocation11 + $0x300] sm:$0xff]
        %v6492 = vld [vmem:[#allocation11 + $0x308] sm:$0xff]
        %v6493 = vld [vmem:[#allocation11 + $0x310] sm:$0xff]
        %v6494 = vld [vmem:[#allocation11 + $0x318] sm:$0xff]
        %v6495 = vld [vmem:[#allocation11 + $0x320] sm:$0xff]
        %v6496 = vld [vmem:[#allocation11 + $0x328] sm:$0xff]
        %v6497 = vld [vmem:[#allocation11 + $0x330] sm:$0xff]
        %v6498 = vld [vmem:[#allocation11 + $0x338] sm:$0xff]
        %v6499 = vld [vmem:[#allocation11 + $0x340] sm:$0xff]
        %v6500 = vld [vmem:[#allocation11 + $0x348] sm:$0xff]
        %v6501 = vld [vmem:[#allocation11 + $0x350] sm:$0xff]
        %v6502 = vld [vmem:[#allocation11 + $0x358] sm:$0xff]
        %v6503 = vld [vmem:[#allocation11 + $0x360] sm:$0xff]
        %v6504 = vld [vmem:[#allocation11 + $0x368] sm:$0xff]
        %v6505 = vld [vmem:[#allocation11 + $0x370] sm:$0xff]
        %v6506 = vld [vmem:[#allocation11 + $0x378] sm:$0xff]
        %v6507 = vld [vmem:[#allocation11 + $0x380] sm:$0xff]
        %v6508 = vld [vmem:[#allocation11 + $0x388] sm:$0xff]
        %v6509 = vld [vmem:[#allocation11 + $0x390] sm:$0xff]
        %v6510 = vld [vmem:[#allocation11 + $0x398] sm:$0xff]
        %v6511 = vld [vmem:[#allocation11 + $0x3a0] sm:$0xff]
        %v6512 = vld [vmem:[#allocation11 + $0x3a8] sm:$0xff]
        %v6513 = vld [vmem:[#allocation11 + $0x3b0] sm:$0xff]
        %v6514 = vld [vmem:[#allocation11 + $0x3b8] sm:$0xff]
        %v6515 = vld [vmem:[#allocation11 + $0x3c0] sm:$0xff]
        %v6516 = vld [vmem:[#allocation11 + $0x3c8] sm:$0xff]
        %v6517 = vld [vmem:[#allocation11 + $0x3d0] sm:$0xff]
        %v6518 = vld [vmem:[#allocation11 + $0x3d8] sm:$0xff]
        %v6519 = vld [vmem:[#allocation11 + $0x3e0] sm:$0xff]
        %v6520 = vld [vmem:[#allocation11 + $0x3e8] sm:$0xff]
        %v6521 = vld [vmem:[#allocation11 + $0x3f0] sm:$0xff]
        %v6522 = vld [vmem:[#allocation11 + $0x3f8] sm:$0xff]
        %v6523 = vld [vmem:[#allocation11 + $0x400] sm:$0xff]
        %v6524 = vld [vmem:[#allocation11 + $0x408] sm:$0xff]
        %v6525 = vld [vmem:[#allocation11 + $0x410] sm:$0xff]
        %v6526 = vld [vmem:[#allocation11 + $0x418] sm:$0xff]
        %v6527 = vld [vmem:[#allocation11 + $0x420] sm:$0xff]
        %v6528 = vld [vmem:[#allocation11 + $0x428] sm:$0xff]
        %v6529 = vld [vmem:[#allocation11 + $0x430] sm:$0xff]
        %v6530 = vld [vmem:[#allocation11 + $0x438] sm:$0xff]
        %v6531 = vld [vmem:[#allocation11 + $0x440] sm:$0xff]
        %v6532 = vld [vmem:[#allocation11 + $0x448] sm:$0xff]
        %v6533 = vld [vmem:[#allocation11 + $0x450] sm:$0xff]
        %v6534 = vld [vmem:[#allocation11 + $0x458] sm:$0xff]
        %v6535 = vld [vmem:[#allocation11 + $0x460] sm:$0xff]
        %v6536 = vld [vmem:[#allocation11 + $0x468] sm:$0xff]
        %v6537 = vld [vmem:[#allocation11 + $0x470] sm:$0xff]
        %v6538 = vld [vmem:[#allocation11 + $0x478] sm:$0xff]
        %v6539 = vld [vmem:[#allocation11 + $0x480] sm:$0xff]
        %v6540 = vld [vmem:[#allocation11 + $0x488] sm:$0xff]
        %v6541 = vld [vmem:[#allocation11 + $0x490] sm:$0xff]
        %v6542 = vld [vmem:[#allocation11 + $0x498] sm:$0xff]
        %v6543 = vld [vmem:[#allocation11 + $0x4a0] sm:$0xff]
        %v6544 = vld [vmem:[#allocation11 + $0x4a8] sm:$0xff]
        %v6545 = vld [vmem:[#allocation11 + $0x4b0] sm:$0xff]
        %v6546 = vld [vmem:[#allocation11 + $0x4b8] sm:$0xff]
        %v6547 = vld [vmem:[#allocation11 + $0x4c0] sm:$0xff]
        %v6548 = vld [vmem:[#allocation11 + $0x4c8] sm:$0xff]
        %v6549 = vld [vmem:[#allocation11 + $0x4d0] sm:$0xff]
        %v6550 = vld [vmem:[#allocation11 + $0x4d8] sm:$0xff]
        %v6551 = vld [vmem:[#allocation11 + $0x4e0] sm:$0xff]
        %v6552 = vld [vmem:[#allocation11 + $0x4e8] sm:$0xff]
        %v6553 = vld [vmem:[#allocation11 + $0x4f0] sm:$0xff]
        %v6554 = vld [vmem:[#allocation11 + $0x4f8] sm:$0xff]
        %v6555 = vld [vmem:[#allocation11 + $0x500] sm:$0xff]
        %v6556 = vld [vmem:[#allocation11 + $0x508] sm:$0xff]
        %v6557 = vld [vmem:[#allocation11 + $0x510] sm:$0xff]
        %v6558 = vld [vmem:[#allocation11 + $0x518] sm:$0xff]
        %v6559 = vld [vmem:[#allocation11 + $0x520] sm:$0xff]
        %v6560 = vld [vmem:[#allocation11 + $0x528] sm:$0xff]
        %v6561 = vld [vmem:[#allocation11 + $0x530] sm:$0xff]
        %v6562 = vld [vmem:[#allocation11 + $0x538] sm:$0xff]
        %v6563 = vld [vmem:[#allocation11 + $0x540] sm:$0xff]
        %v6564 = vld [vmem:[#allocation11 + $0x548] sm:$0xff]
        %v6565 = vld [vmem:[#allocation11 + $0x550] sm:$0xff]
        %v6566 = vld [vmem:[#allocation11 + $0x558] sm:$0xff]
        %v6567 = vld [vmem:[#allocation11 + $0x560] sm:$0xff]
        %v6568 = vld [vmem:[#allocation11 + $0x568] sm:$0xff]
        %v6569 = vld [vmem:[#allocation11 + $0x570] sm:$0xff]
        %v6570 = vld [vmem:[#allocation11 + $0x578] sm:$0xff]
        %v6571 = vld [vmem:[#allocation11 + $0x580] sm:$0xff]
        %v6572 = vld [vmem:[#allocation11 + $0x588] sm:$0xff]
        %v6573 = vld [vmem:[#allocation11 + $0x590] sm:$0xff]
        %v6574 = vld [vmem:[#allocation11 + $0x598] sm:$0xff]
        %v6575 = vld [vmem:[#allocation11 + $0x5a0] sm:$0xff]
        %v6576 = vld [vmem:[#allocation11 + $0x5a8] sm:$0xff]
        %v6577 = vld [vmem:[#allocation11 + $0x5b0] sm:$0xff]
        %v6578 = vld [vmem:[#allocation11 + $0x5b8] sm:$0xff]
        %v6579 = vld [vmem:[#allocation11 + $0x5c0] sm:$0xff]
        %v6580 = vld [vmem:[#allocation11 + $0x5c8] sm:$0xff]
        %v6581 = vld [vmem:[#allocation11 + $0x5d0] sm:$0xff]
        %v6582 = vld [vmem:[#allocation11 + $0x5d8] sm:$0xff]
        %v6583 = vld [vmem:[#allocation11 + $0x5e0] sm:$0xff]
        %v6584 = vld [vmem:[#allocation11 + $0x5e8] sm:$0xff]
        %v6585 = vld [vmem:[#allocation11 + $0x5f0] sm:$0xff]
        %v6586 = vld [vmem:[#allocation11 + $0x5f8] sm:$0xff]
        %v6587 = vld [vmem:[#allocation11 + $0x600] sm:$0xff]
        %v6588 = vld [vmem:[#allocation11 + $0x608] sm:$0xff]
        %v6589 = vld [vmem:[#allocation11 + $0x610] sm:$0xff]
        %v6590 = vld [vmem:[#allocation11 + $0x618] sm:$0xff]
        %v6591 = vld [vmem:[#allocation11 + $0x620] sm:$0xff]
        %v6592 = vld [vmem:[#allocation11 + $0x628] sm:$0xff]
        %v6593 = vld [vmem:[#allocation11 + $0x630] sm:$0xff]
        %v6594 = vld [vmem:[#allocation11 + $0x638] sm:$0xff]
        %v6595 = vld [vmem:[#allocation11 + $0x640] sm:$0xff]
        %v6596 = vld [vmem:[#allocation11 + $0x648] sm:$0xff]
        %v6597 = vld [vmem:[#allocation11 + $0x650] sm:$0xff]
        %v6598 = vld [vmem:[#allocation11 + $0x658] sm:$0xff]
        %v6599 = vld [vmem:[#allocation11 + $0x660] sm:$0xff]
        %v6600 = vld [vmem:[#allocation11 + $0x668] sm:$0xff]
        %v6601 = vld [vmem:[#allocation11 + $0x670] sm:$0xff]
        %v6602 = vld [vmem:[#allocation11 + $0x678] sm:$0xff]
        %v6603 = vld [vmem:[#allocation11 + $0x680] sm:$0xff]
        %v6604 = vld [vmem:[#allocation11 + $0x688] sm:$0xff]
        %v6605 = vld [vmem:[#allocation11 + $0x690] sm:$0xff]
        %v6606 = vld [vmem:[#allocation11 + $0x698] sm:$0xff]
        %v6607 = vld [vmem:[#allocation11 + $0x6a0] sm:$0xff]
        %v6608 = vld [vmem:[#allocation11 + $0x6a8] sm:$0xff]
        %v6609 = vld [vmem:[#allocation11 + $0x6b0] sm:$0xff]
        %v6610 = vld [vmem:[#allocation11 + $0x6b8] sm:$0xff]
        %v6611 = vld [vmem:[#allocation11 + $0x6c0] sm:$0xff]
        %v6612 = vld [vmem:[#allocation11 + $0x6c8] sm:$0xff]
        %v6613 = vld [vmem:[#allocation11 + $0x6d0] sm:$0xff]
        %v6614 = vld [vmem:[#allocation11 + $0x6d8] sm:$0xff]
        %v6615 = vld [vmem:[#allocation11 + $0x6e0] sm:$0xff]
        %v6616 = vld [vmem:[#allocation11 + $0x6e8] sm:$0xff]
        %v6617 = vld [vmem:[#allocation11 + $0x6f0] sm:$0xff]
        %v6618 = vld [vmem:[#allocation11 + $0x6f8] sm:$0xff]
        %v6619 = vld [vmem:[#allocation11 + $0x700] sm:$0xff]
        %v6620 = vld [vmem:[#allocation11 + $0x708] sm:$0xff]
        %v6621 = vld [vmem:[#allocation11 + $0x710] sm:$0xff]
        %v6622 = vld [vmem:[#allocation11 + $0x718] sm:$0xff]
        %v6623 = vld [vmem:[#allocation11 + $0x720] sm:$0xff]
        %v6624 = vld [vmem:[#allocation11 + $0x728] sm:$0xff]
        %v6625 = vld [vmem:[#allocation11 + $0x730] sm:$0xff]
        %v6626 = vld [vmem:[#allocation11 + $0x738] sm:$0xff]
        %v6627 = vld [vmem:[#allocation11 + $0x740] sm:$0xff]
        %v6628 = vld [vmem:[#allocation11 + $0x748] sm:$0xff]
        %v6629 = vld [vmem:[#allocation11 + $0x750] sm:$0xff]
        %v6630 = vld [vmem:[#allocation11 + $0x758] sm:$0xff]
        %v6631 = vld [vmem:[#allocation11 + $0x760] sm:$0xff]
        %v6632 = vld [vmem:[#allocation11 + $0x768] sm:$0xff]
        %v6633 = vld [vmem:[#allocation11 + $0x770] sm:$0xff]
        %v6634 = vld [vmem:[#allocation11 + $0x778] sm:$0xff]
        %v6635 = vld [vmem:[#allocation11 + $0x780] sm:$0xff]
        %v6636 = vld [vmem:[#allocation11 + $0x788] sm:$0xff]
        %v6637 = vld [vmem:[#allocation11 + $0x790] sm:$0xff]
        %v6638 = vld [vmem:[#allocation11 + $0x798] sm:$0xff]
        %v6639 = vld [vmem:[#allocation11 + $0x7a0] sm:$0xff]
        %v6640 = vld [vmem:[#allocation11 + $0x7a8] sm:$0xff]
        %v6641 = vld [vmem:[#allocation11 + $0x7b0] sm:$0xff]
        %v6642 = vld [vmem:[#allocation11 + $0x7b8] sm:$0xff]
        %v6643 = vld [vmem:[#allocation11 + $0x7c0] sm:$0xff]
        %v6644 = vld [vmem:[#allocation11 + $0x7c8] sm:$0xff]
        %v6645 = vld [vmem:[#allocation11 + $0x7d0] sm:$0xff]
        %v6646 = vld [vmem:[#allocation11 + $0x7d8] sm:$0xff]
        %v6647 = vld [vmem:[#allocation11 + $0x7e0] sm:$0xff]
        %v6648 = vld [vmem:[#allocation11 + $0x7e8] sm:$0xff]
        %v6649 = vld [vmem:[#allocation11 + $0x7f0] sm:$0xff]
        %v6650 = vld [vmem:[#allocation11 + $0x7f8] sm:$0xff]
        %v6651 = vld [vmem:[#allocation11 + $0x800] sm:$0xff]
        %v6652 = vld [vmem:[#allocation11 + $0x808] sm:$0xff]
        %v6653 = vld [vmem:[#allocation11 + $0x810] sm:$0xff]
        %v6654 = vld [vmem:[#allocation11 + $0x818] sm:$0xff]
        %v6655 = vld [vmem:[#allocation11 + $0x820] sm:$0xff]
        %v6656 = vld [vmem:[#allocation11 + $0x828] sm:$0xff]
        %v6657 = vld [vmem:[#allocation11 + $0x830] sm:$0xff]
        %v6658 = vld [vmem:[#allocation11 + $0x838] sm:$0xff]
        %v6659 = vld [vmem:[#allocation11 + $0x840] sm:$0xff]
        %v6660 = vld [vmem:[#allocation11 + $0x848] sm:$0xff]
        %v6661 = vld [vmem:[#allocation11 + $0x850] sm:$0xff]
        %v6662 = vld [vmem:[#allocation11 + $0x858] sm:$0xff]
        %v6663 = vld [vmem:[#allocation11 + $0x860] sm:$0xff]
        %v6664 = vld [vmem:[#allocation11 + $0x868] sm:$0xff]
        %v6665 = vld [vmem:[#allocation11 + $0x870] sm:$0xff]
        %v6666 = vld [vmem:[#allocation11 + $0x878] sm:$0xff]
        %v6667 = vld [vmem:[#allocation11 + $0x880] sm:$0xff]
        %v6668 = vld [vmem:[#allocation11 + $0x888] sm:$0xff]
        %v6669 = vld [vmem:[#allocation11 + $0x890] sm:$0xff]
        %v6670 = vld [vmem:[#allocation11 + $0x898] sm:$0xff]
        %v6671 = vld [vmem:[#allocation11 + $0x8a0] sm:$0xff]
        %v6672 = vld [vmem:[#allocation11 + $0x8a8] sm:$0xff]
        %v6673 = vld [vmem:[#allocation11 + $0x8b0] sm:$0xff]
        %v6674 = vld [vmem:[#allocation11 + $0x8b8] sm:$0xff]
        %v6675 = vld [vmem:[#allocation11 + $0x8c0] sm:$0xff]
        %v6676 = vld [vmem:[#allocation11 + $0x8c8] sm:$0xff]
        %v6677 = vld [vmem:[#allocation11 + $0x8d0] sm:$0xff]
        %v6678 = vld [vmem:[#allocation11 + $0x8d8] sm:$0xff]
        %v6679 = vld [vmem:[#allocation11 + $0x8e0] sm:$0xff]
        %v6680 = vld [vmem:[#allocation11 + $0x8e8] sm:$0xff]
        %v6681 = vld [vmem:[#allocation11 + $0x8f0] sm:$0xff]
        %v6682 = vld [vmem:[#allocation11 + $0x8f8] sm:$0xff]
        %v6683 = vld [vmem:[#allocation11 + $0x900] sm:$0xff]
        %v6684 = vld [vmem:[#allocation11 + $0x908] sm:$0xff]
        %v6685 = vld [vmem:[#allocation11 + $0x910] sm:$0xff]
        %v6686 = vld [vmem:[#allocation11 + $0x918] sm:$0xff]
        %v6687 = vld [vmem:[#allocation11 + $0x920] sm:$0xff]
        %v6688 = vld [vmem:[#allocation11 + $0x928] sm:$0xff]
        %v6689 = vld [vmem:[#allocation11 + $0x930] sm:$0xff]
        %v6690 = vld [vmem:[#allocation11 + $0x938] sm:$0xff]
        %v6691 = vld [vmem:[#allocation11 + $0x940] sm:$0xff]
        %v6692 = vld [vmem:[#allocation11 + $0x948] sm:$0xff]
        %v6693 = vld [vmem:[#allocation11 + $0x950] sm:$0xff]
        %v6694 = vld [vmem:[#allocation11 + $0x958] sm:$0xff]
        %v6695 = vld [vmem:[#allocation11 + $0x960] sm:$0xff]
        %v6696 = vld [vmem:[#allocation11 + $0x968] sm:$0xff]
        %v6697 = vld [vmem:[#allocation11 + $0x970] sm:$0xff]
        %v6698 = vld [vmem:[#allocation11 + $0x978] sm:$0xff]
        %v6699 = vld [vmem:[#allocation11 + $0x980] sm:$0xff]
        %v6700 = vld [vmem:[#allocation11 + $0x988] sm:$0xff]
        %v6701 = vld [vmem:[#allocation11 + $0x990] sm:$0xff]
        %v6702 = vld [vmem:[#allocation11 + $0x998] sm:$0xff]
        %v6703 = vld [vmem:[#allocation11 + $0x9a0] sm:$0xff]
        %v6704 = vld [vmem:[#allocation11 + $0x9a8] sm:$0xff]
        %v6705 = vld [vmem:[#allocation11 + $0x9b0] sm:$0xff]
        %v6706 = vld [vmem:[#allocation11 + $0x9b8] sm:$0xff]
        %v6707 = vld [vmem:[#allocation11 + $0x9c0] sm:$0xff]
        %v6708 = vld [vmem:[#allocation11 + $0x9c8] sm:$0xff]
        %v6709 = vld [vmem:[#allocation11 + $0x9d0] sm:$0xff]
        %v6710 = vld [vmem:[#allocation11 + $0x9d8] sm:$0xff]
        %v6711 = vld [vmem:[#allocation11 + $0x9e0] sm:$0xff]
        %v6712 = vld [vmem:[#allocation11 + $0x9e8] sm:$0xff]
        %v6713 = vld [vmem:[#allocation11 + $0x9f0] sm:$0xff]
        %v6714 = vld [vmem:[#allocation11 + $0x9f8] sm:$0xff]
        %v6715 = vld [vmem:[#allocation11 + $0xa00] sm:$0xff]
        %v6716 = vld [vmem:[#allocation11 + $0xa08] sm:$0xff]
        %v6717 = vld [vmem:[#allocation11 + $0xa10] sm:$0xff]
        %v6718 = vld [vmem:[#allocation11 + $0xa18] sm:$0xff]
        %v6719 = vld [vmem:[#allocation11 + $0xa20] sm:$0xff]
        %v6720 = vld [vmem:[#allocation11 + $0xa28] sm:$0xff]
        %v6721 = vld [vmem:[#allocation11 + $0xa30] sm:$0xff]
        %v6722 = vld [vmem:[#allocation11 + $0xa38] sm:$0xff]
        %v6723 = vld [vmem:[#allocation11 + $0xa40] sm:$0xff]
        %v6724 = vld [vmem:[#allocation11 + $0xa48] sm:$0xff]
        %v6725 = vld [vmem:[#allocation11 + $0xa50] sm:$0xff]
        %v6726 = vld [vmem:[#allocation11 + $0xa58] sm:$0xff]
        %v6727 = vld [vmem:[#allocation11 + $0xa60] sm:$0xff]
        %v6728 = vld [vmem:[#allocation11 + $0xa68] sm:$0xff]
        %v6729 = vld [vmem:[#allocation11 + $0xa70] sm:$0xff]
        %v6730 = vld [vmem:[#allocation11 + $0xa78] sm:$0xff]
        %v6731 = vld [vmem:[#allocation11 + $0xa80] sm:$0xff]
        %v6732 = vld [vmem:[#allocation11 + $0xa88] sm:$0xff]
        %v6733 = vld [vmem:[#allocation11 + $0xa90] sm:$0xff]
        %v6734 = vld [vmem:[#allocation11 + $0xa98] sm:$0xff]
        %v6735 = vld [vmem:[#allocation11 + $0xaa0] sm:$0xff]
        %v6736 = vld [vmem:[#allocation11 + $0xaa8] sm:$0xff]
        %v6737 = vld [vmem:[#allocation11 + $0xab0] sm:$0xff]
        %v6738 = vld [vmem:[#allocation11 + $0xab8] sm:$0xff]
        %v6739 = vld [vmem:[#allocation11 + $0xac0] sm:$0xff]
        %v6740 = vld [vmem:[#allocation11 + $0xac8] sm:$0xff]
        %v6741 = vld [vmem:[#allocation11 + $0xad0] sm:$0xff]
        %v6742 = vld [vmem:[#allocation11 + $0xad8] sm:$0xff]
        %v6743 = vld [vmem:[#allocation11 + $0xae0] sm:$0xff]
        %v6744 = vld [vmem:[#allocation11 + $0xae8] sm:$0xff]
        %v6745 = vld [vmem:[#allocation11 + $0xaf0] sm:$0xff]
        %v6746 = vld [vmem:[#allocation11 + $0xaf8] sm:$0xff]
        %v6747 = vld [vmem:[#allocation11 + $0xb00] sm:$0xff]
        %v6748 = vld [vmem:[#allocation11 + $0xb08] sm:$0xff]
        %v6749 = vld [vmem:[#allocation11 + $0xb10] sm:$0xff]
        %v6750 = vld [vmem:[#allocation11 + $0xb18] sm:$0xff]
        %v6751 = vld [vmem:[#allocation11 + $0xb20] sm:$0xff]
        %v6752 = vld [vmem:[#allocation11 + $0xb28] sm:$0xff]
        %v6753 = vld [vmem:[#allocation11 + $0xb30] sm:$0xff]
        %v6754 = vld [vmem:[#allocation11 + $0xb38] sm:$0xff]
        %v6755 = vld [vmem:[#allocation11 + $0xb40] sm:$0xff]
        %v6756 = vld [vmem:[#allocation11 + $0xb48] sm:$0xff]
        %v6757 = vld [vmem:[#allocation11 + $0xb50] sm:$0xff]
        %v6758 = vld [vmem:[#allocation11 + $0xb58] sm:$0xff]
        %v6759 = vld [vmem:[#allocation11 + $0xb60] sm:$0xff]
        %v6760 = vld [vmem:[#allocation11 + $0xb68] sm:$0xff]
        %v6761 = vld [vmem:[#allocation11 + $0xb70] sm:$0xff]
        %v6762 = vld [vmem:[#allocation11 + $0xb78] sm:$0xff]
        %v6763 = vld [vmem:[#allocation11 + $0xb80] sm:$0xff]
        %v6764 = vld [vmem:[#allocation11 + $0xb88] sm:$0xff]
        %v6765 = vld [vmem:[#allocation11 + $0xb90] sm:$0xff]
        %v6766 = vld [vmem:[#allocation11 + $0xb98] sm:$0xff]
        %v6767 = vld [vmem:[#allocation11 + $0xba0] sm:$0xff]
        %v6768 = vld [vmem:[#allocation11 + $0xba8] sm:$0xff]
        %v6769 = vld [vmem:[#allocation11 + $0xbb0] sm:$0xff]
        %v6770 = vld [vmem:[#allocation11 + $0xbb8] sm:$0xff]
        %v6771 = vld [vmem:[#allocation11 + $0xbc0] sm:$0xff]
        %v6772 = vld [vmem:[#allocation11 + $0xbc8] sm:$0xff]
        %v6773 = vld [vmem:[#allocation11 + $0xbd0] sm:$0xff]
        %v6774 = vld [vmem:[#allocation11 + $0xbd8] sm:$0xff]
        %v6775 = vld [vmem:[#allocation11 + $0xbe0] sm:$0xff]
        %v6776 = vld [vmem:[#allocation11 + $0xbe8] sm:$0xff]
        %v6777 = vld [vmem:[#allocation11 + $0xbf0] sm:$0xff]
        %v6778 = vld [vmem:[#allocation11 + $0xbf8] sm:$0xff]
        %v6779 = vld [vmem:[#allocation11 + $0xc00] sm:$0xff]
        %v6780 = vld [vmem:[#allocation11 + $0xc08] sm:$0xff]
        %v6781 = vld [vmem:[#allocation11 + $0xc10] sm:$0xff]
        %v6782 = vld [vmem:[#allocation11 + $0xc18] sm:$0xff]
        %v6783 = vld [vmem:[#allocation11 + $0xc20] sm:$0xff]
        %v6784 = vld [vmem:[#allocation11 + $0xc28] sm:$0xff]
        %v6785 = vld [vmem:[#allocation11 + $0xc30] sm:$0xff]
        %v6786 = vld [vmem:[#allocation11 + $0xc38] sm:$0xff]
        %v6787 = vld [vmem:[#allocation11 + $0xc40] sm:$0xff]
        %v6788 = vld [vmem:[#allocation11 + $0xc48] sm:$0xff]
        %v6789 = vld [vmem:[#allocation11 + $0xc50] sm:$0xff]
        %v6790 = vld [vmem:[#allocation11 + $0xc58] sm:$0xff]
        %v6791 = vld [vmem:[#allocation11 + $0xc60] sm:$0xff]
        %v6792 = vld [vmem:[#allocation11 + $0xc68] sm:$0xff]
        %v6793 = vld [vmem:[#allocation11 + $0xc70] sm:$0xff]
        %v6794 = vld [vmem:[#allocation11 + $0xc78] sm:$0xff]
        %v6795 = vld [vmem:[#allocation11 + $0xc80] sm:$0xff]
        %v6796 = vld [vmem:[#allocation11 + $0xc88] sm:$0xff]
        %v6797 = vld [vmem:[#allocation11 + $0xc90] sm:$0xff]
        %v6798 = vld [vmem:[#allocation11 + $0xc98] sm:$0xff]
        %v6799 = vld [vmem:[#allocation11 + $0xca0] sm:$0xff]
        %v6800 = vld [vmem:[#allocation11 + $0xca8] sm:$0xff]
        %v6801 = vld [vmem:[#allocation11 + $0xcb0] sm:$0xff]
        %v6802 = vld [vmem:[#allocation11 + $0xcb8] sm:$0xff]
        %v6803 = vld [vmem:[#allocation11 + $0xcc0] sm:$0xff]
        %v6804 = vld [vmem:[#allocation11 + $0xcc8] sm:$0xff]
        %v6805 = vld [vmem:[#allocation11 + $0xcd0] sm:$0xff]
        %v6806 = vld [vmem:[#allocation11 + $0xcd8] sm:$0xff]
        %v6807 = vld [vmem:[#allocation11 + $0xce0] sm:$0xff]
        %v6808 = vld [vmem:[#allocation11 + $0xce8] sm:$0xff]
        %v6809 = vld [vmem:[#allocation11 + $0xcf0] sm:$0xff]
        %v6810 = vld [vmem:[#allocation11 + $0xcf8] sm:$0xff]
        %v6811 = vld [vmem:[#allocation11 + $0xd00] sm:$0xff]
        %v6812 = vld [vmem:[#allocation11 + $0xd08] sm:$0xff]
        %v6813 = vld [vmem:[#allocation11 + $0xd10] sm:$0xff]
        %v6814 = vld [vmem:[#allocation11 + $0xd18] sm:$0xff]
        %v6815 = vld [vmem:[#allocation11 + $0xd20] sm:$0xff]
        %v6816 = vld [vmem:[#allocation11 + $0xd28] sm:$0xff]
        %v6817 = vld [vmem:[#allocation11 + $0xd30] sm:$0xff]
        %v6818 = vld [vmem:[#allocation11 + $0xd38] sm:$0xff]
        %v6819 = vld [vmem:[#allocation11 + $0xd40] sm:$0xff]
        %v6820 = vld [vmem:[#allocation11 + $0xd48] sm:$0xff]
        %v6821 = vld [vmem:[#allocation11 + $0xd50] sm:$0xff]
        %v6822 = vld [vmem:[#allocation11 + $0xd58] sm:$0xff]
        %v6823 = vld [vmem:[#allocation11 + $0xd60] sm:$0xff]
        %v6824 = vld [vmem:[#allocation11 + $0xd68] sm:$0xff]
        %v6825 = vld [vmem:[#allocation11 + $0xd70] sm:$0xff]
        %v6826 = vld [vmem:[#allocation11 + $0xd78] sm:$0xff]
        %v6827 = vld [vmem:[#allocation11 + $0xd80] sm:$0xff]
        %v6828 = vld [vmem:[#allocation11 + $0xd88] sm:$0xff]
        %v6829 = vld [vmem:[#allocation11 + $0xd90] sm:$0xff]
        %v6830 = vld [vmem:[#allocation11 + $0xd98] sm:$0xff]
        %v6831 = vld [vmem:[#allocation11 + $0xda0] sm:$0xff]
        %v6832 = vld [vmem:[#allocation11 + $0xda8] sm:$0xff]
        %v6833 = vld [vmem:[#allocation11 + $0xdb0] sm:$0xff]
        %v6834 = vld [vmem:[#allocation11 + $0xdb8] sm:$0xff]
        %v6835 = vld [vmem:[#allocation11 + $0xdc0] sm:$0xff]
        %v6836 = vld [vmem:[#allocation11 + $0xdc8] sm:$0xff]
        %v6837 = vld [vmem:[#allocation11 + $0xdd0] sm:$0xff]
        %v6838 = vld [vmem:[#allocation11 + $0xdd8] sm:$0xff]
        %v6839 = vld [vmem:[#allocation11 + $0xde0] sm:$0xff]
        %v6840 = vld [vmem:[#allocation11 + $0xde8] sm:$0xff]
        %v6841 = vld [vmem:[#allocation11 + $0xdf0] sm:$0xff]
        %v6842 = vld [vmem:[#allocation11 + $0xdf8] sm:$0xff]
        %v6843 = vld [vmem:[#allocation11 + $0xe00] sm:$0xff]
        %v6844 = vld [vmem:[#allocation11 + $0xe08] sm:$0xff]
        %v6845 = vld [vmem:[#allocation11 + $0xe10] sm:$0xff]
        %v6846 = vld [vmem:[#allocation11 + $0xe18] sm:$0xff]
        %v6847 = vld [vmem:[#allocation11 + $0xe20] sm:$0xff]
        %v6848 = vld [vmem:[#allocation11 + $0xe28] sm:$0xff]
        %v6849 = vld [vmem:[#allocation11 + $0xe30] sm:$0xff]
        %v6850 = vld [vmem:[#allocation11 + $0xe38] sm:$0xff]
        %v6851 = vld [vmem:[#allocation11 + $0xe40] sm:$0xff]
        %v6852 = vld [vmem:[#allocation11 + $0xe48] sm:$0xff]
        %v6853 = vld [vmem:[#allocation11 + $0xe50] sm:$0xff]
        %v6854 = vld [vmem:[#allocation11 + $0xe58] sm:$0xff]
        %v6855 = vld [vmem:[#allocation11 + $0xe60] sm:$0xff]
        %v6856 = vld [vmem:[#allocation11 + $0xe68] sm:$0xff]
        %v6857 = vld [vmem:[#allocation11 + $0xe70] sm:$0xff]
        %v6858 = vld [vmem:[#allocation11 + $0xe78] sm:$0xff]
        %v6859 = vld [vmem:[#allocation11 + $0xe80] sm:$0xff]
        %v6860 = vld [vmem:[#allocation11 + $0xe88] sm:$0xff]
        %v6861 = vld [vmem:[#allocation11 + $0xe90] sm:$0xff]
        %v6862 = vld [vmem:[#allocation11 + $0xe98] sm:$0xff]
        %v6863 = vld [vmem:[#allocation11 + $0xea0] sm:$0xff]
        %v6864 = vld [vmem:[#allocation11 + $0xea8] sm:$0xff]
        %v6865 = vld [vmem:[#allocation11 + $0xeb0] sm:$0xff]
        %v6866 = vld [vmem:[#allocation11 + $0xeb8] sm:$0xff]
        %v6867 = vld [vmem:[#allocation11 + $0xec0] sm:$0xff]
        %v6868 = vld [vmem:[#allocation11 + $0xec8] sm:$0xff]
        %v6869 = vld [vmem:[#allocation11 + $0xed0] sm:$0xff]
        %v6870 = vld [vmem:[#allocation11 + $0xed8] sm:$0xff]
        %v6871 = vld [vmem:[#allocation11 + $0xee0] sm:$0xff]
        %v6872 = vld [vmem:[#allocation11 + $0xee8] sm:$0xff]
        %v6873 = vld [vmem:[#allocation11 + $0xef0] sm:$0xff]
        %v6874 = vld [vmem:[#allocation11 + $0xef8] sm:$0xff]
        %v6875 = vld [vmem:[#allocation11 + $0xf00] sm:$0xff]
        %v6876 = vld [vmem:[#allocation11 + $0xf08] sm:$0xff]
        %v6877 = vld [vmem:[#allocation11 + $0xf10] sm:$0xff]
        %v6878 = vld [vmem:[#allocation11 + $0xf18] sm:$0xff]
        %v6879 = vld [vmem:[#allocation11 + $0xf20] sm:$0xff]
        %v6880 = vld [vmem:[#allocation11 + $0xf28] sm:$0xff]
        %v6881 = vld [vmem:[#allocation11 + $0xf30] sm:$0xff]
        %v6882 = vld [vmem:[#allocation11 + $0xf38] sm:$0xff]
        %v6883 = vld [vmem:[#allocation11 + $0xf40] sm:$0xff]
        %v6884 = vld [vmem:[#allocation11 + $0xf48] sm:$0xff]
        %v6885 = vld [vmem:[#allocation11 + $0xf50] sm:$0xff]
        %v6886 = vld [vmem:[#allocation11 + $0xf58] sm:$0xff]
        %v6887 = vld [vmem:[#allocation11 + $0xf60] sm:$0xff]
        %v6888 = vld [vmem:[#allocation11 + $0xf68] sm:$0xff]
        %v6889 = vld [vmem:[#allocation11 + $0xf70] sm:$0xff]
        %v6890 = vld [vmem:[#allocation11 + $0xf78] sm:$0xff]
        %v6891 = vld [vmem:[#allocation13] sm:$0x1]
        %6892 = vmatprep.subr.mxu0 0.0
        %6893 = vmatpush1.msra.mxu0 %v6410
        %6894 = vmatprep.subr.mxu0 0.0
        %6895 = vmatpush1.msra.mxu0 %v6409
        %6896 = vmatprep.subr.mxu0 0.0
        %6897 = vmatpush1.msra.mxu0 %v6408
        %6898 = vmatprep.subr.mxu0 0.0
        %6899 = vmatpush1.msra.mxu0 %v6407
        %6900 = vmatprep.subr.mxu0 0.0
        %6901 = vmatpush1.msra.mxu0 %v6406
        %6902 = vmatprep.subr.mxu0 0.0
        %6903 = vmatpush1.msra.mxu0 %v6405
        %6904 = vmatprep.subr.mxu0 0.0
        %6905 = vmatpush1.msra.mxu0 %v6404
        %6906 = vmatprep.subr.mxu0 0.0
        %6907 = vmatpush1.msra.mxu0 %v6403
        %6908 = vmatprep.subr.mxu0 0.0
        %6909 = vmatpush1.msra.mxu0 %v6402
        %6910 = vmatprep.subr.mxu0 0.0
        %6911 = vmatpush1.msra.mxu0 %v6401
        %6912 = vmatprep.subr.mxu0 0.0
        %6913 = vmatpush1.msra.mxu0 %v6400
        %6914 = vmatprep.subr.mxu0 0.0
        %6915 = vmatpush1.msra.mxu0 %v6399
        %6916 = vmatprep.subr.mxu0 0.0
        %6917 = vmatpush1.msra.mxu0 %v6398
        %6918 = vmatprep.subr.mxu0 0.0
        %6919 = vmatpush1.msra.mxu0 %v6397
        %6920 = vmatprep.subr.mxu0 0.0
        %6921 = vmatpush1.msra.mxu0 %v6396
        %6922 = vmatprep.subr.mxu0 0.0
        %6923 = vmatpush1.msra.mxu0 %v6395
        %6924 = vmatprep.subr.mxu0 0.0
        %6925 = vmatpush2.msra.mxu0 %v6426
        %6926 = vmatprep.subr.mxu0 0.0
        %6927 = vmatpush2.msra.mxu0 %v6425
        %6928 = vmatprep.subr.mxu0 0.0
        %6929 = vmatpush2.msra.mxu0 %v6424
        %6930 = vmatprep.subr.mxu0 0.0
        %6931 = vmatpush2.msra.mxu0 %v6423
        %6932 = vmatprep.subr.mxu0 0.0
        %6933 = vmatpush2.msra.mxu0 %v6422
        %6934 = vmatprep.subr.mxu0 0.0
        %6935 = vmatpush2.msra.mxu0 %v6421
        %6936 = vmatprep.subr.mxu0 0.0
        %6937 = vmatpush2.msra.mxu0 %v6420
        %6938 = vmatprep.subr.mxu0 0.0
        %6939 = vmatpush2.msra.mxu0 %v6419
        %6940 = vmatprep.subr.mxu0 0.0
        %6941 = vmatpush2.msra.mxu0 %v6418
        %6942 = vmatprep.subr.mxu0 0.0
        %6943 = vmatpush2.msra.mxu0 %v6417
        %6944 = vmatprep.subr.mxu0 0.0
        %6945 = vmatpush2.msra.mxu0 %v6416
        %6946 = vmatprep.subr.mxu0 0.0
        %6947 = vmatpush2.msra.mxu0 %v6415
        %6948 = vmatprep.subr.mxu0 0.0
        %6949 = vmatpush2.msra.mxu0 %v6414
        %6950 = vmatprep.subr.mxu0 0.0
        %6951 = vmatpush2.msra.mxu0 %v6413
        %6952 = vmatprep.subr.mxu0 0.0
        %6953 = vmatpush2.msra.mxu0 %v6412
        %6954 = vmatprep.subr.mxu0 0.0
        %6955 = vmatpush2.msra.mxu0 %v6411
        %6956 = vmatprep.mubr.f32.mxu0 %v6338
        %6957 = vmatmul.mubr.f32.gmra.mxu0 %v6333
        %v6958 = vpop.f32.mrf.mxu0
        %v6959 = vadd.f32 %v6891, %v6958
        %v6960 = vpop.f32.mrf.mxu0
        %6961 = vdwg.mxu0
        %6962 = vmatprep.subr.mxu0 0.0
        %6963 = vmatpush1.msra.mxu0 %v6442
        %6964 = vmatprep.subr.mxu0 0.0
        %6965 = vmatpush1.msra.mxu0 %v6441
        %6966 = vmatprep.subr.mxu0 0.0
        %6967 = vmatpush1.msra.mxu0 %v6440
        %6968 = vmatprep.subr.mxu0 0.0
        %6969 = vmatpush1.msra.mxu0 %v6439
        %6970 = vmatprep.subr.mxu0 0.0
        %6971 = vmatpush1.msra.mxu0 %v6438
        %6972 = vmatprep.subr.mxu0 0.0
        %6973 = vmatpush1.msra.mxu0 %v6437
        %6974 = vmatprep.subr.mxu0 0.0
        %6975 = vmatpush1.msra.mxu0 %v6436
        %6976 = vmatprep.subr.mxu0 0.0
        %6977 = vmatpush1.msra.mxu0 %v6435
        %6978 = vmatprep.subr.mxu0 0.0
        %6979 = vmatpush1.msra.mxu0 %v6434
        %6980 = vmatprep.subr.mxu0 0.0
        %6981 = vmatpush1.msra.mxu0 %v6433
        %6982 = vmatprep.subr.mxu0 0.0
        %6983 = vmatpush1.msra.mxu0 %v6432
        %6984 = vmatprep.subr.mxu0 0.0
        %6985 = vmatpush1.msra.mxu0 %v6431
        %6986 = vmatprep.subr.mxu0 0.0
        %6987 = vmatpush1.msra.mxu0 %v6430
        %6988 = vmatprep.subr.mxu0 0.0
        %6989 = vmatpush1.msra.mxu0 %v6429
        %6990 = vmatprep.subr.mxu0 0.0
        %6991 = vmatpush1.msra.mxu0 %v6428
        %6992 = vmatprep.subr.mxu0 0.0
        %6993 = vmatpush1.msra.mxu0 %v6427
        %6994 = vmatprep.subr.mxu0 0.0
        %6995 = vmatpush2.msra.mxu0 %v6458
        %6996 = vmatprep.subr.mxu0 0.0
        %6997 = vmatpush2.msra.mxu0 %v6457
        %6998 = vmatprep.subr.mxu0 0.0
        %6999 = vmatpush2.msra.mxu0 %v6456
        %7000 = vmatprep.subr.mxu0 0.0
        %7001 = vmatpush2.msra.mxu0 %v6455
        %7002 = vmatprep.subr.mxu0 0.0
        %7003 = vmatpush2.msra.mxu0 %v6454
        %7004 = vmatprep.subr.mxu0 0.0
        %7005 = vmatpush2.msra.mxu0 %v6453
        %7006 = vmatprep.subr.mxu0 0.0
        %7007 = vmatpush2.msra.mxu0 %v6452
        %7008 = vmatprep.subr.mxu0 0.0
        %7009 = vmatpush2.msra.mxu0 %v6451
        %7010 = vmatprep.subr.mxu0 0.0
        %7011 = vmatpush2.msra.mxu0 %v6450
        %7012 = vmatprep.subr.mxu0 0.0
        %7013 = vmatpush2.msra.mxu0 %v6449
        %7014 = vmatprep.subr.mxu0 0.0
        %7015 = vmatpush2.msra.mxu0 %v6448
        %7016 = vmatprep.subr.mxu0 0.0
        %7017 = vmatpush2.msra.mxu0 %v6447
        %7018 = vmatprep.subr.mxu0 0.0
        %7019 = vmatpush2.msra.mxu0 %v6446
        %7020 = vmatprep.subr.mxu0 0.0
        %7021 = vmatpush2.msra.mxu0 %v6445
        %7022 = vmatprep.subr.mxu0 0.0
        %7023 = vmatpush2.msra.mxu0 %v6444
        %7024 = vmatprep.subr.mxu0 0.0
        %7025 = vmatpush2.msra.mxu0 %v6443
        %7026 = vmatprep.mubr.f32.mxu0 %v6342
        %7027 = vmatmul.mubr.f32.gmra.mxu0 %v6340
        %v7028 = vpop.f32.mrf.mxu0
        %v7029 = vadd.f32 %v6959, %v7028
        %v7030 = vpop.f32.mrf.mxu0
        %7031 = vdwg.mxu0
        %7032 = vmatprep.subr.mxu0 0.0
        %7033 = vmatpush1.msra.mxu0 %v6474
        %7034 = vmatprep.subr.mxu0 0.0
        %7035 = vmatpush1.msra.mxu0 %v6473
        %7036 = vmatprep.subr.mxu0 0.0
        %7037 = vmatpush1.msra.mxu0 %v6472
        %7038 = vmatprep.subr.mxu0 0.0
        %7039 = vmatpush1.msra.mxu0 %v6471
        %7040 = vmatprep.subr.mxu0 0.0
        %7041 = vmatpush1.msra.mxu0 %v6470
        %7042 = vmatprep.subr.mxu0 0.0
        %7043 = vmatpush1.msra.mxu0 %v6469
        %7044 = vmatprep.subr.mxu0 0.0
        %7045 = vmatpush1.msra.mxu0 %v6468
        %7046 = vmatprep.subr.mxu0 0.0
        %7047 = vmatpush1.msra.mxu0 %v6467
        %7048 = vmatprep.subr.mxu0 0.0
        %7049 = vmatpush1.msra.mxu0 %v6466
        %7050 = vmatprep.subr.mxu0 0.0
        %7051 = vmatpush1.msra.mxu0 %v6465
        %7052 = vmatprep.subr.mxu0 0.0
        %7053 = vmatpush1.msra.mxu0 %v6464
        %7054 = vmatprep.subr.mxu0 0.0
        %7055 = vmatpush1.msra.mxu0 %v6463
        %7056 = vmatprep.subr.mxu0 0.0
        %7057 = vmatpush1.msra.mxu0 %v6462
        %7058 = vmatprep.subr.mxu0 0.0
        %7059 = vmatpush1.msra.mxu0 %v6461
        %7060 = vmatprep.subr.mxu0 0.0
        %7061 = vmatpush1.msra.mxu0 %v6460
        %7062 = vmatprep.subr.mxu0 0.0
        %7063 = vmatpush1.msra.mxu0 %v6459
        %7064 = vmatprep.subr.mxu0 0.0
        %7065 = vmatpush2.msra.mxu0 %v6490
        %7066 = vmatprep.subr.mxu0 0.0
        %7067 = vmatpush2.msra.mxu0 %v6489
        %7068 = vmatprep.subr.mxu0 0.0
        %7069 = vmatpush2.msra.mxu0 %v6488
        %7070 = vmatprep.subr.mxu0 0.0
        %7071 = vmatpush2.msra.mxu0 %v6487
        %7072 = vmatprep.subr.mxu0 0.0
        %7073 = vmatpush2.msra.mxu0 %v6486
        %7074 = vmatprep.subr.mxu0 0.0
        %7075 = vmatpush2.msra.mxu0 %v6485
        %7076 = vmatprep.subr.mxu0 0.0
        %7077 = vmatpush2.msra.mxu0 %v6484
        %7078 = vmatprep.subr.mxu0 0.0
        %7079 = vmatpush2.msra.mxu0 %v6483
        %7080 = vmatprep.subr.mxu0 0.0
        %7081 = vmatpush2.msra.mxu0 %v6482
        %7082 = vmatprep.subr.mxu0 0.0
        %7083 = vmatpush2.msra.mxu0 %v6481
        %7084 = vmatprep.subr.mxu0 0.0
        %7085 = vmatpush2.msra.mxu0 %v6480
        %7086 = vmatprep.subr.mxu0 0.0
        %7087 = vmatpush2.msra.mxu0 %v6479
        %7088 = vmatprep.subr.mxu0 0.0
        %7089 = vmatpush2.msra.mxu0 %v6478
        %7090 = vmatprep.subr.mxu0 0.0
        %7091 = vmatpush2.msra.mxu0 %v6477
        %7092 = vmatprep.subr.mxu0 0.0
        %7093 = vmatpush2.msra.mxu0 %v6476
        %7094 = vmatprep.subr.mxu0 0.0
        %7095 = vmatpush2.msra.mxu0 %v6475
        %7096 = vmatprep.mubr.f32.mxu0 %v6346
        %7097 = vmatmul.mubr.f32.gmra.mxu0 %v6344
        %v7098 = vpop.f32.mrf.mxu0
        %v7099 = vadd.f32 %v7029, %v7098
        %v7100 = vpop.f32.mrf.mxu0
        %7101 = vdwg.mxu0
        %7102 = vmatprep.subr.mxu0 0.0
        %7103 = vmatpush1.msra.mxu0 %v6506
        %7104 = vmatprep.subr.mxu0 0.0
        %7105 = vmatpush1.msra.mxu0 %v6505
        %7106 = vmatprep.subr.mxu0 0.0
        %7107 = vmatpush1.msra.mxu0 %v6504
        %7108 = vmatprep.subr.mxu0 0.0
        %7109 = vmatpush1.msra.mxu0 %v6503
        %7110 = vmatprep.subr.mxu0 0.0
        %7111 = vmatpush1.msra.mxu0 %v6502
        %7112 = vmatprep.subr.mxu0 0.0
        %7113 = vmatpush1.msra.mxu0 %v6501
        %7114 = vmatprep.subr.mxu0 0.0
        %7115 = vmatpush1.msra.mxu0 %v6500
        %7116 = vmatprep.subr.mxu0 0.0
        %7117 = vmatpush1.msra.mxu0 %v6499
        %7118 = vmatprep.subr.mxu0 0.0
        %7119 = vmatpush1.msra.mxu0 %v6498
        %7120 = vmatprep.subr.mxu0 0.0
        %7121 = vmatpush1.msra.mxu0 %v6497
        %7122 = vmatprep.subr.mxu0 0.0
        %7123 = vmatpush1.msra.mxu0 %v6496
        %7124 = vmatprep.subr.mxu0 0.0
        %7125 = vmatpush1.msra.mxu0 %v6495
        %7126 = vmatprep.subr.mxu0 0.0
        %7127 = vmatpush1.msra.mxu0 %v6494
        %7128 = vmatprep.subr.mxu0 0.0
        %7129 = vmatpush1.msra.mxu0 %v6493
        %7130 = vmatprep.subr.mxu0 0.0
        %7131 = vmatpush1.msra.mxu0 %v6492
        %7132 = vmatprep.subr.mxu0 0.0
        %7133 = vmatpush1.msra.mxu0 %v6491
        %7134 = vmatprep.subr.mxu0 0.0
        %7135 = vmatpush2.msra.mxu0 %v6522
        %7136 = vmatprep.subr.mxu0 0.0
        %7137 = vmatpush2.msra.mxu0 %v6521
        %7138 = vmatprep.subr.mxu0 0.0
        %7139 = vmatpush2.msra.mxu0 %v6520
        %7140 = vmatprep.subr.mxu0 0.0
        %7141 = vmatpush2.msra.mxu0 %v6519
        %7142 = vmatprep.subr.mxu0 0.0
        %7143 = vmatpush2.msra.mxu0 %v6518
        %7144 = vmatprep.subr.mxu0 0.0
        %7145 = vmatpush2.msra.mxu0 %v6517
        %7146 = vmatprep.subr.mxu0 0.0
        %7147 = vmatpush2.msra.mxu0 %v6516
        %7148 = vmatprep.subr.mxu0 0.0
        %7149 = vmatpush2.msra.mxu0 %v6515
        %7150 = vmatprep.subr.mxu0 0.0
        %7151 = vmatpush2.msra.mxu0 %v6514
        %7152 = vmatprep.subr.mxu0 0.0
        %7153 = vmatpush2.msra.mxu0 %v6513
        %7154 = vmatprep.subr.mxu0 0.0
        %7155 = vmatpush2.msra.mxu0 %v6512
        %7156 = vmatprep.subr.mxu0 0.0
        %7157 = vmatpush2.msra.mxu0 %v6511
        %7158 = vmatprep.subr.mxu0 0.0
        %7159 = vmatpush2.msra.mxu0 %v6510
        %7160 = vmatprep.subr.mxu0 0.0
        %7161 = vmatpush2.msra.mxu0 %v6509
        %7162 = vmatprep.subr.mxu0 0.0
        %7163 = vmatpush2.msra.mxu0 %v6508
        %7164 = vmatprep.subr.mxu0 0.0
        %7165 = vmatpush2.msra.mxu0 %v6507
        %7166 = vmatprep.mubr.f32.mxu0 %v6350
        %7167 = vmatmul.mubr.f32.gmra.mxu0 %v6348
        %v7168 = vpop.f32.mrf.mxu0
        %v7169 = vadd.f32 %v7099, %v7168
        %v7170 = vpop.f32.mrf.mxu0
        %7171 = vdwg.mxu0
        %7172 = vmatprep.subr.mxu0 0.0
        %7173 = vmatpush1.msra.mxu0 %v6538
        %7174 = vmatprep.subr.mxu0 0.0
        %7175 = vmatpush1.msra.mxu0 %v6537
        %7176 = vmatprep.subr.mxu0 0.0
        %7177 = vmatpush1.msra.mxu0 %v6536
        %7178 = vmatprep.subr.mxu0 0.0
        %7179 = vmatpush1.msra.mxu0 %v6535
        %7180 = vmatprep.subr.mxu0 0.0
        %7181 = vmatpush1.msra.mxu0 %v6534
        %7182 = vmatprep.subr.mxu0 0.0
        %7183 = vmatpush1.msra.mxu0 %v6533
        %7184 = vmatprep.subr.mxu0 0.0
        %7185 = vmatpush1.msra.mxu0 %v6532
        %7186 = vmatprep.subr.mxu0 0.0
        %7187 = vmatpush1.msra.mxu0 %v6531
        %7188 = vmatprep.subr.mxu0 0.0
        %7189 = vmatpush1.msra.mxu0 %v6530
        %7190 = vmatprep.subr.mxu0 0.0
        %7191 = vmatpush1.msra.mxu0 %v6529
        %7192 = vmatprep.subr.mxu0 0.0
        %7193 = vmatpush1.msra.mxu0 %v6528
        %7194 = vmatprep.subr.mxu0 0.0
        %7195 = vmatpush1.msra.mxu0 %v6527
        %7196 = vmatprep.subr.mxu0 0.0
        %7197 = vmatpush1.msra.mxu0 %v6526
        %7198 = vmatprep.subr.mxu0 0.0
        %7199 = vmatpush1.msra.mxu0 %v6525
        %7200 = vmatprep.subr.mxu0 0.0
        %7201 = vmatpush1.msra.mxu0 %v6524
        %7202 = vmatprep.subr.mxu0 0.0
        %7203 = vmatpush1.msra.mxu0 %v6523
        %7204 = vmatprep.subr.mxu0 0.0
        %7205 = vmatpush2.msra.mxu0 %v6554
        %7206 = vmatprep.subr.mxu0 0.0
        %7207 = vmatpush2.msra.mxu0 %v6553
        %7208 = vmatprep.subr.mxu0 0.0
        %7209 = vmatpush2.msra.mxu0 %v6552
        %7210 = vmatprep.subr.mxu0 0.0
        %7211 = vmatpush2.msra.mxu0 %v6551
        %7212 = vmatprep.subr.mxu0 0.0
        %7213 = vmatpush2.msra.mxu0 %v6550
        %7214 = vmatprep.subr.mxu0 0.0
        %7215 = vmatpush2.msra.mxu0 %v6549
        %7216 = vmatprep.subr.mxu0 0.0
        %7217 = vmatpush2.msra.mxu0 %v6548
        %7218 = vmatprep.subr.mxu0 0.0
        %7219 = vmatpush2.msra.mxu0 %v6547
        %7220 = vmatprep.subr.mxu0 0.0
        %7221 = vmatpush2.msra.mxu0 %v6546
        %7222 = vmatprep.subr.mxu0 0.0
        %7223 = vmatpush2.msra.mxu0 %v6545
        %7224 = vmatprep.subr.mxu0 0.0
        %7225 = vmatpush2.msra.mxu0 %v6544
        %7226 = vmatprep.subr.mxu0 0.0
        %7227 = vmatpush2.msra.mxu0 %v6543
        %7228 = vmatprep.subr.mxu0 0.0
        %7229 = vmatpush2.msra.mxu0 %v6542
        %7230 = vmatprep.subr.mxu0 0.0
        %7231 = vmatpush2.msra.mxu0 %v6541
        %7232 = vmatprep.subr.mxu0 0.0
        %7233 = vmatpush2.msra.mxu0 %v6540
        %7234 = vmatprep.subr.mxu0 0.0
        %7235 = vmatpush2.msra.mxu0 %v6539
        %7236 = vmatprep.mubr.f32.mxu0 %v6353
        %7237 = vmatmul.mubr.f32.gmra.mxu0 %v6334
        %v7238 = vpop.f32.mrf.mxu0
        %v7239 = vadd.f32 %v7169, %v7238
        %v7240 = vpop.f32.mrf.mxu0
        %7241 = vdwg.mxu0
        %7242 = vmatprep.subr.mxu0 0.0
        %7243 = vmatpush1.msra.mxu0 %v6570
        %7244 = vmatprep.subr.mxu0 0.0
        %7245 = vmatpush1.msra.mxu0 %v6569
        %7246 = vmatprep.subr.mxu0 0.0
        %7247 = vmatpush1.msra.mxu0 %v6568
        %7248 = vmatprep.subr.mxu0 0.0
        %7249 = vmatpush1.msra.mxu0 %v6567
        %7250 = vmatprep.subr.mxu0 0.0
        %7251 = vmatpush1.msra.mxu0 %v6566
        %7252 = vmatprep.subr.mxu0 0.0
        %7253 = vmatpush1.msra.mxu0 %v6565
        %7254 = vmatprep.subr.mxu0 0.0
        %7255 = vmatpush1.msra.mxu0 %v6564
        %7256 = vmatprep.subr.mxu0 0.0
        %7257 = vmatpush1.msra.mxu0 %v6563
        %7258 = vmatprep.subr.mxu0 0.0
        %7259 = vmatpush1.msra.mxu0 %v6562
        %7260 = vmatprep.subr.mxu0 0.0
        %7261 = vmatpush1.msra.mxu0 %v6561
        %7262 = vmatprep.subr.mxu0 0.0
        %7263 = vmatpush1.msra.mxu0 %v6560
        %7264 = vmatprep.subr.mxu0 0.0
        %7265 = vmatpush1.msra.mxu0 %v6559
        %7266 = vmatprep.subr.mxu0 0.0
        %7267 = vmatpush1.msra.mxu0 %v6558
        %7268 = vmatprep.subr.mxu0 0.0
        %7269 = vmatpush1.msra.mxu0 %v6557
        %7270 = vmatprep.subr.mxu0 0.0
        %7271 = vmatpush1.msra.mxu0 %v6556
        %7272 = vmatprep.subr.mxu0 0.0
        %7273 = vmatpush1.msra.mxu0 %v6555
        %7274 = vmatprep.subr.mxu0 0.0
        %7275 = vmatpush2.msra.mxu0 %v6586
        %7276 = vmatprep.subr.mxu0 0.0
        %7277 = vmatpush2.msra.mxu0 %v6585
        %7278 = vmatprep.subr.mxu0 0.0
        %7279 = vmatpush2.msra.mxu0 %v6584
        %7280 = vmatprep.subr.mxu0 0.0
        %7281 = vmatpush2.msra.mxu0 %v6583
        %7282 = vmatprep.subr.mxu0 0.0
        %7283 = vmatpush2.msra.mxu0 %v6582
        %7284 = vmatprep.subr.mxu0 0.0
        %7285 = vmatpush2.msra.mxu0 %v6581
        %7286 = vmatprep.subr.mxu0 0.0
        %7287 = vmatpush2.msra.mxu0 %v6580
        %7288 = vmatprep.subr.mxu0 0.0
        %7289 = vmatpush2.msra.mxu0 %v6579
        %7290 = vmatprep.subr.mxu0 0.0
        %7291 = vmatpush2.msra.mxu0 %v6578
        %7292 = vmatprep.subr.mxu0 0.0
        %7293 = vmatpush2.msra.mxu0 %v6577
        %7294 = vmatprep.subr.mxu0 0.0
        %7295 = vmatpush2.msra.mxu0 %v6576
        %7296 = vmatprep.subr.mxu0 0.0
        %7297 = vmatpush2.msra.mxu0 %v6575
        %7298 = vmatprep.subr.mxu0 0.0
        %7299 = vmatpush2.msra.mxu0 %v6574
        %7300 = vmatprep.subr.mxu0 0.0
        %7301 = vmatpush2.msra.mxu0 %v6573
        %7302 = vmatprep.subr.mxu0 0.0
        %7303 = vmatpush2.msra.mxu0 %v6572
        %7304 = vmatprep.subr.mxu0 0.0
        %7305 = vmatpush2.msra.mxu0 %v6571
        %7306 = vmatprep.mubr.f32.mxu0 %v6357
        %7307 = vmatmul.mubr.f32.gmra.mxu0 %v6355
        %v7308 = vpop.f32.mrf.mxu0
        %v7309 = vadd.f32 %v7239, %v7308
        %v7310 = vpop.f32.mrf.mxu0
        %7311 = vdwg.mxu0
        %7312 = vmatprep.subr.mxu0 0.0
        %7313 = vmatpush1.msra.mxu0 %v6602
        %7314 = vmatprep.subr.mxu0 0.0
        %7315 = vmatpush1.msra.mxu0 %v6601
        %7316 = vmatprep.subr.mxu0 0.0
        %7317 = vmatpush1.msra.mxu0 %v6600
        %7318 = vmatprep.subr.mxu0 0.0
        %7319 = vmatpush1.msra.mxu0 %v6599
        %7320 = vmatprep.subr.mxu0 0.0
        %7321 = vmatpush1.msra.mxu0 %v6598
        %7322 = vmatprep.subr.mxu0 0.0
        %7323 = vmatpush1.msra.mxu0 %v6597
        %7324 = vmatprep.subr.mxu0 0.0
        %7325 = vmatpush1.msra.mxu0 %v6596
        %7326 = vmatprep.subr.mxu0 0.0
        %7327 = vmatpush1.msra.mxu0 %v6595
        %7328 = vmatprep.subr.mxu0 0.0
        %7329 = vmatpush1.msra.mxu0 %v6594
        %7330 = vmatprep.subr.mxu0 0.0
        %7331 = vmatpush1.msra.mxu0 %v6593
        %7332 = vmatprep.subr.mxu0 0.0
        %7333 = vmatpush1.msra.mxu0 %v6592
        %7334 = vmatprep.subr.mxu0 0.0
        %7335 = vmatpush1.msra.mxu0 %v6591
        %7336 = vmatprep.subr.mxu0 0.0
        %7337 = vmatpush1.msra.mxu0 %v6590
        %7338 = vmatprep.subr.mxu0 0.0
        %7339 = vmatpush1.msra.mxu0 %v6589
        %7340 = vmatprep.subr.mxu0 0.0
        %7341 = vmatpush1.msra.mxu0 %v6588
        %7342 = vmatprep.subr.mxu0 0.0
        %7343 = vmatpush1.msra.mxu0 %v6587
        %7344 = vmatprep.subr.mxu0 0.0
        %7345 = vmatpush2.msra.mxu0 %v6618
        %7346 = vmatprep.subr.mxu0 0.0
        %7347 = vmatpush2.msra.mxu0 %v6617
        %7348 = vmatprep.subr.mxu0 0.0
        %7349 = vmatpush2.msra.mxu0 %v6616
        %7350 = vmatprep.subr.mxu0 0.0
        %7351 = vmatpush2.msra.mxu0 %v6615
        %7352 = vmatprep.subr.mxu0 0.0
        %7353 = vmatpush2.msra.mxu0 %v6614
        %7354 = vmatprep.subr.mxu0 0.0
        %7355 = vmatpush2.msra.mxu0 %v6613
        %7356 = vmatprep.subr.mxu0 0.0
        %7357 = vmatpush2.msra.mxu0 %v6612
        %7358 = vmatprep.subr.mxu0 0.0
        %7359 = vmatpush2.msra.mxu0 %v6611
        %7360 = vmatprep.subr.mxu0 0.0
        %7361 = vmatpush2.msra.mxu0 %v6610
        %7362 = vmatprep.subr.mxu0 0.0
        %7363 = vmatpush2.msra.mxu0 %v6609
        %7364 = vmatprep.subr.mxu0 0.0
        %7365 = vmatpush2.msra.mxu0 %v6608
        %7366 = vmatprep.subr.mxu0 0.0
        %7367 = vmatpush2.msra.mxu0 %v6607
        %7368 = vmatprep.subr.mxu0 0.0
        %7369 = vmatpush2.msra.mxu0 %v6606
        %7370 = vmatprep.subr.mxu0 0.0
        %7371 = vmatpush2.msra.mxu0 %v6605
        %7372 = vmatprep.subr.mxu0 0.0
        %7373 = vmatpush2.msra.mxu0 %v6604
        %7374 = vmatprep.subr.mxu0 0.0
        %7375 = vmatpush2.msra.mxu0 %v6603
        %7376 = vmatprep.mubr.f32.mxu0 %v6361
        %7377 = vmatmul.mubr.f32.gmra.mxu0 %v6359
        %v7378 = vpop.f32.mrf.mxu0
        %v7379 = vadd.f32 %v7309, %v7378
        %v7380 = vpop.f32.mrf.mxu0
        %7381 = vdwg.mxu0
        %7382 = vmatprep.subr.mxu0 0.0
        %7383 = vmatpush1.msra.mxu0 %v6634
        %7384 = vmatprep.subr.mxu0 0.0
        %7385 = vmatpush1.msra.mxu0 %v6633
        %7386 = vmatprep.subr.mxu0 0.0
        %7387 = vmatpush1.msra.mxu0 %v6632
        %7388 = vmatprep.subr.mxu0 0.0
        %7389 = vmatpush1.msra.mxu0 %v6631
        %7390 = vmatprep.subr.mxu0 0.0
        %7391 = vmatpush1.msra.mxu0 %v6630
        %7392 = vmatprep.subr.mxu0 0.0
        %7393 = vmatpush1.msra.mxu0 %v6629
        %7394 = vmatprep.subr.mxu0 0.0
        %7395 = vmatpush1.msra.mxu0 %v6628
        %7396 = vmatprep.subr.mxu0 0.0
        %7397 = vmatpush1.msra.mxu0 %v6627
        %7398 = vmatprep.subr.mxu0 0.0
        %7399 = vmatpush1.msra.mxu0 %v6626
        %7400 = vmatprep.subr.mxu0 0.0
        %7401 = vmatpush1.msra.mxu0 %v6625
        %7402 = vmatprep.subr.mxu0 0.0
        %7403 = vmatpush1.msra.mxu0 %v6624
        %7404 = vmatprep.subr.mxu0 0.0
        %7405 = vmatpush1.msra.mxu0 %v6623
        %7406 = vmatprep.subr.mxu0 0.0
        %7407 = vmatpush1.msra.mxu0 %v6622
        %7408 = vmatprep.subr.mxu0 0.0
        %7409 = vmatpush1.msra.mxu0 %v6621
        %7410 = vmatprep.subr.mxu0 0.0
        %7411 = vmatpush1.msra.mxu0 %v6620
        %7412 = vmatprep.subr.mxu0 0.0
        %7413 = vmatpush1.msra.mxu0 %v6619
        %7414 = vmatprep.subr.mxu0 0.0
        %7415 = vmatpush2.msra.mxu0 %v6650
        %7416 = vmatprep.subr.mxu0 0.0
        %7417 = vmatpush2.msra.mxu0 %v6649
        %7418 = vmatprep.subr.mxu0 0.0
        %7419 = vmatpush2.msra.mxu0 %v6648
        %7420 = vmatprep.subr.mxu0 0.0
        %7421 = vmatpush2.msra.mxu0 %v6647
        %7422 = vmatprep.subr.mxu0 0.0
        %7423 = vmatpush2.msra.mxu0 %v6646
        %7424 = vmatprep.subr.mxu0 0.0
        %7425 = vmatpush2.msra.mxu0 %v6645
        %7426 = vmatprep.subr.mxu0 0.0
        %7427 = vmatpush2.msra.mxu0 %v6644
        %7428 = vmatprep.subr.mxu0 0.0
        %7429 = vmatpush2.msra.mxu0 %v6643
        %7430 = vmatprep.subr.mxu0 0.0
        %7431 = vmatpush2.msra.mxu0 %v6642
        %7432 = vmatprep.subr.mxu0 0.0
        %7433 = vmatpush2.msra.mxu0 %v6641
        %7434 = vmatprep.subr.mxu0 0.0
        %7435 = vmatpush2.msra.mxu0 %v6640
        %7436 = vmatprep.subr.mxu0 0.0
        %7437 = vmatpush2.msra.mxu0 %v6639
        %7438 = vmatprep.subr.mxu0 0.0
        %7439 = vmatpush2.msra.mxu0 %v6638
        %7440 = vmatprep.subr.mxu0 0.0
        %7441 = vmatpush2.msra.mxu0 %v6637
        %7442 = vmatprep.subr.mxu0 0.0
        %7443 = vmatpush2.msra.mxu0 %v6636
        %7444 = vmatprep.subr.mxu0 0.0
        %7445 = vmatpush2.msra.mxu0 %v6635
        %7446 = vmatprep.mubr.f32.mxu0 %v6365
        %7447 = vmatmul.mubr.f32.gmra.mxu0 %v6363
        %v7448 = vpop.f32.mrf.mxu0
        %v7449 = vadd.f32 %v7379, %v7448
        %v7450 = vpop.f32.mrf.mxu0
        %7451 = vdwg.mxu0
        %7452 = vmatprep.subr.mxu0 0.0
        %7453 = vmatpush1.msra.mxu0 %v6666
        %7454 = vmatprep.subr.mxu0 0.0
        %7455 = vmatpush1.msra.mxu0 %v6665
        %7456 = vmatprep.subr.mxu0 0.0
        %7457 = vmatpush1.msra.mxu0 %v6664
        %7458 = vmatprep.subr.mxu0 0.0
        %7459 = vmatpush1.msra.mxu0 %v6663
        %7460 = vmatprep.subr.mxu0 0.0
        %7461 = vmatpush1.msra.mxu0 %v6662
        %7462 = vmatprep.subr.mxu0 0.0
        %7463 = vmatpush1.msra.mxu0 %v6661
        %7464 = vmatprep.subr.mxu0 0.0
        %7465 = vmatpush1.msra.mxu0 %v6660
        %7466 = vmatprep.subr.mxu0 0.0
        %7467 = vmatpush1.msra.mxu0 %v6659
        %7468 = vmatprep.subr.mxu0 0.0
        %7469 = vmatpush1.msra.mxu0 %v6658
        %7470 = vmatprep.subr.mxu0 0.0
        %7471 = vmatpush1.msra.mxu0 %v6657
        %7472 = vmatprep.subr.mxu0 0.0
        %7473 = vmatpush1.msra.mxu0 %v6656
        %7474 = vmatprep.subr.mxu0 0.0
        %7475 = vmatpush1.msra.mxu0 %v6655
        %7476 = vmatprep.subr.mxu0 0.0
        %7477 = vmatpush1.msra.mxu0 %v6654
        %7478 = vmatprep.subr.mxu0 0.0
        %7479 = vmatpush1.msra.mxu0 %v6653
        %7480 = vmatprep.subr.mxu0 0.0
        %7481 = vmatpush1.msra.mxu0 %v6652
        %7482 = vmatprep.subr.mxu0 0.0
        %7483 = vmatpush1.msra.mxu0 %v6651
        %7484 = vmatprep.subr.mxu0 0.0
        %7485 = vmatpush2.msra.mxu0 %v6682
        %7486 = vmatprep.subr.mxu0 0.0
        %7487 = vmatpush2.msra.mxu0 %v6681
        %7488 = vmatprep.subr.mxu0 0.0
        %7489 = vmatpush2.msra.mxu0 %v6680
        %7490 = vmatprep.subr.mxu0 0.0
        %7491 = vmatpush2.msra.mxu0 %v6679
        %7492 = vmatprep.subr.mxu0 0.0
        %7493 = vmatpush2.msra.mxu0 %v6678
        %7494 = vmatprep.subr.mxu0 0.0
        %7495 = vmatpush2.msra.mxu0 %v6677
        %7496 = vmatprep.subr.mxu0 0.0
        %7497 = vmatpush2.msra.mxu0 %v6676
        %7498 = vmatprep.subr.mxu0 0.0
        %7499 = vmatpush2.msra.mxu0 %v6675
        %7500 = vmatprep.subr.mxu0 0.0
        %7501 = vmatpush2.msra.mxu0 %v6674
        %7502 = vmatprep.subr.mxu0 0.0
        %7503 = vmatpush2.msra.mxu0 %v6673
        %7504 = vmatprep.subr.mxu0 0.0
        %7505 = vmatpush2.msra.mxu0 %v6672
        %7506 = vmatprep.subr.mxu0 0.0
        %7507 = vmatpush2.msra.mxu0 %v6671
        %7508 = vmatprep.subr.mxu0 0.0
        %7509 = vmatpush2.msra.mxu0 %v6670
        %7510 = vmatprep.subr.mxu0 0.0
        %7511 = vmatpush2.msra.mxu0 %v6669
        %7512 = vmatprep.subr.mxu0 0.0
        %7513 = vmatpush2.msra.mxu0 %v6668
        %7514 = vmatprep.subr.mxu0 0.0
        %7515 = vmatpush2.msra.mxu0 %v6667
        %7516 = vmatprep.mubr.f32.mxu0 %v6368
        %7517 = vmatmul.mubr.f32.gmra.mxu0 %v6335
        %v7518 = vpop.f32.mrf.mxu0
        %v7519 = vadd.f32 %v7449, %v7518
        %v7520 = vpop.f32.mrf.mxu0
        %7521 = vdwg.mxu0
        %7522 = vmatprep.subr.mxu0 0.0
        %7523 = vmatpush1.msra.mxu0 %v6698
        %7524 = vmatprep.subr.mxu0 0.0
        %7525 = vmatpush1.msra.mxu0 %v6697
        %7526 = vmatprep.subr.mxu0 0.0
        %7527 = vmatpush1.msra.mxu0 %v6696
        %7528 = vmatprep.subr.mxu0 0.0
        %7529 = vmatpush1.msra.mxu0 %v6695
        %7530 = vmatprep.subr.mxu0 0.0
        %7531 = vmatpush1.msra.mxu0 %v6694
        %7532 = vmatprep.subr.mxu0 0.0
        %7533 = vmatpush1.msra.mxu0 %v6693
        %7534 = vmatprep.subr.mxu0 0.0
        %7535 = vmatpush1.msra.mxu0 %v6692
        %7536 = vmatprep.subr.mxu0 0.0
        %7537 = vmatpush1.msra.mxu0 %v6691
        %7538 = vmatprep.subr.mxu0 0.0
        %7539 = vmatpush1.msra.mxu0 %v6690
        %7540 = vmatprep.subr.mxu0 0.0
        %7541 = vmatpush1.msra.mxu0 %v6689
        %7542 = vmatprep.subr.mxu0 0.0
        %7543 = vmatpush1.msra.mxu0 %v6688
        %7544 = vmatprep.subr.mxu0 0.0
        %7545 = vmatpush1.msra.mxu0 %v6687
        %7546 = vmatprep.subr.mxu0 0.0
        %7547 = vmatpush1.msra.mxu0 %v6686
        %7548 = vmatprep.subr.mxu0 0.0
        %7549 = vmatpush1.msra.mxu0 %v6685
        %7550 = vmatprep.subr.mxu0 0.0
        %7551 = vmatpush1.msra.mxu0 %v6684
        %7552 = vmatprep.subr.mxu0 0.0
        %7553 = vmatpush1.msra.mxu0 %v6683
        %7554 = vmatprep.subr.mxu0 0.0
        %7555 = vmatpush2.msra.mxu0 %v6714
        %7556 = vmatprep.subr.mxu0 0.0
        %7557 = vmatpush2.msra.mxu0 %v6713
        %7558 = vmatprep.subr.mxu0 0.0
        %7559 = vmatpush2.msra.mxu0 %v6712
        %7560 = vmatprep.subr.mxu0 0.0
        %7561 = vmatpush2.msra.mxu0 %v6711
        %7562 = vmatprep.subr.mxu0 0.0
        %7563 = vmatpush2.msra.mxu0 %v6710
        %7564 = vmatprep.subr.mxu0 0.0
        %7565 = vmatpush2.msra.mxu0 %v6709
        %7566 = vmatprep.subr.mxu0 0.0
        %7567 = vmatpush2.msra.mxu0 %v6708
        %7568 = vmatprep.subr.mxu0 0.0
        %7569 = vmatpush2.msra.mxu0 %v6707
        %7570 = vmatprep.subr.mxu0 0.0
        %7571 = vmatpush2.msra.mxu0 %v6706
        %7572 = vmatprep.subr.mxu0 0.0
        %7573 = vmatpush2.msra.mxu0 %v6705
        %7574 = vmatprep.subr.mxu0 0.0
        %7575 = vmatpush2.msra.mxu0 %v6704
        %7576 = vmatprep.subr.mxu0 0.0
        %7577 = vmatpush2.msra.mxu0 %v6703
        %7578 = vmatprep.subr.mxu0 0.0
        %7579 = vmatpush2.msra.mxu0 %v6702
        %7580 = vmatprep.subr.mxu0 0.0
        %7581 = vmatpush2.msra.mxu0 %v6701
        %7582 = vmatprep.subr.mxu0 0.0
        %7583 = vmatpush2.msra.mxu0 %v6700
        %7584 = vmatprep.subr.mxu0 0.0
        %7585 = vmatpush2.msra.mxu0 %v6699
        %7586 = vmatprep.mubr.f32.mxu0 %v6372
        %7587 = vmatmul.mubr.f32.gmra.mxu0 %v6370
        %v7588 = vpop.f32.mrf.mxu0
        %v7589 = vadd.f32 %v7519, %v7588
        %v7590 = vpop.f32.mrf.mxu0
        %7591 = vdwg.mxu0
        %7592 = vmatprep.subr.mxu0 0.0
        %7593 = vmatpush1.msra.mxu0 %v6730
        %7594 = vmatprep.subr.mxu0 0.0
        %7595 = vmatpush1.msra.mxu0 %v6729
        %7596 = vmatprep.subr.mxu0 0.0
        %7597 = vmatpush1.msra.mxu0 %v6728
        %7598 = vmatprep.subr.mxu0 0.0
        %7599 = vmatpush1.msra.mxu0 %v6727
        %7600 = vmatprep.subr.mxu0 0.0
        %7601 = vmatpush1.msra.mxu0 %v6726
        %7602 = vmatprep.subr.mxu0 0.0
        %7603 = vmatpush1.msra.mxu0 %v6725
        %7604 = vmatprep.subr.mxu0 0.0
        %7605 = vmatpush1.msra.mxu0 %v6724
        %7606 = vmatprep.subr.mxu0 0.0
        %7607 = vmatpush1.msra.mxu0 %v6723
        %7608 = vmatprep.subr.mxu0 0.0
        %7609 = vmatpush1.msra.mxu0 %v6722
        %7610 = vmatprep.subr.mxu0 0.0
        %7611 = vmatpush1.msra.mxu0 %v6721
        %7612 = vmatprep.subr.mxu0 0.0
        %7613 = vmatpush1.msra.mxu0 %v6720
        %7614 = vmatprep.subr.mxu0 0.0
        %7615 = vmatpush1.msra.mxu0 %v6719
        %7616 = vmatprep.subr.mxu0 0.0
        %7617 = vmatpush1.msra.mxu0 %v6718
        %7618 = vmatprep.subr.mxu0 0.0
        %7619 = vmatpush1.msra.mxu0 %v6717
        %7620 = vmatprep.subr.mxu0 0.0
        %7621 = vmatpush1.msra.mxu0 %v6716
        %7622 = vmatprep.subr.mxu0 0.0
        %7623 = vmatpush1.msra.mxu0 %v6715
        %7624 = vmatprep.subr.mxu0 0.0
        %7625 = vmatpush2.msra.mxu0 %v6746
        %7626 = vmatprep.subr.mxu0 0.0
        %7627 = vmatpush2.msra.mxu0 %v6745
        %7628 = vmatprep.subr.mxu0 0.0
        %7629 = vmatpush2.msra.mxu0 %v6744
        %7630 = vmatprep.subr.mxu0 0.0
        %7631 = vmatpush2.msra.mxu0 %v6743
        %7632 = vmatprep.subr.mxu0 0.0
        %7633 = vmatpush2.msra.mxu0 %v6742
        %7634 = vmatprep.subr.mxu0 0.0
        %7635 = vmatpush2.msra.mxu0 %v6741
        %7636 = vmatprep.subr.mxu0 0.0
        %7637 = vmatpush2.msra.mxu0 %v6740
        %7638 = vmatprep.subr.mxu0 0.0
        %7639 = vmatpush2.msra.mxu0 %v6739
        %7640 = vmatprep.subr.mxu0 0.0
        %7641 = vmatpush2.msra.mxu0 %v6738
        %7642 = vmatprep.subr.mxu0 0.0
        %7643 = vmatpush2.msra.mxu0 %v6737
        %7644 = vmatprep.subr.mxu0 0.0
        %7645 = vmatpush2.msra.mxu0 %v6736
        %7646 = vmatprep.subr.mxu0 0.0
        %7647 = vmatpush2.msra.mxu0 %v6735
        %7648 = vmatprep.subr.mxu0 0.0
        %7649 = vmatpush2.msra.mxu0 %v6734
        %7650 = vmatprep.subr.mxu0 0.0
        %7651 = vmatpush2.msra.mxu0 %v6733
        %7652 = vmatprep.subr.mxu0 0.0
        %7653 = vmatpush2.msra.mxu0 %v6732
        %7654 = vmatprep.subr.mxu0 0.0
        %7655 = vmatpush2.msra.mxu0 %v6731
        %7656 = vmatprep.mubr.f32.mxu0 %v6376
        %7657 = vmatmul.mubr.f32.gmra.mxu0 %v6374
        %v7658 = vpop.f32.mrf.mxu0
        %v7659 = vadd.f32 %v7589, %v7658
        %v7660 = vpop.f32.mrf.mxu0
        %7661 = vdwg.mxu0
        %7662 = vmatprep.subr.mxu0 0.0
        %7663 = vmatpush1.msra.mxu0 %v6762
        %7664 = vmatprep.subr.mxu0 0.0
        %7665 = vmatpush1.msra.mxu0 %v6761
        %7666 = vmatprep.subr.mxu0 0.0
        %7667 = vmatpush1.msra.mxu0 %v6760
        %7668 = vmatprep.subr.mxu0 0.0
        %7669 = vmatpush1.msra.mxu0 %v6759
        %7670 = vmatprep.subr.mxu0 0.0
        %7671 = vmatpush1.msra.mxu0 %v6758
        %7672 = vmatprep.subr.mxu0 0.0
        %7673 = vmatpush1.msra.mxu0 %v6757
        %7674 = vmatprep.subr.mxu0 0.0
        %7675 = vmatpush1.msra.mxu0 %v6756
        %7676 = vmatprep.subr.mxu0 0.0
        %7677 = vmatpush1.msra.mxu0 %v6755
        %7678 = vmatprep.subr.mxu0 0.0
        %7679 = vmatpush1.msra.mxu0 %v6754
        %7680 = vmatprep.subr.mxu0 0.0
        %7681 = vmatpush1.msra.mxu0 %v6753
        %7682 = vmatprep.subr.mxu0 0.0
        %7683 = vmatpush1.msra.mxu0 %v6752
        %7684 = vmatprep.subr.mxu0 0.0
        %7685 = vmatpush1.msra.mxu0 %v6751
        %7686 = vmatprep.subr.mxu0 0.0
        %7687 = vmatpush1.msra.mxu0 %v6750
        %7688 = vmatprep.subr.mxu0 0.0
        %7689 = vmatpush1.msra.mxu0 %v6749
        %7690 = vmatprep.subr.mxu0 0.0
        %7691 = vmatpush1.msra.mxu0 %v6748
        %7692 = vmatprep.subr.mxu0 0.0
        %7693 = vmatpush1.msra.mxu0 %v6747
        %7694 = vmatprep.subr.mxu0 0.0
        %7695 = vmatpush2.msra.mxu0 %v6778
        %7696 = vmatprep.subr.mxu0 0.0
        %7697 = vmatpush2.msra.mxu0 %v6777
        %7698 = vmatprep.subr.mxu0 0.0
        %7699 = vmatpush2.msra.mxu0 %v6776
        %7700 = vmatprep.subr.mxu0 0.0
        %7701 = vmatpush2.msra.mxu0 %v6775
        %7702 = vmatprep.subr.mxu0 0.0
        %7703 = vmatpush2.msra.mxu0 %v6774
        %7704 = vmatprep.subr.mxu0 0.0
        %7705 = vmatpush2.msra.mxu0 %v6773
        %7706 = vmatprep.subr.mxu0 0.0
        %7707 = vmatpush2.msra.mxu0 %v6772
        %7708 = vmatprep.subr.mxu0 0.0
        %7709 = vmatpush2.msra.mxu0 %v6771
        %7710 = vmatprep.subr.mxu0 0.0
        %7711 = vmatpush2.msra.mxu0 %v6770
        %7712 = vmatprep.subr.mxu0 0.0
        %7713 = vmatpush2.msra.mxu0 %v6769
        %7714 = vmatprep.subr.mxu0 0.0
        %7715 = vmatpush2.msra.mxu0 %v6768
        %7716 = vmatprep.subr.mxu0 0.0
        %7717 = vmatpush2.msra.mxu0 %v6767
        %7718 = vmatprep.subr.mxu0 0.0
        %7719 = vmatpush2.msra.mxu0 %v6766
        %7720 = vmatprep.subr.mxu0 0.0
        %7721 = vmatpush2.msra.mxu0 %v6765
        %7722 = vmatprep.subr.mxu0 0.0
        %7723 = vmatpush2.msra.mxu0 %v6764
        %7724 = vmatprep.subr.mxu0 0.0
        %7725 = vmatpush2.msra.mxu0 %v6763
        %7726 = vmatprep.mubr.f32.mxu0 %v6380
        %7727 = vmatmul.mubr.f32.gmra.mxu0 %v6378
        %v7728 = vpop.f32.mrf.mxu0
        %v7729 = vadd.f32 %v7659, %v7728
        %v7730 = vpop.f32.mrf.mxu0
        %7731 = vdwg.mxu0
        %7732 = vmatprep.subr.mxu0 0.0
        %7733 = vmatpush1.msra.mxu0 %v6794
        %7734 = vmatprep.subr.mxu0 0.0
        %7735 = vmatpush1.msra.mxu0 %v6793
        %7736 = vmatprep.subr.mxu0 0.0
        %7737 = vmatpush1.msra.mxu0 %v6792
        %7738 = vmatprep.subr.mxu0 0.0
        %7739 = vmatpush1.msra.mxu0 %v6791
        %7740 = vmatprep.subr.mxu0 0.0
        %7741 = vmatpush1.msra.mxu0 %v6790
        %7742 = vmatprep.subr.mxu0 0.0
        %7743 = vmatpush1.msra.mxu0 %v6789
        %7744 = vmatprep.subr.mxu0 0.0
        %7745 = vmatpush1.msra.mxu0 %v6788
        %7746 = vmatprep.subr.mxu0 0.0
        %7747 = vmatpush1.msra.mxu0 %v6787
        %7748 = vmatprep.subr.mxu0 0.0
        %7749 = vmatpush1.msra.mxu0 %v6786
        %7750 = vmatprep.subr.mxu0 0.0
        %7751 = vmatpush1.msra.mxu0 %v6785
        %7752 = vmatprep.subr.mxu0 0.0
        %7753 = vmatpush1.msra.mxu0 %v6784
        %7754 = vmatprep.subr.mxu0 0.0
        %7755 = vmatpush1.msra.mxu0 %v6783
        %7756 = vmatprep.subr.mxu0 0.0
        %7757 = vmatpush1.msra.mxu0 %v6782
        %7758 = vmatprep.subr.mxu0 0.0
        %7759 = vmatpush1.msra.mxu0 %v6781
        %7760 = vmatprep.subr.mxu0 0.0
        %7761 = vmatpush1.msra.mxu0 %v6780
        %7762 = vmatprep.subr.mxu0 0.0
        %7763 = vmatpush1.msra.mxu0 %v6779
        %7764 = vmatprep.subr.mxu0 0.0
        %7765 = vmatpush2.msra.mxu0 %v6810
        %7766 = vmatprep.subr.mxu0 0.0
        %7767 = vmatpush2.msra.mxu0 %v6809
        %7768 = vmatprep.subr.mxu0 0.0
        %7769 = vmatpush2.msra.mxu0 %v6808
        %7770 = vmatprep.subr.mxu0 0.0
        %7771 = vmatpush2.msra.mxu0 %v6807
        %7772 = vmatprep.subr.mxu0 0.0
        %7773 = vmatpush2.msra.mxu0 %v6806
        %7774 = vmatprep.subr.mxu0 0.0
        %7775 = vmatpush2.msra.mxu0 %v6805
        %7776 = vmatprep.subr.mxu0 0.0
        %7777 = vmatpush2.msra.mxu0 %v6804
        %7778 = vmatprep.subr.mxu0 0.0
        %7779 = vmatpush2.msra.mxu0 %v6803
        %7780 = vmatprep.subr.mxu0 0.0
        %7781 = vmatpush2.msra.mxu0 %v6802
        %7782 = vmatprep.subr.mxu0 0.0
        %7783 = vmatpush2.msra.mxu0 %v6801
        %7784 = vmatprep.subr.mxu0 0.0
        %7785 = vmatpush2.msra.mxu0 %v6800
        %7786 = vmatprep.subr.mxu0 0.0
        %7787 = vmatpush2.msra.mxu0 %v6799
        %7788 = vmatprep.subr.mxu0 0.0
        %7789 = vmatpush2.msra.mxu0 %v6798
        %7790 = vmatprep.subr.mxu0 0.0
        %7791 = vmatpush2.msra.mxu0 %v6797
        %7792 = vmatprep.subr.mxu0 0.0
        %7793 = vmatpush2.msra.mxu0 %v6796
        %7794 = vmatprep.subr.mxu0 0.0
        %7795 = vmatpush2.msra.mxu0 %v6795
        %7796 = vmatprep.mubr.f32.mxu0 %v6383
        %7797 = vmatmul.mubr.f32.gmra.mxu0 %v6336
        %v7798 = vpop.f32.mrf.mxu0
        %v7799 = vadd.f32 %v7729, %v7798
        %v7800 = vpop.f32.mrf.mxu0
        %7801 = vdwg.mxu0
        %7802 = vmatprep.subr.mxu0 0.0
        %7803 = vmatpush1.msra.mxu0 %v6826
        %7804 = vmatprep.subr.mxu0 0.0
        %7805 = vmatpush1.msra.mxu0 %v6825
        %7806 = vmatprep.subr.mxu0 0.0
        %7807 = vmatpush1.msra.mxu0 %v6824
        %7808 = vmatprep.subr.mxu0 0.0
        %7809 = vmatpush1.msra.mxu0 %v6823
        %7810 = vmatprep.subr.mxu0 0.0
        %7811 = vmatpush1.msra.mxu0 %v6822
        %7812 = vmatprep.subr.mxu0 0.0
        %7813 = vmatpush1.msra.mxu0 %v6821
        %7814 = vmatprep.subr.mxu0 0.0
        %7815 = vmatpush1.msra.mxu0 %v6820
        %7816 = vmatprep.subr.mxu0 0.0
        %7817 = vmatpush1.msra.mxu0 %v6819
        %7818 = vmatprep.subr.mxu0 0.0
        %7819 = vmatpush1.msra.mxu0 %v6818
        %7820 = vmatprep.subr.mxu0 0.0
        %7821 = vmatpush1.msra.mxu0 %v6817
        %7822 = vmatprep.subr.mxu0 0.0
        %7823 = vmatpush1.msra.mxu0 %v6816
        %7824 = vmatprep.subr.mxu0 0.0
        %7825 = vmatpush1.msra.mxu0 %v6815
        %7826 = vmatprep.subr.mxu0 0.0
        %7827 = vmatpush1.msra.mxu0 %v6814
        %7828 = vmatprep.subr.mxu0 0.0
        %7829 = vmatpush1.msra.mxu0 %v6813
        %7830 = vmatprep.subr.mxu0 0.0
        %7831 = vmatpush1.msra.mxu0 %v6812
        %7832 = vmatprep.subr.mxu0 0.0
        %7833 = vmatpush1.msra.mxu0 %v6811
        %7834 = vmatprep.subr.mxu0 0.0
        %7835 = vmatpush2.msra.mxu0 %v6842
        %7836 = vmatprep.subr.mxu0 0.0
        %7837 = vmatpush2.msra.mxu0 %v6841
        %7838 = vmatprep.subr.mxu0 0.0
        %7839 = vmatpush2.msra.mxu0 %v6840
        %7840 = vmatprep.subr.mxu0 0.0
        %7841 = vmatpush2.msra.mxu0 %v6839
        %7842 = vmatprep.subr.mxu0 0.0
        %7843 = vmatpush2.msra.mxu0 %v6838
        %7844 = vmatprep.subr.mxu0 0.0
        %7845 = vmatpush2.msra.mxu0 %v6837
        %7846 = vmatprep.subr.mxu0 0.0
        %7847 = vmatpush2.msra.mxu0 %v6836
        %7848 = vmatprep.subr.mxu0 0.0
        %7849 = vmatpush2.msra.mxu0 %v6835
        %7850 = vmatprep.subr.mxu0 0.0
        %7851 = vmatpush2.msra.mxu0 %v6834
        %7852 = vmatprep.subr.mxu0 0.0
        %7853 = vmatpush2.msra.mxu0 %v6833
        %7854 = vmatprep.subr.mxu0 0.0
        %7855 = vmatpush2.msra.mxu0 %v6832
        %7856 = vmatprep.subr.mxu0 0.0
        %7857 = vmatpush2.msra.mxu0 %v6831
        %7858 = vmatprep.subr.mxu0 0.0
        %7859 = vmatpush2.msra.mxu0 %v6830
        %7860 = vmatprep.subr.mxu0 0.0
        %7861 = vmatpush2.msra.mxu0 %v6829
        %7862 = vmatprep.subr.mxu0 0.0
        %7863 = vmatpush2.msra.mxu0 %v6828
        %7864 = vmatprep.subr.mxu0 0.0
        %7865 = vmatpush2.msra.mxu0 %v6827
        %7866 = vmatprep.mubr.f32.mxu0 %v6387
        %7867 = vmatmul.mubr.f32.gmra.mxu0 %v6385
        %v7868 = vpop.f32.mrf.mxu0
        %v7869 = vadd.f32 %v7799, %v7868
        %v7870 = vpop.f32.mrf.mxu0
        %7871 = vdwg.mxu0
        %7872 = vmatprep.subr.mxu0 0.0
        %7873 = vmatpush1.msra.mxu0 %v6858
        %7874 = vmatprep.subr.mxu0 0.0
        %7875 = vmatpush1.msra.mxu0 %v6857
        %7876 = vmatprep.subr.mxu0 0.0
        %7877 = vmatpush1.msra.mxu0 %v6856
        %7878 = vmatprep.subr.mxu0 0.0
        %7879 = vmatpush1.msra.mxu0 %v6855
        %7880 = vmatprep.subr.mxu0 0.0
        %7881 = vmatpush1.msra.mxu0 %v6854
        %7882 = vmatprep.subr.mxu0 0.0
        %7883 = vmatpush1.msra.mxu0 %v6853
        %7884 = vmatprep.subr.mxu0 0.0
        %7885 = vmatpush1.msra.mxu0 %v6852
        %7886 = vmatprep.subr.mxu0 0.0
        %7887 = vmatpush1.msra.mxu0 %v6851
        %7888 = vmatprep.subr.mxu0 0.0
        %7889 = vmatpush1.msra.mxu0 %v6850
        %7890 = vmatprep.subr.mxu0 0.0
        %7891 = vmatpush1.msra.mxu0 %v6849
        %7892 = vmatprep.subr.mxu0 0.0
        %7893 = vmatpush1.msra.mxu0 %v6848
        %7894 = vmatprep.subr.mxu0 0.0
        %7895 = vmatpush1.msra.mxu0 %v6847
        %7896 = vmatprep.subr.mxu0 0.0
        %7897 = vmatpush1.msra.mxu0 %v6846
        %7898 = vmatprep.subr.mxu0 0.0
        %7899 = vmatpush1.msra.mxu0 %v6845
        %7900 = vmatprep.subr.mxu0 0.0
        %7901 = vmatpush1.msra.mxu0 %v6844
        %7902 = vmatprep.subr.mxu0 0.0
        %7903 = vmatpush1.msra.mxu0 %v6843
        %7904 = vmatprep.subr.mxu0 0.0
        %7905 = vmatpush2.msra.mxu0 %v6874
        %7906 = vmatprep.subr.mxu0 0.0
        %7907 = vmatpush2.msra.mxu0 %v6873
        %7908 = vmatprep.subr.mxu0 0.0
        %7909 = vmatpush2.msra.mxu0 %v6872
        %7910 = vmatprep.subr.mxu0 0.0
        %7911 = vmatpush2.msra.mxu0 %v6871
        %7912 = vmatprep.subr.mxu0 0.0
        %7913 = vmatpush2.msra.mxu0 %v6870
        %7914 = vmatprep.subr.mxu0 0.0
        %7915 = vmatpush2.msra.mxu0 %v6869
        %7916 = vmatprep.subr.mxu0 0.0
        %7917 = vmatpush2.msra.mxu0 %v6868
        %7918 = vmatprep.subr.mxu0 0.0
        %7919 = vmatpush2.msra.mxu0 %v6867
        %7920 = vmatprep.subr.mxu0 0.0
        %7921 = vmatpush2.msra.mxu0 %v6866
        %7922 = vmatprep.subr.mxu0 0.0
        %7923 = vmatpush2.msra.mxu0 %v6865
        %7924 = vmatprep.subr.mxu0 0.0
        %7925 = vmatpush2.msra.mxu0 %v6864
        %7926 = vmatprep.subr.mxu0 0.0
        %7927 = vmatpush2.msra.mxu0 %v6863
        %7928 = vmatprep.subr.mxu0 0.0
        %7929 = vmatpush2.msra.mxu0 %v6862
        %7930 = vmatprep.subr.mxu0 0.0
        %7931 = vmatpush2.msra.mxu0 %v6861
        %7932 = vmatprep.subr.mxu0 0.0
        %7933 = vmatpush2.msra.mxu0 %v6860
        %7934 = vmatprep.subr.mxu0 0.0
        %7935 = vmatpush2.msra.mxu0 %v6859
        %7936 = vmatprep.mubr.f32.mxu0 %v6391
        %7937 = vmatmul.mubr.f32.gmra.mxu0 %v6389
        %v7938 = vpop.f32.mrf.mxu0
        %v7939 = vadd.f32 %v7869, %v7938
        %v7940 = vpop.f32.mrf.mxu0
        %7941 = vdwg.mxu0
        %7942 = vmatprep.subr.mxu0 0.0
        %7943 = vmatpush1.msra.mxu0 %v6890
        %7944 = vmatprep.subr.mxu0 0.0
        %7945 = vmatpush1.msra.mxu0 %v6889
        %7946 = vmatprep.subr.mxu0 0.0
        %7947 = vmatpush1.msra.mxu0 %v6888
        %7948 = vmatprep.subr.mxu0 0.0
        %7949 = vmatpush1.msra.mxu0 %v6887
        %7950 = vmatprep.subr.mxu0 0.0
        %7951 = vmatpush1.msra.mxu0 %v6886
        %7952 = vmatprep.subr.mxu0 0.0
        %7953 = vmatpush1.msra.mxu0 %v6885
        %7954 = vmatprep.subr.mxu0 0.0
        %7955 = vmatpush1.msra.mxu0 %v6884
        %7956 = vmatprep.subr.mxu0 0.0
        %7957 = vmatpush1.msra.mxu0 %v6883
        %7958 = vmatprep.subr.mxu0 0.0
        %7959 = vmatpush1.msra.mxu0 %v6882
        %7960 = vmatprep.subr.mxu0 0.0
        %7961 = vmatpush1.msra.mxu0 %v6881
        %7962 = vmatprep.subr.mxu0 0.0
        %7963 = vmatpush1.msra.mxu0 %v6880
        %7964 = vmatprep.subr.mxu0 0.0
        %7965 = vmatpush1.msra.mxu0 %v6879
        %7966 = vmatprep.subr.mxu0 0.0
        %7967 = vmatpush1.msra.mxu0 %v6878
        %7968 = vmatprep.subr.mxu0 0.0
        %7969 = vmatpush1.msra.mxu0 %v6877
        %7970 = vmatprep.subr.mxu0 0.0
        %7971 = vmatpush1.msra.mxu0 %v6876
        %7972 = vmatprep.subr.mxu0 0.0
        %7973 = vmatpush1.msra.mxu0 %v6875
        %7974 = vmatprep.subr.mxu0 0.0
        %7975 = vmatpush2.msra.mxu0 0.0
        %7976 = vmatprep.subr.mxu0 0.0
        %7977 = vmatpush2.msra.mxu0 0.0
        %7978 = vmatprep.subr.mxu0 0.0
        %7979 = vmatpush2.msra.mxu0 0.0
        %7980 = vmatprep.subr.mxu0 0.0
        %7981 = vmatpush2.msra.mxu0 0.0
        %7982 = vmatprep.subr.mxu0 0.0
        %7983 = vmatpush2.msra.mxu0 0.0
        %7984 = vmatprep.subr.mxu0 0.0
        %7985 = vmatpush2.msra.mxu0 0.0
        %7986 = vmatprep.subr.mxu0 0.0
        %7987 = vmatpush2.msra.mxu0 0.0
        %7988 = vmatprep.subr.mxu0 0.0
        %7989 = vmatpush2.msra.mxu0 0.0
        %7990 = vmatprep.subr.mxu0 0.0
        %7991 = vmatpush2.msra.mxu0 0.0
        %7992 = vmatprep.subr.mxu0 0.0
        %7993 = vmatpush2.msra.mxu0 0.0
        %7994 = vmatprep.subr.mxu0 0.0
        %7995 = vmatpush2.msra.mxu0 0.0
        %7996 = vmatprep.subr.mxu0 0.0
        %7997 = vmatpush2.msra.mxu0 0.0
        %7998 = vmatprep.subr.mxu0 0.0
        %7999 = vmatpush2.msra.mxu0 0.0
        %8000 = vmatprep.subr.mxu0 0.0
        %8001 = vmatpush2.msra.mxu0 0.0
        %8002 = vmatprep.subr.mxu0 0.0
        %8003 = vmatpush2.msra.mxu0 0.0
        %8004 = vmatprep.subr.mxu0 0.0
        %8005 = vmatpush2.msra.mxu0 0.0
        %8006 = vmatprep.mubr.f32.mxu0 0.0
        %8007 = vmatmul.mubr.f32.gmra.mxu0 %v6393
        %v8008 = vpop.f32.mrf.mxu0
        %v8009 = vadd.f32 %v7939, %v8008
        %v8010 = vpop.f32.mrf.mxu0
        %8011 = vdwg.mxu0
        %v8012 = vmax.f32 %v8009, 0.0
        %v8013 = vld [vmem:[%s11] sm:$0xff]
        %v8014 = vld [vmem:[%s11 + $0x8] sm:$0xff]
        %v8015 = vld [vmem:[%s11 + $0x10] sm:$0xff]
        %v8016 = vld [vmem:[%s11 + $0x18] sm:$0xff]
        %v8017 = vld [vmem:[%s11 + $0x20] sm:$0xff]
        %v8018 = vld [vmem:[%s11 + $0x28] sm:$0xff]
        %v8019 = vld [vmem:[%s11 + $0x30] sm:$0xff]
        %v8020 = vld [vmem:[%s11 + $0x38] sm:$0xff]
        %v8021 = vld [vmem:[%s11 + $0x40] sm:$0xff]
        %v8022 = vld [vmem:[%s11 + $0x48] sm:$0xff]
        %v8023 = vld [vmem:[%s11 + $0x50] sm:$0xff]
        %v8024 = vld [vmem:[%s11 + $0x58] sm:$0xff]
        %v8025 = vld [vmem:[%s11 + $0x60] sm:$0xff]
        %v8026 = vld [vmem:[%s11 + $0x68] sm:$0xff]
        %v8027 = vld [vmem:[%s11 + $0x70] sm:$0xff]
        %v8028 = vld [vmem:[%s11 + $0x78] sm:$0xff]
        %v8029 = vld [vmem:[#allocation14] sm:$0x1]
        %8030 = vmatprep.subr.mxu0 0.0
        %8031 = vmatpush1.msra.mxu0 %v8028
        %8032 = vmatprep.subr.mxu0 0.0
        %8033 = vmatpush1.msra.mxu0 %v8027
        %8034 = vmatprep.subr.mxu0 0.0
        %8035 = vmatpush1.msra.mxu0 %v8026
        %8036 = vmatprep.subr.mxu0 0.0
        %8037 = vmatpush1.msra.mxu0 %v8025
        %8038 = vmatprep.subr.mxu0 0.0
        %8039 = vmatpush1.msra.mxu0 %v8024
        %8040 = vmatprep.subr.mxu0 0.0
        %8041 = vmatpush1.msra.mxu0 %v8023
        %8042 = vmatprep.subr.mxu0 0.0
        %8043 = vmatpush1.msra.mxu0 %v8022
        %8044 = vmatprep.subr.mxu0 0.0
        %8045 = vmatpush1.msra.mxu0 %v8021
        %8046 = vmatprep.subr.mxu0 0.0
        %8047 = vmatpush1.msra.mxu0 %v8020
        %8048 = vmatprep.subr.mxu0 0.0
        %8049 = vmatpush1.msra.mxu0 %v8019
        %8050 = vmatprep.subr.mxu0 0.0
        %8051 = vmatpush1.msra.mxu0 %v8018
        %8052 = vmatprep.subr.mxu0 0.0
        %8053 = vmatpush1.msra.mxu0 %v8017
        %8054 = vmatprep.subr.mxu0 0.0
        %8055 = vmatpush1.msra.mxu0 %v8016
        %8056 = vmatprep.subr.mxu0 0.0
        %8057 = vmatpush1.msra.mxu0 %v8015
        %8058 = vmatprep.subr.mxu0 0.0
        %8059 = vmatpush1.msra.mxu0 %v8014
        %8060 = vmatprep.subr.mxu0 0.0
        %8061 = vmatpush1.msra.mxu0 %v8013
        %8062 = vmatprep.subr.mxu0 0.0
        %8063 = vmatpush2.msra.mxu0 0.0
        %8064 = vmatprep.subr.mxu0 0.0
        %8065 = vmatpush2.msra.mxu0 0.0
        %8066 = vmatprep.subr.mxu0 0.0
        %8067 = vmatpush2.msra.mxu0 0.0
        %8068 = vmatprep.subr.mxu0 0.0
        %8069 = vmatpush2.msra.mxu0 0.0
        %8070 = vmatprep.subr.mxu0 0.0
        %8071 = vmatpush2.msra.mxu0 0.0
        %8072 = vmatprep.subr.mxu0 0.0
        %8073 = vmatpush2.msra.mxu0 0.0
        %8074 = vmatprep.subr.mxu0 0.0
        %8075 = vmatpush2.msra.mxu0 0.0
        %8076 = vmatprep.subr.mxu0 0.0
        %8077 = vmatpush2.msra.mxu0 0.0
        %8078 = vmatprep.subr.mxu0 0.0
        %8079 = vmatpush2.msra.mxu0 0.0
        %8080 = vmatprep.subr.mxu0 0.0
        %8081 = vmatpush2.msra.mxu0 0.0
        %8082 = vmatprep.subr.mxu0 0.0
        %8083 = vmatpush2.msra.mxu0 0.0
        %8084 = vmatprep.subr.mxu0 0.0
        %8085 = vmatpush2.msra.mxu0 0.0
        %8086 = vmatprep.subr.mxu0 0.0
        %8087 = vmatpush2.msra.mxu0 0.0
        %8088 = vmatprep.subr.mxu0 0.0
        %8089 = vmatpush2.msra.mxu0 0.0
        %8090 = vmatprep.subr.mxu0 0.0
        %8091 = vmatpush2.msra.mxu0 0.0
        %8092 = vmatprep.subr.mxu0 0.0
        %8093 = vmatpush2.msra.mxu0 0.0
        %8094 = vmatprep.mubr.f32.mxu0 0.0
        %8095 = vmatmul.mubr.f32.gmra.mxu0 %v8012
        %v8096 = vpop.f32.mrf.mxu0
        %v8097 = vadd.f32 %v8029, %v8096
        %v8098 = vpop.f32.mrf.mxu0
        %8099 = vdwg.mxu0
        %vm8100 = vcmask 24576
        %v8101 = vsel %vm8100, %v8097, -inf
        %8102 = vmax.xlane.f32.xlu0 %v8101
        %v8103 = vpop.xlane.xlu0 %8102
        %v8104 = vsub.f32 %v8097, %v8103
        %v8105 = vmul.f32 %v8104, 1.442695
        %v8106 = vpow.pop %v8105
        %v8107 = vsel %vm8100, %v8106, 0.0
        %8108 = vadd.xlane.f32.xlu0 %v8107
        %v8109 = vpop.xlane.xlu0 %8108
        %v8110 = vrcp.pop %v8109
        %v8111 = vmul.f32 %v8106, %v8110
        %8112 = vst.msk [vmem:[%s537] sm:$0x1] %vm8100, %v8111
        %s8113 = sand.u32 %s318, 1
        %s8114 = scalar_lea.sflag [#allocation4], %s8113
        %s8115 = sand.u32 %s318, 1
        %s8116 = scalar_lea.vmem [#allocation16], %s8115
        // Predicated region
        $region105: #{cnn2_forward.1} parent=71 // pred_check
          %p8117 = pneg %p328
        $region106: #{cnn2_forward.1} parent=71 // pred_check_branch
          %8119 = sbr.rel (%p8117) target = $region108
        $region107: #{cnn2_forward.1} parent=71 // pred_region
          %s8121 = ssub.s32 16, 16
          %8122 = vsyncadd %s8114, %s8121
          %s8123 = smul.addr %s32, 16
          %s8124 = scalar_lea.hbm %s13, %s8123
          %s8126 = sshll.u32 %s8116, 4
          %s8127 = int_to_ptr.vmem [resolvable:$true] %s8126
          %8129 = dma.vmem_to_hbm [thread:$0]  %s8127, 16, %s8124, %s8114
        $region108: #{cnn2_forward.1} parent=71 // pred_fallthru
          _
      $region72: #{cnn2_forward.1} parent=5 // pred_fallthru
        _
      %p8130 = scmp.le.s32.totalorder 2, %s27
      // Predicated region
      $region109: #{cnn2_forward.1} parent=5 // pred_check
        %p8131 = pneg %p8130
      $region110: #{cnn2_forward.1} parent=5 // pred_check_branch
        %8133 = sbr.rel (%p8131) target = $region112
      $region111: #{cnn2_forward.1} parent=5 // pred_region
        %s8134 = ssub.s32 %s27, 2
        // Predicated region
        $region113: #{cnn2_forward.1} parent=111 // pred_check
          %p8135 = pneg %p334
        $region114: #{cnn2_forward.1} parent=111 // pred_check_branch
          %8137 = sbr.rel (%p8135) target = $region116
        $region115: #{cnn2_forward.1} parent=111 // pred_region
          %s8138 = sand.u32 %s319, 1
          %s8139 = scalar_lea.sflag [#allocation4], %s8138
          %s8140 = sand.u32 %s319, 1
          %s8141 = scalar_lea.vmem [#allocation16], %s8140
          %8142 = dma.done %s8139, 16
        $region116: #{cnn2_forward.1} parent=111 // pred_fallthru
          _
      $region112: #{cnn2_forward.1} parent=5 // pred_fallthru
        _
    $region6: #{cnn2_forward.1} parent=1 // loop_footer
      %s31 = sadd.s32 1, %s27
    $region7: #{cnn2_forward.1} parent=1 // loop_footer_branch
      %26 = sbr.rel target = $region3
    $region8: #{cnn2_forward.1} parent=1 // loop_exit
      _
    %8143 = vsyncpa [#allocation3], 1
    %s8144 = scalar_lea.sflag [#allocation3], 1
    %8145 = vsyncpa %s8144, 1
    %8146 = vsyncpa [#allocation6], 1
    %8147 = vsyncpa [#allocation9], 1
    %8148 = vsyncpa [#allocation12], 1
    %8149 = vsyncpa [#allocation15], 1
    %8150 = vsyncpa [#allocation4], 1
    %s8151 = scalar_lea.sflag [#allocation4], 1
    %8152 = vsyncpa %s8151, 1

</llo_original>
